<compile_context>
chip_gen: v7x
topology: tpu7x:2x2x1
jax: 0.10.0
libtpu: 0.0.40
codegen_flags: <defaults>
</compile_context>

<pallas_src>
from functools import partial

import jax
import jax.numpy as jnp
from jax.experimental import pallas as pl
from jax.experimental.pallas import tpu as pltpu

CORE_SIZE = 128
CONN_SIZE = 128
CONN_NUM = 4


def _round_up(n, m):
    return -(-n // m) * m


def cell_kernel(x_ref, core_ref,
                wxcx_ref, bxcx_ref,
                wco_ref, bco_ref,
                wcy_ref,
                w1_ref, b1_ref, w2_ref, b2_ref,
                yout_ref, corenew_ref):
    n_conn, bt, conn = x_ref.shape          # connection-major x tile
    core = corenew_ref.shape[1]

    # --- fused shared-LHS matmul over all connections & batch rows at once ---
    # x_flat @ [Wxc | Wcx] + [bxc | bcomb] : one M=4*Bt, N=256 MXU matmul.
    x_flat = x_ref[...].reshape(n_conn * bt, conn).astype(jnp.bfloat16)
    xw = jnp.dot(x_flat, wxcx_ref[...],
                 preferred_element_type=jnp.float32) + bxcx_ref[...]

    # --- core_new = core * prod_i tanh(x_i @ Wxc + bxc) -----------------------
    # Per-connection slabs are contiguous (Bt, core) tiles; pairwise product
    # tree keeps the reduction as full-width VPU multiplies.
    t = jnp.tanh(xw[:, :core]).reshape(n_conn, bt, core)
    prods = [t[i] for i in range(n_conn)]
    while len(prods) > 1:
        nxt = []
        for j in range(0, len(prods), 2):
            nxt.append(prods[j] * prods[j + 1] if j + 1 < len(prods)
                       else prods[j])
        prods = nxt
    core_new = core_ref[...] * prods[0]                      # (Bt, core) f32
    corenew_ref[...] = core_new

    # --- y0 = relu(core_new @ Wco + bco) --------------------------------------
    y = jnp.maximum(
        jnp.dot(core_new.astype(jnp.bfloat16), wco_ref[...],
                preferred_element_type=jnp.float32) + bco_ref[...], 0.0)

    # --- serial combine chain; xc already holds x_i @ Wcx + bcomb -------------
    xc = xw[:, core:].reshape(n_conn, bt, conn)
    ys = []
    for idx in range(n_conn):
        y = jnp.maximum(
            jnp.dot(y.astype(jnp.bfloat16), wcy_ref[...],
                    preferred_element_type=jnp.float32) + xc[idx], 0.0)
        ys.append(y)

    # --- independent per-connection heads; one unmasked (Bt,128) store each ---
    for idx in range(n_conn):
        h = jnp.maximum(
            jnp.dot(ys[idx].astype(jnp.bfloat16), w1_ref[idx],
                    preferred_element_type=jnp.float32)
            + b1_ref[idx:idx + 1, :], 0.0)
        yout_ref[idx] = jnp.maximum(
            jnp.dot(h.astype(jnp.bfloat16), w2_ref[idx],
                    preferred_element_type=jnp.float32)
            + b2_ref[idx:idx + 1, :], 0.0)


def init_params(key):
    """Deterministic synthetic parameters matching the torch module's shapes."""
    def lin(k, in_f, out_f):
        kw, kb = jax.random.split(k)
        bound = 1.0 / jnp.sqrt(jnp.float32(in_f))
        w = jax.random.uniform(kw, (out_f, in_f), jnp.float32, -bound, bound)
        b = jax.random.uniform(kb, (out_f,), jnp.float32, -bound, bound)
        return w, b

    ks = jax.random.split(key, 3 + 2 * CONN_NUM)
    return {
        "core": jnp.ones((CORE_SIZE,), jnp.float32),           # nn.init.ones_
        "x_to_core": lin(ks[0], CONN_SIZE, CORE_SIZE),
        "core_out": lin(ks[1], CORE_SIZE, CONN_SIZE),
        "combine": lin(ks[2], CORE_SIZE + CONN_SIZE, CONN_SIZE),
        "comb1": [lin(ks[3 + 2 * i], CONN_SIZE, CONN_SIZE) for i in range(CONN_NUM)],
        "comb2": [lin(ks[4 + 2 * i], CONN_SIZE, CONN_SIZE) for i in range(CONN_NUM)],
    }


def prepare_params(params):
    """One-time weight layout / dtype work; kept off the per-call forward path.

    Matmul weights are stored bf16 (MXU-native); biases and core stay f32.
    Wxc and Wcx are concatenated along N (with their biases) so the kernel can
    issue a single N=256 shared-LHS matmul.
    """
    assert CORE_SIZE == CONN_SIZE  # required by the torch module's cat([y, x[idx]])
    wxc, bxc = params["x_to_core"]        # (core, conn), (core,)
    wco, bco = params["core_out"]         # (conn, core), (conn,)
    wcomb, bcomb = params["combine"]      # (conn, core+conn), (conn,)
    wcy = wcomb[:, :CONN_SIZE]            # multiplies y
    wcx = wcomb[:, CONN_SIZE:]            # multiplies x[idx]

    wxcx = jnp.concatenate([wxc.T, wcx.T], axis=1)          # (conn, core+conn)
    bxcx = jnp.concatenate([bxc, bcomb]).reshape(1, -1)     # (1, core+conn)

    prepared = {
        "core2d": params["core"].reshape(1, CORE_SIZE).astype(jnp.float32),
        "wxcx": wxcx.astype(jnp.bfloat16),
        "bxcx": bxcx.astype(jnp.float32),
        "wco_t": wco.T.astype(jnp.bfloat16),                # (core, conn)
        "bco": bco.reshape(1, -1).astype(jnp.float32),
        "wcy": wcy.T.astype(jnp.bfloat16),                  # (conn, conn)
        "w1": jnp.stack([w.T for (w, _) in params["comb1"]]).astype(jnp.bfloat16),
        "b1": jnp.stack([b for (_, b) in params["comb1"]]).astype(jnp.float32),
        "w2": jnp.stack([w.T for (w, _) in params["comb2"]]).astype(jnp.bfloat16),
        "b2": jnp.stack([b for (_, b) in params["comb2"]]).astype(jnp.float32),
    }
    return prepared


@partial(jax.jit, static_argnames=("block_b",))
def cell_forward_pallas_batched(prepared, xb, block_b=256):
    """B independent Cell forward evaluations sharing the same parameters.

    xb: (B, CONN_NUM, CONN_SIZE).  Returns:
      y_out   : (CONN_NUM, B, CONN_SIZE)   head-major (y_out[i] = comb_out[i] result)
      core_new: (B, CORE_SIZE)
    """
    B, n_conn, conn = xb.shape
    core = prepared["core2d"].shape[1]

    block_b = _round_up(max(int(block_b), 8), 8)
    b_pad8 = _round_up(B, 8)
    bt = min(block_b, b_pad8)
    # Keep >=2 grid steps when possible so both v7x TensorCores get a tile.
    if b_pad8 // bt < 2 and bt > 8:
        bt = _round_up(pl.cdiv(b_pad8, 2), 8)
    b_pad = _round_up(B, bt)
    grid = (b_pad // bt,)

    x = xb
    if b_pad != B:
        x = jnp.pad(x, ((0, b_pad - B), (0, 0), (0, 0)))
    x_nbc = jnp.transpose(x, (1, 0, 2))       # connection-major (N, B_pad, C)

    in_specs = [
        pl.BlockSpec((n_conn, bt, conn), lambda b: (0, b, 0)),       # x (conn-major)
        pl.BlockSpec((1, core), lambda b: (0, 0)),                   # core
        pl.BlockSpec((conn, core + conn), lambda b: (0, 0)),         # [Wxc|Wcx] bf16
        pl.BlockSpec((1, core + conn), lambda b: (0, 0)),            # [bxc|bcomb]
        pl.BlockSpec((core, conn), lambda b: (0, 0)),                # wco_t bf16
        pl.BlockSpec((1, conn), lambda b: (0, 0)),                   # bco
        pl.BlockSpec((conn, conn), lambda b: (0, 0)),                # wcy bf16
        pl.BlockSpec((n_conn, conn, conn), lambda b: (0, 0, 0)),     # w1 bf16
        pl.BlockSpec((n_conn, conn), lambda b: (0, 0)),              # b1
        pl.BlockSpec((n_conn, conn, conn), lambda b: (0, 0, 0)),     # w2 bf16
        pl.BlockSpec((n_conn, conn), lambda b: (0, 0)),              # b2
    ]
    out_specs = (
        pl.BlockSpec((n_conn, bt, conn), lambda b: (0, b, 0)),       # y_out head-major
        pl.BlockSpec((bt, core), lambda b: (b, 0)),                  # core_new
    )

    y_out, core_new = pl.pallas_call(
        cell_kernel,
        out_shape=(jax.ShapeDtypeStruct((n_conn, b_pad, conn), jnp.float32),
                   jax.ShapeDtypeStruct((b_pad, core), jnp.float32)),
        grid=grid,
        in_specs=in_specs,
        out_specs=out_specs,
        compiler_params=pltpu.CompilerParams(
            dimension_semantics=("parallel",)),
    )(x_nbc, prepared["core2d"],
      prepared["wxcx"], prepared["bxcx"],
      prepared["wco_t"], prepared["bco"],
      prepared["wcy"],
      prepared["w1"], prepared["b1"], prepared["w2"], prepared["b2"])

    return y_out[:, :B], core_new[:B]


def cell_forward_pallas(prepared, x):
    """Single-input path matching the torch return signature:
    (list of per-connection outputs, core_new).  API parity only; the batched
    entry point is the performance path."""
    y_out, core_new = cell_forward_pallas_batched(prepared, x[None], block_b=8)
    return [y_out[i, 0] for i in range(x.shape[0])], core_new[0]


def cell_forward_ref(params, x):
    """Pure-f32 JAX reference mirroring the torch forward exactly (one input)."""
    core_new = params["core"]
    wxc, bxc = params["x_to_core"]
    for i in range(x.shape[0]):
        core_new = core_new * jnp.tanh(x[i] @ wxc.T + bxc)
    wco, bco = params["core_out"]
    y = jnp.maximum(core_new @ wco.T + bco, 0.0)
    wcomb, bcomb = params["combine"]
    y_out = []
    for idx in range(x.shape[0]):
        yc = jnp.concatenate([y, x[idx]], axis=0)
        y = jnp.maximum(yc @ wcomb.T + bcomb, 0.0)
        w1, b1 = params["comb1"][idx]
        w2, b2 = params["comb2"][idx]
        h = jnp.maximum(y @ w1.T + b1, 0.0)
        y_out.append(jnp.maximum(h @ w2.T + b2, 0.0))
    return y_out, core_new


def cell_forward_ref_batched(params, xb):
    """Pure-f32 vectorized reference.  Returns head-major y_out and core_new."""
    wxc, bxc = params["x_to_core"]
    t = jnp.tanh(xb @ wxc.T + bxc)                       # (B, N, core)
    core_new = params["core"][None, :] * jnp.prod(t, axis=1)
    wco, bco = params["core_out"]
    y = jnp.maximum(core_new @ wco.T + bco, 0.0)
    wcomb, bcomb = params["combine"]
    wcy = wcomb[:, :CONN_SIZE]
    wcx = wcomb[:, CONN_SIZE:]
    outs = []
    for idx in range(xb.shape[1]):
        y = jnp.maximum(y @ wcy.T + xb[:, idx] @ wcx.T + bcomb, 0.0)
        w1, b1 = params["comb1"][idx]
        w2, b2 = params["comb2"][idx]
        h = jnp.maximum(y @ w1.T + b1, 0.0)
        outs.append(jnp.maximum(h @ w2.T + b2, 0.0))
    return jnp.stack(outs, axis=0), core_new             # (N,B,C), (B,core)


if __name__ == "__main__":
    key = jax.random.PRNGKey(0)
    kp, kx = jax.random.split(key)
    params = init_params(kp)
    prepared = prepare_params(params)

    # Batched (grid) path — the performance-oriented entry point.
    # B=512 with Bt=256 gives grid=(2,): both v7x TensorCores get a tile.
    B = 512
    xb = jax.random.normal(kx, (B, CONN_NUM, CONN_SIZE), jnp.float32)

    y_out_b, core_new_b = cell_forward_pallas_batched(prepared, xb, block_b=256)
    jax.block_until_ready((y_out_b, core_new_b))

    # bf16 matmul weights => loosened tolerances vs. the pure-f32 reference.
    ATOL, RTOL = 3e-2, 5e-2
    y_ref_b, core_ref_b = cell_forward_ref_batched(params, xb)
    assert jnp.allclose(core_new_b, core_ref_b, atol=ATOL, rtol=RTOL), "core_new mismatch"
    assert jnp.allclose(y_out_b, y_ref_b, atol=ATOL, rtol=RTOL), "y_out mismatch"

    # Single-input path matching the torch module's forward signature.
    x = xb[0]
    y_out, core_new = cell_forward_pallas(prepared, x)
    jax.block_until_ready(core_new)
    y_ref, core_ref_v = cell_forward_ref(params, x)
    assert jnp.allclose(core_new, core_ref_v, atol=ATOL, rtol=RTOL), "single core mismatch"
    for a, r in zip(y_out, y_ref):
        assert jnp.allclose(a, r, atol=ATOL, rtol=RTOL), "single y_out mismatch"

    print("KERNEL_OK")
</pallas_src>

<mosaic_0001>
module attributes {stable_mosaic.version = 11 : i64} {
  func.func @cell_kernel(%arg0: i32, %arg1: memref<4x256x128xf32, #tpu.memory_space<vmem>>, %arg2: memref<1x128xf32, #tpu.memory_space<vmem>>, %arg3: memref<128x256xbf16, #tpu.memory_space<vmem>>, %arg4: memref<1x256xf32, #tpu.memory_space<vmem>>, %arg5: memref<128x128xbf16, #tpu.memory_space<vmem>>, %arg6: memref<1x128xf32, #tpu.memory_space<vmem>>, %arg7: memref<128x128xbf16, #tpu.memory_space<vmem>>, %arg8: memref<4x128x128xbf16, #tpu.memory_space<vmem>>, %arg9: memref<4x128xf32, #tpu.memory_space<vmem>>, %arg10: memref<4x128x128xbf16, #tpu.memory_space<vmem>>, %arg11: memref<4x128xf32, #tpu.memory_space<vmem>>, %arg12: memref<4x256x128xf32, #tpu.memory_space<vmem>>, %arg13: memref<256x128xf32, #tpu.memory_space<vmem>>) attributes {dimension_semantics = [#tpu.dimension_semantics<parallel>], iteration_bounds = array<i64: 2>, scalar_prefetch = 0 : i64, scratch_operands = 0 : i64, tpu.core_type = #tpu.core_type<tc>, window_params = [{transform_indices = @transform_0, window_bounds = array<i64: 4, 256, 128>}, {pipeline_mode = #tpu.pipeline_mode<synchronous>, transform_indices = @transform_1, window_bounds = array<i64: 1, 128>}, {pipeline_mode = #tpu.pipeline_mode<synchronous>, transform_indices = @transform_2, window_bounds = array<i64: 128, 256>}, {pipeline_mode = #tpu.pipeline_mode<synchronous>, transform_indices = @transform_3, window_bounds = array<i64: 1, 256>}, {pipeline_mode = #tpu.pipeline_mode<synchronous>, transform_indices = @transform_4, window_bounds = array<i64: 128, 128>}, {pipeline_mode = #tpu.pipeline_mode<synchronous>, transform_indices = @transform_5, window_bounds = array<i64: 1, 128>}, {pipeline_mode = #tpu.pipeline_mode<synchronous>, transform_indices = @transform_6, window_bounds = array<i64: 128, 128>}, {pipeline_mode = #tpu.pipeline_mode<synchronous>, transform_indices = @transform_7, window_bounds = array<i64: 4, 128, 128>}, {pipeline_mode = #tpu.pipeline_mode<synchronous>, transform_indices = @transform_8, window_bounds = array<i64: 4, 128>}, {pipeline_mode = #tpu.pipeline_mode<synchronous>, transform_indices = @transform_9, window_bounds = array<i64: 4, 128, 128>}, {pipeline_mode = #tpu.pipeline_mode<synchronous>, transform_indices = @transform_10, window_bounds = array<i64: 4, 128>}, {transform_indices = @transform_11, window_bounds = array<i64: 4, 256, 128>}, {transform_indices = @transform_12, window_bounds = array<i64: 256, 128>}]} {
    %c0 = arith.constant 0 : index
    %c0_0 = arith.constant 0 : index
    %c0_1 = arith.constant 0 : index
    %0 = vector.load %arg1[%c0, %c0_0, %c0_1] : memref<4x256x128xf32, #tpu.memory_space<vmem>>, vector<4x256x128xf32>
    %1 = vector.shape_cast %0 : vector<4x256x128xf32> to vector<1024x128xf32>
    %2 = arith.truncf %1 : vector<1024x128xf32> to vector<1024x128xbf16>
    %c0_2 = arith.constant 0 : index
    %c0_3 = arith.constant 0 : index
    %3 = vector.load %arg3[%c0_2, %c0_3] : memref<128x256xbf16, #tpu.memory_space<vmem>>, vector<128x256xbf16>
    %cst = arith.constant dense<0.000000e+00> : vector<1024x256xf32>
    %4 = tpu.matmul %2, %3, %cst {dimension_numbers = #tpu.dot_dimension_numbers<[1], [0], [0], [1], [0, 0, 1, 1], [], []>} : vector<1024x128xbf16>, vector<128x256xbf16>, vector<1024x256xf32> -> vector<1024x256xf32>
    %c0_4 = arith.constant 0 : index
    %c0_5 = arith.constant 0 : index
    %5 = vector.load %arg4[%c0_4, %c0_5] : memref<1x256xf32, #tpu.memory_space<vmem>>, vector<1x256xf32>
    %6 = vector.broadcast %5 : vector<1x256xf32> to vector<1024x256xf32>
    %7 = arith.addf %4, %6 : vector<1024x256xf32>
    %8 = vector.extract_strided_slice %7 {offsets = [0, 0], sizes = [1024, 128], strides = [1, 1]} : vector<1024x256xf32> to vector<1024x128xf32>
    %9 = math.tanh %8 : vector<1024x128xf32>
    %10 = vector.shape_cast %9 : vector<1024x128xf32> to vector<4x256x128xf32>
    %11 = vector.extract_strided_slice %10 {offsets = [0, 0, 0], sizes = [1, 256, 128], strides = [1, 1, 1]} : vector<4x256x128xf32> to vector<1x256x128xf32>
    %12 = vector.shape_cast %11 : vector<1x256x128xf32> to vector<256x128xf32>
    %13 = vector.extract_strided_slice %10 {offsets = [1, 0, 0], sizes = [1, 256, 128], strides = [1, 1, 1]} : vector<4x256x128xf32> to vector<1x256x128xf32>
    %14 = vector.shape_cast %13 : vector<1x256x128xf32> to vector<256x128xf32>
    %15 = vector.extract_strided_slice %10 {offsets = [2, 0, 0], sizes = [1, 256, 128], strides = [1, 1, 1]} : vector<4x256x128xf32> to vector<1x256x128xf32>
    %16 = vector.shape_cast %15 : vector<1x256x128xf32> to vector<256x128xf32>
    %17 = vector.extract_strided_slice %10 {offsets = [3, 0, 0], sizes = [1, 256, 128], strides = [1, 1, 1]} : vector<4x256x128xf32> to vector<1x256x128xf32>
    %18 = vector.shape_cast %17 : vector<1x256x128xf32> to vector<256x128xf32>
    %19 = arith.mulf %12, %14 : vector<256x128xf32>
    %20 = arith.mulf %16, %18 : vector<256x128xf32>
    %21 = arith.mulf %19, %20 : vector<256x128xf32>
    %c0_6 = arith.constant 0 : index
    %c0_7 = arith.constant 0 : index
    %22 = vector.load %arg2[%c0_6, %c0_7] : memref<1x128xf32, #tpu.memory_space<vmem>>, vector<1x128xf32>
    %23 = vector.broadcast %22 : vector<1x128xf32> to vector<256x128xf32>
    %24 = arith.mulf %23, %21 : vector<256x128xf32>
    %c0_8 = arith.constant 0 : index
    %c0_9 = arith.constant 0 : index
    %25 = vector.load %arg13[%c0_8, %c0_9] : memref<256x128xf32, #tpu.memory_space<vmem>>, vector<256x128xf32>
    tpu.vector_store %arg13[%c0_8, %c0_9], %24 {strides = array<i32>} : memref<256x128xf32, #tpu.memory_space<vmem>>, vector<256x128xf32>,
    %26 = arith.truncf %24 : vector<256x128xf32> to vector<256x128xbf16>
    %c0_10 = arith.constant 0 : index
    %c0_11 = arith.constant 0 : index
    %27 = vector.load %arg5[%c0_10, %c0_11] : memref<128x128xbf16, #tpu.memory_space<vmem>>, vector<128x128xbf16>
    %cst_12 = arith.constant dense<0.000000e+00> : vector<256x128xf32>
    %28 = tpu.matmul %26, %27, %cst_12 {dimension_numbers = #tpu.dot_dimension_numbers<[1], [0], [0], [1], [0, 0, 1, 1], [], []>} : vector<256x128xbf16>, vector<128x128xbf16>, vector<256x128xf32> -> vector<256x128xf32>
    %c0_13 = arith.constant 0 : index
    %c0_14 = arith.constant 0 : index
    %29 = vector.load %arg6[%c0_13, %c0_14] : memref<1x128xf32, #tpu.memory_space<vmem>>, vector<1x128xf32>
    %30 = vector.broadcast %29 : vector<1x128xf32> to vector<256x128xf32>
    %31 = arith.addf %28, %30 : vector<256x128xf32>
    %cst_15 = arith.constant 0.000000e+00 : f32
    %32 = vector.broadcast %cst_15 : f32 to vector<256x128xf32>
    %33 = arith.maximumf %31, %32 : vector<256x128xf32>
    %34 = vector.extract_strided_slice %7 {offsets = [0, 128], sizes = [1024, 128], strides = [1, 1]} : vector<1024x256xf32> to vector<1024x128xf32>
    %35 = vector.shape_cast %34 : vector<1024x128xf32> to vector<4x256x128xf32>
    %36 = arith.truncf %33 : vector<256x128xf32> to vector<256x128xbf16>
    %c0_16 = arith.constant 0 : index
    %c0_17 = arith.constant 0 : index
    %37 = vector.load %arg7[%c0_16, %c0_17] : memref<128x128xbf16, #tpu.memory_space<vmem>>, vector<128x128xbf16>
    %cst_18 = arith.constant dense<0.000000e+00> : vector<256x128xf32>
    %38 = tpu.matmul %36, %37, %cst_18 {dimension_numbers = #tpu.dot_dimension_numbers<[1], [0], [0], [1], [0, 0, 1, 1], [], []>} : vector<256x128xbf16>, vector<128x128xbf16>, vector<256x128xf32> -> vector<256x128xf32>
    %39 = vector.extract_strided_slice %35 {offsets = [0, 0, 0], sizes = [1, 256, 128], strides = [1, 1, 1]} : vector<4x256x128xf32> to vector<1x256x128xf32>
    %40 = vector.shape_cast %39 : vector<1x256x128xf32> to vector<256x128xf32>
    %41 = arith.addf %38, %40 : vector<256x128xf32>
    %cst_19 = arith.constant 0.000000e+00 : f32
    %42 = vector.broadcast %cst_19 : f32 to vector<256x128xf32>
    %43 = arith.maximumf %41, %42 : vector<256x128xf32>
    %44 = arith.truncf %43 : vector<256x128xf32> to vector<256x128xbf16>
    %c0_20 = arith.constant 0 : index
    %c0_21 = arith.constant 0 : index
    %45 = vector.load %arg7[%c0_20, %c0_21] : memref<128x128xbf16, #tpu.memory_space<vmem>>, vector<128x128xbf16>
    %cst_22 = arith.constant dense<0.000000e+00> : vector<256x128xf32>
    %46 = tpu.matmul %44, %45, %cst_22 {dimension_numbers = #tpu.dot_dimension_numbers<[1], [0], [0], [1], [0, 0, 1, 1], [], []>} : vector<256x128xbf16>, vector<128x128xbf16>, vector<256x128xf32> -> vector<256x128xf32>
    %47 = vector.extract_strided_slice %35 {offsets = [1, 0, 0], sizes = [1, 256, 128], strides = [1, 1, 1]} : vector<4x256x128xf32> to vector<1x256x128xf32>
    %48 = vector.shape_cast %47 : vector<1x256x128xf32> to vector<256x128xf32>
    %49 = arith.addf %46, %48 : vector<256x128xf32>
    %cst_23 = arith.constant 0.000000e+00 : f32
    %50 = vector.broadcast %cst_23 : f32 to vector<256x128xf32>
    %51 = arith.maximumf %49, %50 : vector<256x128xf32>
    %52 = arith.truncf %51 : vector<256x128xf32> to vector<256x128xbf16>
    %c0_24 = arith.constant 0 : index
    %c0_25 = arith.constant 0 : index
    %53 = vector.load %arg7[%c0_24, %c0_25] : memref<128x128xbf16, #tpu.memory_space<vmem>>, vector<128x128xbf16>
    %cst_26 = arith.constant dense<0.000000e+00> : vector<256x128xf32>
    %54 = tpu.matmul %52, %53, %cst_26 {dimension_numbers = #tpu.dot_dimension_numbers<[1], [0], [0], [1], [0, 0, 1, 1], [], []>} : vector<256x128xbf16>, vector<128x128xbf16>, vector<256x128xf32> -> vector<256x128xf32>
    %55 = vector.extract_strided_slice %35 {offsets = [2, 0, 0], sizes = [1, 256, 128], strides = [1, 1, 1]} : vector<4x256x128xf32> to vector<1x256x128xf32>
    %56 = vector.shape_cast %55 : vector<1x256x128xf32> to vector<256x128xf32>
    %57 = arith.addf %54, %56 : vector<256x128xf32>
    %cst_27 = arith.constant 0.000000e+00 : f32
    %58 = vector.broadcast %cst_27 : f32 to vector<256x128xf32>
    %59 = arith.maximumf %57, %58 : vector<256x128xf32>
    %60 = arith.truncf %59 : vector<256x128xf32> to vector<256x128xbf16>
    %c0_28 = arith.constant 0 : index
    %c0_29 = arith.constant 0 : index
    %61 = vector.load %arg7[%c0_28, %c0_29] : memref<128x128xbf16, #tpu.memory_space<vmem>>, vector<128x128xbf16>
    %cst_30 = arith.constant dense<0.000000e+00> : vector<256x128xf32>
    %62 = tpu.matmul %60, %61, %cst_30 {dimension_numbers = #tpu.dot_dimension_numbers<[1], [0], [0], [1], [0, 0, 1, 1], [], []>} : vector<256x128xbf16>, vector<128x128xbf16>, vector<256x128xf32> -> vector<256x128xf32>
    %63 = vector.extract_strided_slice %35 {offsets = [3, 0, 0], sizes = [1, 256, 128], strides = [1, 1, 1]} : vector<4x256x128xf32> to vector<1x256x128xf32>
    %64 = vector.shape_cast %63 : vector<1x256x128xf32> to vector<256x128xf32>
    %65 = arith.addf %62, %64 : vector<256x128xf32>
    %cst_31 = arith.constant 0.000000e+00 : f32
    %66 = vector.broadcast %cst_31 : f32 to vector<256x128xf32>
    %67 = arith.maximumf %65, %66 : vector<256x128xf32>
    %68 = arith.truncf %43 : vector<256x128xf32> to vector<256x128xbf16>
    %c0_32 = arith.constant 0 : index
    %c0_33 = arith.constant 0 : index
    %c0_34 = arith.constant 0 : index
    %69 = vector.load %arg8[%c0_32, %c0_33, %c0_34] : memref<4x128x128xbf16, #tpu.memory_space<vmem>>, vector<1x128x128xbf16>
    %70 = vector.shape_cast %69 : vector<1x128x128xbf16> to vector<128x128xbf16>
    %cst_35 = arith.constant dense<0.000000e+00> : vector<256x128xf32>
    %71 = tpu.matmul %68, %70, %cst_35 {dimension_numbers = #tpu.dot_dimension_numbers<[1], [0], [0], [1], [0, 0, 1, 1], [], []>} : vector<256x128xbf16>, vector<128x128xbf16>, vector<256x128xf32> -> vector<256x128xf32>
    %c0_36 = arith.constant 0 : index
    %c0_37 = arith.constant 0 : index
    %72 = vector.load %arg9[%c0_36, %c0_37] : memref<4x128xf32, #tpu.memory_space<vmem>>, vector<1x128xf32>
    %73 = vector.broadcast %72 : vector<1x128xf32> to vector<256x128xf32>
    %74 = arith.addf %71, %73 : vector<256x128xf32>
    %cst_38 = arith.constant 0.000000e+00 : f32
    %75 = vector.broadcast %cst_38 : f32 to vector<256x128xf32>
    %76 = arith.maximumf %74, %75 : vector<256x128xf32>
    %77 = arith.truncf %76 : vector<256x128xf32> to vector<256x128xbf16>
    %c0_39 = arith.constant 0 : index
    %c0_40 = arith.constant 0 : index
    %c0_41 = arith.constant 0 : index
    %78 = vector.load %arg10[%c0_39, %c0_40, %c0_41] : memref<4x128x128xbf16, #tpu.memory_space<vmem>>, vector<1x128x128xbf16>
    %79 = vector.shape_cast %78 : vector<1x128x128xbf16> to vector<128x128xbf16>
    %cst_42 = arith.constant dense<0.000000e+00> : vector<256x128xf32>
    %80 = tpu.matmul %77, %79, %cst_42 {dimension_numbers = #tpu.dot_dimension_numbers<[1], [0], [0], [1], [0, 0, 1, 1], [], []>} : vector<256x128xbf16>, vector<128x128xbf16>, vector<256x128xf32> -> vector<256x128xf32>
    %c0_43 = arith.constant 0 : index
    %c0_44 = arith.constant 0 : index
    %81 = vector.load %arg11[%c0_43, %c0_44] : memref<4x128xf32, #tpu.memory_space<vmem>>, vector<1x128xf32>
    %82 = vector.broadcast %81 : vector<1x128xf32> to vector<256x128xf32>
    %83 = arith.addf %80, %82 : vector<256x128xf32>
    %cst_45 = arith.constant 0.000000e+00 : f32
    %84 = vector.broadcast %cst_45 : f32 to vector<256x128xf32>
    %85 = arith.maximumf %83, %84 : vector<256x128xf32>
    %c0_46 = arith.constant 0 : index
    %c0_47 = arith.constant 0 : index
    %c0_48 = arith.constant 0 : index
    %86 = vector.load %arg12[%c0_46, %c0_47, %c0_48] : memref<4x256x128xf32, #tpu.memory_space<vmem>>, vector<1x256x128xf32>
    %87 = vector.shape_cast %86 : vector<1x256x128xf32> to vector<256x128xf32>
    %88 = vector.shape_cast %85 : vector<256x128xf32> to vector<1x256x128xf32>
    tpu.vector_store %arg12[%c0_46, %c0_47, %c0_48], %88 {strides = array<i32>} : memref<4x256x128xf32, #tpu.memory_space<vmem>>, vector<1x256x128xf32>,
    %89 = arith.truncf %51 : vector<256x128xf32> to vector<256x128xbf16>
    %c1 = arith.constant 1 : index
    %c0_49 = arith.constant 0 : index
    %c0_50 = arith.constant 0 : index
    %90 = vector.load %arg8[%c1, %c0_49, %c0_50] : memref<4x128x128xbf16, #tpu.memory_space<vmem>>, vector<1x128x128xbf16>
    %91 = vector.shape_cast %90 : vector<1x128x128xbf16> to vector<128x128xbf16>
    %cst_51 = arith.constant dense<0.000000e+00> : vector<256x128xf32>
    %92 = tpu.matmul %89, %91, %cst_51 {dimension_numbers = #tpu.dot_dimension_numbers<[1], [0], [0], [1], [0, 0, 1, 1], [], []>} : vector<256x128xbf16>, vector<128x128xbf16>, vector<256x128xf32> -> vector<256x128xf32>
    %c1_52 = arith.constant 1 : index
    %c0_53 = arith.constant 0 : index
    %93 = vector.load %arg9[%c1_52, %c0_53] : memref<4x128xf32, #tpu.memory_space<vmem>>, vector<1x128xf32>
    %94 = vector.broadcast %93 : vector<1x128xf32> to vector<256x128xf32>
    %95 = arith.addf %92, %94 : vector<256x128xf32>
    %cst_54 = arith.constant 0.000000e+00 : f32
    %96 = vector.broadcast %cst_54 : f32 to vector<256x128xf32>
    %97 = arith.maximumf %95, %96 : vector<256x128xf32>
    %98 = arith.truncf %97 : vector<256x128xf32> to vector<256x128xbf16>
    %c1_55 = arith.constant 1 : index
    %c0_56 = arith.constant 0 : index
    %c0_57 = arith.constant 0 : index
    %99 = vector.load %arg10[%c1_55, %c0_56, %c0_57] : memref<4x128x128xbf16, #tpu.memory_space<vmem>>, vector<1x128x128xbf16>
    %100 = vector.shape_cast %99 : vector<1x128x128xbf16> to vector<128x128xbf16>
    %cst_58 = arith.constant dense<0.000000e+00> : vector<256x128xf32>
    %101 = tpu.matmul %98, %100, %cst_58 {dimension_numbers = #tpu.dot_dimension_numbers<[1], [0], [0], [1], [0, 0, 1, 1], [], []>} : vector<256x128xbf16>, vector<128x128xbf16>, vector<256x128xf32> -> vector<256x128xf32>
    %c1_59 = arith.constant 1 : index
    %c0_60 = arith.constant 0 : index
    %102 = vector.load %arg11[%c1_59, %c0_60] : memref<4x128xf32, #tpu.memory_space<vmem>>, vector<1x128xf32>
    %103 = vector.broadcast %102 : vector<1x128xf32> to vector<256x128xf32>
    %104 = arith.addf %101, %103 : vector<256x128xf32>
    %cst_61 = arith.constant 0.000000e+00 : f32
    %105 = vector.broadcast %cst_61 : f32 to vector<256x128xf32>
    %106 = arith.maximumf %104, %105 : vector<256x128xf32>
    %c1_62 = arith.constant 1 : index
    %c0_63 = arith.constant 0 : index
    %c0_64 = arith.constant 0 : index
    %107 = vector.load %arg12[%c1_62, %c0_63, %c0_64] : memref<4x256x128xf32, #tpu.memory_space<vmem>>, vector<1x256x128xf32>
    %108 = vector.shape_cast %107 : vector<1x256x128xf32> to vector<256x128xf32>
    %109 = vector.shape_cast %106 : vector<256x128xf32> to vector<1x256x128xf32>
    tpu.vector_store %arg12[%c1_62, %c0_63, %c0_64], %109 {strides = array<i32>} : memref<4x256x128xf32, #tpu.memory_space<vmem>>, vector<1x256x128xf32>,
    %110 = arith.truncf %59 : vector<256x128xf32> to vector<256x128xbf16>
    %c2 = arith.constant 2 : index
    %c0_65 = arith.constant 0 : index
    %c0_66 = arith.constant 0 : index
    %111 = vector.load %arg8[%c2, %c0_65, %c0_66] : memref<4x128x128xbf16, #tpu.memory_space<vmem>>, vector<1x128x128xbf16>
    %112 = vector.shape_cast %111 : vector<1x128x128xbf16> to vector<128x128xbf16>
    %cst_67 = arith.constant dense<0.000000e+00> : vector<256x128xf32>
    %113 = tpu.matmul %110, %112, %cst_67 {dimension_numbers = #tpu.dot_dimension_numbers<[1], [0], [0], [1], [0, 0, 1, 1], [], []>} : vector<256x128xbf16>, vector<128x128xbf16>, vector<256x128xf32> -> vector<256x128xf32>
    %c2_68 = arith.constant 2 : index
    %c0_69 = arith.constant 0 : index
    %114 = vector.load %arg9[%c2_68, %c0_69] : memref<4x128xf32, #tpu.memory_space<vmem>>, vector<1x128xf32>
    %115 = vector.broadcast %114 : vector<1x128xf32> to vector<256x128xf32>
    %116 = arith.addf %113, %115 : vector<256x128xf32>
    %cst_70 = arith.constant 0.000000e+00 : f32
    %117 = vector.broadcast %cst_70 : f32 to vector<256x128xf32>
    %118 = arith.maximumf %116, %117 : vector<256x128xf32>
    %119 = arith.truncf %118 : vector<256x128xf32> to vector<256x128xbf16>
    %c2_71 = arith.constant 2 : index
    %c0_72 = arith.constant 0 : index
    %c0_73 = arith.constant 0 : index
    %120 = vector.load %arg10[%c2_71, %c0_72, %c0_73] : memref<4x128x128xbf16, #tpu.memory_space<vmem>>, vector<1x128x128xbf16>
    %121 = vector.shape_cast %120 : vector<1x128x128xbf16> to vector<128x128xbf16>
    %cst_74 = arith.constant dense<0.000000e+00> : vector<256x128xf32>
    %122 = tpu.matmul %119, %121, %cst_74 {dimension_numbers = #tpu.dot_dimension_numbers<[1], [0], [0], [1], [0, 0, 1, 1], [], []>} : vector<256x128xbf16>, vector<128x128xbf16>, vector<256x128xf32> -> vector<256x128xf32>
    %c2_75 = arith.constant 2 : index
    %c0_76 = arith.constant 0 : index
    %123 = vector.load %arg11[%c2_75, %c0_76] : memref<4x128xf32, #tpu.memory_space<vmem>>, vector<1x128xf32>
    %124 = vector.broadcast %123 : vector<1x128xf32> to vector<256x128xf32>
    %125 = arith.addf %122, %124 : vector<256x128xf32>
    %cst_77 = arith.constant 0.000000e+00 : f32
    %126 = vector.broadcast %cst_77 : f32 to vector<256x128xf32>
    %127 = arith.maximumf %125, %126 : vector<256x128xf32>
    %c2_78 = arith.constant 2 : index
    %c0_79 = arith.constant 0 : index
    %c0_80 = arith.constant 0 : index
    %128 = vector.load %arg12[%c2_78, %c0_79, %c0_80] : memref<4x256x128xf32, #tpu.memory_space<vmem>>, vector<1x256x128xf32>
    %129 = vector.shape_cast %128 : vector<1x256x128xf32> to vector<256x128xf32>
    %130 = vector.shape_cast %127 : vector<256x128xf32> to vector<1x256x128xf32>
    tpu.vector_store %arg12[%c2_78, %c0_79, %c0_80], %130 {strides = array<i32>} : memref<4x256x128xf32, #tpu.memory_space<vmem>>, vector<1x256x128xf32>,
    %131 = arith.truncf %67 : vector<256x128xf32> to vector<256x128xbf16>
    %c3 = arith.constant 3 : index
    %c0_81 = arith.constant 0 : index
    %c0_82 = arith.constant 0 : index
    %132 = vector.load %arg8[%c3, %c0_81, %c0_82] : memref<4x128x128xbf16, #tpu.memory_space<vmem>>, vector<1x128x128xbf16>
    %133 = vector.shape_cast %132 : vector<1x128x128xbf16> to vector<128x128xbf16>
    %cst_83 = arith.constant dense<0.000000e+00> : vector<256x128xf32>
    %134 = tpu.matmul %131, %133, %cst_83 {dimension_numbers = #tpu.dot_dimension_numbers<[1], [0], [0], [1], [0, 0, 1, 1], [], []>} : vector<256x128xbf16>, vector<128x128xbf16>, vector<256x128xf32> -> vector<256x128xf32>
    %c3_84 = arith.constant 3 : index
    %c0_85 = arith.constant 0 : index
    %135 = vector.load %arg9[%c3_84, %c0_85] : memref<4x128xf32, #tpu.memory_space<vmem>>, vector<1x128xf32>
    %136 = vector.broadcast %135 : vector<1x128xf32> to vector<256x128xf32>
    %137 = arith.addf %134, %136 : vector<256x128xf32>
    %cst_86 = arith.constant 0.000000e+00 : f32
    %138 = vector.broadcast %cst_86 : f32 to vector<256x128xf32>
    %139 = arith.maximumf %137, %138 : vector<256x128xf32>
    %140 = arith.truncf %139 : vector<256x128xf32> to vector<256x128xbf16>
    %c3_87 = arith.constant 3 : index
    %c0_88 = arith.constant 0 : index
    %c0_89 = arith.constant 0 : index
    %141 = vector.load %arg10[%c3_87, %c0_88, %c0_89] : memref<4x128x128xbf16, #tpu.memory_space<vmem>>, vector<1x128x128xbf16>
    %142 = vector.shape_cast %141 : vector<1x128x128xbf16> to vector<128x128xbf16>
    %cst_90 = arith.constant dense<0.000000e+00> : vector<256x128xf32>
    %143 = tpu.matmul %140, %142, %cst_90 {dimension_numbers = #tpu.dot_dimension_numbers<[1], [0], [0], [1], [0, 0, 1, 1], [], []>} : vector<256x128xbf16>, vector<128x128xbf16>, vector<256x128xf32> -> vector<256x128xf32>
    %c3_91 = arith.constant 3 : index
    %c0_92 = arith.constant 0 : index
    %144 = vector.load %arg11[%c3_91, %c0_92] : memref<4x128xf32, #tpu.memory_space<vmem>>, vector<1x128xf32>
    %145 = vector.broadcast %144 : vector<1x128xf32> to vector<256x128xf32>
    %146 = arith.addf %143, %145 : vector<256x128xf32>
    %cst_93 = arith.constant 0.000000e+00 : f32
    %147 = vector.broadcast %cst_93 : f32 to vector<256x128xf32>
    %148 = arith.maximumf %146, %147 : vector<256x128xf32>
    %c3_94 = arith.constant 3 : index
    %c0_95 = arith.constant 0 : index
    %c0_96 = arith.constant 0 : index
    %149 = vector.load %arg12[%c3_94, %c0_95, %c0_96] : memref<4x256x128xf32, #tpu.memory_space<vmem>>, vector<1x256x128xf32>
    %150 = vector.shape_cast %149 : vector<1x256x128xf32> to vector<256x128xf32>
    %151 = vector.shape_cast %148 : vector<256x128xf32> to vector<1x256x128xf32>
    tpu.vector_store %arg12[%c3_94, %c0_95, %c0_96], %151 {strides = array<i32>} : memref<4x256x128xf32, #tpu.memory_space<vmem>>, vector<1x256x128xf32>,
    return
  }
  func.func @transform_0(%arg0: i32) -> (i32, i32, i32) {
    %c0_i32 = arith.constant 0 : i32
    %c0_i32_0 = arith.constant 0 : i32
    %c0_i32_1 = arith.constant 0 : i32
    return %c0_i32, %arg0, %c0_i32_0 : i32, i32, i32
  }
  func.func @transform_1(%arg0: i32) -> (i32, i32) {
    %c0_i32 = arith.constant 0 : i32
    %c0_i32_0 = arith.constant 0 : i32
    %c0_i32_1 = arith.constant 0 : i32
    return %c0_i32, %c0_i32_0 : i32, i32
  }
  func.func @transform_2(%arg0: i32) -> (i32, i32) {
    %c0_i32 = arith.constant 0 : i32
    %c0_i32_0 = arith.constant 0 : i32
    %c0_i32_1 = arith.constant 0 : i32
    return %c0_i32, %c0_i32_0 : i32, i32
  }
  func.func @transform_3(%arg0: i32) -> (i32, i32) {
    %c0_i32 = arith.constant 0 : i32
    %c0_i32_0 = arith.constant 0 : i32
    %c0_i32_1 = arith.constant 0 : i32
    return %c0_i32, %c0_i32_0 : i32, i32
  }
  func.func @transform_4(%arg0: i32) -> (i32, i32) {
    %c0_i32 = arith.constant 0 : i32
    %c0_i32_0 = arith.constant 0 : i32
    %c0_i32_1 = arith.constant 0 : i32
    return %c0_i32, %c0_i32_0 : i32, i32
  }
  func.func @transform_5(%arg0: i32) -> (i32, i32) {
    %c0_i32 = arith.constant 0 : i32
    %c0_i32_0 = arith.constant 0 : i32
    %c0_i32_1 = arith.constant 0 : i32
    return %c0_i32, %c0_i32_0 : i32, i32
  }
  func.func @transform_6(%arg0: i32) -> (i32, i32) {
    %c0_i32 = arith.constant 0 : i32
    %c0_i32_0 = arith.constant 0 : i32
    %c0_i32_1 = arith.constant 0 : i32
    return %c0_i32, %c0_i32_0 : i32, i32
  }
  func.func @transform_7(%arg0: i32) -> (i32, i32, i32) {
    %c0_i32 = arith.constant 0 : i32
    %c0_i32_0 = arith.constant 0 : i32
    %c0_i32_1 = arith.constant 0 : i32
    %c0_i32_2 = arith.constant 0 : i32
    return %c0_i32, %c0_i32_0, %c0_i32_1 : i32, i32, i32
  }
  func.func @transform_8(%arg0: i32) -> (i32, i32) {
    %c0_i32 = arith.constant 0 : i32
    %c0_i32_0 = arith.constant 0 : i32
    %c0_i32_1 = arith.constant 0 : i32
    return %c0_i32, %c0_i32_0 : i32, i32
  }
  func.func @transform_9(%arg0: i32) -> (i32, i32, i32) {
    %c0_i32 = arith.constant 0 : i32
    %c0_i32_0 = arith.constant 0 : i32
    %c0_i32_1 = arith.constant 0 : i32
    %c0_i32_2 = arith.constant 0 : i32
    return %c0_i32, %c0_i32_0, %c0_i32_1 : i32, i32, i32
  }
  func.func @transform_10(%arg0: i32) -> (i32, i32) {
    %c0_i32 = arith.constant 0 : i32
    %c0_i32_0 = arith.constant 0 : i32
    %c0_i32_1 = arith.constant 0 : i32
    return %c0_i32, %c0_i32_0 : i32, i32
  }
  func.func @transform_11(%arg0: i32) -> (i32, i32, i32) {
    %c0_i32 = arith.constant 0 : i32
    %c0_i32_0 = arith.constant 0 : i32
    %c0_i32_1 = arith.constant 0 : i32
    return %c0_i32, %arg0, %c0_i32_0 : i32, i32, i32
  }
  func.func @transform_12(%arg0: i32) -> (i32, i32) {
    %c0_i32 = arith.constant 0 : i32
    %c0_i32_0 = arith.constant 0 : i32
    return %arg0, %c0_i32 : i32, i32
  }
}

</mosaic_0001>

<llo_original>
// kernel: cell_forward_pallas_batched.1
$region0: #{cell_forward_pallas_batched.1}
  #allocation0 [shape = 'u32[]', space=smem, size = 0x4, offset = 0x4, fixed_abs, tag = 'smem constant byte address 0x4 - core index']
  #allocation1 [shape = 'u32[144,128]{1,0:T(1,128)}', space=vmem, size = 0x12000, scoped, tag = 'internal scratch']
  #allocation7 [shape = 's32[]', space=sflag, size = 0x4, offset = 0, fixed_abs, tag = 'sflag constant byte address 0x0 - dummy sync flag']
  %s0 = inlined_call_operand.vmem [shape: f32[4,512,128], index: 0, kind: input, shape index: {}]
  %s1 = inlined_call_operand.vmem [shape: f32[1,128], index: 1, kind: input, shape index: {}]
  %s2 = inlined_call_operand.vmem [shape: bf16[128,256], index: 2, kind: input, shape index: {}]
  %s3 = inlined_call_operand.vmem [shape: f32[1,256], index: 3, kind: input, shape index: {}]
  %s4 = inlined_call_operand.vmem [shape: bf16[128,128], index: 4, kind: input, shape index: {}]
  %s5 = inlined_call_operand.vmem [shape: f32[1,128], index: 5, kind: input, shape index: {}]
  %s6 = inlined_call_operand.vmem [shape: bf16[128,128], index: 6, kind: input, shape index: {}]
  %s7 = inlined_call_operand.vmem [shape: bf16[4,128,128], index: 7, kind: input, shape index: {}]
  %s8 = inlined_call_operand.vmem [shape: f32[4,128], index: 8, kind: input, shape index: {}]
  %s9 = inlined_call_operand.vmem [shape: bf16[4,128,128], index: 9, kind: input, shape index: {}]
  %s10 = inlined_call_operand.vmem [shape: f32[4,128], index: 10, kind: input, shape index: {}]
  %s11 = inlined_call_operand.hbm [shape: f32[4,512,128], index: 11, kind: output, shape index: {0}]
  %s12 = inlined_call_operand.hbm [shape: f32[512,128], index: 12, kind: output, shape index: {1}]
  %13 = xla_tuple %s11, %s12
  %s14 = sld [smem:[#allocation0]]
  $region123: #{cell_forward_pallas_batched.1} parent=0
    _
  %s16 = ssub.s32 1, %s14
  %s17 = scalar_select 0, %s16, %s14
  $region1: #{cell_forward_pallas_batched.1} parent=0
    #allocation2 [shape = 'u8[1048576]{0}', space=vmem, size = 0x100000, scoped, tag = 'input window, operand 0']
    #allocation3 [shape = 'u8[1048576]{0}', space=vmem, size = 0x100000, scoped, tag = 'output window, operand 0']
    #allocation4 [shape = 's32[2]{0}', space=sflag, size = 0x8, scoped, tag = 'scoped memory for cell_forward_pallas_batched.1']
    #allocation5 [shape = 'u8[262144]{0}', space=vmem, size = 0x40000, scoped, tag = 'output window, operand 1']
    #allocation6 [shape = 's32[2]{0}', space=sflag, size = 0x8, scoped, tag = 'scoped memory for cell_forward_pallas_batched.1']
    %18 = vsyncpa [#allocation4], 0
    %s19 = scalar_lea.sflag [#allocation4], 1
    %20 = vsyncpa %s19, 0
    %21 = vsyncpa [#allocation6], 0
    %s22 = scalar_lea.sflag [#allocation6], 1
    %23 = vsyncpa %s22, 0
    loop: start=0, step=1, limit=4
    $region2: #{cell_forward_pallas_batched.1} parent=1 // loop_pre_header
      _
    $region3: #{cell_forward_pallas_batched.1} parent=1 // loop_header
      %s25 = sphi 0, %s29
      %p26 = scmp.ge.s32.totalorder %s25, 4
      %s35 = sphi 0, %s37
      %s38 = sphi 0, %s35
      %s39 = sphi 0, %s38
      %s55 = sphi 0, %s39
      %s59 = sphi 0, %s59
      %s61 = sphi 0, %s59
      %s62 = sphi 0, %s61
      %s76 = sphi 0, %s62
      %s80 = sphi 0, %s80
      %s82 = sphi 0, %s80
      %s83 = sphi 0, %s82
      %s97 = sphi 0, %s83
      %s101 = sphi 0, %s101
      %s103 = sphi 0, %s101
      %s104 = sphi 0, %s103
      %s118 = sphi 0, %s104
      %s122 = sphi 0, %s122
      %s124 = sphi 0, %s122
      %s125 = sphi 0, %s124
      %s139 = sphi 0, %s125
      %s143 = sphi 0, %s143
      %s145 = sphi 0, %s143
      %s146 = sphi 0, %s145
      %s160 = sphi 0, %s146
      %s164 = sphi 0, %s164
      %s166 = sphi 0, %s164
      %s167 = sphi 0, %s166
      %s181 = sphi 0, %s167
      %s185 = sphi 0, %s185
      %s187 = sphi 0, %s185
      %s188 = sphi 0, %s187
      %s202 = sphi 0, %s188
      %s206 = sphi 0, %s206
      %s208 = sphi 0, %s206
      %s209 = sphi 0, %s208
      %s223 = sphi 0, %s209
      %s227 = sphi 0, %s227
      %s229 = sphi 0, %s227
      %s230 = sphi 0, %s229
      %s244 = sphi 0, %s230
      %s248 = sphi 0, %s248
      %s250 = sphi 0, %s248
      %s251 = sphi 0, %s250
      %s265 = sphi 0, %s251
      %s271 = sphi 0, %s273
      %s274 = sphi 0, %s271
      %s275 = sphi 0, %s274
      %s291 = sphi 0, %s275
      %s297 = sphi 0, %s299
      %s300 = sphi 0, %s297
      %s301 = sphi 0, %s300
      %s317 = sphi 0, %s301
    $region4: #{cell_forward_pallas_batched.1} parent=1 // loop_header_branch
      %28 = sbr.rel (%p26) target = $region8
    $region5: #{cell_forward_pallas_batched.1} parent=1 // loop_body
      %s30 = ssub.s32 %s25, 1
      %s31 = ssub.s32 %s25, 2
      %s32 = sadd.s32 %s25, 1
      %s33 = ssub.s32 %s25, %s32
      %p34 = scmp.eq.s32.totalorder %s33, 0
      %s36 = sadd.s32 %s35, 1
      %s37 = scalar_select %p34, %s35, %s36
      %p40 = pneg %p34
      %p41 = scmp.eq.s32.totalorder %s25, 1
      %p42 = por %p40, %p41
      %p43 = scmp.ne.s32.totalorder %s35, %s38
      %p44 = scmp.eq.s32.totalorder %s25, 0
      %p45 = por %p43, %p44
      %p46 = scmp.ne.s32.totalorder %s35, %s38
      %p47 = scmp.eq.s32.totalorder %s30, 1
      %p48 = por %p46, %p47
      %p49 = scmp.ne.s32.totalorder %s38, %s39
      %p50 = scmp.eq.s32.totalorder %s30, 0
      %p51 = por %p49, %p50
      %p52 = scmp.ne.s32.totalorder %s38, %s39
      %p53 = scmp.eq.s32.totalorder %s31, 1
      %p54 = por %p52, %p53
      %p56 = scmp.ne.s32.totalorder %s39, %s55
      %p57 = scmp.eq.s32.totalorder %s31, 0
      %p58 = por %p56, %p57
      %s60 = sadd.s32 %s59, 1
      %p63 = scmp.eq.s32.totalorder %s25, 1
      %p64 = scmp.ne.s32.totalorder %s59, %s61
      %p65 = scmp.eq.s32.totalorder %s25, 0
      %p66 = por %p64, %p65
      %p67 = scmp.ne.s32.totalorder %s59, %s61
      %p68 = scmp.eq.s32.totalorder %s30, 1
      %p69 = por %p67, %p68
      %p70 = scmp.ne.s32.totalorder %s61, %s62
      %p71 = scmp.eq.s32.totalorder %s30, 0
      %p72 = por %p70, %p71
      %p73 = scmp.ne.s32.totalorder %s61, %s62
      %p74 = scmp.eq.s32.totalorder %s31, 1
      %p75 = por %p73, %p74
      %p77 = scmp.ne.s32.totalorder %s62, %s76
      %p78 = scmp.eq.s32.totalorder %s31, 0
      %p79 = por %p77, %p78
      %s81 = sadd.s32 %s80, 1
      %p84 = scmp.eq.s32.totalorder %s25, 1
      %p85 = scmp.ne.s32.totalorder %s80, %s82
      %p86 = scmp.eq.s32.totalorder %s25, 0
      %p87 = por %p85, %p86
      %p88 = scmp.ne.s32.totalorder %s80, %s82
      %p89 = scmp.eq.s32.totalorder %s30, 1
      %p90 = por %p88, %p89
      %p91 = scmp.ne.s32.totalorder %s82, %s83
      %p92 = scmp.eq.s32.totalorder %s30, 0
      %p93 = por %p91, %p92
      %p94 = scmp.ne.s32.totalorder %s82, %s83
      %p95 = scmp.eq.s32.totalorder %s31, 1
      %p96 = por %p94, %p95
      %p98 = scmp.ne.s32.totalorder %s83, %s97
      %p99 = scmp.eq.s32.totalorder %s31, 0
      %p100 = por %p98, %p99
      %s102 = sadd.s32 %s101, 1
      %p105 = scmp.eq.s32.totalorder %s25, 1
      %p106 = scmp.ne.s32.totalorder %s101, %s103
      %p107 = scmp.eq.s32.totalorder %s25, 0
      %p108 = por %p106, %p107
      %p109 = scmp.ne.s32.totalorder %s101, %s103
      %p110 = scmp.eq.s32.totalorder %s30, 1
      %p111 = por %p109, %p110
      %p112 = scmp.ne.s32.totalorder %s103, %s104
      %p113 = scmp.eq.s32.totalorder %s30, 0
      %p114 = por %p112, %p113
      %p115 = scmp.ne.s32.totalorder %s103, %s104
      %p116 = scmp.eq.s32.totalorder %s31, 1
      %p117 = por %p115, %p116
      %p119 = scmp.ne.s32.totalorder %s104, %s118
      %p120 = scmp.eq.s32.totalorder %s31, 0
      %p121 = por %p119, %p120
      %s123 = sadd.s32 %s122, 1
      %p126 = scmp.eq.s32.totalorder %s25, 1
      %p127 = scmp.ne.s32.totalorder %s122, %s124
      %p128 = scmp.eq.s32.totalorder %s25, 0
      %p129 = por %p127, %p128
      %p130 = scmp.ne.s32.totalorder %s122, %s124
      %p131 = scmp.eq.s32.totalorder %s30, 1
      %p132 = por %p130, %p131
      %p133 = scmp.ne.s32.totalorder %s124, %s125
      %p134 = scmp.eq.s32.totalorder %s30, 0
      %p135 = por %p133, %p134
      %p136 = scmp.ne.s32.totalorder %s124, %s125
      %p137 = scmp.eq.s32.totalorder %s31, 1
      %p138 = por %p136, %p137
      %p140 = scmp.ne.s32.totalorder %s125, %s139
      %p141 = scmp.eq.s32.totalorder %s31, 0
      %p142 = por %p140, %p141
      %s144 = sadd.s32 %s143, 1
      %p147 = scmp.eq.s32.totalorder %s25, 1
      %p148 = scmp.ne.s32.totalorder %s143, %s145
      %p149 = scmp.eq.s32.totalorder %s25, 0
      %p150 = por %p148, %p149
      %p151 = scmp.ne.s32.totalorder %s143, %s145
      %p152 = scmp.eq.s32.totalorder %s30, 1
      %p153 = por %p151, %p152
      %p154 = scmp.ne.s32.totalorder %s145, %s146
      %p155 = scmp.eq.s32.totalorder %s30, 0
      %p156 = por %p154, %p155
      %p157 = scmp.ne.s32.totalorder %s145, %s146
      %p158 = scmp.eq.s32.totalorder %s31, 1
      %p159 = por %p157, %p158
      %p161 = scmp.ne.s32.totalorder %s146, %s160
      %p162 = scmp.eq.s32.totalorder %s31, 0
      %p163 = por %p161, %p162
      %s165 = sadd.s32 %s164, 1
      %p168 = scmp.eq.s32.totalorder %s25, 1
      %p169 = scmp.ne.s32.totalorder %s164, %s166
      %p170 = scmp.eq.s32.totalorder %s25, 0
      %p171 = por %p169, %p170
      %p172 = scmp.ne.s32.totalorder %s164, %s166
      %p173 = scmp.eq.s32.totalorder %s30, 1
      %p174 = por %p172, %p173
      %p175 = scmp.ne.s32.totalorder %s166, %s167
      %p176 = scmp.eq.s32.totalorder %s30, 0
      %p177 = por %p175, %p176
      %p178 = scmp.ne.s32.totalorder %s166, %s167
      %p179 = scmp.eq.s32.totalorder %s31, 1
      %p180 = por %p178, %p179
      %p182 = scmp.ne.s32.totalorder %s167, %s181
      %p183 = scmp.eq.s32.totalorder %s31, 0
      %p184 = por %p182, %p183
      %s186 = sadd.s32 %s185, 1
      %p189 = scmp.eq.s32.totalorder %s25, 1
      %p190 = scmp.ne.s32.totalorder %s185, %s187
      %p191 = scmp.eq.s32.totalorder %s25, 0
      %p192 = por %p190, %p191
      %p193 = scmp.ne.s32.totalorder %s185, %s187
      %p194 = scmp.eq.s32.totalorder %s30, 1
      %p195 = por %p193, %p194
      %p196 = scmp.ne.s32.totalorder %s187, %s188
      %p197 = scmp.eq.s32.totalorder %s30, 0
      %p198 = por %p196, %p197
      %p199 = scmp.ne.s32.totalorder %s187, %s188
      %p200 = scmp.eq.s32.totalorder %s31, 1
      %p201 = por %p199, %p200
      %p203 = scmp.ne.s32.totalorder %s188, %s202
      %p204 = scmp.eq.s32.totalorder %s31, 0
      %p205 = por %p203, %p204
      %s207 = sadd.s32 %s206, 1
      %p210 = scmp.eq.s32.totalorder %s25, 1
      %p211 = scmp.ne.s32.totalorder %s206, %s208
      %p212 = scmp.eq.s32.totalorder %s25, 0
      %p213 = por %p211, %p212
      %p214 = scmp.ne.s32.totalorder %s206, %s208
      %p215 = scmp.eq.s32.totalorder %s30, 1
      %p216 = por %p214, %p215
      %p217 = scmp.ne.s32.totalorder %s208, %s209
      %p218 = scmp.eq.s32.totalorder %s30, 0
      %p219 = por %p217, %p218
      %p220 = scmp.ne.s32.totalorder %s208, %s209
      %p221 = scmp.eq.s32.totalorder %s31, 1
      %p222 = por %p220, %p221
      %p224 = scmp.ne.s32.totalorder %s209, %s223
      %p225 = scmp.eq.s32.totalorder %s31, 0
      %p226 = por %p224, %p225
      %s228 = sadd.s32 %s227, 1
      %p231 = scmp.eq.s32.totalorder %s25, 1
      %p232 = scmp.ne.s32.totalorder %s227, %s229
      %p233 = scmp.eq.s32.totalorder %s25, 0
      %p234 = por %p232, %p233
      %p235 = scmp.ne.s32.totalorder %s227, %s229
      %p236 = scmp.eq.s32.totalorder %s30, 1
      %p237 = por %p235, %p236
      %p238 = scmp.ne.s32.totalorder %s229, %s230
      %p239 = scmp.eq.s32.totalorder %s30, 0
      %p240 = por %p238, %p239
      %p241 = scmp.ne.s32.totalorder %s229, %s230
      %p242 = scmp.eq.s32.totalorder %s31, 1
      %p243 = por %p241, %p242
      %p245 = scmp.ne.s32.totalorder %s230, %s244
      %p246 = scmp.eq.s32.totalorder %s31, 0
      %p247 = por %p245, %p246
      %s249 = sadd.s32 %s248, 1
      %p252 = scmp.eq.s32.totalorder %s25, 1
      %p253 = scmp.ne.s32.totalorder %s248, %s250
      %p254 = scmp.eq.s32.totalorder %s25, 0
      %p255 = por %p253, %p254
      %p256 = scmp.ne.s32.totalorder %s248, %s250
      %p257 = scmp.eq.s32.totalorder %s30, 1
      %p258 = por %p256, %p257
      %p259 = scmp.ne.s32.totalorder %s250, %s251
      %p260 = scmp.eq.s32.totalorder %s30, 0
      %p261 = por %p259, %p260
      %p262 = scmp.ne.s32.totalorder %s250, %s251
      %p263 = scmp.eq.s32.totalorder %s31, 1
      %p264 = por %p262, %p263
      %p266 = scmp.ne.s32.totalorder %s251, %s265
      %p267 = scmp.eq.s32.totalorder %s31, 0
      %p268 = por %p266, %p267
      %s269 = ssub.s32 %s25, %s32
      %p270 = scmp.eq.s32.totalorder %s269, 0
      %s272 = sadd.s32 %s271, 1
      %s273 = scalar_select %p270, %s271, %s272
      %p276 = pneg %p270
      %p277 = scmp.eq.s32.totalorder %s25, 1
      %p278 = por %p276, %p277
      %p279 = scmp.ne.s32.totalorder %s271, %s274
      %p280 = scmp.eq.s32.totalorder %s25, 0
      %p281 = por %p279, %p280
      %p282 = scmp.ne.s32.totalorder %s271, %s274
      %p283 = scmp.eq.s32.totalorder %s30, 1
      %p284 = por %p282, %p283
      %p285 = scmp.ne.s32.totalorder %s274, %s275
      %p286 = scmp.eq.s32.totalorder %s30, 0
      %p287 = por %p285, %p286
      %p288 = scmp.ne.s32.totalorder %s274, %s275
      %p289 = scmp.eq.s32.totalorder %s31, 1
      %p290 = por %p288, %p289
      %p292 = scmp.ne.s32.totalorder %s275, %s291
      %p293 = scmp.eq.s32.totalorder %s31, 0
      %p294 = por %p292, %p293
      %s295 = ssub.s32 %s25, %s32
      %p296 = scmp.eq.s32.totalorder %s295, 0
      %s298 = sadd.s32 %s297, 1
      %s299 = scalar_select %p296, %s297, %s298
      %p302 = pneg %p296
      %p303 = scmp.eq.s32.totalorder %s25, 1
      %p304 = por %p302, %p303
      %p305 = scmp.ne.s32.totalorder %s297, %s300
      %p306 = scmp.eq.s32.totalorder %s25, 0
      %p307 = por %p305, %p306
      %p308 = scmp.ne.s32.totalorder %s297, %s300
      %p309 = scmp.eq.s32.totalorder %s30, 1
      %p310 = por %p308, %p309
      %p311 = scmp.ne.s32.totalorder %s300, %s301
      %p312 = scmp.eq.s32.totalorder %s30, 0
      %p313 = por %p311, %p312
      %p314 = scmp.ne.s32.totalorder %s300, %s301
      %p315 = scmp.eq.s32.totalorder %s31, 1
      %p316 = por %p314, %p315
      %p318 = scmp.ne.s32.totalorder %s301, %s317
      %p319 = scmp.eq.s32.totalorder %s31, 0
      %p320 = por %p318, %p319
      %p321 = scmp.le.s32.totalorder 1, %s25
      %p322 = scmp.lt.s32.totalorder %s25, 3
      %p323 = pnand %p321, %p322
      %p324 = pneg %p323
      // Predicated region
      $region9: #{cell_forward_pallas_batched.1} parent=5 // pred_check
        _
      $region10: #{cell_forward_pallas_batched.1} parent=5 // pred_check_branch
        %326 = sbr.rel (%p323) target = $region12
      $region11: #{cell_forward_pallas_batched.1} parent=5 // pred_region
        %s327 = ssub.s32 %s25, 1
        // Predicated region
        $region13: #{cell_forward_pallas_batched.1} parent=11 // pred_check
          %p328 = pneg %p72
        $region14: #{cell_forward_pallas_batched.1} parent=11 // pred_check_branch
          %330 = sbr.rel (%p328) target = $region16
        $region15: #{cell_forward_pallas_batched.1} parent=11 // pred_region
          _
        $region16: #{cell_forward_pallas_batched.1} parent=11 // pred_fallthru
          _
        // Predicated region
        $region17: #{cell_forward_pallas_batched.1} parent=11 // pred_check
          %p331 = pneg %p93
        $region18: #{cell_forward_pallas_batched.1} parent=11 // pred_check_branch
          %333 = sbr.rel (%p331) target = $region20
        $region19: #{cell_forward_pallas_batched.1} parent=11 // pred_region
          _
        $region20: #{cell_forward_pallas_batched.1} parent=11 // pred_fallthru
          _
        // Predicated region
        $region21: #{cell_forward_pallas_batched.1} parent=11 // pred_check
          %p334 = pneg %p114
        $region22: #{cell_forward_pallas_batched.1} parent=11 // pred_check_branch
          %336 = sbr.rel (%p334) target = $region24
        $region23: #{cell_forward_pallas_batched.1} parent=11 // pred_region
          _
        $region24: #{cell_forward_pallas_batched.1} parent=11 // pred_fallthru
          _
        // Predicated region
        $region25: #{cell_forward_pallas_batched.1} parent=11 // pred_check
          %p337 = pneg %p135
        $region26: #{cell_forward_pallas_batched.1} parent=11 // pred_check_branch
          %339 = sbr.rel (%p337) target = $region28
        $region27: #{cell_forward_pallas_batched.1} parent=11 // pred_region
          _
        $region28: #{cell_forward_pallas_batched.1} parent=11 // pred_fallthru
          _
        // Predicated region
        $region29: #{cell_forward_pallas_batched.1} parent=11 // pred_check
          %p340 = pneg %p156
        $region30: #{cell_forward_pallas_batched.1} parent=11 // pred_check_branch
          %342 = sbr.rel (%p340) target = $region32
        $region31: #{cell_forward_pallas_batched.1} parent=11 // pred_region
          _
        $region32: #{cell_forward_pallas_batched.1} parent=11 // pred_fallthru
          _
        // Predicated region
        $region33: #{cell_forward_pallas_batched.1} parent=11 // pred_check
          %p343 = pneg %p177
        $region34: #{cell_forward_pallas_batched.1} parent=11 // pred_check_branch
          %345 = sbr.rel (%p343) target = $region36
        $region35: #{cell_forward_pallas_batched.1} parent=11 // pred_region
          _
        $region36: #{cell_forward_pallas_batched.1} parent=11 // pred_fallthru
          _
        // Predicated region
        $region37: #{cell_forward_pallas_batched.1} parent=11 // pred_check
          %p346 = pneg %p198
        $region38: #{cell_forward_pallas_batched.1} parent=11 // pred_check_branch
          %348 = sbr.rel (%p346) target = $region40
        $region39: #{cell_forward_pallas_batched.1} parent=11 // pred_region
          _
        $region40: #{cell_forward_pallas_batched.1} parent=11 // pred_fallthru
          _
        // Predicated region
        $region41: #{cell_forward_pallas_batched.1} parent=11 // pred_check
          %p349 = pneg %p219
        $region42: #{cell_forward_pallas_batched.1} parent=11 // pred_check_branch
          %351 = sbr.rel (%p349) target = $region44
        $region43: #{cell_forward_pallas_batched.1} parent=11 // pred_region
          _
        $region44: #{cell_forward_pallas_batched.1} parent=11 // pred_fallthru
          _
        // Predicated region
        $region45: #{cell_forward_pallas_batched.1} parent=11 // pred_check
          %p352 = pneg %p240
        $region46: #{cell_forward_pallas_batched.1} parent=11 // pred_check_branch
          %354 = sbr.rel (%p352) target = $region48
        $region47: #{cell_forward_pallas_batched.1} parent=11 // pred_region
          _
        $region48: #{cell_forward_pallas_batched.1} parent=11 // pred_fallthru
          _
        // Predicated region
        $region49: #{cell_forward_pallas_batched.1} parent=11 // pred_check
          %p355 = pneg %p261
        $region50: #{cell_forward_pallas_batched.1} parent=11 // pred_check_branch
          %357 = sbr.rel (%p355) target = $region52
        $region51: #{cell_forward_pallas_batched.1} parent=11 // pred_region
          _
        $region52: #{cell_forward_pallas_batched.1} parent=11 // pred_fallthru
          _
      $region12: #{cell_forward_pallas_batched.1} parent=5 // pred_fallthru
        _
      %p358 = scmp.lt.s32.totalorder %s25, 2
      // Predicated region
      $region53: #{cell_forward_pallas_batched.1} parent=5 // pred_check
        %p359 = pneg %p358
      $region54: #{cell_forward_pallas_batched.1} parent=5 // pred_check_branch
        %361 = sbr.rel (%p359) target = $region56
      $region55: #{cell_forward_pallas_batched.1} parent=5 // pred_region
        // Predicated region
        $region57: #{cell_forward_pallas_batched.1} parent=55 // pred_check
          %p362 = pneg %p45
        $region58: #{cell_forward_pallas_batched.1} parent=55 // pred_check_branch
          %364 = sbr.rel (%p362) target = $region60
        $region59: #{cell_forward_pallas_batched.1} parent=55 // pred_region
          %s365 = sand.u32 %s35, 1
          %s366 = sand.u32 %s35, 1
          %s367 = smul.addr %s366, 1024
          %s368 = scalar_lea.vmem [#allocation2], %s367
          %s369 = smul.u32 32, %s25
          %s370 = smul.addr %s369, 8
          %s371 = scalar_lea.vmem %s0, %s370
          // Predicated region
          $region61: #{cell_forward_pallas_batched.1} parent=59 // pred_check
            _
          $region62: #{cell_forward_pallas_batched.1} parent=59 // pred_check_branch
            %373 = sbr.rel (0) target = $region64
          $region63: #{cell_forward_pallas_batched.1} parent=59 // pred_region
            // Predicated region
            $region65: #{cell_forward_pallas_batched.1} parent=63 // pred_check
              _
            $region66: #{cell_forward_pallas_batched.1} parent=63 // pred_check_branch
              %375 = sbr.rel (0) target = $region68
            $region67: #{cell_forward_pallas_batched.1} parent=63 // pred_region
              // Predicated region
              $region80: #{cell_forward_pallas_batched.1} parent=67 // pred_check
                _
              $region81: #{cell_forward_pallas_batched.1} parent=67 // pred_check_branch
                %644 = sbr.rel (0) target = $region83
              $region82: #{cell_forward_pallas_batched.1} parent=67 // pred_region
                loop: start=0, step=1, limit=1
                $region84: #{cell_forward_pallas_batched.1} parent=82 // loop_pre_header
                  _
                $region85: #{cell_forward_pallas_batched.1} parent=82 // loop_header
                  %s646 = sphi 0, %s650
                  %p647 = scmp.ge.s32.totalorder %s646, 1
                  %s651 = sphi %s371, %s371
                  %s652 = sphi %s368, %s368
                $region86: #{cell_forward_pallas_batched.1} parent=82 // loop_header_branch
                  %649 = sbr.rel (%p647) target = $region90
                $region87: #{cell_forward_pallas_batched.1} parent=82 // loop_body
                  %v653 = vld [vmem:[%s651] sm:$0xff]
                  %654 = vst [vmem:[%s652] sm:$0xff] %v653
                  %v655 = vld [vmem:[%s651 + $0x8] sm:$0xff]
                  %656 = vst [vmem:[%s652 + $0x8] sm:$0xff] %v655
                  %v657 = vld [vmem:[%s651 + $0x10] sm:$0xff]
                  %658 = vst [vmem:[%s652 + $0x10] sm:$0xff] %v657
                  %v659 = vld [vmem:[%s651 + $0x18] sm:$0xff]
                  %660 = vst [vmem:[%s652 + $0x18] sm:$0xff] %v659
                  %v661 = vld [vmem:[%s651 + $0x20] sm:$0xff]
                  %662 = vst [vmem:[%s652 + $0x20] sm:$0xff] %v661
                  %v663 = vld [vmem:[%s651 + $0x28] sm:$0xff]
                  %664 = vst [vmem:[%s652 + $0x28] sm:$0xff] %v663
                  %v665 = vld [vmem:[%s651 + $0x30] sm:$0xff]
                  %666 = vst [vmem:[%s652 + $0x30] sm:$0xff] %v665
                  %v667 = vld [vmem:[%s651 + $0x38] sm:$0xff]
                  %668 = vst [vmem:[%s652 + $0x38] sm:$0xff] %v667
                  %v669 = vld [vmem:[%s651 + $0x40] sm:$0xff]
                  %670 = vst [vmem:[%s652 + $0x40] sm:$0xff] %v669
                  %v671 = vld [vmem:[%s651 + $0x48] sm:$0xff]
                  %672 = vst [vmem:[%s652 + $0x48] sm:$0xff] %v671
                  %v673 = vld [vmem:[%s651 + $0x50] sm:$0xff]
                  %674 = vst [vmem:[%s652 + $0x50] sm:$0xff] %v673
                  %v675 = vld [vmem:[%s651 + $0x58] sm:$0xff]
                  %676 = vst [vmem:[%s652 + $0x58] sm:$0xff] %v675
                  %v677 = vld [vmem:[%s651 + $0x60] sm:$0xff]
                  %678 = vst [vmem:[%s652 + $0x60] sm:$0xff] %v677
                  %v679 = vld [vmem:[%s651 + $0x68] sm:$0xff]
                  %680 = vst [vmem:[%s652 + $0x68] sm:$0xff] %v679
                  %v681 = vld [vmem:[%s651 + $0x70] sm:$0xff]
                  %682 = vst [vmem:[%s652 + $0x70] sm:$0xff] %v681
                  %v683 = vld [vmem:[%s651 + $0x78] sm:$0xff]
                  %684 = vst [vmem:[%s652 + $0x78] sm:$0xff] %v683
                  %v685 = vld [vmem:[%s651 + $0x80] sm:$0xff]
                  %686 = vst [vmem:[%s652 + $0x80] sm:$0xff] %v685
                  %v687 = vld [vmem:[%s651 + $0x88] sm:$0xff]
                  %688 = vst [vmem:[%s652 + $0x88] sm:$0xff] %v687
                  %v689 = vld [vmem:[%s651 + $0x90] sm:$0xff]
                  %690 = vst [vmem:[%s652 + $0x90] sm:$0xff] %v689
                  %v691 = vld [vmem:[%s651 + $0x98] sm:$0xff]
                  %692 = vst [vmem:[%s652 + $0x98] sm:$0xff] %v691
                  %v693 = vld [vmem:[%s651 + $0xa0] sm:$0xff]
                  %694 = vst [vmem:[%s652 + $0xa0] sm:$0xff] %v693
                  %v695 = vld [vmem:[%s651 + $0xa8] sm:$0xff]
                  %696 = vst [vmem:[%s652 + $0xa8] sm:$0xff] %v695
                  %v697 = vld [vmem:[%s651 + $0xb0] sm:$0xff]
                  %698 = vst [vmem:[%s652 + $0xb0] sm:$0xff] %v697
                  %v699 = vld [vmem:[%s651 + $0xb8] sm:$0xff]
                  %700 = vst [vmem:[%s652 + $0xb8] sm:$0xff] %v699
                  %v701 = vld [vmem:[%s651 + $0xc0] sm:$0xff]
                  %702 = vst [vmem:[%s652 + $0xc0] sm:$0xff] %v701
                  %v703 = vld [vmem:[%s651 + $0xc8] sm:$0xff]
                  %704 = vst [vmem:[%s652 + $0xc8] sm:$0xff] %v703
                  %v705 = vld [vmem:[%s651 + $0xd0] sm:$0xff]
                  %706 = vst [vmem:[%s652 + $0xd0] sm:$0xff] %v705
                  %v707 = vld [vmem:[%s651 + $0xd8] sm:$0xff]
                  %708 = vst [vmem:[%s652 + $0xd8] sm:$0xff] %v707
                  %v709 = vld [vmem:[%s651 + $0xe0] sm:$0xff]
                  %710 = vst [vmem:[%s652 + $0xe0] sm:$0xff] %v709
                  %v711 = vld [vmem:[%s651 + $0xe8] sm:$0xff]
                  %712 = vst [vmem:[%s652 + $0xe8] sm:$0xff] %v711
                  %v713 = vld [vmem:[%s651 + $0xf0] sm:$0xff]
                  %714 = vst [vmem:[%s652 + $0xf0] sm:$0xff] %v713
                  %v715 = vld [vmem:[%s651 + $0xf8] sm:$0xff]
                  %716 = vst [vmem:[%s652 + $0xf8] sm:$0xff] %v715
                  %v717 = vld [vmem:[%s651 + $0x200] sm:$0xff]
                  %718 = vst [vmem:[%s652 + $0x100] sm:$0xff] %v717
                  %v719 = vld [vmem:[%s651 + $0x208] sm:$0xff]
                  %720 = vst [vmem:[%s652 + $0x108] sm:$0xff] %v719
                  %v721 = vld [vmem:[%s651 + $0x210] sm:$0xff]
                  %722 = vst [vmem:[%s652 + $0x110] sm:$0xff] %v721
                  %v723 = vld [vmem:[%s651 + $0x218] sm:$0xff]
                  %724 = vst [vmem:[%s652 + $0x118] sm:$0xff] %v723
                  %v725 = vld [vmem:[%s651 + $0x220] sm:$0xff]
                  %726 = vst [vmem:[%s652 + $0x120] sm:$0xff] %v725
                  %v727 = vld [vmem:[%s651 + $0x228] sm:$0xff]
                  %728 = vst [vmem:[%s652 + $0x128] sm:$0xff] %v727
                  %v729 = vld [vmem:[%s651 + $0x230] sm:$0xff]
                  %730 = vst [vmem:[%s652 + $0x130] sm:$0xff] %v729
                  %v731 = vld [vmem:[%s651 + $0x238] sm:$0xff]
                  %732 = vst [vmem:[%s652 + $0x138] sm:$0xff] %v731
                  %v733 = vld [vmem:[%s651 + $0x240] sm:$0xff]
                  %734 = vst [vmem:[%s652 + $0x140] sm:$0xff] %v733
                  %v735 = vld [vmem:[%s651 + $0x248] sm:$0xff]
                  %736 = vst [vmem:[%s652 + $0x148] sm:$0xff] %v735
                  %v737 = vld [vmem:[%s651 + $0x250] sm:$0xff]
                  %738 = vst [vmem:[%s652 + $0x150] sm:$0xff] %v737
                  %v739 = vld [vmem:[%s651 + $0x258] sm:$0xff]
                  %740 = vst [vmem:[%s652 + $0x158] sm:$0xff] %v739
                  %v741 = vld [vmem:[%s651 + $0x260] sm:$0xff]
                  %742 = vst [vmem:[%s652 + $0x160] sm:$0xff] %v741
                  %v743 = vld [vmem:[%s651 + $0x268] sm:$0xff]
                  %744 = vst [vmem:[%s652 + $0x168] sm:$0xff] %v743
                  %v745 = vld [vmem:[%s651 + $0x270] sm:$0xff]
                  %746 = vst [vmem:[%s652 + $0x170] sm:$0xff] %v745
                  %v747 = vld [vmem:[%s651 + $0x278] sm:$0xff]
                  %748 = vst [vmem:[%s652 + $0x178] sm:$0xff] %v747
                  %v749 = vld [vmem:[%s651 + $0x280] sm:$0xff]
                  %750 = vst [vmem:[%s652 + $0x180] sm:$0xff] %v749
                  %v751 = vld [vmem:[%s651 + $0x288] sm:$0xff]
                  %752 = vst [vmem:[%s652 + $0x188] sm:$0xff] %v751
                  %v753 = vld [vmem:[%s651 + $0x290] sm:$0xff]
                  %754 = vst [vmem:[%s652 + $0x190] sm:$0xff] %v753
                  %v755 = vld [vmem:[%s651 + $0x298] sm:$0xff]
                  %756 = vst [vmem:[%s652 + $0x198] sm:$0xff] %v755
                  %v757 = vld [vmem:[%s651 + $0x2a0] sm:$0xff]
                  %758 = vst [vmem:[%s652 + $0x1a0] sm:$0xff] %v757
                  %v759 = vld [vmem:[%s651 + $0x2a8] sm:$0xff]
                  %760 = vst [vmem:[%s652 + $0x1a8] sm:$0xff] %v759
                  %v761 = vld [vmem:[%s651 + $0x2b0] sm:$0xff]
                  %762 = vst [vmem:[%s652 + $0x1b0] sm:$0xff] %v761
                  %v763 = vld [vmem:[%s651 + $0x2b8] sm:$0xff]
                  %764 = vst [vmem:[%s652 + $0x1b8] sm:$0xff] %v763
                  %v765 = vld [vmem:[%s651 + $0x2c0] sm:$0xff]
                  %766 = vst [vmem:[%s652 + $0x1c0] sm:$0xff] %v765
                  %v767 = vld [vmem:[%s651 + $0x2c8] sm:$0xff]
                  %768 = vst [vmem:[%s652 + $0x1c8] sm:$0xff] %v767
                  %v769 = vld [vmem:[%s651 + $0x2d0] sm:$0xff]
                  %770 = vst [vmem:[%s652 + $0x1d0] sm:$0xff] %v769
                  %v771 = vld [vmem:[%s651 + $0x2d8] sm:$0xff]
                  %772 = vst [vmem:[%s652 + $0x1d8] sm:$0xff] %v771
                  %v773 = vld [vmem:[%s651 + $0x2e0] sm:$0xff]
                  %774 = vst [vmem:[%s652 + $0x1e0] sm:$0xff] %v773
                  %v775 = vld [vmem:[%s651 + $0x2e8] sm:$0xff]
                  %776 = vst [vmem:[%s652 + $0x1e8] sm:$0xff] %v775
                  %v777 = vld [vmem:[%s651 + $0x2f0] sm:$0xff]
                  %778 = vst [vmem:[%s652 + $0x1f0] sm:$0xff] %v777
                  %v779 = vld [vmem:[%s651 + $0x2f8] sm:$0xff]
                  %780 = vst [vmem:[%s652 + $0x1f8] sm:$0xff] %v779
                  %v781 = vld [vmem:[%s651 + $0x400] sm:$0xff]
                  %782 = vst [vmem:[%s652 + $0x200] sm:$0xff] %v781
                  %v783 = vld [vmem:[%s651 + $0x408] sm:$0xff]
                  %784 = vst [vmem:[%s652 + $0x208] sm:$0xff] %v783
                  %v785 = vld [vmem:[%s651 + $0x410] sm:$0xff]
                  %786 = vst [vmem:[%s652 + $0x210] sm:$0xff] %v785
                  %v787 = vld [vmem:[%s651 + $0x418] sm:$0xff]
                  %788 = vst [vmem:[%s652 + $0x218] sm:$0xff] %v787
                  %v789 = vld [vmem:[%s651 + $0x420] sm:$0xff]
                  %790 = vst [vmem:[%s652 + $0x220] sm:$0xff] %v789
                  %v791 = vld [vmem:[%s651 + $0x428] sm:$0xff]
                  %792 = vst [vmem:[%s652 + $0x228] sm:$0xff] %v791
                  %v793 = vld [vmem:[%s651 + $0x430] sm:$0xff]
                  %794 = vst [vmem:[%s652 + $0x230] sm:$0xff] %v793
                  %v795 = vld [vmem:[%s651 + $0x438] sm:$0xff]
                  %796 = vst [vmem:[%s652 + $0x238] sm:$0xff] %v795
                  %v797 = vld [vmem:[%s651 + $0x440] sm:$0xff]
                  %798 = vst [vmem:[%s652 + $0x240] sm:$0xff] %v797
                  %v799 = vld [vmem:[%s651 + $0x448] sm:$0xff]
                  %800 = vst [vmem:[%s652 + $0x248] sm:$0xff] %v799
                  %v801 = vld [vmem:[%s651 + $0x450] sm:$0xff]
                  %802 = vst [vmem:[%s652 + $0x250] sm:$0xff] %v801
                  %v803 = vld [vmem:[%s651 + $0x458] sm:$0xff]
                  %804 = vst [vmem:[%s652 + $0x258] sm:$0xff] %v803
                  %v805 = vld [vmem:[%s651 + $0x460] sm:$0xff]
                  %806 = vst [vmem:[%s652 + $0x260] sm:$0xff] %v805
                  %v807 = vld [vmem:[%s651 + $0x468] sm:$0xff]
                  %808 = vst [vmem:[%s652 + $0x268] sm:$0xff] %v807
                  %v809 = vld [vmem:[%s651 + $0x470] sm:$0xff]
                  %810 = vst [vmem:[%s652 + $0x270] sm:$0xff] %v809
                  %v811 = vld [vmem:[%s651 + $0x478] sm:$0xff]
                  %812 = vst [vmem:[%s652 + $0x278] sm:$0xff] %v811
                  %v813 = vld [vmem:[%s651 + $0x480] sm:$0xff]
                  %814 = vst [vmem:[%s652 + $0x280] sm:$0xff] %v813
                  %v815 = vld [vmem:[%s651 + $0x488] sm:$0xff]
                  %816 = vst [vmem:[%s652 + $0x288] sm:$0xff] %v815
                  %v817 = vld [vmem:[%s651 + $0x490] sm:$0xff]
                  %818 = vst [vmem:[%s652 + $0x290] sm:$0xff] %v817
                  %v819 = vld [vmem:[%s651 + $0x498] sm:$0xff]
                  %820 = vst [vmem:[%s652 + $0x298] sm:$0xff] %v819
                  %v821 = vld [vmem:[%s651 + $0x4a0] sm:$0xff]
                  %822 = vst [vmem:[%s652 + $0x2a0] sm:$0xff] %v821
                  %v823 = vld [vmem:[%s651 + $0x4a8] sm:$0xff]
                  %824 = vst [vmem:[%s652 + $0x2a8] sm:$0xff] %v823
                  %v825 = vld [vmem:[%s651 + $0x4b0] sm:$0xff]
                  %826 = vst [vmem:[%s652 + $0x2b0] sm:$0xff] %v825
                  %v827 = vld [vmem:[%s651 + $0x4b8] sm:$0xff]
                  %828 = vst [vmem:[%s652 + $0x2b8] sm:$0xff] %v827
                  %v829 = vld [vmem:[%s651 + $0x4c0] sm:$0xff]
                  %830 = vst [vmem:[%s652 + $0x2c0] sm:$0xff] %v829
                  %v831 = vld [vmem:[%s651 + $0x4c8] sm:$0xff]
                  %832 = vst [vmem:[%s652 + $0x2c8] sm:$0xff] %v831
                  %v833 = vld [vmem:[%s651 + $0x4d0] sm:$0xff]
                  %834 = vst [vmem:[%s652 + $0x2d0] sm:$0xff] %v833
                  %v835 = vld [vmem:[%s651 + $0x4d8] sm:$0xff]
                  %836 = vst [vmem:[%s652 + $0x2d8] sm:$0xff] %v835
                  %v837 = vld [vmem:[%s651 + $0x4e0] sm:$0xff]
                  %838 = vst [vmem:[%s652 + $0x2e0] sm:$0xff] %v837
                  %v839 = vld [vmem:[%s651 + $0x4e8] sm:$0xff]
                  %840 = vst [vmem:[%s652 + $0x2e8] sm:$0xff] %v839
                  %v841 = vld [vmem:[%s651 + $0x4f0] sm:$0xff]
                  %842 = vst [vmem:[%s652 + $0x2f0] sm:$0xff] %v841
                  %v843 = vld [vmem:[%s651 + $0x4f8] sm:$0xff]
                  %844 = vst [vmem:[%s652 + $0x2f8] sm:$0xff] %v843
                  %v845 = vld [vmem:[%s651 + $0x600] sm:$0xff]
                  %846 = vst [vmem:[%s652 + $0x300] sm:$0xff] %v845
                  %v847 = vld [vmem:[%s651 + $0x608] sm:$0xff]
                  %848 = vst [vmem:[%s652 + $0x308] sm:$0xff] %v847
                  %v849 = vld [vmem:[%s651 + $0x610] sm:$0xff]
                  %850 = vst [vmem:[%s652 + $0x310] sm:$0xff] %v849
                  %v851 = vld [vmem:[%s651 + $0x618] sm:$0xff]
                  %852 = vst [vmem:[%s652 + $0x318] sm:$0xff] %v851
                  %v853 = vld [vmem:[%s651 + $0x620] sm:$0xff]
                  %854 = vst [vmem:[%s652 + $0x320] sm:$0xff] %v853
                  %v855 = vld [vmem:[%s651 + $0x628] sm:$0xff]
                  %856 = vst [vmem:[%s652 + $0x328] sm:$0xff] %v855
                  %v857 = vld [vmem:[%s651 + $0x630] sm:$0xff]
                  %858 = vst [vmem:[%s652 + $0x330] sm:$0xff] %v857
                  %v859 = vld [vmem:[%s651 + $0x638] sm:$0xff]
                  %860 = vst [vmem:[%s652 + $0x338] sm:$0xff] %v859
                  %v861 = vld [vmem:[%s651 + $0x640] sm:$0xff]
                  %862 = vst [vmem:[%s652 + $0x340] sm:$0xff] %v861
                  %v863 = vld [vmem:[%s651 + $0x648] sm:$0xff]
                  %864 = vst [vmem:[%s652 + $0x348] sm:$0xff] %v863
                  %v865 = vld [vmem:[%s651 + $0x650] sm:$0xff]
                  %866 = vst [vmem:[%s652 + $0x350] sm:$0xff] %v865
                  %v867 = vld [vmem:[%s651 + $0x658] sm:$0xff]
                  %868 = vst [vmem:[%s652 + $0x358] sm:$0xff] %v867
                  %v869 = vld [vmem:[%s651 + $0x660] sm:$0xff]
                  %870 = vst [vmem:[%s652 + $0x360] sm:$0xff] %v869
                  %v871 = vld [vmem:[%s651 + $0x668] sm:$0xff]
                  %872 = vst [vmem:[%s652 + $0x368] sm:$0xff] %v871
                  %v873 = vld [vmem:[%s651 + $0x670] sm:$0xff]
                  %874 = vst [vmem:[%s652 + $0x370] sm:$0xff] %v873
                  %v875 = vld [vmem:[%s651 + $0x678] sm:$0xff]
                  %876 = vst [vmem:[%s652 + $0x378] sm:$0xff] %v875
                  %v877 = vld [vmem:[%s651 + $0x680] sm:$0xff]
                  %878 = vst [vmem:[%s652 + $0x380] sm:$0xff] %v877
                  %v879 = vld [vmem:[%s651 + $0x688] sm:$0xff]
                  %880 = vst [vmem:[%s652 + $0x388] sm:$0xff] %v879
                  %v881 = vld [vmem:[%s651 + $0x690] sm:$0xff]
                  %882 = vst [vmem:[%s652 + $0x390] sm:$0xff] %v881
                  %v883 = vld [vmem:[%s651 + $0x698] sm:$0xff]
                  %884 = vst [vmem:[%s652 + $0x398] sm:$0xff] %v883
                  %v885 = vld [vmem:[%s651 + $0x6a0] sm:$0xff]
                  %886 = vst [vmem:[%s652 + $0x3a0] sm:$0xff] %v885
                  %v887 = vld [vmem:[%s651 + $0x6a8] sm:$0xff]
                  %888 = vst [vmem:[%s652 + $0x3a8] sm:$0xff] %v887
                  %v889 = vld [vmem:[%s651 + $0x6b0] sm:$0xff]
                  %890 = vst [vmem:[%s652 + $0x3b0] sm:$0xff] %v889
                  %v891 = vld [vmem:[%s651 + $0x6b8] sm:$0xff]
                  %892 = vst [vmem:[%s652 + $0x3b8] sm:$0xff] %v891
                  %v893 = vld [vmem:[%s651 + $0x6c0] sm:$0xff]
                  %894 = vst [vmem:[%s652 + $0x3c0] sm:$0xff] %v893
                  %v895 = vld [vmem:[%s651 + $0x6c8] sm:$0xff]
                  %896 = vst [vmem:[%s652 + $0x3c8] sm:$0xff] %v895
                  %v897 = vld [vmem:[%s651 + $0x6d0] sm:$0xff]
                  %898 = vst [vmem:[%s652 + $0x3d0] sm:$0xff] %v897
                  %v899 = vld [vmem:[%s651 + $0x6d8] sm:$0xff]
                  %900 = vst [vmem:[%s652 + $0x3d8] sm:$0xff] %v899
                  %v901 = vld [vmem:[%s651 + $0x6e0] sm:$0xff]
                  %902 = vst [vmem:[%s652 + $0x3e0] sm:$0xff] %v901
                  %v903 = vld [vmem:[%s651 + $0x6e8] sm:$0xff]
                  %904 = vst [vmem:[%s652 + $0x3e8] sm:$0xff] %v903
                  %v905 = vld [vmem:[%s651 + $0x6f0] sm:$0xff]
                  %906 = vst [vmem:[%s652 + $0x3f0] sm:$0xff] %v905
                  %v907 = vld [vmem:[%s651 + $0x6f8] sm:$0xff]
                  %908 = vst [vmem:[%s652 + $0x3f8] sm:$0xff] %v907
                $region88: #{cell_forward_pallas_batched.1} parent=82 // loop_footer
                  %s650 = sadd.s32 1, %s646
                $region89: #{cell_forward_pallas_batched.1} parent=82 // loop_footer_branch
                  %645 = sbr.rel target = $region85
                $region90: #{cell_forward_pallas_batched.1} parent=82 // loop_exit
                  _
              $region83: #{cell_forward_pallas_batched.1} parent=67 // pred_fallthru
                _
              // Predicated region
              $region91: #{cell_forward_pallas_batched.1} parent=67 // pred_check
                _
              $region92: #{cell_forward_pallas_batched.1} parent=67 // pred_check_branch
                %910 = sbr.rel target = $region94
              $region93: #{cell_forward_pallas_batched.1} parent=67 // pred_region
                _
              $region94: #{cell_forward_pallas_batched.1} parent=67 // pred_fallthru
                _
            $region68: #{cell_forward_pallas_batched.1} parent=63 // pred_fallthru
              _
            // Predicated region
            $region69: #{cell_forward_pallas_batched.1} parent=63 // pred_check
              _
            $region70: #{cell_forward_pallas_batched.1} parent=63 // pred_check_branch
              %377 = sbr.rel target = $region72
            $region71: #{cell_forward_pallas_batched.1} parent=63 // pred_region
              loop: start=0, step=1, limit=1
              $region73: #{cell_forward_pallas_batched.1} parent=71 // loop_pre_header
                _
              $region74: #{cell_forward_pallas_batched.1} parent=71 // loop_header
                %s380 = sphi 0, %s384
                %p381 = scmp.ge.s32.totalorder %s380, 1
                %s385 = sphi %s371, %s371
                %s386 = sphi %s368, %s368
              $region75: #{cell_forward_pallas_batched.1} parent=71 // loop_header_branch
                %383 = sbr.rel (%p381) target = $region79
              $region76: #{cell_forward_pallas_batched.1} parent=71 // loop_body
                %v387 = vld [vmem:[%s385] sm:$0xff]
                %388 = vst [vmem:[%s386] sm:$0xff] %v387
                %v389 = vld [vmem:[%s385 + $0x8] sm:$0xff]
                %390 = vst [vmem:[%s386 + $0x8] sm:$0xff] %v389
                %v391 = vld [vmem:[%s385 + $0x10] sm:$0xff]
                %392 = vst [vmem:[%s386 + $0x10] sm:$0xff] %v391
                %v393 = vld [vmem:[%s385 + $0x18] sm:$0xff]
                %394 = vst [vmem:[%s386 + $0x18] sm:$0xff] %v393
                %v395 = vld [vmem:[%s385 + $0x20] sm:$0xff]
                %396 = vst [vmem:[%s386 + $0x20] sm:$0xff] %v395
                %v397 = vld [vmem:[%s385 + $0x28] sm:$0xff]
                %398 = vst [vmem:[%s386 + $0x28] sm:$0xff] %v397
                %v399 = vld [vmem:[%s385 + $0x30] sm:$0xff]
                %400 = vst [vmem:[%s386 + $0x30] sm:$0xff] %v399
                %v401 = vld [vmem:[%s385 + $0x38] sm:$0xff]
                %402 = vst [vmem:[%s386 + $0x38] sm:$0xff] %v401
                %v403 = vld [vmem:[%s385 + $0x40] sm:$0xff]
                %404 = vst [vmem:[%s386 + $0x40] sm:$0xff] %v403
                %v405 = vld [vmem:[%s385 + $0x48] sm:$0xff]
                %406 = vst [vmem:[%s386 + $0x48] sm:$0xff] %v405
                %v407 = vld [vmem:[%s385 + $0x50] sm:$0xff]
                %408 = vst [vmem:[%s386 + $0x50] sm:$0xff] %v407
                %v409 = vld [vmem:[%s385 + $0x58] sm:$0xff]
                %410 = vst [vmem:[%s386 + $0x58] sm:$0xff] %v409
                %v411 = vld [vmem:[%s385 + $0x60] sm:$0xff]
                %412 = vst [vmem:[%s386 + $0x60] sm:$0xff] %v411
                %v413 = vld [vmem:[%s385 + $0x68] sm:$0xff]
                %414 = vst [vmem:[%s386 + $0x68] sm:$0xff] %v413
                %v415 = vld [vmem:[%s385 + $0x70] sm:$0xff]
                %416 = vst [vmem:[%s386 + $0x70] sm:$0xff] %v415
                %v417 = vld [vmem:[%s385 + $0x78] sm:$0xff]
                %418 = vst [vmem:[%s386 + $0x78] sm:$0xff] %v417
                %v419 = vld [vmem:[%s385 + $0x80] sm:$0xff]
                %420 = vst [vmem:[%s386 + $0x80] sm:$0xff] %v419
                %v421 = vld [vmem:[%s385 + $0x88] sm:$0xff]
                %422 = vst [vmem:[%s386 + $0x88] sm:$0xff] %v421
                %v423 = vld [vmem:[%s385 + $0x90] sm:$0xff]
                %424 = vst [vmem:[%s386 + $0x90] sm:$0xff] %v423
                %v425 = vld [vmem:[%s385 + $0x98] sm:$0xff]
                %426 = vst [vmem:[%s386 + $0x98] sm:$0xff] %v425
                %v427 = vld [vmem:[%s385 + $0xa0] sm:$0xff]
                %428 = vst [vmem:[%s386 + $0xa0] sm:$0xff] %v427
                %v429 = vld [vmem:[%s385 + $0xa8] sm:$0xff]
                %430 = vst [vmem:[%s386 + $0xa8] sm:$0xff] %v429
                %v431 = vld [vmem:[%s385 + $0xb0] sm:$0xff]
                %432 = vst [vmem:[%s386 + $0xb0] sm:$0xff] %v431
                %v433 = vld [vmem:[%s385 + $0xb8] sm:$0xff]
                %434 = vst [vmem:[%s386 + $0xb8] sm:$0xff] %v433
                %v435 = vld [vmem:[%s385 + $0xc0] sm:$0xff]
                %436 = vst [vmem:[%s386 + $0xc0] sm:$0xff] %v435
                %v437 = vld [vmem:[%s385 + $0xc8] sm:$0xff]
                %438 = vst [vmem:[%s386 + $0xc8] sm:$0xff] %v437
                %v439 = vld [vmem:[%s385 + $0xd0] sm:$0xff]
                %440 = vst [vmem:[%s386 + $0xd0] sm:$0xff] %v439
                %v441 = vld [vmem:[%s385 + $0xd8] sm:$0xff]
                %442 = vst [vmem:[%s386 + $0xd8] sm:$0xff] %v441
                %v443 = vld [vmem:[%s385 + $0xe0] sm:$0xff]
                %444 = vst [vmem:[%s386 + $0xe0] sm:$0xff] %v443
                %v445 = vld [vmem:[%s385 + $0xe8] sm:$0xff]
                %446 = vst [vmem:[%s386 + $0xe8] sm:$0xff] %v445
                %v447 = vld [vmem:[%s385 + $0xf0] sm:$0xff]
                %448 = vst [vmem:[%s386 + $0xf0] sm:$0xff] %v447
                %v449 = vld [vmem:[%s385 + $0xf8] sm:$0xff]
                %450 = vst [vmem:[%s386 + $0xf8] sm:$0xff] %v449
                %v451 = vld [vmem:[%s385 + $0x200] sm:$0xff]
                %452 = vst [vmem:[%s386 + $0x100] sm:$0xff] %v451
                %v453 = vld [vmem:[%s385 + $0x208] sm:$0xff]
                %454 = vst [vmem:[%s386 + $0x108] sm:$0xff] %v453
                %v455 = vld [vmem:[%s385 + $0x210] sm:$0xff]
                %456 = vst [vmem:[%s386 + $0x110] sm:$0xff] %v455
                %v457 = vld [vmem:[%s385 + $0x218] sm:$0xff]
                %458 = vst [vmem:[%s386 + $0x118] sm:$0xff] %v457
                %v459 = vld [vmem:[%s385 + $0x220] sm:$0xff]
                %460 = vst [vmem:[%s386 + $0x120] sm:$0xff] %v459
                %v461 = vld [vmem:[%s385 + $0x228] sm:$0xff]
                %462 = vst [vmem:[%s386 + $0x128] sm:$0xff] %v461
                %v463 = vld [vmem:[%s385 + $0x230] sm:$0xff]
                %464 = vst [vmem:[%s386 + $0x130] sm:$0xff] %v463
                %v465 = vld [vmem:[%s385 + $0x238] sm:$0xff]
                %466 = vst [vmem:[%s386 + $0x138] sm:$0xff] %v465
                %v467 = vld [vmem:[%s385 + $0x240] sm:$0xff]
                %468 = vst [vmem:[%s386 + $0x140] sm:$0xff] %v467
                %v469 = vld [vmem:[%s385 + $0x248] sm:$0xff]
                %470 = vst [vmem:[%s386 + $0x148] sm:$0xff] %v469
                %v471 = vld [vmem:[%s385 + $0x250] sm:$0xff]
                %472 = vst [vmem:[%s386 + $0x150] sm:$0xff] %v471
                %v473 = vld [vmem:[%s385 + $0x258] sm:$0xff]
                %474 = vst [vmem:[%s386 + $0x158] sm:$0xff] %v473
                %v475 = vld [vmem:[%s385 + $0x260] sm:$0xff]
                %476 = vst [vmem:[%s386 + $0x160] sm:$0xff] %v475
                %v477 = vld [vmem:[%s385 + $0x268] sm:$0xff]
                %478 = vst [vmem:[%s386 + $0x168] sm:$0xff] %v477
                %v479 = vld [vmem:[%s385 + $0x270] sm:$0xff]
                %480 = vst [vmem:[%s386 + $0x170] sm:$0xff] %v479
                %v481 = vld [vmem:[%s385 + $0x278] sm:$0xff]
                %482 = vst [vmem:[%s386 + $0x178] sm:$0xff] %v481
                %v483 = vld [vmem:[%s385 + $0x280] sm:$0xff]
                %484 = vst [vmem:[%s386 + $0x180] sm:$0xff] %v483
                %v485 = vld [vmem:[%s385 + $0x288] sm:$0xff]
                %486 = vst [vmem:[%s386 + $0x188] sm:$0xff] %v485
                %v487 = vld [vmem:[%s385 + $0x290] sm:$0xff]
                %488 = vst [vmem:[%s386 + $0x190] sm:$0xff] %v487
                %v489 = vld [vmem:[%s385 + $0x298] sm:$0xff]
                %490 = vst [vmem:[%s386 + $0x198] sm:$0xff] %v489
                %v491 = vld [vmem:[%s385 + $0x2a0] sm:$0xff]
                %492 = vst [vmem:[%s386 + $0x1a0] sm:$0xff] %v491
                %v493 = vld [vmem:[%s385 + $0x2a8] sm:$0xff]
                %494 = vst [vmem:[%s386 + $0x1a8] sm:$0xff] %v493
                %v495 = vld [vmem:[%s385 + $0x2b0] sm:$0xff]
                %496 = vst [vmem:[%s386 + $0x1b0] sm:$0xff] %v495
                %v497 = vld [vmem:[%s385 + $0x2b8] sm:$0xff]
                %498 = vst [vmem:[%s386 + $0x1b8] sm:$0xff] %v497
                %v499 = vld [vmem:[%s385 + $0x2c0] sm:$0xff]
                %500 = vst [vmem:[%s386 + $0x1c0] sm:$0xff] %v499
                %v501 = vld [vmem:[%s385 + $0x2c8] sm:$0xff]
                %502 = vst [vmem:[%s386 + $0x1c8] sm:$0xff] %v501
                %v503 = vld [vmem:[%s385 + $0x2d0] sm:$0xff]
                %504 = vst [vmem:[%s386 + $0x1d0] sm:$0xff] %v503
                %v505 = vld [vmem:[%s385 + $0x2d8] sm:$0xff]
                %506 = vst [vmem:[%s386 + $0x1d8] sm:$0xff] %v505
                %v507 = vld [vmem:[%s385 + $0x2e0] sm:$0xff]
                %508 = vst [vmem:[%s386 + $0x1e0] sm:$0xff] %v507
                %v509 = vld [vmem:[%s385 + $0x2e8] sm:$0xff]
                %510 = vst [vmem:[%s386 + $0x1e8] sm:$0xff] %v509
                %v511 = vld [vmem:[%s385 + $0x2f0] sm:$0xff]
                %512 = vst [vmem:[%s386 + $0x1f0] sm:$0xff] %v511
                %v513 = vld [vmem:[%s385 + $0x2f8] sm:$0xff]
                %514 = vst [vmem:[%s386 + $0x1f8] sm:$0xff] %v513
                %v515 = vld [vmem:[%s385 + $0x400] sm:$0xff]
                %516 = vst [vmem:[%s386 + $0x200] sm:$0xff] %v515
                %v517 = vld [vmem:[%s385 + $0x408] sm:$0xff]
                %518 = vst [vmem:[%s386 + $0x208] sm:$0xff] %v517
                %v519 = vld [vmem:[%s385 + $0x410] sm:$0xff]
                %520 = vst [vmem:[%s386 + $0x210] sm:$0xff] %v519
                %v521 = vld [vmem:[%s385 + $0x418] sm:$0xff]
                %522 = vst [vmem:[%s386 + $0x218] sm:$0xff] %v521
                %v523 = vld [vmem:[%s385 + $0x420] sm:$0xff]
                %524 = vst [vmem:[%s386 + $0x220] sm:$0xff] %v523
                %v525 = vld [vmem:[%s385 + $0x428] sm:$0xff]
                %526 = vst [vmem:[%s386 + $0x228] sm:$0xff] %v525
                %v527 = vld [vmem:[%s385 + $0x430] sm:$0xff]
                %528 = vst [vmem:[%s386 + $0x230] sm:$0xff] %v527
                %v529 = vld [vmem:[%s385 + $0x438] sm:$0xff]
                %530 = vst [vmem:[%s386 + $0x238] sm:$0xff] %v529
                %v531 = vld [vmem:[%s385 + $0x440] sm:$0xff]
                %532 = vst [vmem:[%s386 + $0x240] sm:$0xff] %v531
                %v533 = vld [vmem:[%s385 + $0x448] sm:$0xff]
                %534 = vst [vmem:[%s386 + $0x248] sm:$0xff] %v533
                %v535 = vld [vmem:[%s385 + $0x450] sm:$0xff]
                %536 = vst [vmem:[%s386 + $0x250] sm:$0xff] %v535
                %v537 = vld [vmem:[%s385 + $0x458] sm:$0xff]
                %538 = vst [vmem:[%s386 + $0x258] sm:$0xff] %v537
                %v539 = vld [vmem:[%s385 + $0x460] sm:$0xff]
                %540 = vst [vmem:[%s386 + $0x260] sm:$0xff] %v539
                %v541 = vld [vmem:[%s385 + $0x468] sm:$0xff]
                %542 = vst [vmem:[%s386 + $0x268] sm:$0xff] %v541
                %v543 = vld [vmem:[%s385 + $0x470] sm:$0xff]
                %544 = vst [vmem:[%s386 + $0x270] sm:$0xff] %v543
                %v545 = vld [vmem:[%s385 + $0x478] sm:$0xff]
                %546 = vst [vmem:[%s386 + $0x278] sm:$0xff] %v545
                %v547 = vld [vmem:[%s385 + $0x480] sm:$0xff]
                %548 = vst [vmem:[%s386 + $0x280] sm:$0xff] %v547
                %v549 = vld [vmem:[%s385 + $0x488] sm:$0xff]
                %550 = vst [vmem:[%s386 + $0x288] sm:$0xff] %v549
                %v551 = vld [vmem:[%s385 + $0x490] sm:$0xff]
                %552 = vst [vmem:[%s386 + $0x290] sm:$0xff] %v551
                %v553 = vld [vmem:[%s385 + $0x498] sm:$0xff]
                %554 = vst [vmem:[%s386 + $0x298] sm:$0xff] %v553
                %v555 = vld [vmem:[%s385 + $0x4a0] sm:$0xff]
                %556 = vst [vmem:[%s386 + $0x2a0] sm:$0xff] %v555
                %v557 = vld [vmem:[%s385 + $0x4a8] sm:$0xff]
                %558 = vst [vmem:[%s386 + $0x2a8] sm:$0xff] %v557
                %v559 = vld [vmem:[%s385 + $0x4b0] sm:$0xff]
                %560 = vst [vmem:[%s386 + $0x2b0] sm:$0xff] %v559
                %v561 = vld [vmem:[%s385 + $0x4b8] sm:$0xff]
                %562 = vst [vmem:[%s386 + $0x2b8] sm:$0xff] %v561
                %v563 = vld [vmem:[%s385 + $0x4c0] sm:$0xff]
                %564 = vst [vmem:[%s386 + $0x2c0] sm:$0xff] %v563
                %v565 = vld [vmem:[%s385 + $0x4c8] sm:$0xff]
                %566 = vst [vmem:[%s386 + $0x2c8] sm:$0xff] %v565
                %v567 = vld [vmem:[%s385 + $0x4d0] sm:$0xff]
                %568 = vst [vmem:[%s386 + $0x2d0] sm:$0xff] %v567
                %v569 = vld [vmem:[%s385 + $0x4d8] sm:$0xff]
                %570 = vst [vmem:[%s386 + $0x2d8] sm:$0xff] %v569
                %v571 = vld [vmem:[%s385 + $0x4e0] sm:$0xff]
                %572 = vst [vmem:[%s386 + $0x2e0] sm:$0xff] %v571
                %v573 = vld [vmem:[%s385 + $0x4e8] sm:$0xff]
                %574 = vst [vmem:[%s386 + $0x2e8] sm:$0xff] %v573
                %v575 = vld [vmem:[%s385 + $0x4f0] sm:$0xff]
                %576 = vst [vmem:[%s386 + $0x2f0] sm:$0xff] %v575
                %v577 = vld [vmem:[%s385 + $0x4f8] sm:$0xff]
                %578 = vst [vmem:[%s386 + $0x2f8] sm:$0xff] %v577
                %v579 = vld [vmem:[%s385 + $0x600] sm:$0xff]
                %580 = vst [vmem:[%s386 + $0x300] sm:$0xff] %v579
                %v581 = vld [vmem:[%s385 + $0x608] sm:$0xff]
                %582 = vst [vmem:[%s386 + $0x308] sm:$0xff] %v581
                %v583 = vld [vmem:[%s385 + $0x610] sm:$0xff]
                %584 = vst [vmem:[%s386 + $0x310] sm:$0xff] %v583
                %v585 = vld [vmem:[%s385 + $0x618] sm:$0xff]
                %586 = vst [vmem:[%s386 + $0x318] sm:$0xff] %v585
                %v587 = vld [vmem:[%s385 + $0x620] sm:$0xff]
                %588 = vst [vmem:[%s386 + $0x320] sm:$0xff] %v587
                %v589 = vld [vmem:[%s385 + $0x628] sm:$0xff]
                %590 = vst [vmem:[%s386 + $0x328] sm:$0xff] %v589
                %v591 = vld [vmem:[%s385 + $0x630] sm:$0xff]
                %592 = vst [vmem:[%s386 + $0x330] sm:$0xff] %v591
                %v593 = vld [vmem:[%s385 + $0x638] sm:$0xff]
                %594 = vst [vmem:[%s386 + $0x338] sm:$0xff] %v593
                %v595 = vld [vmem:[%s385 + $0x640] sm:$0xff]
                %596 = vst [vmem:[%s386 + $0x340] sm:$0xff] %v595
                %v597 = vld [vmem:[%s385 + $0x648] sm:$0xff]
                %598 = vst [vmem:[%s386 + $0x348] sm:$0xff] %v597
                %v599 = vld [vmem:[%s385 + $0x650] sm:$0xff]
                %600 = vst [vmem:[%s386 + $0x350] sm:$0xff] %v599
                %v601 = vld [vmem:[%s385 + $0x658] sm:$0xff]
                %602 = vst [vmem:[%s386 + $0x358] sm:$0xff] %v601
                %v603 = vld [vmem:[%s385 + $0x660] sm:$0xff]
                %604 = vst [vmem:[%s386 + $0x360] sm:$0xff] %v603
                %v605 = vld [vmem:[%s385 + $0x668] sm:$0xff]
                %606 = vst [vmem:[%s386 + $0x368] sm:$0xff] %v605
                %v607 = vld [vmem:[%s385 + $0x670] sm:$0xff]
                %608 = vst [vmem:[%s386 + $0x370] sm:$0xff] %v607
                %v609 = vld [vmem:[%s385 + $0x678] sm:$0xff]
                %610 = vst [vmem:[%s386 + $0x378] sm:$0xff] %v609
                %v611 = vld [vmem:[%s385 + $0x680] sm:$0xff]
                %612 = vst [vmem:[%s386 + $0x380] sm:$0xff] %v611
                %v613 = vld [vmem:[%s385 + $0x688] sm:$0xff]
                %614 = vst [vmem:[%s386 + $0x388] sm:$0xff] %v613
                %v615 = vld [vmem:[%s385 + $0x690] sm:$0xff]
                %616 = vst [vmem:[%s386 + $0x390] sm:$0xff] %v615
                %v617 = vld [vmem:[%s385 + $0x698] sm:$0xff]
                %618 = vst [vmem:[%s386 + $0x398] sm:$0xff] %v617
                %v619 = vld [vmem:[%s385 + $0x6a0] sm:$0xff]
                %620 = vst [vmem:[%s386 + $0x3a0] sm:$0xff] %v619
                %v621 = vld [vmem:[%s385 + $0x6a8] sm:$0xff]
                %622 = vst [vmem:[%s386 + $0x3a8] sm:$0xff] %v621
                %v623 = vld [vmem:[%s385 + $0x6b0] sm:$0xff]
                %624 = vst [vmem:[%s386 + $0x3b0] sm:$0xff] %v623
                %v625 = vld [vmem:[%s385 + $0x6b8] sm:$0xff]
                %626 = vst [vmem:[%s386 + $0x3b8] sm:$0xff] %v625
                %v627 = vld [vmem:[%s385 + $0x6c0] sm:$0xff]
                %628 = vst [vmem:[%s386 + $0x3c0] sm:$0xff] %v627
                %v629 = vld [vmem:[%s385 + $0x6c8] sm:$0xff]
                %630 = vst [vmem:[%s386 + $0x3c8] sm:$0xff] %v629
                %v631 = vld [vmem:[%s385 + $0x6d0] sm:$0xff]
                %632 = vst [vmem:[%s386 + $0x3d0] sm:$0xff] %v631
                %v633 = vld [vmem:[%s385 + $0x6d8] sm:$0xff]
                %634 = vst [vmem:[%s386 + $0x3d8] sm:$0xff] %v633
                %v635 = vld [vmem:[%s385 + $0x6e0] sm:$0xff]
                %636 = vst [vmem:[%s386 + $0x3e0] sm:$0xff] %v635
                %v637 = vld [vmem:[%s385 + $0x6e8] sm:$0xff]
                %638 = vst [vmem:[%s386 + $0x3e8] sm:$0xff] %v637
                %v639 = vld [vmem:[%s385 + $0x6f0] sm:$0xff]
                %640 = vst [vmem:[%s386 + $0x3f0] sm:$0xff] %v639
                %v641 = vld [vmem:[%s385 + $0x6f8] sm:$0xff]
                %642 = vst [vmem:[%s386 + $0x3f8] sm:$0xff] %v641
              $region77: #{cell_forward_pallas_batched.1} parent=71 // loop_footer
                %s384 = sadd.s32 1, %s380
              $region78: #{cell_forward_pallas_batched.1} parent=71 // loop_footer_branch
                %379 = sbr.rel target = $region74
              $region79: #{cell_forward_pallas_batched.1} parent=71 // loop_exit
                _
            $region72: #{cell_forward_pallas_batched.1} parent=63 // pred_fallthru
              _
          $region64: #{cell_forward_pallas_batched.1} parent=59 // pred_fallthru
            _
          %911 = vnop
        $region60: #{cell_forward_pallas_batched.1} parent=55 // pred_fallthru
          _
      $region56: #{cell_forward_pallas_batched.1} parent=5 // pred_fallthru
        _
      %p912 = scmp.le.s32.totalorder 1, %s25
      %p913 = scmp.lt.s32.totalorder %s25, 3
      %p914 = pnand %p912, %p913
      %p915 = pneg %p914
      // Predicated region
      $region95: #{cell_forward_pallas_batched.1} parent=5 // pred_check
        _
      $region96: #{cell_forward_pallas_batched.1} parent=5 // pred_check_branch
        %917 = sbr.rel (%p914) target = $region98
      $region97: #{cell_forward_pallas_batched.1} parent=5 // pred_region
        %s918 = ssub.s32 %s25, 1
        %s919 = sand.u32 %s38, 1
        %s920 = sand.u32 %s38, 1
        %s921 = smul.addr %s920, 1024
        %s922 = scalar_lea.vmem [#allocation2], %s921
        // Predicated region
        $region99: #{cell_forward_pallas_batched.1} parent=97 // pred_check
          %p923 = pneg %p51
        $region100: #{cell_forward_pallas_batched.1} parent=97 // pred_check_branch
          %925 = sbr.rel (%p923) target = $region102
        $region101: #{cell_forward_pallas_batched.1} parent=97 // pred_region
          _
        $region102: #{cell_forward_pallas_batched.1} parent=97 // pred_fallthru
          _
        %s926 = sand.u32 %s38, 1
        %s927 = sand.u32 %s38, 1
        %s928 = smul.addr %s927, 1024
        %s929 = scalar_lea.vmem [#allocation2], %s928
        %p930 = pneg %p51
        %p931 = pneg %p48
        %p932 = pneg %p72
        %p933 = pneg %p69
        %p934 = pneg %p93
        %p935 = pneg %p90
        %p936 = pneg %p114
        %p937 = pneg %p111
        %p938 = pneg %p135
        %p939 = pneg %p132
        %p940 = pneg %p156
        %p941 = pneg %p153
        %p942 = pneg %p177
        %p943 = pneg %p174
        %p944 = pneg %p198
        %p945 = pneg %p195
        %p946 = pneg %p219
        %p947 = pneg %p216
        %p948 = pneg %p240
        %p949 = pneg %p237
        %p950 = pneg %p261
        %p951 = pneg %p258
        %p952 = pneg %p287
        %p953 = pneg %p284
        %s954 = sand.u32 %s274, 1
        %s955 = scalar_lea.sflag [#allocation4], %s954
        %s956 = sand.u32 %s274, 1
        %s957 = smul.addr %s956, 1024
        %s958 = scalar_lea.vmem [#allocation3], %s957
        %p959 = pneg %p313
        %p960 = pneg %p310
        %s961 = sand.u32 %s300, 1
        %s962 = scalar_lea.sflag [#allocation6], %s961
        %s963 = sand.u32 %s300, 1
        %s964 = smul.addr %s963, 256
        %s965 = scalar_lea.vmem [#allocation5], %s964
        %s966 = smul.u32 32, %s30
        %s967 = smul.u32 32, %s30
        %s968 = smul.u32 32, %s30
        %v970 = vld [vmem:[%s922] sm:$0xff]
        %v971 = vld [vmem:[%s922 + $0x8] sm:$0xff]
        %v972 = vld [vmem:[%s922 + $0x10] sm:$0xff]
        %v973 = vld [vmem:[%s922 + $0x18] sm:$0xff]
        %v974 = vld [vmem:[%s922 + $0x20] sm:$0xff]
        %v975 = vld [vmem:[%s922 + $0x28] sm:$0xff]
        %v976 = vld [vmem:[%s922 + $0x30] sm:$0xff]
        %v977 = vld [vmem:[%s922 + $0x38] sm:$0xff]
        %v978 = vld [vmem:[%s922 + $0x40] sm:$0xff]
        %v979 = vld [vmem:[%s922 + $0x48] sm:$0xff]
        %v980 = vld [vmem:[%s922 + $0x50] sm:$0xff]
        %v981 = vld [vmem:[%s922 + $0x58] sm:$0xff]
        %v982 = vld [vmem:[%s922 + $0x60] sm:$0xff]
        %v983 = vld [vmem:[%s922 + $0x68] sm:$0xff]
        %v984 = vld [vmem:[%s922 + $0x70] sm:$0xff]
        %v985 = vld [vmem:[%s922 + $0x78] sm:$0xff]
        %v986 = vld [vmem:[%s922 + $0x80] sm:$0xff]
        %v987 = vld [vmem:[%s922 + $0x88] sm:$0xff]
        %v988 = vld [vmem:[%s922 + $0x90] sm:$0xff]
        %v989 = vld [vmem:[%s922 + $0x98] sm:$0xff]
        %v990 = vld [vmem:[%s922 + $0xa0] sm:$0xff]
        %v991 = vld [vmem:[%s922 + $0xa8] sm:$0xff]
        %v992 = vld [vmem:[%s922 + $0xb0] sm:$0xff]
        %v993 = vld [vmem:[%s922 + $0xb8] sm:$0xff]
        %v994 = vld [vmem:[%s922 + $0xc0] sm:$0xff]
        %v995 = vld [vmem:[%s922 + $0xc8] sm:$0xff]
        %v996 = vld [vmem:[%s922 + $0xd0] sm:$0xff]
        %v997 = vld [vmem:[%s922 + $0xd8] sm:$0xff]
        %v998 = vld [vmem:[%s922 + $0xe0] sm:$0xff]
        %v999 = vld [vmem:[%s922 + $0xe8] sm:$0xff]
        %v1000 = vld [vmem:[%s922 + $0xf0] sm:$0xff]
        %v1001 = vld [vmem:[%s922 + $0xf8] sm:$0xff]
        %v1002 = vld [vmem:[%s922 + $0x100] sm:$0xff]
        %v1003 = vld [vmem:[%s922 + $0x108] sm:$0xff]
        %v1004 = vld [vmem:[%s922 + $0x110] sm:$0xff]
        %v1005 = vld [vmem:[%s922 + $0x118] sm:$0xff]
        %v1006 = vld [vmem:[%s922 + $0x120] sm:$0xff]
        %v1007 = vld [vmem:[%s922 + $0x128] sm:$0xff]
        %v1008 = vld [vmem:[%s922 + $0x130] sm:$0xff]
        %v1009 = vld [vmem:[%s922 + $0x138] sm:$0xff]
        %v1010 = vld [vmem:[%s922 + $0x140] sm:$0xff]
        %v1011 = vld [vmem:[%s922 + $0x148] sm:$0xff]
        %v1012 = vld [vmem:[%s922 + $0x150] sm:$0xff]
        %v1013 = vld [vmem:[%s922 + $0x158] sm:$0xff]
        %v1014 = vld [vmem:[%s922 + $0x160] sm:$0xff]
        %v1015 = vld [vmem:[%s922 + $0x168] sm:$0xff]
        %v1016 = vld [vmem:[%s922 + $0x170] sm:$0xff]
        %v1017 = vld [vmem:[%s922 + $0x178] sm:$0xff]
        %v1018 = vld [vmem:[%s922 + $0x180] sm:$0xff]
        %v1019 = vld [vmem:[%s922 + $0x188] sm:$0xff]
        %v1020 = vld [vmem:[%s922 + $0x190] sm:$0xff]
        %v1021 = vld [vmem:[%s922 + $0x198] sm:$0xff]
        %v1022 = vld [vmem:[%s922 + $0x1a0] sm:$0xff]
        %v1023 = vld [vmem:[%s922 + $0x1a8] sm:$0xff]
        %v1024 = vld [vmem:[%s922 + $0x1b0] sm:$0xff]
        %v1025 = vld [vmem:[%s922 + $0x1b8] sm:$0xff]
        %v1026 = vld [vmem:[%s922 + $0x1c0] sm:$0xff]
        %v1027 = vld [vmem:[%s922 + $0x1c8] sm:$0xff]
        %v1028 = vld [vmem:[%s922 + $0x1d0] sm:$0xff]
        %v1029 = vld [vmem:[%s922 + $0x1d8] sm:$0xff]
        %v1030 = vld [vmem:[%s922 + $0x1e0] sm:$0xff]
        %v1031 = vld [vmem:[%s922 + $0x1e8] sm:$0xff]
        %v1032 = vld [vmem:[%s922 + $0x1f0] sm:$0xff]
        %v1033 = vld [vmem:[%s922 + $0x1f8] sm:$0xff]
        %v1034 = vld [vmem:[%s922 + $0x200] sm:$0xff]
        %v1035 = vld [vmem:[%s922 + $0x208] sm:$0xff]
        %v1036 = vld [vmem:[%s922 + $0x210] sm:$0xff]
        %v1037 = vld [vmem:[%s922 + $0x218] sm:$0xff]
        %v1038 = vld [vmem:[%s922 + $0x220] sm:$0xff]
        %v1039 = vld [vmem:[%s922 + $0x228] sm:$0xff]
        %v1040 = vld [vmem:[%s922 + $0x230] sm:$0xff]
        %v1041 = vld [vmem:[%s922 + $0x238] sm:$0xff]
        %v1042 = vld [vmem:[%s922 + $0x240] sm:$0xff]
        %v1043 = vld [vmem:[%s922 + $0x248] sm:$0xff]
        %v1044 = vld [vmem:[%s922 + $0x250] sm:$0xff]
        %v1045 = vld [vmem:[%s922 + $0x258] sm:$0xff]
        %v1046 = vld [vmem:[%s922 + $0x260] sm:$0xff]
        %v1047 = vld [vmem:[%s922 + $0x268] sm:$0xff]
        %v1048 = vld [vmem:[%s922 + $0x270] sm:$0xff]
        %v1049 = vld [vmem:[%s922 + $0x278] sm:$0xff]
        %v1050 = vld [vmem:[%s922 + $0x280] sm:$0xff]
        %v1051 = vld [vmem:[%s922 + $0x288] sm:$0xff]
        %v1052 = vld [vmem:[%s922 + $0x290] sm:$0xff]
        %v1053 = vld [vmem:[%s922 + $0x298] sm:$0xff]
        %v1054 = vld [vmem:[%s922 + $0x2a0] sm:$0xff]
        %v1055 = vld [vmem:[%s922 + $0x2a8] sm:$0xff]
        %v1056 = vld [vmem:[%s922 + $0x2b0] sm:$0xff]
        %v1057 = vld [vmem:[%s922 + $0x2b8] sm:$0xff]
        %v1058 = vld [vmem:[%s922 + $0x2c0] sm:$0xff]
        %v1059 = vld [vmem:[%s922 + $0x2c8] sm:$0xff]
        %v1060 = vld [vmem:[%s922 + $0x2d0] sm:$0xff]
        %v1061 = vld [vmem:[%s922 + $0x2d8] sm:$0xff]
        %v1062 = vld [vmem:[%s922 + $0x2e0] sm:$0xff]
        %v1063 = vld [vmem:[%s922 + $0x2e8] sm:$0xff]
        %v1064 = vld [vmem:[%s922 + $0x2f0] sm:$0xff]
        %v1065 = vld [vmem:[%s922 + $0x2f8] sm:$0xff]
        %v1066 = vld [vmem:[%s922 + $0x300] sm:$0xff]
        %v1067 = vld [vmem:[%s922 + $0x308] sm:$0xff]
        %v1068 = vld [vmem:[%s922 + $0x310] sm:$0xff]
        %v1069 = vld [vmem:[%s922 + $0x318] sm:$0xff]
        %v1070 = vld [vmem:[%s922 + $0x320] sm:$0xff]
        %v1071 = vld [vmem:[%s922 + $0x328] sm:$0xff]
        %v1072 = vld [vmem:[%s922 + $0x330] sm:$0xff]
        %v1073 = vld [vmem:[%s922 + $0x338] sm:$0xff]
        %v1074 = vld [vmem:[%s922 + $0x340] sm:$0xff]
        %v1075 = vld [vmem:[%s922 + $0x348] sm:$0xff]
        %v1076 = vld [vmem:[%s922 + $0x350] sm:$0xff]
        %v1077 = vld [vmem:[%s922 + $0x358] sm:$0xff]
        %v1078 = vld [vmem:[%s922 + $0x360] sm:$0xff]
        %v1079 = vld [vmem:[%s922 + $0x368] sm:$0xff]
        %v1080 = vld [vmem:[%s922 + $0x370] sm:$0xff]
        %v1081 = vld [vmem:[%s922 + $0x378] sm:$0xff]
        %v1082 = vld [vmem:[%s922 + $0x380] sm:$0xff]
        %v1083 = vld [vmem:[%s922 + $0x388] sm:$0xff]
        %v1084 = vld [vmem:[%s922 + $0x390] sm:$0xff]
        %v1085 = vld [vmem:[%s922 + $0x398] sm:$0xff]
        %v1086 = vld [vmem:[%s922 + $0x3a0] sm:$0xff]
        %v1087 = vld [vmem:[%s922 + $0x3a8] sm:$0xff]
        %v1088 = vld [vmem:[%s922 + $0x3b0] sm:$0xff]
        %v1089 = vld [vmem:[%s922 + $0x3b8] sm:$0xff]
        %v1090 = vld [vmem:[%s922 + $0x3c0] sm:$0xff]
        %v1091 = vld [vmem:[%s922 + $0x3c8] sm:$0xff]
        %v1092 = vld [vmem:[%s922 + $0x3d0] sm:$0xff]
        %v1093 = vld [vmem:[%s922 + $0x3d8] sm:$0xff]
        %v1094 = vld [vmem:[%s922 + $0x3e0] sm:$0xff]
        %v1095 = vld [vmem:[%s922 + $0x3e8] sm:$0xff]
        %v1096 = vld [vmem:[%s922 + $0x3f0] sm:$0xff]
        %v1097 = vld [vmem:[%s922 + $0x3f8] sm:$0xff]
        %v1098 = vpack.c.bf16 %v971, %v970
        %v1099 = vpack.c.bf16 %v973, %v972
        %v1100 = vpack.c.bf16 %v975, %v974
        %v1101 = vpack.c.bf16 %v977, %v976
        %v1102 = vpack.c.bf16 %v979, %v978
        %v1103 = vpack.c.bf16 %v981, %v980
        %v1104 = vpack.c.bf16 %v983, %v982
        %v1105 = vpack.c.bf16 %v985, %v984
        %v1106 = vpack.c.bf16 %v987, %v986
        %v1107 = vpack.c.bf16 %v989, %v988
        %v1108 = vpack.c.bf16 %v991, %v990
        %v1109 = vpack.c.bf16 %v993, %v992
        %v1110 = vpack.c.bf16 %v995, %v994
        %v1111 = vpack.c.bf16 %v997, %v996
        %v1112 = vpack.c.bf16 %v999, %v998
        %v1113 = vpack.c.bf16 %v1001, %v1000
        %v1114 = vpack.c.bf16 %v1003, %v1002
        %v1115 = vpack.c.bf16 %v1005, %v1004
        %v1116 = vpack.c.bf16 %v1007, %v1006
        %v1117 = vpack.c.bf16 %v1009, %v1008
        %v1118 = vpack.c.bf16 %v1011, %v1010
        %v1119 = vpack.c.bf16 %v1013, %v1012
        %v1120 = vpack.c.bf16 %v1015, %v1014
        %v1121 = vpack.c.bf16 %v1017, %v1016
        %v1122 = vpack.c.bf16 %v1019, %v1018
        %v1123 = vpack.c.bf16 %v1021, %v1020
        %v1124 = vpack.c.bf16 %v1023, %v1022
        %v1125 = vpack.c.bf16 %v1025, %v1024
        %v1126 = vpack.c.bf16 %v1027, %v1026
        %v1127 = vpack.c.bf16 %v1029, %v1028
        %v1128 = vpack.c.bf16 %v1031, %v1030
        %v1129 = vpack.c.bf16 %v1033, %v1032
        %v1130 = vpack.c.bf16 %v1035, %v1034
        %v1131 = vpack.c.bf16 %v1037, %v1036
        %v1132 = vpack.c.bf16 %v1039, %v1038
        %v1133 = vpack.c.bf16 %v1041, %v1040
        %v1134 = vpack.c.bf16 %v1043, %v1042
        %v1135 = vpack.c.bf16 %v1045, %v1044
        %v1136 = vpack.c.bf16 %v1047, %v1046
        %v1137 = vpack.c.bf16 %v1049, %v1048
        %v1138 = vpack.c.bf16 %v1051, %v1050
        %v1139 = vpack.c.bf16 %v1053, %v1052
        %v1140 = vpack.c.bf16 %v1055, %v1054
        %v1141 = vpack.c.bf16 %v1057, %v1056
        %v1142 = vpack.c.bf16 %v1059, %v1058
        %v1143 = vpack.c.bf16 %v1061, %v1060
        %v1144 = vpack.c.bf16 %v1063, %v1062
        %v1145 = vpack.c.bf16 %v1065, %v1064
        %v1146 = vpack.c.bf16 %v1067, %v1066
        %v1147 = vpack.c.bf16 %v1069, %v1068
        %v1148 = vpack.c.bf16 %v1071, %v1070
        %v1149 = vpack.c.bf16 %v1073, %v1072
        %v1150 = vpack.c.bf16 %v1075, %v1074
        %v1151 = vpack.c.bf16 %v1077, %v1076
        %v1152 = vpack.c.bf16 %v1079, %v1078
        %v1153 = vpack.c.bf16 %v1081, %v1080
        %v1154 = vpack.c.bf16 %v1083, %v1082
        %v1155 = vpack.c.bf16 %v1085, %v1084
        %v1156 = vpack.c.bf16 %v1087, %v1086
        %v1157 = vpack.c.bf16 %v1089, %v1088
        %v1158 = vpack.c.bf16 %v1091, %v1090
        %v1159 = vpack.c.bf16 %v1093, %v1092
        %v1160 = vpack.c.bf16 %v1095, %v1094
        %v1161 = vpack.c.bf16 %v1097, %v1096
        %v1162 = vld [vmem:[%s2] sm:$0xff]
        %v1163 = vld [vmem:[%s2 + $0x8] sm:$0xff]
        %v1164 = vld [vmem:[%s2 + $0x10] sm:$0xff]
        %v1165 = vld [vmem:[%s2 + $0x18] sm:$0xff]
        %v1166 = vld [vmem:[%s2 + $0x20] sm:$0xff]
        %v1167 = vld [vmem:[%s2 + $0x28] sm:$0xff]
        %v1168 = vld [vmem:[%s2 + $0x30] sm:$0xff]
        %v1169 = vld [vmem:[%s2 + $0x38] sm:$0xff]
        %v1170 = vld [vmem:[%s2 + $0x40] sm:$0xff]
        %v1171 = vld [vmem:[%s2 + $0x48] sm:$0xff]
        %v1172 = vld [vmem:[%s2 + $0x50] sm:$0xff]
        %v1173 = vld [vmem:[%s2 + $0x58] sm:$0xff]
        %v1174 = vld [vmem:[%s2 + $0x60] sm:$0xff]
        %v1175 = vld [vmem:[%s2 + $0x68] sm:$0xff]
        %v1176 = vld [vmem:[%s2 + $0x70] sm:$0xff]
        %v1177 = vld [vmem:[%s2 + $0x78] sm:$0xff]
        %v1178 = vld [vmem:[%s3] sm:$0x3]
        %v1180 = vlaneseq
        %v1181 = vshrl.u32 %v1180, 7
        %v1182 = vsub.s32 0, %v1181
        %v1183 = vrot.slane %v1178, %v1182
        %v1184 = vlaneseq
        %v1185 = vshrl.u32 %v1184, 7
        %v1186 = vsub.s32 1, %v1185
        %v1187 = vrot.slane %v1178, %v1186
        %v1206 = vunpack.c.l.b16 %v1162
        %v1207 = vunpack.c.h.b16 %v1162
        %v1208 = vunpack.c.l.b16 %v1163
        %v1209 = vunpack.c.h.b16 %v1163
        %v1210 = vunpack.c.l.b16 %v1164
        %v1211 = vunpack.c.h.b16 %v1164
        %v1212 = vunpack.c.l.b16 %v1165
        %v1213 = vunpack.c.h.b16 %v1165
        %v1214 = vunpack.c.l.b16 %v1166
        %v1215 = vunpack.c.h.b16 %v1166
        %v1216 = vunpack.c.l.b16 %v1167
        %v1217 = vunpack.c.h.b16 %v1167
        %v1218 = vunpack.c.l.b16 %v1168
        %v1219 = vunpack.c.h.b16 %v1168
        %v1220 = vunpack.c.l.b16 %v1169
        %v1221 = vunpack.c.h.b16 %v1169
        %v1222 = vunpack.c.l.b16 %v1170
        %v1223 = vunpack.c.h.b16 %v1170
        %v1224 = vunpack.c.l.b16 %v1171
        %v1225 = vunpack.c.h.b16 %v1171
        %v1226 = vunpack.c.l.b16 %v1172
        %v1227 = vunpack.c.h.b16 %v1172
        %v1228 = vunpack.c.l.b16 %v1173
        %v1229 = vunpack.c.h.b16 %v1173
        %v1230 = vunpack.c.l.b16 %v1174
        %v1231 = vunpack.c.h.b16 %v1174
        %v1232 = vunpack.c.l.b16 %v1175
        %v1233 = vunpack.c.h.b16 %v1175
        %v1234 = vunpack.c.l.b16 %v1176
        %v1235 = vunpack.c.h.b16 %v1176
        %v1236 = vunpack.c.l.b16 %v1177
        %v1237 = vunpack.c.h.b16 %v1177
        %v1238 = vpack.c.b16 %v1208, %v1206
        %v1239 = vpack.c.b16 %v1209, %v1207
        %v1240 = vpack.c.b16 %v1212, %v1210
        %v1241 = vpack.c.b16 %v1213, %v1211
        %v1242 = vpack.c.b16 %v1216, %v1214
        %v1243 = vpack.c.b16 %v1217, %v1215
        %v1244 = vpack.c.b16 %v1220, %v1218
        %v1245 = vpack.c.b16 %v1221, %v1219
        %v1246 = vpack.c.b16 %v1224, %v1222
        %v1247 = vpack.c.b16 %v1225, %v1223
        %v1248 = vpack.c.b16 %v1228, %v1226
        %v1249 = vpack.c.b16 %v1229, %v1227
        %v1250 = vpack.c.b16 %v1232, %v1230
        %v1251 = vpack.c.b16 %v1233, %v1231
        %v1252 = vpack.c.b16 %v1236, %v1234
        %v1253 = vpack.c.b16 %v1237, %v1235
        %1270 = vmatprep.subr.bf16.mxu0 %v1239
        %1271 = vmatpush1.bf16.msra.mxu0 %v1238
        %1272 = vmatprep.subr.bf16.mxu0 %v1241
        %1273 = vmatpush1.bf16.msra.mxu0 %v1240
        %1274 = vmatprep.subr.bf16.mxu0 %v1243
        %1275 = vmatpush1.bf16.msra.mxu0 %v1242
        %1276 = vmatprep.subr.bf16.mxu0 %v1245
        %1277 = vmatpush1.bf16.msra.mxu0 %v1244
        %1278 = vmatprep.subr.bf16.mxu0 %v1247
        %1279 = vmatpush1.bf16.msra.mxu0 %v1246
        %1280 = vmatprep.subr.bf16.mxu0 %v1249
        %1281 = vmatpush1.bf16.msra.mxu0 %v1248
        %1282 = vmatprep.subr.bf16.mxu0 %v1251
        %1283 = vmatpush1.bf16.msra.mxu0 %v1250
        %1284 = vmatprep.subr.bf16.mxu0 %v1253
        %1285 = vmatpush1.bf16.msra.mxu0 %v1252
        %1286 = vmatprep.subr.bf16.mxu0 0
        %1287 = vmatpush1.bf16.msra.mxu0 0
        %1288 = vmatprep.subr.bf16.mxu0 0
        %1289 = vmatpush1.bf16.msra.mxu0 0
        %1290 = vmatprep.subr.bf16.mxu0 0
        %1291 = vmatpush1.bf16.msra.mxu0 0
        %1292 = vmatprep.subr.bf16.mxu0 0
        %1293 = vmatpush1.bf16.msra.mxu0 0
        %1294 = vmatprep.subr.bf16.mxu0 0
        %1295 = vmatpush1.bf16.msra.mxu0 0
        %1296 = vmatprep.subr.bf16.mxu0 0
        %1297 = vmatpush1.bf16.msra.mxu0 0
        %1298 = vmatprep.subr.bf16.mxu0 0
        %1299 = vmatpush1.bf16.msra.mxu0 0
        %1300 = vmatprep.subr.bf16.mxu0 0
        %1301 = vmatpush1.bf16.msra.mxu0 0
        %1302 = vmatprep.mubr.bf16.mxu0 0
        %1303 = vmatmul.mubr.bf16.gmra.mrb[0].mxu0 %v1098
        %v1304 = vpop.f32.mrb[0].mxu0
        %v1305 = vadd.f32 %v1183, %v1304
        %v1306 = vpop.f32.mrb[0].mxu0
        %v1307 = vadd.f32 %v1187, %v1306
        %v1308 = vpop.f32.mrb[0].mxu0
        %v1309 = vadd.f32 %v1183, %v1308
        %v1310 = vpop.f32.mrb[0].mxu0
        %v1311 = vadd.f32 %v1187, %v1310
        %1312 = vmatprep.mubr.bf16.mxu0 0
        %1313 = vmatmul.mubr.bf16.gmra.mrb[0].mxu0 %v1099
        %v1314 = vpop.f32.mrb[0].mxu0
        %v1315 = vadd.f32 %v1183, %v1314
        %v1316 = vpop.f32.mrb[0].mxu0
        %v1317 = vadd.f32 %v1187, %v1316
        %v1318 = vpop.f32.mrb[0].mxu0
        %v1319 = vadd.f32 %v1183, %v1318
        %v1320 = vpop.f32.mrb[0].mxu0
        %v1321 = vadd.f32 %v1187, %v1320
        %1322 = vmatprep.mubr.bf16.mxu0 0
        %1323 = vmatmul.mubr.bf16.gmra.mrb[0].mxu0 %v1100
        %v1324 = vpop.f32.mrb[0].mxu0
        %v1325 = vadd.f32 %v1183, %v1324
        %v1326 = vpop.f32.mrb[0].mxu0
        %v1327 = vadd.f32 %v1187, %v1326
        %v1328 = vpop.f32.mrb[0].mxu0
        %v1329 = vadd.f32 %v1183, %v1328
        %v1330 = vpop.f32.mrb[0].mxu0
        %v1331 = vadd.f32 %v1187, %v1330
        %1332 = vmatprep.mubr.bf16.mxu0 0
        %1333 = vmatmul.mubr.bf16.gmra.mrb[0].mxu0 %v1101
        %v1334 = vpop.f32.mrb[0].mxu0
        %v1335 = vadd.f32 %v1183, %v1334
        %v1336 = vpop.f32.mrb[0].mxu0
        %v1337 = vadd.f32 %v1187, %v1336
        %v1338 = vpop.f32.mrb[0].mxu0
        %v1339 = vadd.f32 %v1183, %v1338
        %v1340 = vpop.f32.mrb[0].mxu0
        %v1341 = vadd.f32 %v1187, %v1340
        %1342 = vmatprep.mubr.bf16.mxu0 0
        %1343 = vmatmul.mubr.bf16.gmra.mrb[0].mxu0 %v1102
        %v1344 = vpop.f32.mrb[0].mxu0
        %v1345 = vadd.f32 %v1183, %v1344
        %v1346 = vpop.f32.mrb[0].mxu0
        %v1347 = vadd.f32 %v1187, %v1346
        %v1348 = vpop.f32.mrb[0].mxu0
        %v1349 = vadd.f32 %v1183, %v1348
        %v1350 = vpop.f32.mrb[0].mxu0
        %v1351 = vadd.f32 %v1187, %v1350
        %1352 = vmatprep.mubr.bf16.mxu0 0
        %1353 = vmatmul.mubr.bf16.gmra.mrb[0].mxu0 %v1103
        %v1354 = vpop.f32.mrb[0].mxu0
        %v1355 = vadd.f32 %v1183, %v1354
        %v1356 = vpop.f32.mrb[0].mxu0
        %v1357 = vadd.f32 %v1187, %v1356
        %v1358 = vpop.f32.mrb[0].mxu0
        %v1359 = vadd.f32 %v1183, %v1358
        %v1360 = vpop.f32.mrb[0].mxu0
        %v1361 = vadd.f32 %v1187, %v1360
        %1362 = vmatprep.mubr.bf16.mxu0 0
        %1363 = vmatmul.mubr.bf16.gmra.mrb[0].mxu0 %v1104
        %v1364 = vpop.f32.mrb[0].mxu0
        %v1365 = vadd.f32 %v1183, %v1364
        %v1366 = vpop.f32.mrb[0].mxu0
        %v1367 = vadd.f32 %v1187, %v1366
        %v1368 = vpop.f32.mrb[0].mxu0
        %v1369 = vadd.f32 %v1183, %v1368
        %v1370 = vpop.f32.mrb[0].mxu0
        %v1371 = vadd.f32 %v1187, %v1370
        %1372 = vmatprep.mubr.bf16.mxu0 0
        %1373 = vmatmul.mubr.bf16.gmra.mrb[0].mxu0 %v1105
        %v1374 = vpop.f32.mrb[0].mxu0
        %v1375 = vadd.f32 %v1183, %v1374
        %v1376 = vpop.f32.mrb[0].mxu0
        %v1377 = vadd.f32 %v1187, %v1376
        %v1378 = vpop.f32.mrb[0].mxu0
        %v1379 = vadd.f32 %v1183, %v1378
        %v1380 = vpop.f32.mrb[0].mxu0
        %v1381 = vadd.f32 %v1187, %v1380
        %1382 = vmatprep.mubr.bf16.mxu0 0
        %1383 = vmatmul.mubr.bf16.gmra.mrb[0].mxu0 %v1106
        %v1384 = vpop.f32.mrb[0].mxu0
        %v1385 = vadd.f32 %v1183, %v1384
        %v1386 = vpop.f32.mrb[0].mxu0
        %v1387 = vadd.f32 %v1187, %v1386
        %v1388 = vpop.f32.mrb[0].mxu0
        %v1389 = vadd.f32 %v1183, %v1388
        %v1390 = vpop.f32.mrb[0].mxu0
        %v1391 = vadd.f32 %v1187, %v1390
        %1392 = vmatprep.mubr.bf16.mxu0 0
        %1393 = vmatmul.mubr.bf16.gmra.mrb[0].mxu0 %v1107
        %v1394 = vpop.f32.mrb[0].mxu0
        %v1395 = vadd.f32 %v1183, %v1394
        %v1396 = vpop.f32.mrb[0].mxu0
        %v1397 = vadd.f32 %v1187, %v1396
        %v1398 = vpop.f32.mrb[0].mxu0
        %v1399 = vadd.f32 %v1183, %v1398
        %v1400 = vpop.f32.mrb[0].mxu0
        %v1401 = vadd.f32 %v1187, %v1400
        %1402 = vmatprep.mubr.bf16.mxu0 0
        %1403 = vmatmul.mubr.bf16.gmra.mrb[0].mxu0 %v1108
        %v1404 = vpop.f32.mrb[0].mxu0
        %v1405 = vadd.f32 %v1183, %v1404
        %v1406 = vpop.f32.mrb[0].mxu0
        %v1407 = vadd.f32 %v1187, %v1406
        %v1408 = vpop.f32.mrb[0].mxu0
        %v1409 = vadd.f32 %v1183, %v1408
        %v1410 = vpop.f32.mrb[0].mxu0
        %v1411 = vadd.f32 %v1187, %v1410
        %1412 = vmatprep.mubr.bf16.mxu0 0
        %1413 = vmatmul.mubr.bf16.gmra.mrb[0].mxu0 %v1109
        %v1414 = vpop.f32.mrb[0].mxu0
        %v1415 = vadd.f32 %v1183, %v1414
        %v1416 = vpop.f32.mrb[0].mxu0
        %v1417 = vadd.f32 %v1187, %v1416
        %v1418 = vpop.f32.mrb[0].mxu0
        %v1419 = vadd.f32 %v1183, %v1418
        %v1420 = vpop.f32.mrb[0].mxu0
        %v1421 = vadd.f32 %v1187, %v1420
        %1422 = vmatprep.mubr.bf16.mxu0 0
        %1423 = vmatmul.mubr.bf16.gmra.mrb[0].mxu0 %v1110
        %v1424 = vpop.f32.mrb[0].mxu0
        %v1425 = vadd.f32 %v1183, %v1424
        %v1426 = vpop.f32.mrb[0].mxu0
        %v1427 = vadd.f32 %v1187, %v1426
        %v1428 = vpop.f32.mrb[0].mxu0
        %v1429 = vadd.f32 %v1183, %v1428
        %v1430 = vpop.f32.mrb[0].mxu0
        %v1431 = vadd.f32 %v1187, %v1430
        %1432 = vmatprep.mubr.bf16.mxu0 0
        %1433 = vmatmul.mubr.bf16.gmra.mrb[0].mxu0 %v1111
        %v1434 = vpop.f32.mrb[0].mxu0
        %v1435 = vadd.f32 %v1183, %v1434
        %v1436 = vpop.f32.mrb[0].mxu0
        %v1437 = vadd.f32 %v1187, %v1436
        %v1438 = vpop.f32.mrb[0].mxu0
        %v1439 = vadd.f32 %v1183, %v1438
        %v1440 = vpop.f32.mrb[0].mxu0
        %v1441 = vadd.f32 %v1187, %v1440
        %1442 = vmatprep.mubr.bf16.mxu0 0
        %1443 = vmatmul.mubr.bf16.gmra.mrb[0].mxu0 %v1112
        %v1444 = vpop.f32.mrb[0].mxu0
        %v1445 = vadd.f32 %v1183, %v1444
        %v1446 = vpop.f32.mrb[0].mxu0
        %v1447 = vadd.f32 %v1187, %v1446
        %v1448 = vpop.f32.mrb[0].mxu0
        %v1449 = vadd.f32 %v1183, %v1448
        %v1450 = vpop.f32.mrb[0].mxu0
        %v1451 = vadd.f32 %v1187, %v1450
        %1452 = vmatprep.mubr.bf16.mxu0 0
        %1453 = vmatmul.mubr.bf16.gmra.mrb[0].mxu0 %v1113
        %v1454 = vpop.f32.mrb[0].mxu0
        %v1455 = vadd.f32 %v1183, %v1454
        %v1456 = vpop.f32.mrb[0].mxu0
        %v1457 = vadd.f32 %v1187, %v1456
        %v1458 = vpop.f32.mrb[0].mxu0
        %v1459 = vadd.f32 %v1183, %v1458
        %v1460 = vpop.f32.mrb[0].mxu0
        %v1461 = vadd.f32 %v1187, %v1460
        %1462 = vmatprep.mubr.bf16.mxu0 0
        %1463 = vmatmul.mubr.bf16.gmra.mrb[0].mxu0 %v1114
        %v1464 = vpop.f32.mrb[0].mxu0
        %v1465 = vadd.f32 %v1183, %v1464
        %v1466 = vpop.f32.mrb[0].mxu0
        %v1467 = vadd.f32 %v1187, %v1466
        %v1468 = vpop.f32.mrb[0].mxu0
        %v1469 = vadd.f32 %v1183, %v1468
        %v1470 = vpop.f32.mrb[0].mxu0
        %v1471 = vadd.f32 %v1187, %v1470
        %1472 = vmatprep.mubr.bf16.mxu0 0
        %1473 = vmatmul.mubr.bf16.gmra.mrb[0].mxu0 %v1115
        %v1474 = vpop.f32.mrb[0].mxu0
        %v1475 = vadd.f32 %v1183, %v1474
        %v1476 = vpop.f32.mrb[0].mxu0
        %v1477 = vadd.f32 %v1187, %v1476
        %v1478 = vpop.f32.mrb[0].mxu0
        %v1479 = vadd.f32 %v1183, %v1478
        %v1480 = vpop.f32.mrb[0].mxu0
        %v1481 = vadd.f32 %v1187, %v1480
        %1482 = vmatprep.mubr.bf16.mxu0 0
        %1483 = vmatmul.mubr.bf16.gmra.mrb[0].mxu0 %v1116
        %v1484 = vpop.f32.mrb[0].mxu0
        %v1485 = vadd.f32 %v1183, %v1484
        %v1486 = vpop.f32.mrb[0].mxu0
        %v1487 = vadd.f32 %v1187, %v1486
        %v1488 = vpop.f32.mrb[0].mxu0
        %v1489 = vadd.f32 %v1183, %v1488
        %v1490 = vpop.f32.mrb[0].mxu0
        %v1491 = vadd.f32 %v1187, %v1490
        %1492 = vmatprep.mubr.bf16.mxu0 0
        %1493 = vmatmul.mubr.bf16.gmra.mrb[0].mxu0 %v1117
        %v1494 = vpop.f32.mrb[0].mxu0
        %v1495 = vadd.f32 %v1183, %v1494
        %v1496 = vpop.f32.mrb[0].mxu0
        %v1497 = vadd.f32 %v1187, %v1496
        %v1498 = vpop.f32.mrb[0].mxu0
        %v1499 = vadd.f32 %v1183, %v1498
        %v1500 = vpop.f32.mrb[0].mxu0
        %v1501 = vadd.f32 %v1187, %v1500
        %1502 = vmatprep.mubr.bf16.mxu0 0
        %1503 = vmatmul.mubr.bf16.gmra.mrb[0].mxu0 %v1118
        %v1504 = vpop.f32.mrb[0].mxu0
        %v1505 = vadd.f32 %v1183, %v1504
        %v1506 = vpop.f32.mrb[0].mxu0
        %v1507 = vadd.f32 %v1187, %v1506
        %v1508 = vpop.f32.mrb[0].mxu0
        %v1509 = vadd.f32 %v1183, %v1508
        %v1510 = vpop.f32.mrb[0].mxu0
        %v1511 = vadd.f32 %v1187, %v1510
        %1512 = vmatprep.mubr.bf16.mxu0 0
        %1513 = vmatmul.mubr.bf16.gmra.mrb[0].mxu0 %v1119
        %v1514 = vpop.f32.mrb[0].mxu0
        %v1515 = vadd.f32 %v1183, %v1514
        %v1516 = vpop.f32.mrb[0].mxu0
        %v1517 = vadd.f32 %v1187, %v1516
        %v1518 = vpop.f32.mrb[0].mxu0
        %v1519 = vadd.f32 %v1183, %v1518
        %v1520 = vpop.f32.mrb[0].mxu0
        %v1521 = vadd.f32 %v1187, %v1520
        %1522 = vmatprep.mubr.bf16.mxu0 0
        %1523 = vmatmul.mubr.bf16.gmra.mrb[0].mxu0 %v1120
        %v1524 = vpop.f32.mrb[0].mxu0
        %v1525 = vadd.f32 %v1183, %v1524
        %v1526 = vpop.f32.mrb[0].mxu0
        %v1527 = vadd.f32 %v1187, %v1526
        %v1528 = vpop.f32.mrb[0].mxu0
        %v1529 = vadd.f32 %v1183, %v1528
        %v1530 = vpop.f32.mrb[0].mxu0
        %v1531 = vadd.f32 %v1187, %v1530
        %1532 = vmatprep.mubr.bf16.mxu0 0
        %1533 = vmatmul.mubr.bf16.gmra.mrb[0].mxu0 %v1121
        %v1534 = vpop.f32.mrb[0].mxu0
        %v1535 = vadd.f32 %v1183, %v1534
        %v1536 = vpop.f32.mrb[0].mxu0
        %v1537 = vadd.f32 %v1187, %v1536
        %v1538 = vpop.f32.mrb[0].mxu0
        %v1539 = vadd.f32 %v1183, %v1538
        %v1540 = vpop.f32.mrb[0].mxu0
        %v1541 = vadd.f32 %v1187, %v1540
        %1542 = vmatprep.mubr.bf16.mxu0 0
        %1543 = vmatmul.mubr.bf16.gmra.mrb[0].mxu0 %v1122
        %v1544 = vpop.f32.mrb[0].mxu0
        %v1545 = vadd.f32 %v1183, %v1544
        %v1546 = vpop.f32.mrb[0].mxu0
        %v1547 = vadd.f32 %v1187, %v1546
        %v1548 = vpop.f32.mrb[0].mxu0
        %v1549 = vadd.f32 %v1183, %v1548
        %v1550 = vpop.f32.mrb[0].mxu0
        %v1551 = vadd.f32 %v1187, %v1550
        %1552 = vmatprep.mubr.bf16.mxu0 0
        %1553 = vmatmul.mubr.bf16.gmra.mrb[0].mxu0 %v1123
        %v1554 = vpop.f32.mrb[0].mxu0
        %v1555 = vadd.f32 %v1183, %v1554
        %v1556 = vpop.f32.mrb[0].mxu0
        %v1557 = vadd.f32 %v1187, %v1556
        %v1558 = vpop.f32.mrb[0].mxu0
        %v1559 = vadd.f32 %v1183, %v1558
        %v1560 = vpop.f32.mrb[0].mxu0
        %v1561 = vadd.f32 %v1187, %v1560
        %1562 = vmatprep.mubr.bf16.mxu0 0
        %1563 = vmatmul.mubr.bf16.gmra.mrb[0].mxu0 %v1124
        %v1564 = vpop.f32.mrb[0].mxu0
        %v1565 = vadd.f32 %v1183, %v1564
        %v1566 = vpop.f32.mrb[0].mxu0
        %v1567 = vadd.f32 %v1187, %v1566
        %v1568 = vpop.f32.mrb[0].mxu0
        %v1569 = vadd.f32 %v1183, %v1568
        %v1570 = vpop.f32.mrb[0].mxu0
        %v1571 = vadd.f32 %v1187, %v1570
        %1572 = vmatprep.mubr.bf16.mxu0 0
        %1573 = vmatmul.mubr.bf16.gmra.mrb[0].mxu0 %v1125
        %v1574 = vpop.f32.mrb[0].mxu0
        %v1575 = vadd.f32 %v1183, %v1574
        %v1576 = vpop.f32.mrb[0].mxu0
        %v1577 = vadd.f32 %v1187, %v1576
        %v1578 = vpop.f32.mrb[0].mxu0
        %v1579 = vadd.f32 %v1183, %v1578
        %v1580 = vpop.f32.mrb[0].mxu0
        %v1581 = vadd.f32 %v1187, %v1580
        %1582 = vmatprep.mubr.bf16.mxu0 0
        %1583 = vmatmul.mubr.bf16.gmra.mrb[0].mxu0 %v1126
        %v1584 = vpop.f32.mrb[0].mxu0
        %v1585 = vadd.f32 %v1183, %v1584
        %v1586 = vpop.f32.mrb[0].mxu0
        %v1587 = vadd.f32 %v1187, %v1586
        %v1588 = vpop.f32.mrb[0].mxu0
        %v1589 = vadd.f32 %v1183, %v1588
        %v1590 = vpop.f32.mrb[0].mxu0
        %v1591 = vadd.f32 %v1187, %v1590
        %1592 = vmatprep.mubr.bf16.mxu0 0
        %1593 = vmatmul.mubr.bf16.gmra.mrb[0].mxu0 %v1127
        %v1594 = vpop.f32.mrb[0].mxu0
        %v1595 = vadd.f32 %v1183, %v1594
        %v1596 = vpop.f32.mrb[0].mxu0
        %v1597 = vadd.f32 %v1187, %v1596
        %v1598 = vpop.f32.mrb[0].mxu0
        %v1599 = vadd.f32 %v1183, %v1598
        %v1600 = vpop.f32.mrb[0].mxu0
        %v1601 = vadd.f32 %v1187, %v1600
        %1602 = vmatprep.mubr.bf16.mxu0 0
        %1603 = vmatmul.mubr.bf16.gmra.mrb[0].mxu0 %v1128
        %v1604 = vpop.f32.mrb[0].mxu0
        %v1605 = vadd.f32 %v1183, %v1604
        %v1606 = vpop.f32.mrb[0].mxu0
        %v1607 = vadd.f32 %v1187, %v1606
        %v1608 = vpop.f32.mrb[0].mxu0
        %v1609 = vadd.f32 %v1183, %v1608
        %v1610 = vpop.f32.mrb[0].mxu0
        %v1611 = vadd.f32 %v1187, %v1610
        %1612 = vmatprep.mubr.bf16.mxu0 0
        %1613 = vmatmul.mubr.bf16.gmra.mrb[0].mxu0 %v1129
        %v1614 = vpop.f32.mrb[0].mxu0
        %v1615 = vadd.f32 %v1183, %v1614
        %v1616 = vpop.f32.mrb[0].mxu0
        %v1617 = vadd.f32 %v1187, %v1616
        %v1618 = vpop.f32.mrb[0].mxu0
        %v1619 = vadd.f32 %v1183, %v1618
        %v1620 = vpop.f32.mrb[0].mxu0
        %v1621 = vadd.f32 %v1187, %v1620
        %1622 = vmatprep.mubr.bf16.mxu0 0
        %1623 = vmatmul.mubr.bf16.gmra.mrb[0].mxu0 %v1130
        %v1624 = vpop.f32.mrb[0].mxu0
        %v1625 = vadd.f32 %v1183, %v1624
        %v1626 = vpop.f32.mrb[0].mxu0
        %v1627 = vadd.f32 %v1187, %v1626
        %v1628 = vpop.f32.mrb[0].mxu0
        %v1629 = vadd.f32 %v1183, %v1628
        %v1630 = vpop.f32.mrb[0].mxu0
        %v1631 = vadd.f32 %v1187, %v1630
        %1632 = vmatprep.mubr.bf16.mxu0 0
        %1633 = vmatmul.mubr.bf16.gmra.mrb[0].mxu0 %v1131
        %v1634 = vpop.f32.mrb[0].mxu0
        %v1635 = vadd.f32 %v1183, %v1634
        %v1636 = vpop.f32.mrb[0].mxu0
        %v1637 = vadd.f32 %v1187, %v1636
        %v1638 = vpop.f32.mrb[0].mxu0
        %v1639 = vadd.f32 %v1183, %v1638
        %v1640 = vpop.f32.mrb[0].mxu0
        %v1641 = vadd.f32 %v1187, %v1640
        %1642 = vmatprep.mubr.bf16.mxu0 0
        %1643 = vmatmul.mubr.bf16.gmra.mrb[0].mxu0 %v1132
        %v1644 = vpop.f32.mrb[0].mxu0
        %v1645 = vadd.f32 %v1183, %v1644
        %v1646 = vpop.f32.mrb[0].mxu0
        %v1647 = vadd.f32 %v1187, %v1646
        %v1648 = vpop.f32.mrb[0].mxu0
        %v1649 = vadd.f32 %v1183, %v1648
        %v1650 = vpop.f32.mrb[0].mxu0
        %v1651 = vadd.f32 %v1187, %v1650
        %1652 = vmatprep.mubr.bf16.mxu0 0
        %1653 = vmatmul.mubr.bf16.gmra.mrb[0].mxu0 %v1133
        %v1654 = vpop.f32.mrb[0].mxu0
        %v1655 = vadd.f32 %v1183, %v1654
        %v1656 = vpop.f32.mrb[0].mxu0
        %v1657 = vadd.f32 %v1187, %v1656
        %v1658 = vpop.f32.mrb[0].mxu0
        %v1659 = vadd.f32 %v1183, %v1658
        %v1660 = vpop.f32.mrb[0].mxu0
        %v1661 = vadd.f32 %v1187, %v1660
        %1662 = vmatprep.mubr.bf16.mxu0 0
        %1663 = vmatmul.mubr.bf16.gmra.mrb[0].mxu0 %v1134
        %v1664 = vpop.f32.mrb[0].mxu0
        %v1665 = vadd.f32 %v1183, %v1664
        %v1666 = vpop.f32.mrb[0].mxu0
        %v1667 = vadd.f32 %v1187, %v1666
        %v1668 = vpop.f32.mrb[0].mxu0
        %v1669 = vadd.f32 %v1183, %v1668
        %v1670 = vpop.f32.mrb[0].mxu0
        %v1671 = vadd.f32 %v1187, %v1670
        %1672 = vmatprep.mubr.bf16.mxu0 0
        %1673 = vmatmul.mubr.bf16.gmra.mrb[0].mxu0 %v1135
        %v1674 = vpop.f32.mrb[0].mxu0
        %v1675 = vadd.f32 %v1183, %v1674
        %v1676 = vpop.f32.mrb[0].mxu0
        %v1677 = vadd.f32 %v1187, %v1676
        %v1678 = vpop.f32.mrb[0].mxu0
        %v1679 = vadd.f32 %v1183, %v1678
        %v1680 = vpop.f32.mrb[0].mxu0
        %v1681 = vadd.f32 %v1187, %v1680
        %1682 = vmatprep.mubr.bf16.mxu0 0
        %1683 = vmatmul.mubr.bf16.gmra.mrb[0].mxu0 %v1136
        %v1684 = vpop.f32.mrb[0].mxu0
        %v1685 = vadd.f32 %v1183, %v1684
        %v1686 = vpop.f32.mrb[0].mxu0
        %v1687 = vadd.f32 %v1187, %v1686
        %v1688 = vpop.f32.mrb[0].mxu0
        %v1689 = vadd.f32 %v1183, %v1688
        %v1690 = vpop.f32.mrb[0].mxu0
        %v1691 = vadd.f32 %v1187, %v1690
        %1692 = vmatprep.mubr.bf16.mxu0 0
        %1693 = vmatmul.mubr.bf16.gmra.mrb[0].mxu0 %v1137
        %v1694 = vpop.f32.mrb[0].mxu0
        %v1695 = vadd.f32 %v1183, %v1694
        %v1696 = vpop.f32.mrb[0].mxu0
        %v1697 = vadd.f32 %v1187, %v1696
        %v1698 = vpop.f32.mrb[0].mxu0
        %v1699 = vadd.f32 %v1183, %v1698
        %v1700 = vpop.f32.mrb[0].mxu0
        %v1701 = vadd.f32 %v1187, %v1700
        %1702 = vmatprep.mubr.bf16.mxu0 0
        %1703 = vmatmul.mubr.bf16.gmra.mrb[0].mxu0 %v1138
        %v1704 = vpop.f32.mrb[0].mxu0
        %v1705 = vadd.f32 %v1183, %v1704
        %v1706 = vpop.f32.mrb[0].mxu0
        %v1707 = vadd.f32 %v1187, %v1706
        %v1708 = vpop.f32.mrb[0].mxu0
        %v1709 = vadd.f32 %v1183, %v1708
        %v1710 = vpop.f32.mrb[0].mxu0
        %v1711 = vadd.f32 %v1187, %v1710
        %1712 = vmatprep.mubr.bf16.mxu0 0
        %1713 = vmatmul.mubr.bf16.gmra.mrb[0].mxu0 %v1139
        %v1714 = vpop.f32.mrb[0].mxu0
        %v1715 = vadd.f32 %v1183, %v1714
        %v1716 = vpop.f32.mrb[0].mxu0
        %v1717 = vadd.f32 %v1187, %v1716
        %v1718 = vpop.f32.mrb[0].mxu0
        %v1719 = vadd.f32 %v1183, %v1718
        %v1720 = vpop.f32.mrb[0].mxu0
        %v1721 = vadd.f32 %v1187, %v1720
        %1722 = vmatprep.mubr.bf16.mxu0 0
        %1723 = vmatmul.mubr.bf16.gmra.mrb[0].mxu0 %v1140
        %v1724 = vpop.f32.mrb[0].mxu0
        %v1725 = vadd.f32 %v1183, %v1724
        %v1726 = vpop.f32.mrb[0].mxu0
        %v1727 = vadd.f32 %v1187, %v1726
        %v1728 = vpop.f32.mrb[0].mxu0
        %v1729 = vadd.f32 %v1183, %v1728
        %v1730 = vpop.f32.mrb[0].mxu0
        %v1731 = vadd.f32 %v1187, %v1730
        %1732 = vmatprep.mubr.bf16.mxu0 0
        %1733 = vmatmul.mubr.bf16.gmra.mrb[0].mxu0 %v1141
        %v1734 = vpop.f32.mrb[0].mxu0
        %v1735 = vadd.f32 %v1183, %v1734
        %v1736 = vpop.f32.mrb[0].mxu0
        %v1737 = vadd.f32 %v1187, %v1736
        %v1738 = vpop.f32.mrb[0].mxu0
        %v1739 = vadd.f32 %v1183, %v1738
        %v1740 = vpop.f32.mrb[0].mxu0
        %v1741 = vadd.f32 %v1187, %v1740
        %1742 = vmatprep.mubr.bf16.mxu0 0
        %1743 = vmatmul.mubr.bf16.gmra.mrb[0].mxu0 %v1142
        %v1744 = vpop.f32.mrb[0].mxu0
        %v1745 = vadd.f32 %v1183, %v1744
        %v1746 = vpop.f32.mrb[0].mxu0
        %v1747 = vadd.f32 %v1187, %v1746
        %v1748 = vpop.f32.mrb[0].mxu0
        %v1749 = vadd.f32 %v1183, %v1748
        %v1750 = vpop.f32.mrb[0].mxu0
        %v1751 = vadd.f32 %v1187, %v1750
        %1752 = vmatprep.mubr.bf16.mxu0 0
        %1753 = vmatmul.mubr.bf16.gmra.mrb[0].mxu0 %v1143
        %v1754 = vpop.f32.mrb[0].mxu0
        %v1755 = vadd.f32 %v1183, %v1754
        %v1756 = vpop.f32.mrb[0].mxu0
        %v1757 = vadd.f32 %v1187, %v1756
        %v1758 = vpop.f32.mrb[0].mxu0
        %v1759 = vadd.f32 %v1183, %v1758
        %v1760 = vpop.f32.mrb[0].mxu0
        %v1761 = vadd.f32 %v1187, %v1760
        %1762 = vmatprep.mubr.bf16.mxu0 0
        %1763 = vmatmul.mubr.bf16.gmra.mrb[0].mxu0 %v1144
        %v1764 = vpop.f32.mrb[0].mxu0
        %v1765 = vadd.f32 %v1183, %v1764
        %v1766 = vpop.f32.mrb[0].mxu0
        %v1767 = vadd.f32 %v1187, %v1766
        %v1768 = vpop.f32.mrb[0].mxu0
        %v1769 = vadd.f32 %v1183, %v1768
        %v1770 = vpop.f32.mrb[0].mxu0
        %v1771 = vadd.f32 %v1187, %v1770
        %1772 = vmatprep.mubr.bf16.mxu0 0
        %1773 = vmatmul.mubr.bf16.gmra.mrb[0].mxu0 %v1145
        %v1774 = vpop.f32.mrb[0].mxu0
        %v1775 = vadd.f32 %v1183, %v1774
        %v1776 = vpop.f32.mrb[0].mxu0
        %v1777 = vadd.f32 %v1187, %v1776
        %v1778 = vpop.f32.mrb[0].mxu0
        %v1779 = vadd.f32 %v1183, %v1778
        %v1780 = vpop.f32.mrb[0].mxu0
        %v1781 = vadd.f32 %v1187, %v1780
        %1782 = vmatprep.mubr.bf16.mxu0 0
        %1783 = vmatmul.mubr.bf16.gmra.mrb[0].mxu0 %v1146
        %v1784 = vpop.f32.mrb[0].mxu0
        %v1785 = vadd.f32 %v1183, %v1784
        %v1786 = vpop.f32.mrb[0].mxu0
        %v1787 = vadd.f32 %v1187, %v1786
        %v1788 = vpop.f32.mrb[0].mxu0
        %v1789 = vadd.f32 %v1183, %v1788
        %v1790 = vpop.f32.mrb[0].mxu0
        %v1791 = vadd.f32 %v1187, %v1790
        %1792 = vmatprep.mubr.bf16.mxu0 0
        %1793 = vmatmul.mubr.bf16.gmra.mrb[0].mxu0 %v1147
        %v1794 = vpop.f32.mrb[0].mxu0
        %v1795 = vadd.f32 %v1183, %v1794
        %v1796 = vpop.f32.mrb[0].mxu0
        %v1797 = vadd.f32 %v1187, %v1796
        %v1798 = vpop.f32.mrb[0].mxu0
        %v1799 = vadd.f32 %v1183, %v1798
        %v1800 = vpop.f32.mrb[0].mxu0
        %v1801 = vadd.f32 %v1187, %v1800
        %1802 = vmatprep.mubr.bf16.mxu0 0
        %1803 = vmatmul.mubr.bf16.gmra.mrb[0].mxu0 %v1148
        %v1804 = vpop.f32.mrb[0].mxu0
        %v1805 = vadd.f32 %v1183, %v1804
        %v1806 = vpop.f32.mrb[0].mxu0
        %v1807 = vadd.f32 %v1187, %v1806
        %v1808 = vpop.f32.mrb[0].mxu0
        %v1809 = vadd.f32 %v1183, %v1808
        %v1810 = vpop.f32.mrb[0].mxu0
        %v1811 = vadd.f32 %v1187, %v1810
        %1812 = vmatprep.mubr.bf16.mxu0 0
        %1813 = vmatmul.mubr.bf16.gmra.mrb[0].mxu0 %v1149
        %v1814 = vpop.f32.mrb[0].mxu0
        %v1815 = vadd.f32 %v1183, %v1814
        %v1816 = vpop.f32.mrb[0].mxu0
        %v1817 = vadd.f32 %v1187, %v1816
        %v1818 = vpop.f32.mrb[0].mxu0
        %v1819 = vadd.f32 %v1183, %v1818
        %v1820 = vpop.f32.mrb[0].mxu0
        %v1821 = vadd.f32 %v1187, %v1820
        %1822 = vmatprep.mubr.bf16.mxu0 0
        %1823 = vmatmul.mubr.bf16.gmra.mrb[0].mxu0 %v1150
        %v1824 = vpop.f32.mrb[0].mxu0
        %v1825 = vadd.f32 %v1183, %v1824
        %v1826 = vpop.f32.mrb[0].mxu0
        %v1827 = vadd.f32 %v1187, %v1826
        %v1828 = vpop.f32.mrb[0].mxu0
        %v1829 = vadd.f32 %v1183, %v1828
        %v1830 = vpop.f32.mrb[0].mxu0
        %v1831 = vadd.f32 %v1187, %v1830
        %1832 = vmatprep.mubr.bf16.mxu0 0
        %1833 = vmatmul.mubr.bf16.gmra.mrb[0].mxu0 %v1151
        %v1834 = vpop.f32.mrb[0].mxu0
        %v1835 = vadd.f32 %v1183, %v1834
        %v1836 = vpop.f32.mrb[0].mxu0
        %v1837 = vadd.f32 %v1187, %v1836
        %v1838 = vpop.f32.mrb[0].mxu0
        %v1839 = vadd.f32 %v1183, %v1838
        %v1840 = vpop.f32.mrb[0].mxu0
        %v1841 = vadd.f32 %v1187, %v1840
        %1842 = vmatprep.mubr.bf16.mxu0 0
        %1843 = vmatmul.mubr.bf16.gmra.mrb[0].mxu0 %v1152
        %v1844 = vpop.f32.mrb[0].mxu0
        %v1845 = vadd.f32 %v1183, %v1844
        %v1846 = vpop.f32.mrb[0].mxu0
        %v1847 = vadd.f32 %v1187, %v1846
        %v1848 = vpop.f32.mrb[0].mxu0
        %v1849 = vadd.f32 %v1183, %v1848
        %v1850 = vpop.f32.mrb[0].mxu0
        %v1851 = vadd.f32 %v1187, %v1850
        %1852 = vmatprep.mubr.bf16.mxu0 0
        %1853 = vmatmul.mubr.bf16.gmra.mrb[0].mxu0 %v1153
        %v1854 = vpop.f32.mrb[0].mxu0
        %v1855 = vadd.f32 %v1183, %v1854
        %v1856 = vpop.f32.mrb[0].mxu0
        %v1857 = vadd.f32 %v1187, %v1856
        %v1858 = vpop.f32.mrb[0].mxu0
        %v1859 = vadd.f32 %v1183, %v1858
        %v1860 = vpop.f32.mrb[0].mxu0
        %v1861 = vadd.f32 %v1187, %v1860
        %1862 = vmatprep.mubr.bf16.mxu0 0
        %1863 = vmatmul.mubr.bf16.gmra.mrb[0].mxu0 %v1154
        %v1864 = vpop.f32.mrb[0].mxu0
        %v1865 = vadd.f32 %v1183, %v1864
        %v1866 = vpop.f32.mrb[0].mxu0
        %v1867 = vadd.f32 %v1187, %v1866
        %v1868 = vpop.f32.mrb[0].mxu0
        %v1869 = vadd.f32 %v1183, %v1868
        %v1870 = vpop.f32.mrb[0].mxu0
        %v1871 = vadd.f32 %v1187, %v1870
        %1872 = vmatprep.mubr.bf16.mxu0 0
        %1873 = vmatmul.mubr.bf16.gmra.mrb[0].mxu0 %v1155
        %v1874 = vpop.f32.mrb[0].mxu0
        %v1875 = vadd.f32 %v1183, %v1874
        %v1876 = vpop.f32.mrb[0].mxu0
        %v1877 = vadd.f32 %v1187, %v1876
        %v1878 = vpop.f32.mrb[0].mxu0
        %v1879 = vadd.f32 %v1183, %v1878
        %v1880 = vpop.f32.mrb[0].mxu0
        %v1881 = vadd.f32 %v1187, %v1880
        %1882 = vmatprep.mubr.bf16.mxu0 0
        %1883 = vmatmul.mubr.bf16.gmra.mrb[0].mxu0 %v1156
        %v1884 = vpop.f32.mrb[0].mxu0
        %v1885 = vadd.f32 %v1183, %v1884
        %v1886 = vpop.f32.mrb[0].mxu0
        %v1887 = vadd.f32 %v1187, %v1886
        %v1888 = vpop.f32.mrb[0].mxu0
        %v1889 = vadd.f32 %v1183, %v1888
        %v1890 = vpop.f32.mrb[0].mxu0
        %v1891 = vadd.f32 %v1187, %v1890
        %1892 = vmatprep.mubr.bf16.mxu0 0
        %1893 = vmatmul.mubr.bf16.gmra.mrb[0].mxu0 %v1157
        %v1894 = vpop.f32.mrb[0].mxu0
        %v1895 = vadd.f32 %v1183, %v1894
        %v1896 = vpop.f32.mrb[0].mxu0
        %v1897 = vadd.f32 %v1187, %v1896
        %v1898 = vpop.f32.mrb[0].mxu0
        %v1899 = vadd.f32 %v1183, %v1898
        %v1900 = vpop.f32.mrb[0].mxu0
        %v1901 = vadd.f32 %v1187, %v1900
        %1902 = vmatprep.mubr.bf16.mxu0 0
        %1903 = vmatmul.mubr.bf16.gmra.mrb[0].mxu0 %v1158
        %v1904 = vpop.f32.mrb[0].mxu0
        %v1905 = vadd.f32 %v1183, %v1904
        %v1906 = vpop.f32.mrb[0].mxu0
        %v1907 = vadd.f32 %v1187, %v1906
        %v1908 = vpop.f32.mrb[0].mxu0
        %v1909 = vadd.f32 %v1183, %v1908
        %v1910 = vpop.f32.mrb[0].mxu0
        %v1911 = vadd.f32 %v1187, %v1910
        %1912 = vmatprep.mubr.bf16.mxu0 0
        %1913 = vmatmul.mubr.bf16.gmra.mrb[0].mxu0 %v1159
        %v1914 = vpop.f32.mrb[0].mxu0
        %v1915 = vadd.f32 %v1183, %v1914
        %v1916 = vpop.f32.mrb[0].mxu0
        %v1917 = vadd.f32 %v1187, %v1916
        %v1918 = vpop.f32.mrb[0].mxu0
        %v1919 = vadd.f32 %v1183, %v1918
        %v1920 = vpop.f32.mrb[0].mxu0
        %v1921 = vadd.f32 %v1187, %v1920
        %1922 = vmatprep.mubr.bf16.mxu0 0
        %1923 = vmatmul.mubr.bf16.gmra.mrb[0].mxu0 %v1160
        %v1924 = vpop.f32.mrb[0].mxu0
        %v1925 = vadd.f32 %v1183, %v1924
        %v1926 = vpop.f32.mrb[0].mxu0
        %v1927 = vadd.f32 %v1187, %v1926
        %v1928 = vpop.f32.mrb[0].mxu0
        %v1929 = vadd.f32 %v1183, %v1928
        %v1930 = vpop.f32.mrb[0].mxu0
        %v1931 = vadd.f32 %v1187, %v1930
        %1932 = vmatprep.mubr.bf16.mxu0 0
        %1933 = vmatmul.mubr.bf16.gmra.mrb[0].mxu0 %v1161
        %v1934 = vpop.f32.mrb[0].mxu0
        %v1935 = vadd.f32 %v1183, %v1934
        %v1936 = vpop.f32.mrb[0].mxu0
        %v1937 = vadd.f32 %v1187, %v1936
        %v1938 = vpop.f32.mrb[0].mxu0
        %v1939 = vadd.f32 %v1183, %v1938
        %v1940 = vpop.f32.mrb[0].mxu0
        %v1941 = vadd.f32 %v1187, %v1940
        %1942 = vdwg.mxu0
        %v1943 = vtanh.pop %v1305
        %v1944 = vtanh.pop %v1309
        %v1945 = vtanh.pop %v1315
        %v1946 = vtanh.pop %v1319
        %v1947 = vtanh.pop %v1325
        %v1948 = vtanh.pop %v1329
        %v1949 = vtanh.pop %v1335
        %v1950 = vtanh.pop %v1339
        %v1951 = vtanh.pop %v1345
        %v1952 = vtanh.pop %v1349
        %v1953 = vtanh.pop %v1355
        %v1954 = vtanh.pop %v1359
        %v1955 = vtanh.pop %v1365
        %v1956 = vtanh.pop %v1369
        %v1957 = vtanh.pop %v1375
        %v1958 = vtanh.pop %v1379
        %v1959 = vtanh.pop %v1385
        %v1960 = vtanh.pop %v1389
        %v1961 = vtanh.pop %v1395
        %v1962 = vtanh.pop %v1399
        %v1963 = vtanh.pop %v1405
        %v1964 = vtanh.pop %v1409
        %v1965 = vtanh.pop %v1415
        %v1966 = vtanh.pop %v1419
        %v1967 = vtanh.pop %v1425
        %v1968 = vtanh.pop %v1429
        %v1969 = vtanh.pop %v1435
        %v1970 = vtanh.pop %v1439
        %v1971 = vtanh.pop %v1445
        %v1972 = vtanh.pop %v1449
        %v1973 = vtanh.pop %v1455
        %v1974 = vtanh.pop %v1459
        %v1975 = vtanh.pop %v1465
        %v1976 = vtanh.pop %v1469
        %v1977 = vtanh.pop %v1475
        %v1978 = vtanh.pop %v1479
        %v1979 = vtanh.pop %v1485
        %v1980 = vtanh.pop %v1489
        %v1981 = vtanh.pop %v1495
        %v1982 = vtanh.pop %v1499
        %v1983 = vtanh.pop %v1505
        %v1984 = vtanh.pop %v1509
        %v1985 = vtanh.pop %v1515
        %v1986 = vtanh.pop %v1519
        %v1987 = vtanh.pop %v1525
        %v1988 = vtanh.pop %v1529
        %v1989 = vtanh.pop %v1535
        %v1990 = vtanh.pop %v1539
        %v1991 = vtanh.pop %v1545
        %v1992 = vtanh.pop %v1549
        %v1993 = vtanh.pop %v1555
        %v1994 = vtanh.pop %v1559
        %v1995 = vtanh.pop %v1565
        %v1996 = vtanh.pop %v1569
        %v1997 = vtanh.pop %v1575
        %v1998 = vtanh.pop %v1579
        %v1999 = vtanh.pop %v1585
        %v2000 = vtanh.pop %v1589
        %v2001 = vtanh.pop %v1595
        %v2002 = vtanh.pop %v1599
        %v2003 = vtanh.pop %v1605
        %v2004 = vtanh.pop %v1609
        %v2005 = vtanh.pop %v1615
        %v2006 = vtanh.pop %v1619
        %v2007 = vtanh.pop %v1625
        %v2008 = vtanh.pop %v1629
        %v2009 = vtanh.pop %v1635
        %v2010 = vtanh.pop %v1639
        %v2011 = vtanh.pop %v1645
        %v2012 = vtanh.pop %v1649
        %v2013 = vtanh.pop %v1655
        %v2014 = vtanh.pop %v1659
        %v2015 = vtanh.pop %v1665
        %v2016 = vtanh.pop %v1669
        %v2017 = vtanh.pop %v1675
        %v2018 = vtanh.pop %v1679
        %v2019 = vtanh.pop %v1685
        %v2020 = vtanh.pop %v1689
        %v2021 = vtanh.pop %v1695
        %v2022 = vtanh.pop %v1699
        %v2023 = vtanh.pop %v1705
        %v2024 = vtanh.pop %v1709
        %v2025 = vtanh.pop %v1715
        %v2026 = vtanh.pop %v1719
        %v2027 = vtanh.pop %v1725
        %v2028 = vtanh.pop %v1729
        %v2029 = vtanh.pop %v1735
        %v2030 = vtanh.pop %v1739
        %v2031 = vtanh.pop %v1745
        %v2032 = vtanh.pop %v1749
        %v2033 = vtanh.pop %v1755
        %v2034 = vtanh.pop %v1759
        %v2035 = vtanh.pop %v1765
        %v2036 = vtanh.pop %v1769
        %v2037 = vtanh.pop %v1775
        %v2038 = vtanh.pop %v1779
        %v2039 = vtanh.pop %v1785
        %v2040 = vtanh.pop %v1789
        %v2041 = vtanh.pop %v1795
        %v2042 = vtanh.pop %v1799
        %v2043 = vtanh.pop %v1805
        %v2044 = vtanh.pop %v1809
        %v2045 = vtanh.pop %v1815
        %v2046 = vtanh.pop %v1819
        %v2047 = vtanh.pop %v1825
        %v2048 = vtanh.pop %v1829
        %v2049 = vtanh.pop %v1835
        %v2050 = vtanh.pop %v1839
        %v2051 = vtanh.pop %v1845
        %v2052 = vtanh.pop %v1849
        %v2053 = vtanh.pop %v1855
        %v2054 = vtanh.pop %v1859
        %v2055 = vtanh.pop %v1865
        %v2056 = vtanh.pop %v1869
        %v2057 = vtanh.pop %v1875
        %v2058 = vtanh.pop %v1879
        %v2059 = vtanh.pop %v1885
        %v2060 = vtanh.pop %v1889
        %v2061 = vtanh.pop %v1895
        %v2062 = vtanh.pop %v1899
        %v2063 = vtanh.pop %v1905
        %v2064 = vtanh.pop %v1909
        %v2065 = vtanh.pop %v1915
        %v2066 = vtanh.pop %v1919
        %v2067 = vtanh.pop %v1925
        %v2068 = vtanh.pop %v1929
        %v2069 = vtanh.pop %v1935
        %v2070 = vtanh.pop %v1939
        %v2071 = vmul.f32 %v1943, %v1975
        %v2072 = vmul.f32 %v1944, %v1976
        %v2073 = vmul.f32 %v1945, %v1977
        %v2074 = vmul.f32 %v1946, %v1978
        %v2075 = vmul.f32 %v1947, %v1979
        %v2076 = vmul.f32 %v1948, %v1980
        %v2077 = vmul.f32 %v1949, %v1981
        %v2078 = vmul.f32 %v1950, %v1982
        %v2079 = vmul.f32 %v1951, %v1983
        %v2080 = vmul.f32 %v1952, %v1984
        %v2081 = vmul.f32 %v1953, %v1985
        %v2082 = vmul.f32 %v1954, %v1986
        %v2083 = vmul.f32 %v1955, %v1987
        %v2084 = vmul.f32 %v1956, %v1988
        %v2085 = vmul.f32 %v1957, %v1989
        %v2086 = vmul.f32 %v1958, %v1990
        %v2087 = vmul.f32 %v1959, %v1991
        %v2088 = vmul.f32 %v1960, %v1992
        %v2089 = vmul.f32 %v1961, %v1993
        %v2090 = vmul.f32 %v1962, %v1994
        %v2091 = vmul.f32 %v1963, %v1995
        %v2092 = vmul.f32 %v1964, %v1996
        %v2093 = vmul.f32 %v1965, %v1997
        %v2094 = vmul.f32 %v1966, %v1998
        %v2095 = vmul.f32 %v1967, %v1999
        %v2096 = vmul.f32 %v1968, %v2000
        %v2097 = vmul.f32 %v1969, %v2001
        %v2098 = vmul.f32 %v1970, %v2002
        %v2099 = vmul.f32 %v1971, %v2003
        %v2100 = vmul.f32 %v1972, %v2004
        %v2101 = vmul.f32 %v1973, %v2005
        %v2102 = vmul.f32 %v1974, %v2006
        %v2103 = vmul.f32 %v2007, %v2039
        %v2104 = vmul.f32 %v2008, %v2040
        %v2105 = vmul.f32 %v2009, %v2041
        %v2106 = vmul.f32 %v2010, %v2042
        %v2107 = vmul.f32 %v2011, %v2043
        %v2108 = vmul.f32 %v2012, %v2044
        %v2109 = vmul.f32 %v2013, %v2045
        %v2110 = vmul.f32 %v2014, %v2046
        %v2111 = vmul.f32 %v2015, %v2047
        %v2112 = vmul.f32 %v2016, %v2048
        %v2113 = vmul.f32 %v2017, %v2049
        %v2114 = vmul.f32 %v2018, %v2050
        %v2115 = vmul.f32 %v2019, %v2051
        %v2116 = vmul.f32 %v2020, %v2052
        %v2117 = vmul.f32 %v2021, %v2053
        %v2118 = vmul.f32 %v2022, %v2054
        %v2119 = vmul.f32 %v2023, %v2055
        %v2120 = vmul.f32 %v2024, %v2056
        %v2121 = vmul.f32 %v2025, %v2057
        %v2122 = vmul.f32 %v2026, %v2058
        %v2123 = vmul.f32 %v2027, %v2059
        %v2124 = vmul.f32 %v2028, %v2060
        %v2125 = vmul.f32 %v2029, %v2061
        %v2126 = vmul.f32 %v2030, %v2062
        %v2127 = vmul.f32 %v2031, %v2063
        %v2128 = vmul.f32 %v2032, %v2064
        %v2129 = vmul.f32 %v2033, %v2065
        %v2130 = vmul.f32 %v2034, %v2066
        %v2131 = vmul.f32 %v2035, %v2067
        %v2132 = vmul.f32 %v2036, %v2068
        %v2133 = vmul.f32 %v2037, %v2069
        %v2134 = vmul.f32 %v2038, %v2070
        %v2135 = vmul.f32 %v2071, %v2103
        %v2136 = vmul.f32 %v2072, %v2104
        %v2137 = vmul.f32 %v2073, %v2105
        %v2138 = vmul.f32 %v2074, %v2106
        %v2139 = vmul.f32 %v2075, %v2107
        %v2140 = vmul.f32 %v2076, %v2108
        %v2141 = vmul.f32 %v2077, %v2109
        %v2142 = vmul.f32 %v2078, %v2110
        %v2143 = vmul.f32 %v2079, %v2111
        %v2144 = vmul.f32 %v2080, %v2112
        %v2145 = vmul.f32 %v2081, %v2113
        %v2146 = vmul.f32 %v2082, %v2114
        %v2147 = vmul.f32 %v2083, %v2115
        %v2148 = vmul.f32 %v2084, %v2116
        %v2149 = vmul.f32 %v2085, %v2117
        %v2150 = vmul.f32 %v2086, %v2118
        %v2151 = vmul.f32 %v2087, %v2119
        %v2152 = vmul.f32 %v2088, %v2120
        %v2153 = vmul.f32 %v2089, %v2121
        %v2154 = vmul.f32 %v2090, %v2122
        %v2155 = vmul.f32 %v2091, %v2123
        %v2156 = vmul.f32 %v2092, %v2124
        %v2157 = vmul.f32 %v2093, %v2125
        %v2158 = vmul.f32 %v2094, %v2126
        %v2159 = vmul.f32 %v2095, %v2127
        %v2160 = vmul.f32 %v2096, %v2128
        %v2161 = vmul.f32 %v2097, %v2129
        %v2162 = vmul.f32 %v2098, %v2130
        %v2163 = vmul.f32 %v2099, %v2131
        %v2164 = vmul.f32 %v2100, %v2132
        %v2165 = vmul.f32 %v2101, %v2133
        %v2166 = vmul.f32 %v2102, %v2134
        %v2167 = vld [vmem:[%s1] sm:$0x1]
        %v2169 = vlaneseq
        %v2170 = vshrl.u32 %v2169, 7
        %v2171 = vsub.s32 0, %v2170
        %v2172 = vrot.slane %v2167, %v2171
        %v2174 = vmul.f32 %v2172, %v2135
        %v2175 = vmul.f32 %v2172, %v2136
        %v2176 = vmul.f32 %v2172, %v2137
        %v2177 = vmul.f32 %v2172, %v2138
        %v2178 = vmul.f32 %v2172, %v2139
        %v2179 = vmul.f32 %v2172, %v2140
        %v2180 = vmul.f32 %v2172, %v2141
        %v2181 = vmul.f32 %v2172, %v2142
        %v2182 = vmul.f32 %v2172, %v2143
        %v2183 = vmul.f32 %v2172, %v2144
        %v2184 = vmul.f32 %v2172, %v2145
        %v2185 = vmul.f32 %v2172, %v2146
        %v2186 = vmul.f32 %v2172, %v2147
        %v2187 = vmul.f32 %v2172, %v2148
        %v2188 = vmul.f32 %v2172, %v2149
        %v2189 = vmul.f32 %v2172, %v2150
        %v2190 = vmul.f32 %v2172, %v2151
        %v2191 = vmul.f32 %v2172, %v2152
        %v2192 = vmul.f32 %v2172, %v2153
        %v2193 = vmul.f32 %v2172, %v2154
        %v2194 = vmul.f32 %v2172, %v2155
        %v2195 = vmul.f32 %v2172, %v2156
        %v2196 = vmul.f32 %v2172, %v2157
        %v2197 = vmul.f32 %v2172, %v2158
        %v2198 = vmul.f32 %v2172, %v2159
        %v2199 = vmul.f32 %v2172, %v2160
        %v2200 = vmul.f32 %v2172, %v2161
        %v2201 = vmul.f32 %v2172, %v2162
        %v2202 = vmul.f32 %v2172, %v2163
        %v2203 = vmul.f32 %v2172, %v2164
        %v2204 = vmul.f32 %v2172, %v2165
        %v2205 = vmul.f32 %v2172, %v2166
        %2206 = vst [vmem:[%s965] sm:$0xff] %v2174
        %2207 = vst [vmem:[%s965 + $0x8] sm:$0xff] %v2175
        %2208 = vst [vmem:[%s965 + $0x10] sm:$0xff] %v2176
        %2209 = vst [vmem:[%s965 + $0x18] sm:$0xff] %v2177
        %2210 = vst [vmem:[%s965 + $0x20] sm:$0xff] %v2178
        %2211 = vst [vmem:[%s965 + $0x28] sm:$0xff] %v2179
        %2212 = vst [vmem:[%s965 + $0x30] sm:$0xff] %v2180
        %2213 = vst [vmem:[%s965 + $0x38] sm:$0xff] %v2181
        %2214 = vst [vmem:[%s965 + $0x40] sm:$0xff] %v2182
        %2215 = vst [vmem:[%s965 + $0x48] sm:$0xff] %v2183
        %2216 = vst [vmem:[%s965 + $0x50] sm:$0xff] %v2184
        %2217 = vst [vmem:[%s965 + $0x58] sm:$0xff] %v2185
        %2218 = vst [vmem:[%s965 + $0x60] sm:$0xff] %v2186
        %2219 = vst [vmem:[%s965 + $0x68] sm:$0xff] %v2187
        %2220 = vst [vmem:[%s965 + $0x70] sm:$0xff] %v2188
        %2221 = vst [vmem:[%s965 + $0x78] sm:$0xff] %v2189
        %2222 = vst [vmem:[%s965 + $0x80] sm:$0xff] %v2190
        %2223 = vst [vmem:[%s965 + $0x88] sm:$0xff] %v2191
        %2224 = vst [vmem:[%s965 + $0x90] sm:$0xff] %v2192
        %2225 = vst [vmem:[%s965 + $0x98] sm:$0xff] %v2193
        %2226 = vst [vmem:[%s965 + $0xa0] sm:$0xff] %v2194
        %2227 = vst [vmem:[%s965 + $0xa8] sm:$0xff] %v2195
        %2228 = vst [vmem:[%s965 + $0xb0] sm:$0xff] %v2196
        %2229 = vst [vmem:[%s965 + $0xb8] sm:$0xff] %v2197
        %2230 = vst [vmem:[%s965 + $0xc0] sm:$0xff] %v2198
        %2231 = vst [vmem:[%s965 + $0xc8] sm:$0xff] %v2199
        %2232 = vst [vmem:[%s965 + $0xd0] sm:$0xff] %v2200
        %2233 = vst [vmem:[%s965 + $0xd8] sm:$0xff] %v2201
        %2234 = vst [vmem:[%s965 + $0xe0] sm:$0xff] %v2202
        %2235 = vst [vmem:[%s965 + $0xe8] sm:$0xff] %v2203
        %2236 = vst [vmem:[%s965 + $0xf0] sm:$0xff] %v2204
        %2237 = vst [vmem:[%s965 + $0xf8] sm:$0xff] %v2205
        %v2238 = vpack.c.bf16 %v2175, %v2174
        %v2239 = vpack.c.bf16 %v2177, %v2176
        %v2240 = vpack.c.bf16 %v2179, %v2178
        %v2241 = vpack.c.bf16 %v2181, %v2180
        %v2242 = vpack.c.bf16 %v2183, %v2182
        %v2243 = vpack.c.bf16 %v2185, %v2184
        %v2244 = vpack.c.bf16 %v2187, %v2186
        %v2245 = vpack.c.bf16 %v2189, %v2188
        %v2246 = vpack.c.bf16 %v2191, %v2190
        %v2247 = vpack.c.bf16 %v2193, %v2192
        %v2248 = vpack.c.bf16 %v2195, %v2194
        %v2249 = vpack.c.bf16 %v2197, %v2196
        %v2250 = vpack.c.bf16 %v2199, %v2198
        %v2251 = vpack.c.bf16 %v2201, %v2200
        %v2252 = vpack.c.bf16 %v2203, %v2202
        %v2253 = vpack.c.bf16 %v2205, %v2204
        %v2254 = vld [vmem:[%s4] sm:$0xf]
        %v2255 = vld [vmem:[%s4 + $0x4] sm:$0xf]
        %v2256 = vld [vmem:[%s4 + $0x8] sm:$0xf]
        %v2257 = vld [vmem:[%s4 + $0xc] sm:$0xf]
        %v2258 = vld [vmem:[%s4 + $0x10] sm:$0xf]
        %v2259 = vld [vmem:[%s4 + $0x14] sm:$0xf]
        %v2260 = vld [vmem:[%s4 + $0x18] sm:$0xf]
        %v2261 = vld [vmem:[%s4 + $0x1c] sm:$0xf]
        %v2262 = vld [vmem:[%s4 + $0x20] sm:$0xf]
        %v2263 = vld [vmem:[%s4 + $0x24] sm:$0xf]
        %v2264 = vld [vmem:[%s4 + $0x28] sm:$0xf]
        %v2265 = vld [vmem:[%s4 + $0x2c] sm:$0xf]
        %v2266 = vld [vmem:[%s4 + $0x30] sm:$0xf]
        %v2267 = vld [vmem:[%s4 + $0x34] sm:$0xf]
        %v2268 = vld [vmem:[%s4 + $0x38] sm:$0xf]
        %v2269 = vld [vmem:[%s4 + $0x3c] sm:$0xf]
        %v2270 = vld [vmem:[%s5] sm:$0x1]
        %v2272 = vlaneseq
        %v2273 = vshrl.u32 %v2272, 7
        %v2274 = vsub.s32 0, %v2273
        %v2275 = vrot.slane %v2270, %v2274
        %v2293 = vunpack.c.l.b16 %v2254
        %v2294 = vunpack.c.l.b16 %v2255
        %v2295 = vunpack.c.l.b16 %v2256
        %v2296 = vunpack.c.l.b16 %v2257
        %v2297 = vunpack.c.l.b16 %v2258
        %v2298 = vunpack.c.l.b16 %v2259
        %v2299 = vunpack.c.l.b16 %v2260
        %v2300 = vunpack.c.l.b16 %v2261
        %v2301 = vunpack.c.l.b16 %v2262
        %v2302 = vunpack.c.l.b16 %v2263
        %v2303 = vunpack.c.l.b16 %v2264
        %v2304 = vunpack.c.l.b16 %v2265
        %v2305 = vunpack.c.l.b16 %v2266
        %v2306 = vunpack.c.l.b16 %v2267
        %v2307 = vunpack.c.l.b16 %v2268
        %v2308 = vunpack.c.l.b16 %v2269
        %v2309 = vpack.c.b16 %v2294, %v2293
        %v2310 = vpack.c.b16 %v2296, %v2295
        %v2311 = vpack.c.b16 %v2298, %v2297
        %v2312 = vpack.c.b16 %v2300, %v2299
        %v2313 = vpack.c.b16 %v2302, %v2301
        %v2314 = vpack.c.b16 %v2304, %v2303
        %v2315 = vpack.c.b16 %v2306, %v2305
        %v2316 = vpack.c.b16 %v2308, %v2307
        %2325 = vmatprep.subr.bf16.mxu0 0
        %2326 = vmatpush1.bf16.msra.mxu0 %v2309
        %2327 = vmatprep.subr.bf16.mxu0 0
        %2328 = vmatpush1.bf16.msra.mxu0 %v2310
        %2329 = vmatprep.subr.bf16.mxu0 0
        %2330 = vmatpush1.bf16.msra.mxu0 %v2311
        %2331 = vmatprep.subr.bf16.mxu0 0
        %2332 = vmatpush1.bf16.msra.mxu0 %v2312
        %2333 = vmatprep.subr.bf16.mxu0 0
        %2334 = vmatpush1.bf16.msra.mxu0 %v2313
        %2335 = vmatprep.subr.bf16.mxu0 0
        %2336 = vmatpush1.bf16.msra.mxu0 %v2314
        %2337 = vmatprep.subr.bf16.mxu0 0
        %2338 = vmatpush1.bf16.msra.mxu0 %v2315
        %2339 = vmatprep.subr.bf16.mxu0 0
        %2340 = vmatpush1.bf16.msra.mxu0 %v2316
        %2341 = vmatprep.subr.bf16.mxu0 0
        %2342 = vmatpush1.bf16.msra.mxu0 0
        %2343 = vmatprep.subr.bf16.mxu0 0
        %2344 = vmatpush1.bf16.msra.mxu0 0
        %2345 = vmatprep.subr.bf16.mxu0 0
        %2346 = vmatpush1.bf16.msra.mxu0 0
        %2347 = vmatprep.subr.bf16.mxu0 0
        %2348 = vmatpush1.bf16.msra.mxu0 0
        %2349 = vmatprep.subr.bf16.mxu0 0
        %2350 = vmatpush1.bf16.msra.mxu0 0
        %2351 = vmatprep.subr.bf16.mxu0 0
        %2352 = vmatpush1.bf16.msra.mxu0 0
        %2353 = vmatprep.subr.bf16.mxu0 0
        %2354 = vmatpush1.bf16.msra.mxu0 0
        %2355 = vmatprep.subr.bf16.mxu0 0
        %2356 = vmatpush1.bf16.msra.mxu0 0
        %2357 = vmatprep.mubr.bf16.mxu0 0
        %2358 = vmatmul.mubr.bf16.gmra.mrb[0].mxu0 %v2238
        %v2359 = vpop.f32.mrb[0].mxu0
        %v2360 = vadd.f32 %v2275, %v2359
        %v2361 = vpop.f32.mrb[0].mxu0
        %v2362 = vpop.f32.mrb[0].mxu0
        %v2363 = vadd.f32 %v2275, %v2362
        %v2364 = vpop.f32.mrb[0].mxu0
        %2365 = vmatprep.mubr.bf16.mxu0 0
        %2366 = vmatmul.mubr.bf16.gmra.mrb[0].mxu0 %v2239
        %v2367 = vpop.f32.mrb[0].mxu0
        %v2368 = vadd.f32 %v2275, %v2367
        %v2369 = vpop.f32.mrb[0].mxu0
        %v2370 = vpop.f32.mrb[0].mxu0
        %v2371 = vadd.f32 %v2275, %v2370
        %v2372 = vpop.f32.mrb[0].mxu0
        %2373 = vmatprep.mubr.bf16.mxu0 0
        %2374 = vmatmul.mubr.bf16.gmra.mrb[0].mxu0 %v2240
        %v2375 = vpop.f32.mrb[0].mxu0
        %v2376 = vadd.f32 %v2275, %v2375
        %v2377 = vpop.f32.mrb[0].mxu0
        %v2378 = vpop.f32.mrb[0].mxu0
        %v2379 = vadd.f32 %v2275, %v2378
        %v2380 = vpop.f32.mrb[0].mxu0
        %2381 = vmatprep.mubr.bf16.mxu0 0
        %2382 = vmatmul.mubr.bf16.gmra.mrb[0].mxu0 %v2241
        %v2383 = vpop.f32.mrb[0].mxu0
        %v2384 = vadd.f32 %v2275, %v2383
        %v2385 = vpop.f32.mrb[0].mxu0
        %v2386 = vpop.f32.mrb[0].mxu0
        %v2387 = vadd.f32 %v2275, %v2386
        %v2388 = vpop.f32.mrb[0].mxu0
        %2389 = vmatprep.mubr.bf16.mxu0 0
        %2390 = vmatmul.mubr.bf16.gmra.mrb[0].mxu0 %v2242
        %v2391 = vpop.f32.mrb[0].mxu0
        %v2392 = vadd.f32 %v2275, %v2391
        %v2393 = vpop.f32.mrb[0].mxu0
        %v2394 = vpop.f32.mrb[0].mxu0
        %v2395 = vadd.f32 %v2275, %v2394
        %v2396 = vpop.f32.mrb[0].mxu0
        %2397 = vmatprep.mubr.bf16.mxu0 0
        %2398 = vmatmul.mubr.bf16.gmra.mrb[0].mxu0 %v2243
        %v2399 = vpop.f32.mrb[0].mxu0
        %v2400 = vadd.f32 %v2275, %v2399
        %v2401 = vpop.f32.mrb[0].mxu0
        %v2402 = vpop.f32.mrb[0].mxu0
        %v2403 = vadd.f32 %v2275, %v2402
        %v2404 = vpop.f32.mrb[0].mxu0
        %2405 = vmatprep.mubr.bf16.mxu0 0
        %2406 = vmatmul.mubr.bf16.gmra.mrb[0].mxu0 %v2244
        %v2407 = vpop.f32.mrb[0].mxu0
        %v2408 = vadd.f32 %v2275, %v2407
        %v2409 = vpop.f32.mrb[0].mxu0
        %v2410 = vpop.f32.mrb[0].mxu0
        %v2411 = vadd.f32 %v2275, %v2410
        %v2412 = vpop.f32.mrb[0].mxu0
        %2413 = vmatprep.mubr.bf16.mxu0 0
        %2414 = vmatmul.mubr.bf16.gmra.mrb[0].mxu0 %v2245
        %v2415 = vpop.f32.mrb[0].mxu0
        %v2416 = vadd.f32 %v2275, %v2415
        %v2417 = vpop.f32.mrb[0].mxu0
        %v2418 = vpop.f32.mrb[0].mxu0
        %v2419 = vadd.f32 %v2275, %v2418
        %v2420 = vpop.f32.mrb[0].mxu0
        %2421 = vmatprep.mubr.bf16.mxu0 0
        %2422 = vmatmul.mubr.bf16.gmra.mrb[0].mxu0 %v2246
        %v2423 = vpop.f32.mrb[0].mxu0
        %v2424 = vadd.f32 %v2275, %v2423
        %v2425 = vpop.f32.mrb[0].mxu0
        %v2426 = vpop.f32.mrb[0].mxu0
        %v2427 = vadd.f32 %v2275, %v2426
        %v2428 = vpop.f32.mrb[0].mxu0
        %2429 = vmatprep.mubr.bf16.mxu0 0
        %2430 = vmatmul.mubr.bf16.gmra.mrb[0].mxu0 %v2247
        %v2431 = vpop.f32.mrb[0].mxu0
        %v2432 = vadd.f32 %v2275, %v2431
        %v2433 = vpop.f32.mrb[0].mxu0
        %v2434 = vpop.f32.mrb[0].mxu0
        %v2435 = vadd.f32 %v2275, %v2434
        %v2436 = vpop.f32.mrb[0].mxu0
        %2437 = vmatprep.mubr.bf16.mxu0 0
        %2438 = vmatmul.mubr.bf16.gmra.mrb[0].mxu0 %v2248
        %v2439 = vpop.f32.mrb[0].mxu0
        %v2440 = vadd.f32 %v2275, %v2439
        %v2441 = vpop.f32.mrb[0].mxu0
        %v2442 = vpop.f32.mrb[0].mxu0
        %v2443 = vadd.f32 %v2275, %v2442
        %v2444 = vpop.f32.mrb[0].mxu0
        %2445 = vmatprep.mubr.bf16.mxu0 0
        %2446 = vmatmul.mubr.bf16.gmra.mrb[0].mxu0 %v2249
        %v2447 = vpop.f32.mrb[0].mxu0
        %v2448 = vadd.f32 %v2275, %v2447
        %v2449 = vpop.f32.mrb[0].mxu0
        %v2450 = vpop.f32.mrb[0].mxu0
        %v2451 = vadd.f32 %v2275, %v2450
        %v2452 = vpop.f32.mrb[0].mxu0
        %2453 = vmatprep.mubr.bf16.mxu0 0
        %2454 = vmatmul.mubr.bf16.gmra.mrb[0].mxu0 %v2250
        %v2455 = vpop.f32.mrb[0].mxu0
        %v2456 = vadd.f32 %v2275, %v2455
        %v2457 = vpop.f32.mrb[0].mxu0
        %v2458 = vpop.f32.mrb[0].mxu0
        %v2459 = vadd.f32 %v2275, %v2458
        %v2460 = vpop.f32.mrb[0].mxu0
        %2461 = vmatprep.mubr.bf16.mxu0 0
        %2462 = vmatmul.mubr.bf16.gmra.mrb[0].mxu0 %v2251
        %v2463 = vpop.f32.mrb[0].mxu0
        %v2464 = vadd.f32 %v2275, %v2463
        %v2465 = vpop.f32.mrb[0].mxu0
        %v2466 = vpop.f32.mrb[0].mxu0
        %v2467 = vadd.f32 %v2275, %v2466
        %v2468 = vpop.f32.mrb[0].mxu0
        %2469 = vmatprep.mubr.bf16.mxu0 0
        %2470 = vmatmul.mubr.bf16.gmra.mrb[0].mxu0 %v2252
        %v2471 = vpop.f32.mrb[0].mxu0
        %v2472 = vadd.f32 %v2275, %v2471
        %v2473 = vpop.f32.mrb[0].mxu0
        %v2474 = vpop.f32.mrb[0].mxu0
        %v2475 = vadd.f32 %v2275, %v2474
        %v2476 = vpop.f32.mrb[0].mxu0
        %2477 = vmatprep.mubr.bf16.mxu0 0
        %2478 = vmatmul.mubr.bf16.gmra.mrb[0].mxu0 %v2253
        %v2479 = vpop.f32.mrb[0].mxu0
        %v2480 = vadd.f32 %v2275, %v2479
        %v2481 = vpop.f32.mrb[0].mxu0
        %v2482 = vpop.f32.mrb[0].mxu0
        %v2483 = vadd.f32 %v2275, %v2482
        %v2484 = vpop.f32.mrb[0].mxu0
        %2485 = vdwg.mxu0
        %v2486 = vmax.f32 %v2360, 0.0
        %v2487 = vmax.f32 %v2363, 0.0
        %v2488 = vmax.f32 %v2368, 0.0
        %v2489 = vmax.f32 %v2371, 0.0
        %v2490 = vmax.f32 %v2376, 0.0
        %v2491 = vmax.f32 %v2379, 0.0
        %v2492 = vmax.f32 %v2384, 0.0
        %v2493 = vmax.f32 %v2387, 0.0
        %v2494 = vmax.f32 %v2392, 0.0
        %v2495 = vmax.f32 %v2395, 0.0
        %v2496 = vmax.f32 %v2400, 0.0
        %v2497 = vmax.f32 %v2403, 0.0
        %v2498 = vmax.f32 %v2408, 0.0
        %v2499 = vmax.f32 %v2411, 0.0
        %v2500 = vmax.f32 %v2416, 0.0
        %v2501 = vmax.f32 %v2419, 0.0
        %v2502 = vmax.f32 %v2424, 0.0
        %v2503 = vmax.f32 %v2427, 0.0
        %v2504 = vmax.f32 %v2432, 0.0
        %v2505 = vmax.f32 %v2435, 0.0
        %v2506 = vmax.f32 %v2440, 0.0
        %v2507 = vmax.f32 %v2443, 0.0
        %v2508 = vmax.f32 %v2448, 0.0
        %v2509 = vmax.f32 %v2451, 0.0
        %v2510 = vmax.f32 %v2456, 0.0
        %v2511 = vmax.f32 %v2459, 0.0
        %v2512 = vmax.f32 %v2464, 0.0
        %v2513 = vmax.f32 %v2467, 0.0
        %v2514 = vmax.f32 %v2472, 0.0
        %v2515 = vmax.f32 %v2475, 0.0
        %v2516 = vmax.f32 %v2480, 0.0
        %v2517 = vmax.f32 %v2483, 0.0
        %v2518 = vpack.c.bf16 %v2487, %v2486
        %v2519 = vpack.c.bf16 %v2489, %v2488
        %v2520 = vpack.c.bf16 %v2491, %v2490
        %v2521 = vpack.c.bf16 %v2493, %v2492
        %v2522 = vpack.c.bf16 %v2495, %v2494
        %v2523 = vpack.c.bf16 %v2497, %v2496
        %v2524 = vpack.c.bf16 %v2499, %v2498
        %v2525 = vpack.c.bf16 %v2501, %v2500
        %v2526 = vpack.c.bf16 %v2503, %v2502
        %v2527 = vpack.c.bf16 %v2505, %v2504
        %v2528 = vpack.c.bf16 %v2507, %v2506
        %v2529 = vpack.c.bf16 %v2509, %v2508
        %v2530 = vpack.c.bf16 %v2511, %v2510
        %v2531 = vpack.c.bf16 %v2513, %v2512
        %v2532 = vpack.c.bf16 %v2515, %v2514
        %v2533 = vpack.c.bf16 %v2517, %v2516
        %v2534 = vld [vmem:[%s6] sm:$0xf]
        %v2535 = vld [vmem:[%s6 + $0x4] sm:$0xf]
        %v2536 = vld [vmem:[%s6 + $0x8] sm:$0xf]
        %v2537 = vld [vmem:[%s6 + $0xc] sm:$0xf]
        %v2538 = vld [vmem:[%s6 + $0x10] sm:$0xf]
        %v2539 = vld [vmem:[%s6 + $0x14] sm:$0xf]
        %v2540 = vld [vmem:[%s6 + $0x18] sm:$0xf]
        %v2541 = vld [vmem:[%s6 + $0x1c] sm:$0xf]
        %v2542 = vld [vmem:[%s6 + $0x20] sm:$0xf]
        %v2543 = vld [vmem:[%s6 + $0x24] sm:$0xf]
        %v2544 = vld [vmem:[%s6 + $0x28] sm:$0xf]
        %v2545 = vld [vmem:[%s6 + $0x2c] sm:$0xf]
        %v2546 = vld [vmem:[%s6 + $0x30] sm:$0xf]
        %v2547 = vld [vmem:[%s6 + $0x34] sm:$0xf]
        %v2548 = vld [vmem:[%s6 + $0x38] sm:$0xf]
        %v2549 = vld [vmem:[%s6 + $0x3c] sm:$0xf]
        %v2566 = vunpack.c.l.b16 %v2534
        %v2567 = vunpack.c.l.b16 %v2535
        %v2568 = vunpack.c.l.b16 %v2536
        %v2569 = vunpack.c.l.b16 %v2537
        %v2570 = vunpack.c.l.b16 %v2538
        %v2571 = vunpack.c.l.b16 %v2539
        %v2572 = vunpack.c.l.b16 %v2540
        %v2573 = vunpack.c.l.b16 %v2541
        %v2574 = vunpack.c.l.b16 %v2542
        %v2575 = vunpack.c.l.b16 %v2543
        %v2576 = vunpack.c.l.b16 %v2544
        %v2577 = vunpack.c.l.b16 %v2545
        %v2578 = vunpack.c.l.b16 %v2546
        %v2579 = vunpack.c.l.b16 %v2547
        %v2580 = vunpack.c.l.b16 %v2548
        %v2581 = vunpack.c.l.b16 %v2549
        %v2582 = vpack.c.b16 %v2567, %v2566
        %v2583 = vpack.c.b16 %v2569, %v2568
        %v2584 = vpack.c.b16 %v2571, %v2570
        %v2585 = vpack.c.b16 %v2573, %v2572
        %v2586 = vpack.c.b16 %v2575, %v2574
        %v2587 = vpack.c.b16 %v2577, %v2576
        %v2588 = vpack.c.b16 %v2579, %v2578
        %v2589 = vpack.c.b16 %v2581, %v2580
        %2598 = vmatprep.subr.bf16.mxu0 0
        %2599 = vmatpush1.bf16.msra.mxu0 %v2582
        %2600 = vmatprep.subr.bf16.mxu0 0
        %2601 = vmatpush1.bf16.msra.mxu0 %v2583
        %2602 = vmatprep.subr.bf16.mxu0 0
        %2603 = vmatpush1.bf16.msra.mxu0 %v2584
        %2604 = vmatprep.subr.bf16.mxu0 0
        %2605 = vmatpush1.bf16.msra.mxu0 %v2585
        %2606 = vmatprep.subr.bf16.mxu0 0
        %2607 = vmatpush1.bf16.msra.mxu0 %v2586
        %2608 = vmatprep.subr.bf16.mxu0 0
        %2609 = vmatpush1.bf16.msra.mxu0 %v2587
        %2610 = vmatprep.subr.bf16.mxu0 0
        %2611 = vmatpush1.bf16.msra.mxu0 %v2588
        %2612 = vmatprep.subr.bf16.mxu0 0
        %2613 = vmatpush1.bf16.msra.mxu0 %v2589
        %2614 = vmatprep.subr.bf16.mxu0 0
        %2615 = vmatpush1.bf16.msra.mxu0 0
        %2616 = vmatprep.subr.bf16.mxu0 0
        %2617 = vmatpush1.bf16.msra.mxu0 0
        %2618 = vmatprep.subr.bf16.mxu0 0
        %2619 = vmatpush1.bf16.msra.mxu0 0
        %2620 = vmatprep.subr.bf16.mxu0 0
        %2621 = vmatpush1.bf16.msra.mxu0 0
        %2622 = vmatprep.subr.bf16.mxu0 0
        %2623 = vmatpush1.bf16.msra.mxu0 0
        %2624 = vmatprep.subr.bf16.mxu0 0
        %2625 = vmatpush1.bf16.msra.mxu0 0
        %2626 = vmatprep.subr.bf16.mxu0 0
        %2627 = vmatpush1.bf16.msra.mxu0 0
        %2628 = vmatprep.subr.bf16.mxu0 0
        %2629 = vmatpush1.bf16.msra.mxu0 0
        %2630 = vmatprep.mubr.bf16.mxu0 0
        %2631 = vmatmul.mubr.bf16.gmra.mrb[0].mxu0 %v2518
        %v2632 = vpop.f32.mrb[0].mxu0
        %v2633 = vadd.f32 %v1307, %v2632
        %v2634 = vpop.f32.mrb[0].mxu0
        %v2635 = vpop.f32.mrb[0].mxu0
        %v2636 = vadd.f32 %v1311, %v2635
        %v2637 = vpop.f32.mrb[0].mxu0
        %2638 = vmatprep.mubr.bf16.mxu0 0
        %2639 = vmatmul.mubr.bf16.gmra.mrb[0].mxu0 %v2519
        %v2640 = vpop.f32.mrb[0].mxu0
        %v2641 = vadd.f32 %v1317, %v2640
        %v2642 = vpop.f32.mrb[0].mxu0
        %v2643 = vpop.f32.mrb[0].mxu0
        %v2644 = vadd.f32 %v1321, %v2643
        %v2645 = vpop.f32.mrb[0].mxu0
        %2646 = vmatprep.mubr.bf16.mxu0 0
        %2647 = vmatmul.mubr.bf16.gmra.mrb[0].mxu0 %v2520
        %v2648 = vpop.f32.mrb[0].mxu0
        %v2649 = vadd.f32 %v1327, %v2648
        %v2650 = vpop.f32.mrb[0].mxu0
        %v2651 = vpop.f32.mrb[0].mxu0
        %v2652 = vadd.f32 %v1331, %v2651
        %v2653 = vpop.f32.mrb[0].mxu0
        %2654 = vmatprep.mubr.bf16.mxu0 0
        %2655 = vmatmul.mubr.bf16.gmra.mrb[0].mxu0 %v2521
        %v2656 = vpop.f32.mrb[0].mxu0
        %v2657 = vadd.f32 %v1337, %v2656
        %v2658 = vpop.f32.mrb[0].mxu0
        %v2659 = vpop.f32.mrb[0].mxu0
        %v2660 = vadd.f32 %v1341, %v2659
        %v2661 = vpop.f32.mrb[0].mxu0
        %2662 = vmatprep.mubr.bf16.mxu0 0
        %2663 = vmatmul.mubr.bf16.gmra.mrb[0].mxu0 %v2522
        %v2664 = vpop.f32.mrb[0].mxu0
        %v2665 = vadd.f32 %v1347, %v2664
        %v2666 = vpop.f32.mrb[0].mxu0
        %v2667 = vpop.f32.mrb[0].mxu0
        %v2668 = vadd.f32 %v1351, %v2667
        %v2669 = vpop.f32.mrb[0].mxu0
        %2670 = vmatprep.mubr.bf16.mxu0 0
        %2671 = vmatmul.mubr.bf16.gmra.mrb[0].mxu0 %v2523
        %v2672 = vpop.f32.mrb[0].mxu0
        %v2673 = vadd.f32 %v1357, %v2672
        %v2674 = vpop.f32.mrb[0].mxu0
        %v2675 = vpop.f32.mrb[0].mxu0
        %v2676 = vadd.f32 %v1361, %v2675
        %v2677 = vpop.f32.mrb[0].mxu0
        %2678 = vmatprep.mubr.bf16.mxu0 0
        %2679 = vmatmul.mubr.bf16.gmra.mrb[0].mxu0 %v2524
        %v2680 = vpop.f32.mrb[0].mxu0
        %v2681 = vadd.f32 %v1367, %v2680
        %v2682 = vpop.f32.mrb[0].mxu0
        %v2683 = vpop.f32.mrb[0].mxu0
        %v2684 = vadd.f32 %v1371, %v2683
        %v2685 = vpop.f32.mrb[0].mxu0
        %2686 = vmatprep.mubr.bf16.mxu0 0
        %2687 = vmatmul.mubr.bf16.gmra.mrb[0].mxu0 %v2525
        %v2688 = vpop.f32.mrb[0].mxu0
        %v2689 = vadd.f32 %v1377, %v2688
        %v2690 = vpop.f32.mrb[0].mxu0
        %v2691 = vpop.f32.mrb[0].mxu0
        %v2692 = vadd.f32 %v1381, %v2691
        %v2693 = vpop.f32.mrb[0].mxu0
        %2694 = vmatprep.mubr.bf16.mxu0 0
        %2695 = vmatmul.mubr.bf16.gmra.mrb[0].mxu0 %v2526
        %v2696 = vpop.f32.mrb[0].mxu0
        %v2697 = vadd.f32 %v1387, %v2696
        %v2698 = vpop.f32.mrb[0].mxu0
        %v2699 = vpop.f32.mrb[0].mxu0
        %v2700 = vadd.f32 %v1391, %v2699
        %v2701 = vpop.f32.mrb[0].mxu0
        %2702 = vmatprep.mubr.bf16.mxu0 0
        %2703 = vmatmul.mubr.bf16.gmra.mrb[0].mxu0 %v2527
        %v2704 = vpop.f32.mrb[0].mxu0
        %v2705 = vadd.f32 %v1397, %v2704
        %v2706 = vpop.f32.mrb[0].mxu0
        %v2707 = vpop.f32.mrb[0].mxu0
        %v2708 = vadd.f32 %v1401, %v2707
        %v2709 = vpop.f32.mrb[0].mxu0
        %2710 = vmatprep.mubr.bf16.mxu0 0
        %2711 = vmatmul.mubr.bf16.gmra.mrb[0].mxu0 %v2528
        %v2712 = vpop.f32.mrb[0].mxu0
        %v2713 = vadd.f32 %v1407, %v2712
        %v2714 = vpop.f32.mrb[0].mxu0
        %v2715 = vpop.f32.mrb[0].mxu0
        %v2716 = vadd.f32 %v1411, %v2715
        %v2717 = vpop.f32.mrb[0].mxu0
        %2718 = vmatprep.mubr.bf16.mxu0 0
        %2719 = vmatmul.mubr.bf16.gmra.mrb[0].mxu0 %v2529
        %v2720 = vpop.f32.mrb[0].mxu0
        %v2721 = vadd.f32 %v1417, %v2720
        %v2722 = vpop.f32.mrb[0].mxu0
        %v2723 = vpop.f32.mrb[0].mxu0
        %v2724 = vadd.f32 %v1421, %v2723
        %v2725 = vpop.f32.mrb[0].mxu0
        %2726 = vmatprep.mubr.bf16.mxu0 0
        %2727 = vmatmul.mubr.bf16.gmra.mrb[0].mxu0 %v2530
        %v2728 = vpop.f32.mrb[0].mxu0
        %v2729 = vadd.f32 %v1427, %v2728
        %v2730 = vpop.f32.mrb[0].mxu0
        %v2731 = vpop.f32.mrb[0].mxu0
        %v2732 = vadd.f32 %v1431, %v2731
        %v2733 = vpop.f32.mrb[0].mxu0
        %2734 = vmatprep.mubr.bf16.mxu0 0
        %2735 = vmatmul.mubr.bf16.gmra.mrb[0].mxu0 %v2531
        %v2736 = vpop.f32.mrb[0].mxu0
        %v2737 = vadd.f32 %v1437, %v2736
        %v2738 = vpop.f32.mrb[0].mxu0
        %v2739 = vpop.f32.mrb[0].mxu0
        %v2740 = vadd.f32 %v1441, %v2739
        %v2741 = vpop.f32.mrb[0].mxu0
        %2742 = vmatprep.mubr.bf16.mxu0 0
        %2743 = vmatmul.mubr.bf16.gmra.mrb[0].mxu0 %v2532
        %v2744 = vpop.f32.mrb[0].mxu0
        %v2745 = vadd.f32 %v1447, %v2744
        %v2746 = vpop.f32.mrb[0].mxu0
        %v2747 = vpop.f32.mrb[0].mxu0
        %v2748 = vadd.f32 %v1451, %v2747
        %v2749 = vpop.f32.mrb[0].mxu0
        %2750 = vmatprep.mubr.bf16.mxu0 0
        %2751 = vmatmul.mubr.bf16.gmra.mrb[0].mxu0 %v2533
        %v2752 = vpop.f32.mrb[0].mxu0
        %v2753 = vadd.f32 %v1457, %v2752
        %v2754 = vpop.f32.mrb[0].mxu0
        %v2755 = vpop.f32.mrb[0].mxu0
        %v2756 = vadd.f32 %v1461, %v2755
        %v2757 = vpop.f32.mrb[0].mxu0
        %2758 = vdwg.mxu0
        %v2759 = vmax.f32 %v2633, 0.0
        %v2760 = vmax.f32 %v2636, 0.0
        %v2761 = vmax.f32 %v2641, 0.0
        %v2762 = vmax.f32 %v2644, 0.0
        %v2763 = vmax.f32 %v2649, 0.0
        %v2764 = vmax.f32 %v2652, 0.0
        %v2765 = vmax.f32 %v2657, 0.0
        %v2766 = vmax.f32 %v2660, 0.0
        %v2767 = vmax.f32 %v2665, 0.0
        %v2768 = vmax.f32 %v2668, 0.0
        %v2769 = vmax.f32 %v2673, 0.0
        %v2770 = vmax.f32 %v2676, 0.0
        %v2771 = vmax.f32 %v2681, 0.0
        %v2772 = vmax.f32 %v2684, 0.0
        %v2773 = vmax.f32 %v2689, 0.0
        %v2774 = vmax.f32 %v2692, 0.0
        %v2775 = vmax.f32 %v2697, 0.0
        %v2776 = vmax.f32 %v2700, 0.0
        %v2777 = vmax.f32 %v2705, 0.0
        %v2778 = vmax.f32 %v2708, 0.0
        %v2779 = vmax.f32 %v2713, 0.0
        %v2780 = vmax.f32 %v2716, 0.0
        %v2781 = vmax.f32 %v2721, 0.0
        %v2782 = vmax.f32 %v2724, 0.0
        %v2783 = vmax.f32 %v2729, 0.0
        %v2784 = vmax.f32 %v2732, 0.0
        %v2785 = vmax.f32 %v2737, 0.0
        %v2786 = vmax.f32 %v2740, 0.0
        %v2787 = vmax.f32 %v2745, 0.0
        %v2788 = vmax.f32 %v2748, 0.0
        %v2789 = vmax.f32 %v2753, 0.0
        %v2790 = vmax.f32 %v2756, 0.0
        %v2791 = vpack.c.bf16 %v2760, %v2759
        %v2792 = vpack.c.bf16 %v2762, %v2761
        %v2793 = vpack.c.bf16 %v2764, %v2763
        %v2794 = vpack.c.bf16 %v2766, %v2765
        %v2795 = vpack.c.bf16 %v2768, %v2767
        %v2796 = vpack.c.bf16 %v2770, %v2769
        %v2797 = vpack.c.bf16 %v2772, %v2771
        %v2798 = vpack.c.bf16 %v2774, %v2773
        %v2799 = vpack.c.bf16 %v2776, %v2775
        %v2800 = vpack.c.bf16 %v2778, %v2777
        %v2801 = vpack.c.bf16 %v2780, %v2779
        %v2802 = vpack.c.bf16 %v2782, %v2781
        %v2803 = vpack.c.bf16 %v2784, %v2783
        %v2804 = vpack.c.bf16 %v2786, %v2785
        %v2805 = vpack.c.bf16 %v2788, %v2787
        %v2806 = vpack.c.bf16 %v2790, %v2789
        %2807 = vmatprep.subr.bf16.mxu0 0
        %2808 = vmatpush1.bf16.msra.mxu0 %v2582
        %2809 = vmatprep.subr.bf16.mxu0 0
        %2810 = vmatpush1.bf16.msra.mxu0 %v2583
        %2811 = vmatprep.subr.bf16.mxu0 0
        %2812 = vmatpush1.bf16.msra.mxu0 %v2584
        %2813 = vmatprep.subr.bf16.mxu0 0
        %2814 = vmatpush1.bf16.msra.mxu0 %v2585
        %2815 = vmatprep.subr.bf16.mxu0 0
        %2816 = vmatpush1.bf16.msra.mxu0 %v2586
        %2817 = vmatprep.subr.bf16.mxu0 0
        %2818 = vmatpush1.bf16.msra.mxu0 %v2587
        %2819 = vmatprep.subr.bf16.mxu0 0
        %2820 = vmatpush1.bf16.msra.mxu0 %v2588
        %2821 = vmatprep.subr.bf16.mxu0 0
        %2822 = vmatpush1.bf16.msra.mxu0 %v2589
        %2823 = vmatprep.subr.bf16.mxu0 0
        %2824 = vmatpush1.bf16.msra.mxu0 0
        %2825 = vmatprep.subr.bf16.mxu0 0
        %2826 = vmatpush1.bf16.msra.mxu0 0
        %2827 = vmatprep.subr.bf16.mxu0 0
        %2828 = vmatpush1.bf16.msra.mxu0 0
        %2829 = vmatprep.subr.bf16.mxu0 0
        %2830 = vmatpush1.bf16.msra.mxu0 0
        %2831 = vmatprep.subr.bf16.mxu0 0
        %2832 = vmatpush1.bf16.msra.mxu0 0
        %2833 = vmatprep.subr.bf16.mxu0 0
        %2834 = vmatpush1.bf16.msra.mxu0 0
        %2835 = vmatprep.subr.bf16.mxu0 0
        %2836 = vmatpush1.bf16.msra.mxu0 0
        %2837 = vmatprep.subr.bf16.mxu0 0
        %2838 = vmatpush1.bf16.msra.mxu0 0
        %2839 = vmatprep.mubr.bf16.mxu0 0
        %2840 = vmatmul.mubr.bf16.gmra.mrb[0].mxu0 %v2791
        %v2841 = vpop.f32.mrb[0].mxu0
        %v2842 = vadd.f32 %v1467, %v2841
        %v2843 = vpop.f32.mrb[0].mxu0
        %v2844 = vpop.f32.mrb[0].mxu0
        %v2845 = vadd.f32 %v1471, %v2844
        %v2846 = vpop.f32.mrb[0].mxu0
        %2847 = vmatprep.mubr.bf16.mxu0 0
        %2848 = vmatmul.mubr.bf16.gmra.mrb[0].mxu0 %v2792
        %v2849 = vpop.f32.mrb[0].mxu0
        %v2850 = vadd.f32 %v1477, %v2849
        %v2851 = vpop.f32.mrb[0].mxu0
        %v2852 = vpop.f32.mrb[0].mxu0
        %v2853 = vadd.f32 %v1481, %v2852
        %v2854 = vpop.f32.mrb[0].mxu0
        %2855 = vmatprep.mubr.bf16.mxu0 0
        %2856 = vmatmul.mubr.bf16.gmra.mrb[0].mxu0 %v2793
        %v2857 = vpop.f32.mrb[0].mxu0
        %v2858 = vadd.f32 %v1487, %v2857
        %v2859 = vpop.f32.mrb[0].mxu0
        %v2860 = vpop.f32.mrb[0].mxu0
        %v2861 = vadd.f32 %v1491, %v2860
        %v2862 = vpop.f32.mrb[0].mxu0
        %2863 = vmatprep.mubr.bf16.mxu0 0
        %2864 = vmatmul.mubr.bf16.gmra.mrb[0].mxu0 %v2794
        %v2865 = vpop.f32.mrb[0].mxu0
        %v2866 = vadd.f32 %v1497, %v2865
        %v2867 = vpop.f32.mrb[0].mxu0
        %v2868 = vpop.f32.mrb[0].mxu0
        %v2869 = vadd.f32 %v1501, %v2868
        %v2870 = vpop.f32.mrb[0].mxu0
        %2871 = vmatprep.mubr.bf16.mxu0 0
        %2872 = vmatmul.mubr.bf16.gmra.mrb[0].mxu0 %v2795
        %v2873 = vpop.f32.mrb[0].mxu0
        %v2874 = vadd.f32 %v1507, %v2873
        %v2875 = vpop.f32.mrb[0].mxu0
        %v2876 = vpop.f32.mrb[0].mxu0
        %v2877 = vadd.f32 %v1511, %v2876
        %v2878 = vpop.f32.mrb[0].mxu0
        %2879 = vmatprep.mubr.bf16.mxu0 0
        %2880 = vmatmul.mubr.bf16.gmra.mrb[0].mxu0 %v2796
        %v2881 = vpop.f32.mrb[0].mxu0
        %v2882 = vadd.f32 %v1517, %v2881
        %v2883 = vpop.f32.mrb[0].mxu0
        %v2884 = vpop.f32.mrb[0].mxu0
        %v2885 = vadd.f32 %v1521, %v2884
        %v2886 = vpop.f32.mrb[0].mxu0
        %2887 = vmatprep.mubr.bf16.mxu0 0
        %2888 = vmatmul.mubr.bf16.gmra.mrb[0].mxu0 %v2797
        %v2889 = vpop.f32.mrb[0].mxu0
        %v2890 = vadd.f32 %v1527, %v2889
        %v2891 = vpop.f32.mrb[0].mxu0
        %v2892 = vpop.f32.mrb[0].mxu0
        %v2893 = vadd.f32 %v1531, %v2892
        %v2894 = vpop.f32.mrb[0].mxu0
        %2895 = vmatprep.mubr.bf16.mxu0 0
        %2896 = vmatmul.mubr.bf16.gmra.mrb[0].mxu0 %v2798
        %v2897 = vpop.f32.mrb[0].mxu0
        %v2898 = vadd.f32 %v1537, %v2897
        %v2899 = vpop.f32.mrb[0].mxu0
        %v2900 = vpop.f32.mrb[0].mxu0
        %v2901 = vadd.f32 %v1541, %v2900
        %v2902 = vpop.f32.mrb[0].mxu0
        %2903 = vmatprep.mubr.bf16.mxu0 0
        %2904 = vmatmul.mubr.bf16.gmra.mrb[0].mxu0 %v2799
        %v2905 = vpop.f32.mrb[0].mxu0
        %v2906 = vadd.f32 %v1547, %v2905
        %v2907 = vpop.f32.mrb[0].mxu0
        %v2908 = vpop.f32.mrb[0].mxu0
        %v2909 = vadd.f32 %v1551, %v2908
        %v2910 = vpop.f32.mrb[0].mxu0
        %2911 = vmatprep.mubr.bf16.mxu0 0
        %2912 = vmatmul.mubr.bf16.gmra.mrb[0].mxu0 %v2800
        %v2913 = vpop.f32.mrb[0].mxu0
        %v2914 = vadd.f32 %v1557, %v2913
        %v2915 = vpop.f32.mrb[0].mxu0
        %v2916 = vpop.f32.mrb[0].mxu0
        %v2917 = vadd.f32 %v1561, %v2916
        %v2918 = vpop.f32.mrb[0].mxu0
        %2919 = vmatprep.mubr.bf16.mxu0 0
        %2920 = vmatmul.mubr.bf16.gmra.mrb[0].mxu0 %v2801
        %v2921 = vpop.f32.mrb[0].mxu0
        %v2922 = vadd.f32 %v1567, %v2921
        %v2923 = vpop.f32.mrb[0].mxu0
        %v2924 = vpop.f32.mrb[0].mxu0
        %v2925 = vadd.f32 %v1571, %v2924
        %v2926 = vpop.f32.mrb[0].mxu0
        %2927 = vmatprep.mubr.bf16.mxu0 0
        %2928 = vmatmul.mubr.bf16.gmra.mrb[0].mxu0 %v2802
        %v2929 = vpop.f32.mrb[0].mxu0
        %v2930 = vadd.f32 %v1577, %v2929
        %v2931 = vpop.f32.mrb[0].mxu0
        %v2932 = vpop.f32.mrb[0].mxu0
        %v2933 = vadd.f32 %v1581, %v2932
        %v2934 = vpop.f32.mrb[0].mxu0
        %2935 = vmatprep.mubr.bf16.mxu0 0
        %2936 = vmatmul.mubr.bf16.gmra.mrb[0].mxu0 %v2803
        %v2937 = vpop.f32.mrb[0].mxu0
        %v2938 = vadd.f32 %v1587, %v2937
        %v2939 = vpop.f32.mrb[0].mxu0
        %v2940 = vpop.f32.mrb[0].mxu0
        %v2941 = vadd.f32 %v1591, %v2940
        %v2942 = vpop.f32.mrb[0].mxu0
        %2943 = vmatprep.mubr.bf16.mxu0 0
        %2944 = vmatmul.mubr.bf16.gmra.mrb[0].mxu0 %v2804
        %v2945 = vpop.f32.mrb[0].mxu0
        %v2946 = vadd.f32 %v1597, %v2945
        %v2947 = vpop.f32.mrb[0].mxu0
        %v2948 = vpop.f32.mrb[0].mxu0
        %v2949 = vadd.f32 %v1601, %v2948
        %v2950 = vpop.f32.mrb[0].mxu0
        %2951 = vmatprep.mubr.bf16.mxu0 0
        %2952 = vmatmul.mubr.bf16.gmra.mrb[0].mxu0 %v2805
        %v2953 = vpop.f32.mrb[0].mxu0
        %v2954 = vadd.f32 %v1607, %v2953
        %v2955 = vpop.f32.mrb[0].mxu0
        %v2956 = vpop.f32.mrb[0].mxu0
        %v2957 = vadd.f32 %v1611, %v2956
        %v2958 = vpop.f32.mrb[0].mxu0
        %2959 = vmatprep.mubr.bf16.mxu0 0
        %2960 = vmatmul.mubr.bf16.gmra.mrb[0].mxu0 %v2806
        %v2961 = vpop.f32.mrb[0].mxu0
        %v2962 = vadd.f32 %v1617, %v2961
        %v2963 = vpop.f32.mrb[0].mxu0
        %v2964 = vpop.f32.mrb[0].mxu0
        %v2965 = vadd.f32 %v1621, %v2964
        %v2966 = vpop.f32.mrb[0].mxu0
        %2967 = vdwg.mxu0
        %v2968 = vmax.f32 %v2842, 0.0
        %v2969 = vmax.f32 %v2845, 0.0
        %v2970 = vmax.f32 %v2850, 0.0
        %v2971 = vmax.f32 %v2853, 0.0
        %v2972 = vmax.f32 %v2858, 0.0
        %v2973 = vmax.f32 %v2861, 0.0
        %v2974 = vmax.f32 %v2866, 0.0
        %v2975 = vmax.f32 %v2869, 0.0
        %v2976 = vmax.f32 %v2874, 0.0
        %v2977 = vmax.f32 %v2877, 0.0
        %v2978 = vmax.f32 %v2882, 0.0
        %v2979 = vmax.f32 %v2885, 0.0
        %v2980 = vmax.f32 %v2890, 0.0
        %v2981 = vmax.f32 %v2893, 0.0
        %v2982 = vmax.f32 %v2898, 0.0
        %v2983 = vmax.f32 %v2901, 0.0
        %v2984 = vmax.f32 %v2906, 0.0
        %v2985 = vmax.f32 %v2909, 0.0
        %v2986 = vmax.f32 %v2914, 0.0
        %v2987 = vmax.f32 %v2917, 0.0
        %v2988 = vmax.f32 %v2922, 0.0
        %v2989 = vmax.f32 %v2925, 0.0
        %v2990 = vmax.f32 %v2930, 0.0
        %v2991 = vmax.f32 %v2933, 0.0
        %v2992 = vmax.f32 %v2938, 0.0
        %v2993 = vmax.f32 %v2941, 0.0
        %v2994 = vmax.f32 %v2946, 0.0
        %v2995 = vmax.f32 %v2949, 0.0
        %v2996 = vmax.f32 %v2954, 0.0
        %v2997 = vmax.f32 %v2957, 0.0
        %v2998 = vmax.f32 %v2962, 0.0
        %v2999 = vmax.f32 %v2965, 0.0
        %v3000 = vpack.c.bf16 %v2969, %v2968
        %v3001 = vpack.c.bf16 %v2971, %v2970
        %v3002 = vpack.c.bf16 %v2973, %v2972
        %v3003 = vpack.c.bf16 %v2975, %v2974
        %v3004 = vpack.c.bf16 %v2977, %v2976
        %v3005 = vpack.c.bf16 %v2979, %v2978
        %v3006 = vpack.c.bf16 %v2981, %v2980
        %v3007 = vpack.c.bf16 %v2983, %v2982
        %v3008 = vpack.c.bf16 %v2985, %v2984
        %v3009 = vpack.c.bf16 %v2987, %v2986
        %v3010 = vpack.c.bf16 %v2989, %v2988
        %v3011 = vpack.c.bf16 %v2991, %v2990
        %v3012 = vpack.c.bf16 %v2993, %v2992
        %v3013 = vpack.c.bf16 %v2995, %v2994
        %v3014 = vpack.c.bf16 %v2997, %v2996
        %v3015 = vpack.c.bf16 %v2999, %v2998
        %3016 = vmatprep.subr.bf16.mxu0 0
        %3017 = vmatpush1.bf16.msra.mxu0 %v2582
        %3018 = vmatprep.subr.bf16.mxu0 0
        %3019 = vmatpush1.bf16.msra.mxu0 %v2583
        %3020 = vmatprep.subr.bf16.mxu0 0
        %3021 = vmatpush1.bf16.msra.mxu0 %v2584
        %3022 = vmatprep.subr.bf16.mxu0 0
        %3023 = vmatpush1.bf16.msra.mxu0 %v2585
        %3024 = vmatprep.subr.bf16.mxu0 0
        %3025 = vmatpush1.bf16.msra.mxu0 %v2586
        %3026 = vmatprep.subr.bf16.mxu0 0
        %3027 = vmatpush1.bf16.msra.mxu0 %v2587
        %3028 = vmatprep.subr.bf16.mxu0 0
        %3029 = vmatpush1.bf16.msra.mxu0 %v2588
        %3030 = vmatprep.subr.bf16.mxu0 0
        %3031 = vmatpush1.bf16.msra.mxu0 %v2589
        %3032 = vmatprep.subr.bf16.mxu0 0
        %3033 = vmatpush1.bf16.msra.mxu0 0
        %3034 = vmatprep.subr.bf16.mxu0 0
        %3035 = vmatpush1.bf16.msra.mxu0 0
        %3036 = vmatprep.subr.bf16.mxu0 0
        %3037 = vmatpush1.bf16.msra.mxu0 0
        %3038 = vmatprep.subr.bf16.mxu0 0
        %3039 = vmatpush1.bf16.msra.mxu0 0
        %3040 = vmatprep.subr.bf16.mxu0 0
        %3041 = vmatpush1.bf16.msra.mxu0 0
        %3042 = vmatprep.subr.bf16.mxu0 0
        %3043 = vmatpush1.bf16.msra.mxu0 0
        %3044 = vmatprep.subr.bf16.mxu0 0
        %3045 = vmatpush1.bf16.msra.mxu0 0
        %3046 = vmatprep.subr.bf16.mxu0 0
        %3047 = vmatpush1.bf16.msra.mxu0 0
        %3048 = vmatprep.mubr.bf16.mxu0 0
        %3049 = vmatmul.mubr.bf16.gmra.mrb[0].mxu0 %v3000
        %v3050 = vpop.f32.mrb[0].mxu0
        %v3051 = vadd.f32 %v1627, %v3050
        %v3052 = vpop.f32.mrb[0].mxu0
        %v3053 = vpop.f32.mrb[0].mxu0
        %v3054 = vadd.f32 %v1631, %v3053
        %v3055 = vpop.f32.mrb[0].mxu0
        %3056 = vmatprep.mubr.bf16.mxu0 0
        %3057 = vmatmul.mubr.bf16.gmra.mrb[0].mxu0 %v3001
        %v3058 = vpop.f32.mrb[0].mxu0
        %v3059 = vadd.f32 %v1637, %v3058
        %v3060 = vpop.f32.mrb[0].mxu0
        %v3061 = vpop.f32.mrb[0].mxu0
        %v3062 = vadd.f32 %v1641, %v3061
        %v3063 = vpop.f32.mrb[0].mxu0
        %3064 = vmatprep.mubr.bf16.mxu0 0
        %3065 = vmatmul.mubr.bf16.gmra.mrb[0].mxu0 %v3002
        %v3066 = vpop.f32.mrb[0].mxu0
        %v3067 = vadd.f32 %v1647, %v3066
        %v3068 = vpop.f32.mrb[0].mxu0
        %v3069 = vpop.f32.mrb[0].mxu0
        %v3070 = vadd.f32 %v1651, %v3069
        %v3071 = vpop.f32.mrb[0].mxu0
        %3072 = vmatprep.mubr.bf16.mxu0 0
        %3073 = vmatmul.mubr.bf16.gmra.mrb[0].mxu0 %v3003
        %v3074 = vpop.f32.mrb[0].mxu0
        %v3075 = vadd.f32 %v1657, %v3074
        %v3076 = vpop.f32.mrb[0].mxu0
        %v3077 = vpop.f32.mrb[0].mxu0
        %v3078 = vadd.f32 %v1661, %v3077
        %v3079 = vpop.f32.mrb[0].mxu0
        %3080 = vmatprep.mubr.bf16.mxu0 0
        %3081 = vmatmul.mubr.bf16.gmra.mrb[0].mxu0 %v3004
        %v3082 = vpop.f32.mrb[0].mxu0
        %v3083 = vadd.f32 %v1667, %v3082
        %v3084 = vpop.f32.mrb[0].mxu0
        %v3085 = vpop.f32.mrb[0].mxu0
        %v3086 = vadd.f32 %v1671, %v3085
        %v3087 = vpop.f32.mrb[0].mxu0
        %3088 = vmatprep.mubr.bf16.mxu0 0
        %3089 = vmatmul.mubr.bf16.gmra.mrb[0].mxu0 %v3005
        %v3090 = vpop.f32.mrb[0].mxu0
        %v3091 = vadd.f32 %v1677, %v3090
        %v3092 = vpop.f32.mrb[0].mxu0
        %v3093 = vpop.f32.mrb[0].mxu0
        %v3094 = vadd.f32 %v1681, %v3093
        %v3095 = vpop.f32.mrb[0].mxu0
        %3096 = vmatprep.mubr.bf16.mxu0 0
        %3097 = vmatmul.mubr.bf16.gmra.mrb[0].mxu0 %v3006
        %v3098 = vpop.f32.mrb[0].mxu0
        %v3099 = vadd.f32 %v1687, %v3098
        %v3100 = vpop.f32.mrb[0].mxu0
        %v3101 = vpop.f32.mrb[0].mxu0
        %v3102 = vadd.f32 %v1691, %v3101
        %v3103 = vpop.f32.mrb[0].mxu0
        %3104 = vmatprep.mubr.bf16.mxu0 0
        %3105 = vmatmul.mubr.bf16.gmra.mrb[0].mxu0 %v3007
        %v3106 = vpop.f32.mrb[0].mxu0
        %v3107 = vadd.f32 %v1697, %v3106
        %v3108 = vpop.f32.mrb[0].mxu0
        %v3109 = vpop.f32.mrb[0].mxu0
        %v3110 = vadd.f32 %v1701, %v3109
        %v3111 = vpop.f32.mrb[0].mxu0
        %3112 = vmatprep.mubr.bf16.mxu0 0
        %3113 = vmatmul.mubr.bf16.gmra.mrb[0].mxu0 %v3008
        %v3114 = vpop.f32.mrb[0].mxu0
        %v3115 = vadd.f32 %v1707, %v3114
        %v3116 = vpop.f32.mrb[0].mxu0
        %v3117 = vpop.f32.mrb[0].mxu0
        %v3118 = vadd.f32 %v1711, %v3117
        %v3119 = vpop.f32.mrb[0].mxu0
        %3120 = vmatprep.mubr.bf16.mxu0 0
        %3121 = vmatmul.mubr.bf16.gmra.mrb[0].mxu0 %v3009
        %v3122 = vpop.f32.mrb[0].mxu0
        %v3123 = vadd.f32 %v1717, %v3122
        %v3124 = vpop.f32.mrb[0].mxu0
        %v3125 = vpop.f32.mrb[0].mxu0
        %v3126 = vadd.f32 %v1721, %v3125
        %v3127 = vpop.f32.mrb[0].mxu0
        %3128 = vmatprep.mubr.bf16.mxu0 0
        %3129 = vmatmul.mubr.bf16.gmra.mrb[0].mxu0 %v3010
        %v3130 = vpop.f32.mrb[0].mxu0
        %v3131 = vadd.f32 %v1727, %v3130
        %v3132 = vpop.f32.mrb[0].mxu0
        %v3133 = vpop.f32.mrb[0].mxu0
        %v3134 = vadd.f32 %v1731, %v3133
        %v3135 = vpop.f32.mrb[0].mxu0
        %3136 = vmatprep.mubr.bf16.mxu0 0
        %3137 = vmatmul.mubr.bf16.gmra.mrb[0].mxu0 %v3011
        %v3138 = vpop.f32.mrb[0].mxu0
        %v3139 = vadd.f32 %v1737, %v3138
        %v3140 = vpop.f32.mrb[0].mxu0
        %v3141 = vpop.f32.mrb[0].mxu0
        %v3142 = vadd.f32 %v1741, %v3141
        %v3143 = vpop.f32.mrb[0].mxu0
        %3144 = vmatprep.mubr.bf16.mxu0 0
        %3145 = vmatmul.mubr.bf16.gmra.mrb[0].mxu0 %v3012
        %v3146 = vpop.f32.mrb[0].mxu0
        %v3147 = vadd.f32 %v1747, %v3146
        %v3148 = vpop.f32.mrb[0].mxu0
        %v3149 = vpop.f32.mrb[0].mxu0
        %v3150 = vadd.f32 %v1751, %v3149
        %v3151 = vpop.f32.mrb[0].mxu0
        %3152 = vmatprep.mubr.bf16.mxu0 0
        %3153 = vmatmul.mubr.bf16.gmra.mrb[0].mxu0 %v3013
        %v3154 = vpop.f32.mrb[0].mxu0
        %v3155 = vadd.f32 %v1757, %v3154
        %v3156 = vpop.f32.mrb[0].mxu0
        %v3157 = vpop.f32.mrb[0].mxu0
        %v3158 = vadd.f32 %v1761, %v3157
        %v3159 = vpop.f32.mrb[0].mxu0
        %3160 = vmatprep.mubr.bf16.mxu0 0
        %3161 = vmatmul.mubr.bf16.gmra.mrb[0].mxu0 %v3014
        %v3162 = vpop.f32.mrb[0].mxu0
        %v3163 = vadd.f32 %v1767, %v3162
        %v3164 = vpop.f32.mrb[0].mxu0
        %v3165 = vpop.f32.mrb[0].mxu0
        %v3166 = vadd.f32 %v1771, %v3165
        %v3167 = vpop.f32.mrb[0].mxu0
        %3168 = vmatprep.mubr.bf16.mxu0 0
        %3169 = vmatmul.mubr.bf16.gmra.mrb[0].mxu0 %v3015
        %v3170 = vpop.f32.mrb[0].mxu0
        %v3171 = vadd.f32 %v1777, %v3170
        %v3172 = vpop.f32.mrb[0].mxu0
        %v3173 = vpop.f32.mrb[0].mxu0
        %v3174 = vadd.f32 %v1781, %v3173
        %v3175 = vpop.f32.mrb[0].mxu0
        %3176 = vdwg.mxu0
        %v3177 = vmax.f32 %v3051, 0.0
        %v3178 = vmax.f32 %v3054, 0.0
        %v3179 = vmax.f32 %v3059, 0.0
        %v3180 = vmax.f32 %v3062, 0.0
        %v3181 = vmax.f32 %v3067, 0.0
        %v3182 = vmax.f32 %v3070, 0.0
        %v3183 = vmax.f32 %v3075, 0.0
        %v3184 = vmax.f32 %v3078, 0.0
        %v3185 = vmax.f32 %v3083, 0.0
        %v3186 = vmax.f32 %v3086, 0.0
        %v3187 = vmax.f32 %v3091, 0.0
        %v3188 = vmax.f32 %v3094, 0.0
        %v3189 = vmax.f32 %v3099, 0.0
        %v3190 = vmax.f32 %v3102, 0.0
        %v3191 = vmax.f32 %v3107, 0.0
        %v3192 = vmax.f32 %v3110, 0.0
        %v3193 = vmax.f32 %v3115, 0.0
        %v3194 = vmax.f32 %v3118, 0.0
        %v3195 = vmax.f32 %v3123, 0.0
        %v3196 = vmax.f32 %v3126, 0.0
        %v3197 = vmax.f32 %v3131, 0.0
        %v3198 = vmax.f32 %v3134, 0.0
        %v3199 = vmax.f32 %v3139, 0.0
        %v3200 = vmax.f32 %v3142, 0.0
        %v3201 = vmax.f32 %v3147, 0.0
        %v3202 = vmax.f32 %v3150, 0.0
        %v3203 = vmax.f32 %v3155, 0.0
        %v3204 = vmax.f32 %v3158, 0.0
        %v3205 = vmax.f32 %v3163, 0.0
        %v3206 = vmax.f32 %v3166, 0.0
        %v3207 = vmax.f32 %v3171, 0.0
        %v3208 = vmax.f32 %v3174, 0.0
        %v3209 = vpack.c.bf16 %v3178, %v3177
        %v3210 = vpack.c.bf16 %v3180, %v3179
        %v3211 = vpack.c.bf16 %v3182, %v3181
        %v3212 = vpack.c.bf16 %v3184, %v3183
        %v3213 = vpack.c.bf16 %v3186, %v3185
        %v3214 = vpack.c.bf16 %v3188, %v3187
        %v3215 = vpack.c.bf16 %v3190, %v3189
        %v3216 = vpack.c.bf16 %v3192, %v3191
        %v3217 = vpack.c.bf16 %v3194, %v3193
        %v3218 = vpack.c.bf16 %v3196, %v3195
        %v3219 = vpack.c.bf16 %v3198, %v3197
        %v3220 = vpack.c.bf16 %v3200, %v3199
        %v3221 = vpack.c.bf16 %v3202, %v3201
        %v3222 = vpack.c.bf16 %v3204, %v3203
        %v3223 = vpack.c.bf16 %v3206, %v3205
        %v3224 = vpack.c.bf16 %v3208, %v3207
        %3225 = vmatprep.subr.bf16.mxu0 0
        %3226 = vmatpush1.bf16.msra.mxu0 %v2582
        %3227 = vmatprep.subr.bf16.mxu0 0
        %3228 = vmatpush1.bf16.msra.mxu0 %v2583
        %3229 = vmatprep.subr.bf16.mxu0 0
        %3230 = vmatpush1.bf16.msra.mxu0 %v2584
        %3231 = vmatprep.subr.bf16.mxu0 0
        %3232 = vmatpush1.bf16.msra.mxu0 %v2585
        %3233 = vmatprep.subr.bf16.mxu0 0
        %3234 = vmatpush1.bf16.msra.mxu0 %v2586
        %3235 = vmatprep.subr.bf16.mxu0 0
        %3236 = vmatpush1.bf16.msra.mxu0 %v2587
        %3237 = vmatprep.subr.bf16.mxu0 0
        %3238 = vmatpush1.bf16.msra.mxu0 %v2588
        %3239 = vmatprep.subr.bf16.mxu0 0
        %3240 = vmatpush1.bf16.msra.mxu0 %v2589
        %3241 = vmatprep.subr.bf16.mxu0 0
        %3242 = vmatpush1.bf16.msra.mxu0 0
        %3243 = vmatprep.subr.bf16.mxu0 0
        %3244 = vmatpush1.bf16.msra.mxu0 0
        %3245 = vmatprep.subr.bf16.mxu0 0
        %3246 = vmatpush1.bf16.msra.mxu0 0
        %3247 = vmatprep.subr.bf16.mxu0 0
        %3248 = vmatpush1.bf16.msra.mxu0 0
        %3249 = vmatprep.subr.bf16.mxu0 0
        %3250 = vmatpush1.bf16.msra.mxu0 0
        %3251 = vmatprep.subr.bf16.mxu0 0
        %3252 = vmatpush1.bf16.msra.mxu0 0
        %3253 = vmatprep.subr.bf16.mxu0 0
        %3254 = vmatpush1.bf16.msra.mxu0 0
        %3255 = vmatprep.subr.bf16.mxu0 0
        %3256 = vmatpush1.bf16.msra.mxu0 0
        %3257 = vmatprep.mubr.bf16.mxu0 0
        %3258 = vmatmul.mubr.bf16.gmra.mrb[0].mxu0 %v3209
        %v3259 = vpop.f32.mrb[0].mxu0
        %v3260 = vadd.f32 %v1787, %v3259
        %v3261 = vpop.f32.mrb[0].mxu0
        %v3262 = vpop.f32.mrb[0].mxu0
        %v3263 = vadd.f32 %v1791, %v3262
        %v3264 = vpop.f32.mrb[0].mxu0
        %3265 = vmatprep.mubr.bf16.mxu0 0
        %3266 = vmatmul.mubr.bf16.gmra.mrb[0].mxu0 %v3210
        %v3267 = vpop.f32.mrb[0].mxu0
        %v3268 = vadd.f32 %v1797, %v3267
        %v3269 = vpop.f32.mrb[0].mxu0
        %v3270 = vpop.f32.mrb[0].mxu0
        %v3271 = vadd.f32 %v1801, %v3270
        %v3272 = vpop.f32.mrb[0].mxu0
        %3273 = vmatprep.mubr.bf16.mxu0 0
        %3274 = vmatmul.mubr.bf16.gmra.mrb[0].mxu0 %v3211
        %v3275 = vpop.f32.mrb[0].mxu0
        %v3276 = vadd.f32 %v1807, %v3275
        %v3277 = vpop.f32.mrb[0].mxu0
        %v3278 = vpop.f32.mrb[0].mxu0
        %v3279 = vadd.f32 %v1811, %v3278
        %v3280 = vpop.f32.mrb[0].mxu0
        %3281 = vmatprep.mubr.bf16.mxu0 0
        %3282 = vmatmul.mubr.bf16.gmra.mrb[0].mxu0 %v3212
        %v3283 = vpop.f32.mrb[0].mxu0
        %v3284 = vadd.f32 %v1817, %v3283
        %v3285 = vpop.f32.mrb[0].mxu0
        %v3286 = vpop.f32.mrb[0].mxu0
        %v3287 = vadd.f32 %v1821, %v3286
        %v3288 = vpop.f32.mrb[0].mxu0
        %3289 = vmatprep.mubr.bf16.mxu0 0
        %3290 = vmatmul.mubr.bf16.gmra.mrb[0].mxu0 %v3213
        %v3291 = vpop.f32.mrb[0].mxu0
        %v3292 = vadd.f32 %v1827, %v3291
        %v3293 = vpop.f32.mrb[0].mxu0
        %v3294 = vpop.f32.mrb[0].mxu0
        %v3295 = vadd.f32 %v1831, %v3294
        %v3296 = vpop.f32.mrb[0].mxu0
        %3297 = vmatprep.mubr.bf16.mxu0 0
        %3298 = vmatmul.mubr.bf16.gmra.mrb[0].mxu0 %v3214
        %v3299 = vpop.f32.mrb[0].mxu0
        %v3300 = vadd.f32 %v1837, %v3299
        %v3301 = vpop.f32.mrb[0].mxu0
        %v3302 = vpop.f32.mrb[0].mxu0
        %v3303 = vadd.f32 %v1841, %v3302
        %v3304 = vpop.f32.mrb[0].mxu0
        %3305 = vmatprep.mubr.bf16.mxu0 0
        %3306 = vmatmul.mubr.bf16.gmra.mrb[0].mxu0 %v3215
        %v3307 = vpop.f32.mrb[0].mxu0
        %v3308 = vadd.f32 %v1847, %v3307
        %v3309 = vpop.f32.mrb[0].mxu0
        %v3310 = vpop.f32.mrb[0].mxu0
        %v3311 = vadd.f32 %v1851, %v3310
        %v3312 = vpop.f32.mrb[0].mxu0
        %3313 = vmatprep.mubr.bf16.mxu0 0
        %3314 = vmatmul.mubr.bf16.gmra.mrb[0].mxu0 %v3216
        %v3315 = vpop.f32.mrb[0].mxu0
        %v3316 = vadd.f32 %v1857, %v3315
        %v3317 = vpop.f32.mrb[0].mxu0
        %v3318 = vpop.f32.mrb[0].mxu0
        %v3319 = vadd.f32 %v1861, %v3318
        %v3320 = vpop.f32.mrb[0].mxu0
        %3321 = vmatprep.mubr.bf16.mxu0 0
        %3322 = vmatmul.mubr.bf16.gmra.mrb[0].mxu0 %v3217
        %v3323 = vpop.f32.mrb[0].mxu0
        %v3324 = vadd.f32 %v1867, %v3323
        %v3325 = vpop.f32.mrb[0].mxu0
        %v3326 = vpop.f32.mrb[0].mxu0
        %v3327 = vadd.f32 %v1871, %v3326
        %v3328 = vpop.f32.mrb[0].mxu0
        %3329 = vmatprep.mubr.bf16.mxu0 0
        %3330 = vmatmul.mubr.bf16.gmra.mrb[0].mxu0 %v3218
        %v3331 = vpop.f32.mrb[0].mxu0
        %v3332 = vadd.f32 %v1877, %v3331
        %v3333 = vpop.f32.mrb[0].mxu0
        %v3334 = vpop.f32.mrb[0].mxu0
        %v3335 = vadd.f32 %v1881, %v3334
        %v3336 = vpop.f32.mrb[0].mxu0
        %3337 = vmatprep.mubr.bf16.mxu0 0
        %3338 = vmatmul.mubr.bf16.gmra.mrb[0].mxu0 %v3219
        %v3339 = vpop.f32.mrb[0].mxu0
        %v3340 = vadd.f32 %v1887, %v3339
        %v3341 = vpop.f32.mrb[0].mxu0
        %v3342 = vpop.f32.mrb[0].mxu0
        %v3343 = vadd.f32 %v1891, %v3342
        %v3344 = vpop.f32.mrb[0].mxu0
        %3345 = vmatprep.mubr.bf16.mxu0 0
        %3346 = vmatmul.mubr.bf16.gmra.mrb[0].mxu0 %v3220
        %v3347 = vpop.f32.mrb[0].mxu0
        %v3348 = vadd.f32 %v1897, %v3347
        %v3349 = vpop.f32.mrb[0].mxu0
        %v3350 = vpop.f32.mrb[0].mxu0
        %v3351 = vadd.f32 %v1901, %v3350
        %v3352 = vpop.f32.mrb[0].mxu0
        %3353 = vmatprep.mubr.bf16.mxu0 0
        %3354 = vmatmul.mubr.bf16.gmra.mrb[0].mxu0 %v3221
        %v3355 = vpop.f32.mrb[0].mxu0
        %v3356 = vadd.f32 %v1907, %v3355
        %v3357 = vpop.f32.mrb[0].mxu0
        %v3358 = vpop.f32.mrb[0].mxu0
        %v3359 = vadd.f32 %v1911, %v3358
        %v3360 = vpop.f32.mrb[0].mxu0
        %3361 = vmatprep.mubr.bf16.mxu0 0
        %3362 = vmatmul.mubr.bf16.gmra.mrb[0].mxu0 %v3222
        %v3363 = vpop.f32.mrb[0].mxu0
        %v3364 = vadd.f32 %v1917, %v3363
        %v3365 = vpop.f32.mrb[0].mxu0
        %v3366 = vpop.f32.mrb[0].mxu0
        %v3367 = vadd.f32 %v1921, %v3366
        %v3368 = vpop.f32.mrb[0].mxu0
        %3369 = vmatprep.mubr.bf16.mxu0 0
        %3370 = vmatmul.mubr.bf16.gmra.mrb[0].mxu0 %v3223
        %v3371 = vpop.f32.mrb[0].mxu0
        %v3372 = vadd.f32 %v1927, %v3371
        %v3373 = vpop.f32.mrb[0].mxu0
        %v3374 = vpop.f32.mrb[0].mxu0
        %v3375 = vadd.f32 %v1931, %v3374
        %v3376 = vpop.f32.mrb[0].mxu0
        %3377 = vmatprep.mubr.bf16.mxu0 0
        %3378 = vmatmul.mubr.bf16.gmra.mrb[0].mxu0 %v3224
        %v3379 = vpop.f32.mrb[0].mxu0
        %v3380 = vadd.f32 %v1937, %v3379
        %v3381 = vpop.f32.mrb[0].mxu0
        %v3382 = vpop.f32.mrb[0].mxu0
        %v3383 = vadd.f32 %v1941, %v3382
        %v3384 = vpop.f32.mrb[0].mxu0
        %3385 = vdwg.mxu0
        %v3386 = vmax.f32 %v3260, 0.0
        %v3387 = vmax.f32 %v3263, 0.0
        %v3388 = vmax.f32 %v3268, 0.0
        %v3389 = vmax.f32 %v3271, 0.0
        %v3390 = vmax.f32 %v3276, 0.0
        %v3391 = vmax.f32 %v3279, 0.0
        %v3392 = vmax.f32 %v3284, 0.0
        %v3393 = vmax.f32 %v3287, 0.0
        %v3394 = vmax.f32 %v3292, 0.0
        %v3395 = vmax.f32 %v3295, 0.0
        %v3396 = vmax.f32 %v3300, 0.0
        %v3397 = vmax.f32 %v3303, 0.0
        %v3398 = vmax.f32 %v3308, 0.0
        %v3399 = vmax.f32 %v3311, 0.0
        %v3400 = vmax.f32 %v3316, 0.0
        %v3401 = vmax.f32 %v3319, 0.0
        %v3402 = vmax.f32 %v3324, 0.0
        %v3403 = vmax.f32 %v3327, 0.0
        %v3404 = vmax.f32 %v3332, 0.0
        %v3405 = vmax.f32 %v3335, 0.0
        %v3406 = vmax.f32 %v3340, 0.0
        %v3407 = vmax.f32 %v3343, 0.0
        %v3408 = vmax.f32 %v3348, 0.0
        %v3409 = vmax.f32 %v3351, 0.0
        %v3410 = vmax.f32 %v3356, 0.0
        %v3411 = vmax.f32 %v3359, 0.0
        %v3412 = vmax.f32 %v3364, 0.0
        %v3413 = vmax.f32 %v3367, 0.0
        %v3414 = vmax.f32 %v3372, 0.0
        %v3415 = vmax.f32 %v3375, 0.0
        %v3416 = vmax.f32 %v3380, 0.0
        %v3417 = vmax.f32 %v3383, 0.0
        %v3418 = vld [vmem:[%s7] sm:$0xf]
        %v3419 = vld [vmem:[%s7 + $0x4] sm:$0xf]
        %v3420 = vld [vmem:[%s7 + $0x8] sm:$0xf]
        %v3421 = vld [vmem:[%s7 + $0xc] sm:$0xf]
        %v3422 = vld [vmem:[%s7 + $0x10] sm:$0xf]
        %v3423 = vld [vmem:[%s7 + $0x14] sm:$0xf]
        %v3424 = vld [vmem:[%s7 + $0x18] sm:$0xf]
        %v3425 = vld [vmem:[%s7 + $0x1c] sm:$0xf]
        %v3426 = vld [vmem:[%s7 + $0x20] sm:$0xf]
        %v3427 = vld [vmem:[%s7 + $0x24] sm:$0xf]
        %v3428 = vld [vmem:[%s7 + $0x28] sm:$0xf]
        %v3429 = vld [vmem:[%s7 + $0x2c] sm:$0xf]
        %v3430 = vld [vmem:[%s7 + $0x30] sm:$0xf]
        %v3431 = vld [vmem:[%s7 + $0x34] sm:$0xf]
        %v3432 = vld [vmem:[%s7 + $0x38] sm:$0xf]
        %v3433 = vld [vmem:[%s7 + $0x3c] sm:$0xf]
        %v3434 = vld [vmem:[%s8] sm:$0x1]
        %v3435 = vlaneseq
        %v3436 = vshrl.u32 %v3435, 7
        %v3437 = vsub.s32 0, %v3436
        %v3438 = vrot.slane %v3434, %v3437
        %v3455 = vunpack.c.l.b16 %v3418
        %v3456 = vunpack.c.l.b16 %v3419
        %v3457 = vunpack.c.l.b16 %v3420
        %v3458 = vunpack.c.l.b16 %v3421
        %v3459 = vunpack.c.l.b16 %v3422
        %v3460 = vunpack.c.l.b16 %v3423
        %v3461 = vunpack.c.l.b16 %v3424
        %v3462 = vunpack.c.l.b16 %v3425
        %v3463 = vunpack.c.l.b16 %v3426
        %v3464 = vunpack.c.l.b16 %v3427
        %v3465 = vunpack.c.l.b16 %v3428
        %v3466 = vunpack.c.l.b16 %v3429
        %v3467 = vunpack.c.l.b16 %v3430
        %v3468 = vunpack.c.l.b16 %v3431
        %v3469 = vunpack.c.l.b16 %v3432
        %v3470 = vunpack.c.l.b16 %v3433
        %v3471 = vpack.c.b16 %v3456, %v3455
        %v3472 = vpack.c.b16 %v3458, %v3457
        %v3473 = vpack.c.b16 %v3460, %v3459
        %v3474 = vpack.c.b16 %v3462, %v3461
        %v3475 = vpack.c.b16 %v3464, %v3463
        %v3476 = vpack.c.b16 %v3466, %v3465
        %v3477 = vpack.c.b16 %v3468, %v3467
        %v3478 = vpack.c.b16 %v3470, %v3469
        %3487 = vmatprep.subr.bf16.mxu0 0
        %3488 = vmatpush1.bf16.msra.mxu0 %v3471
        %3489 = vmatprep.subr.bf16.mxu0 0
        %3490 = vmatpush1.bf16.msra.mxu0 %v3472
        %3491 = vmatprep.subr.bf16.mxu0 0
        %3492 = vmatpush1.bf16.msra.mxu0 %v3473
        %3493 = vmatprep.subr.bf16.mxu0 0
        %3494 = vmatpush1.bf16.msra.mxu0 %v3474
        %3495 = vmatprep.subr.bf16.mxu0 0
        %3496 = vmatpush1.bf16.msra.mxu0 %v3475
        %3497 = vmatprep.subr.bf16.mxu0 0
        %3498 = vmatpush1.bf16.msra.mxu0 %v3476
        %3499 = vmatprep.subr.bf16.mxu0 0
        %3500 = vmatpush1.bf16.msra.mxu0 %v3477
        %3501 = vmatprep.subr.bf16.mxu0 0
        %3502 = vmatpush1.bf16.msra.mxu0 %v3478
        %3503 = vmatprep.subr.bf16.mxu0 0
        %3504 = vmatpush1.bf16.msra.mxu0 0
        %3505 = vmatprep.subr.bf16.mxu0 0
        %3506 = vmatpush1.bf16.msra.mxu0 0
        %3507 = vmatprep.subr.bf16.mxu0 0
        %3508 = vmatpush1.bf16.msra.mxu0 0
        %3509 = vmatprep.subr.bf16.mxu0 0
        %3510 = vmatpush1.bf16.msra.mxu0 0
        %3511 = vmatprep.subr.bf16.mxu0 0
        %3512 = vmatpush1.bf16.msra.mxu0 0
        %3513 = vmatprep.subr.bf16.mxu0 0
        %3514 = vmatpush1.bf16.msra.mxu0 0
        %3515 = vmatprep.subr.bf16.mxu0 0
        %3516 = vmatpush1.bf16.msra.mxu0 0
        %3517 = vmatprep.subr.bf16.mxu0 0
        %3518 = vmatpush1.bf16.msra.mxu0 0
        %3519 = vmatprep.mubr.bf16.mxu0 0
        %3520 = vmatmul.mubr.bf16.gmra.mrb[0].mxu0 %v2791
        %v3521 = vpop.f32.mrb[0].mxu0
        %v3522 = vadd.f32 %v3438, %v3521
        %v3523 = vpop.f32.mrb[0].mxu0
        %v3524 = vpop.f32.mrb[0].mxu0
        %v3525 = vadd.f32 %v3438, %v3524
        %v3526 = vpop.f32.mrb[0].mxu0
        %3527 = vmatprep.mubr.bf16.mxu0 0
        %3528 = vmatmul.mubr.bf16.gmra.mrb[0].mxu0 %v2792
        %v3529 = vpop.f32.mrb[0].mxu0
        %v3530 = vadd.f32 %v3438, %v3529
        %v3531 = vpop.f32.mrb[0].mxu0
        %v3532 = vpop.f32.mrb[0].mxu0
        %v3533 = vadd.f32 %v3438, %v3532
        %v3534 = vpop.f32.mrb[0].mxu0
        %3535 = vmatprep.mubr.bf16.mxu0 0
        %3536 = vmatmul.mubr.bf16.gmra.mrb[0].mxu0 %v2793
        %v3537 = vpop.f32.mrb[0].mxu0
        %v3538 = vadd.f32 %v3438, %v3537
        %v3539 = vpop.f32.mrb[0].mxu0
        %v3540 = vpop.f32.mrb[0].mxu0
        %v3541 = vadd.f32 %v3438, %v3540
        %v3542 = vpop.f32.mrb[0].mxu0
        %3543 = vmatprep.mubr.bf16.mxu0 0
        %3544 = vmatmul.mubr.bf16.gmra.mrb[0].mxu0 %v2794
        %v3545 = vpop.f32.mrb[0].mxu0
        %v3546 = vadd.f32 %v3438, %v3545
        %v3547 = vpop.f32.mrb[0].mxu0
        %v3548 = vpop.f32.mrb[0].mxu0
        %v3549 = vadd.f32 %v3438, %v3548
        %v3550 = vpop.f32.mrb[0].mxu0
        %3551 = vmatprep.mubr.bf16.mxu0 0
        %3552 = vmatmul.mubr.bf16.gmra.mrb[0].mxu0 %v2795
        %v3553 = vpop.f32.mrb[0].mxu0
        %v3554 = vadd.f32 %v3438, %v3553
        %v3555 = vpop.f32.mrb[0].mxu0
        %v3556 = vpop.f32.mrb[0].mxu0
        %v3557 = vadd.f32 %v3438, %v3556
        %v3558 = vpop.f32.mrb[0].mxu0
        %3559 = vmatprep.mubr.bf16.mxu0 0
        %3560 = vmatmul.mubr.bf16.gmra.mrb[0].mxu0 %v2796
        %v3561 = vpop.f32.mrb[0].mxu0
        %v3562 = vadd.f32 %v3438, %v3561
        %v3563 = vpop.f32.mrb[0].mxu0
        %v3564 = vpop.f32.mrb[0].mxu0
        %v3565 = vadd.f32 %v3438, %v3564
        %v3566 = vpop.f32.mrb[0].mxu0
        %3567 = vmatprep.mubr.bf16.mxu0 0
        %3568 = vmatmul.mubr.bf16.gmra.mrb[0].mxu0 %v2797
        %v3569 = vpop.f32.mrb[0].mxu0
        %v3570 = vadd.f32 %v3438, %v3569
        %v3571 = vpop.f32.mrb[0].mxu0
        %v3572 = vpop.f32.mrb[0].mxu0
        %v3573 = vadd.f32 %v3438, %v3572
        %v3574 = vpop.f32.mrb[0].mxu0
        %3575 = vmatprep.mubr.bf16.mxu0 0
        %3576 = vmatmul.mubr.bf16.gmra.mrb[0].mxu0 %v2798
        %v3577 = vpop.f32.mrb[0].mxu0
        %v3578 = vadd.f32 %v3438, %v3577
        %v3579 = vpop.f32.mrb[0].mxu0
        %v3580 = vpop.f32.mrb[0].mxu0
        %v3581 = vadd.f32 %v3438, %v3580
        %v3582 = vpop.f32.mrb[0].mxu0
        %3583 = vmatprep.mubr.bf16.mxu0 0
        %3584 = vmatmul.mubr.bf16.gmra.mrb[0].mxu0 %v2799
        %v3585 = vpop.f32.mrb[0].mxu0
        %v3586 = vadd.f32 %v3438, %v3585
        %v3587 = vpop.f32.mrb[0].mxu0
        %v3588 = vpop.f32.mrb[0].mxu0
        %v3589 = vadd.f32 %v3438, %v3588
        %v3590 = vpop.f32.mrb[0].mxu0
        %3591 = vmatprep.mubr.bf16.mxu0 0
        %3592 = vmatmul.mubr.bf16.gmra.mrb[0].mxu0 %v2800
        %v3593 = vpop.f32.mrb[0].mxu0
        %v3594 = vadd.f32 %v3438, %v3593
        %v3595 = vpop.f32.mrb[0].mxu0
        %v3596 = vpop.f32.mrb[0].mxu0
        %v3597 = vadd.f32 %v3438, %v3596
        %v3598 = vpop.f32.mrb[0].mxu0
        %3599 = vmatprep.mubr.bf16.mxu0 0
        %3600 = vmatmul.mubr.bf16.gmra.mrb[0].mxu0 %v2801
        %v3601 = vpop.f32.mrb[0].mxu0
        %v3602 = vadd.f32 %v3438, %v3601
        %v3603 = vpop.f32.mrb[0].mxu0
        %v3604 = vpop.f32.mrb[0].mxu0
        %v3605 = vadd.f32 %v3438, %v3604
        %v3606 = vpop.f32.mrb[0].mxu0
        %3607 = vmatprep.mubr.bf16.mxu0 0
        %3608 = vmatmul.mubr.bf16.gmra.mrb[0].mxu0 %v2802
        %v3609 = vpop.f32.mrb[0].mxu0
        %v3610 = vadd.f32 %v3438, %v3609
        %v3611 = vpop.f32.mrb[0].mxu0
        %v3612 = vpop.f32.mrb[0].mxu0
        %v3613 = vadd.f32 %v3438, %v3612
        %v3614 = vpop.f32.mrb[0].mxu0
        %3615 = vmatprep.mubr.bf16.mxu0 0
        %3616 = vmatmul.mubr.bf16.gmra.mrb[0].mxu0 %v2803
        %v3617 = vpop.f32.mrb[0].mxu0
        %v3618 = vadd.f32 %v3438, %v3617
        %v3619 = vpop.f32.mrb[0].mxu0
        %v3620 = vpop.f32.mrb[0].mxu0
        %v3621 = vadd.f32 %v3438, %v3620
        %v3622 = vpop.f32.mrb[0].mxu0
        %3623 = vmatprep.mubr.bf16.mxu0 0
        %3624 = vmatmul.mubr.bf16.gmra.mrb[0].mxu0 %v2804
        %v3625 = vpop.f32.mrb[0].mxu0
        %v3626 = vadd.f32 %v3438, %v3625
        %v3627 = vpop.f32.mrb[0].mxu0
        %v3628 = vpop.f32.mrb[0].mxu0
        %v3629 = vadd.f32 %v3438, %v3628
        %v3630 = vpop.f32.mrb[0].mxu0
        %3631 = vmatprep.mubr.bf16.mxu0 0
        %3632 = vmatmul.mubr.bf16.gmra.mrb[0].mxu0 %v2805
        %v3633 = vpop.f32.mrb[0].mxu0
        %v3634 = vadd.f32 %v3438, %v3633
        %v3635 = vpop.f32.mrb[0].mxu0
        %v3636 = vpop.f32.mrb[0].mxu0
        %v3637 = vadd.f32 %v3438, %v3636
        %v3638 = vpop.f32.mrb[0].mxu0
        %3639 = vmatprep.mubr.bf16.mxu0 0
        %3640 = vmatmul.mubr.bf16.gmra.mrb[0].mxu0 %v2806
        %v3641 = vpop.f32.mrb[0].mxu0
        %v3642 = vadd.f32 %v3438, %v3641
        %v3643 = vpop.f32.mrb[0].mxu0
        %v3644 = vpop.f32.mrb[0].mxu0
        %v3645 = vadd.f32 %v3438, %v3644
        %v3646 = vpop.f32.mrb[0].mxu0
        %3647 = vdwg.mxu0
        %v3648 = vmax.f32 %v3522, 0.0
        %v3649 = vmax.f32 %v3525, 0.0
        %v3650 = vmax.f32 %v3530, 0.0
        %v3651 = vmax.f32 %v3533, 0.0
        %v3652 = vmax.f32 %v3538, 0.0
        %v3653 = vmax.f32 %v3541, 0.0
        %v3654 = vmax.f32 %v3546, 0.0
        %v3655 = vmax.f32 %v3549, 0.0
        %v3656 = vmax.f32 %v3554, 0.0
        %v3657 = vmax.f32 %v3557, 0.0
        %v3658 = vmax.f32 %v3562, 0.0
        %v3659 = vmax.f32 %v3565, 0.0
        %v3660 = vmax.f32 %v3570, 0.0
        %v3661 = vmax.f32 %v3573, 0.0
        %v3662 = vmax.f32 %v3578, 0.0
        %v3663 = vmax.f32 %v3581, 0.0
        %v3664 = vmax.f32 %v3586, 0.0
        %v3665 = vmax.f32 %v3589, 0.0
        %v3666 = vmax.f32 %v3594, 0.0
        %v3667 = vmax.f32 %v3597, 0.0
        %v3668 = vmax.f32 %v3602, 0.0
        %v3669 = vmax.f32 %v3605, 0.0
        %v3670 = vmax.f32 %v3610, 0.0
        %v3671 = vmax.f32 %v3613, 0.0
        %v3672 = vmax.f32 %v3618, 0.0
        %v3673 = vmax.f32 %v3621, 0.0
        %v3674 = vmax.f32 %v3626, 0.0
        %v3675 = vmax.f32 %v3629, 0.0
        %v3676 = vmax.f32 %v3634, 0.0
        %v3677 = vmax.f32 %v3637, 0.0
        %v3678 = vmax.f32 %v3642, 0.0
        %v3679 = vmax.f32 %v3645, 0.0
        %v3680 = vpack.c.bf16 %v3649, %v3648
        %v3681 = vpack.c.bf16 %v3651, %v3650
        %v3682 = vpack.c.bf16 %v3653, %v3652
        %v3683 = vpack.c.bf16 %v3655, %v3654
        %v3684 = vpack.c.bf16 %v3657, %v3656
        %v3685 = vpack.c.bf16 %v3659, %v3658
        %v3686 = vpack.c.bf16 %v3661, %v3660
        %v3687 = vpack.c.bf16 %v3663, %v3662
        %v3688 = vpack.c.bf16 %v3665, %v3664
        %v3689 = vpack.c.bf16 %v3667, %v3666
        %v3690 = vpack.c.bf16 %v3669, %v3668
        %v3691 = vpack.c.bf16 %v3671, %v3670
        %v3692 = vpack.c.bf16 %v3673, %v3672
        %v3693 = vpack.c.bf16 %v3675, %v3674
        %v3694 = vpack.c.bf16 %v3677, %v3676
        %v3695 = vpack.c.bf16 %v3679, %v3678
        %v3696 = vld [vmem:[%s9] sm:$0xf]
        %v3697 = vld [vmem:[%s9 + $0x4] sm:$0xf]
        %v3698 = vld [vmem:[%s9 + $0x8] sm:$0xf]
        %v3699 = vld [vmem:[%s9 + $0xc] sm:$0xf]
        %v3700 = vld [vmem:[%s9 + $0x10] sm:$0xf]
        %v3701 = vld [vmem:[%s9 + $0x14] sm:$0xf]
        %v3702 = vld [vmem:[%s9 + $0x18] sm:$0xf]
        %v3703 = vld [vmem:[%s9 + $0x1c] sm:$0xf]
        %v3704 = vld [vmem:[%s9 + $0x20] sm:$0xf]
        %v3705 = vld [vmem:[%s9 + $0x24] sm:$0xf]
        %v3706 = vld [vmem:[%s9 + $0x28] sm:$0xf]
        %v3707 = vld [vmem:[%s9 + $0x2c] sm:$0xf]
        %v3708 = vld [vmem:[%s9 + $0x30] sm:$0xf]
        %v3709 = vld [vmem:[%s9 + $0x34] sm:$0xf]
        %v3710 = vld [vmem:[%s9 + $0x38] sm:$0xf]
        %v3711 = vld [vmem:[%s9 + $0x3c] sm:$0xf]
        %v3712 = vld [vmem:[%s10] sm:$0x1]
        %v3713 = vlaneseq
        %v3714 = vshrl.u32 %v3713, 7
        %v3715 = vsub.s32 0, %v3714
        %v3716 = vrot.slane %v3712, %v3715
        %v3733 = vunpack.c.l.b16 %v3696
        %v3734 = vunpack.c.l.b16 %v3697
        %v3735 = vunpack.c.l.b16 %v3698
        %v3736 = vunpack.c.l.b16 %v3699
        %v3737 = vunpack.c.l.b16 %v3700
        %v3738 = vunpack.c.l.b16 %v3701
        %v3739 = vunpack.c.l.b16 %v3702
        %v3740 = vunpack.c.l.b16 %v3703
        %v3741 = vunpack.c.l.b16 %v3704
        %v3742 = vunpack.c.l.b16 %v3705
        %v3743 = vunpack.c.l.b16 %v3706
        %v3744 = vunpack.c.l.b16 %v3707
        %v3745 = vunpack.c.l.b16 %v3708
        %v3746 = vunpack.c.l.b16 %v3709
        %v3747 = vunpack.c.l.b16 %v3710
        %v3748 = vunpack.c.l.b16 %v3711
        %v3749 = vpack.c.b16 %v3734, %v3733
        %v3750 = vpack.c.b16 %v3736, %v3735
        %v3751 = vpack.c.b16 %v3738, %v3737
        %v3752 = vpack.c.b16 %v3740, %v3739
        %v3753 = vpack.c.b16 %v3742, %v3741
        %v3754 = vpack.c.b16 %v3744, %v3743
        %v3755 = vpack.c.b16 %v3746, %v3745
        %v3756 = vpack.c.b16 %v3748, %v3747
        %3765 = vmatprep.subr.bf16.mxu0 0
        %3766 = vmatpush1.bf16.msra.mxu0 %v3749
        %3767 = vmatprep.subr.bf16.mxu0 0
        %3768 = vmatpush1.bf16.msra.mxu0 %v3750
        %3769 = vmatprep.subr.bf16.mxu0 0
        %3770 = vmatpush1.bf16.msra.mxu0 %v3751
        %3771 = vmatprep.subr.bf16.mxu0 0
        %3772 = vmatpush1.bf16.msra.mxu0 %v3752
        %3773 = vmatprep.subr.bf16.mxu0 0
        %3774 = vmatpush1.bf16.msra.mxu0 %v3753
        %3775 = vmatprep.subr.bf16.mxu0 0
        %3776 = vmatpush1.bf16.msra.mxu0 %v3754
        %3777 = vmatprep.subr.bf16.mxu0 0
        %3778 = vmatpush1.bf16.msra.mxu0 %v3755
        %3779 = vmatprep.subr.bf16.mxu0 0
        %3780 = vmatpush1.bf16.msra.mxu0 %v3756
        %3781 = vmatprep.subr.bf16.mxu0 0
        %3782 = vmatpush1.bf16.msra.mxu0 0
        %3783 = vmatprep.subr.bf16.mxu0 0
        %3784 = vmatpush1.bf16.msra.mxu0 0
        %3785 = vmatprep.subr.bf16.mxu0 0
        %3786 = vmatpush1.bf16.msra.mxu0 0
        %3787 = vmatprep.subr.bf16.mxu0 0
        %3788 = vmatpush1.bf16.msra.mxu0 0
        %3789 = vmatprep.subr.bf16.mxu0 0
        %3790 = vmatpush1.bf16.msra.mxu0 0
        %3791 = vmatprep.subr.bf16.mxu0 0
        %3792 = vmatpush1.bf16.msra.mxu0 0
        %3793 = vmatprep.subr.bf16.mxu0 0
        %3794 = vmatpush1.bf16.msra.mxu0 0
        %3795 = vmatprep.subr.bf16.mxu0 0
        %3796 = vmatpush1.bf16.msra.mxu0 0
        %3797 = vmatprep.mubr.bf16.mxu0 0
        %3798 = vmatmul.mubr.bf16.gmra.mrb[0].mxu0 %v3680
        %v3799 = vpop.f32.mrb[0].mxu0
        %v3800 = vadd.f32 %v3716, %v3799
        %v3801 = vpop.f32.mrb[0].mxu0
        %v3802 = vpop.f32.mrb[0].mxu0
        %v3803 = vadd.f32 %v3716, %v3802
        %v3804 = vpop.f32.mrb[0].mxu0
        %3805 = vmatprep.mubr.bf16.mxu0 0
        %3806 = vmatmul.mubr.bf16.gmra.mrb[0].mxu0 %v3681
        %v3807 = vpop.f32.mrb[0].mxu0
        %v3808 = vadd.f32 %v3716, %v3807
        %v3809 = vpop.f32.mrb[0].mxu0
        %v3810 = vpop.f32.mrb[0].mxu0
        %v3811 = vadd.f32 %v3716, %v3810
        %v3812 = vpop.f32.mrb[0].mxu0
        %3813 = vmatprep.mubr.bf16.mxu0 0
        %3814 = vmatmul.mubr.bf16.gmra.mrb[0].mxu0 %v3682
        %v3815 = vpop.f32.mrb[0].mxu0
        %v3816 = vadd.f32 %v3716, %v3815
        %v3817 = vpop.f32.mrb[0].mxu0
        %v3818 = vpop.f32.mrb[0].mxu0
        %v3819 = vadd.f32 %v3716, %v3818
        %v3820 = vpop.f32.mrb[0].mxu0
        %3821 = vmatprep.mubr.bf16.mxu0 0
        %3822 = vmatmul.mubr.bf16.gmra.mrb[0].mxu0 %v3683
        %v3823 = vpop.f32.mrb[0].mxu0
        %v3824 = vadd.f32 %v3716, %v3823
        %v3825 = vpop.f32.mrb[0].mxu0
        %v3826 = vpop.f32.mrb[0].mxu0
        %v3827 = vadd.f32 %v3716, %v3826
        %v3828 = vpop.f32.mrb[0].mxu0
        %3829 = vmatprep.mubr.bf16.mxu0 0
        %3830 = vmatmul.mubr.bf16.gmra.mrb[0].mxu0 %v3684
        %v3831 = vpop.f32.mrb[0].mxu0
        %v3832 = vadd.f32 %v3716, %v3831
        %v3833 = vpop.f32.mrb[0].mxu0
        %v3834 = vpop.f32.mrb[0].mxu0
        %v3835 = vadd.f32 %v3716, %v3834
        %v3836 = vpop.f32.mrb[0].mxu0
        %3837 = vmatprep.mubr.bf16.mxu0 0
        %3838 = vmatmul.mubr.bf16.gmra.mrb[0].mxu0 %v3685
        %v3839 = vpop.f32.mrb[0].mxu0
        %v3840 = vadd.f32 %v3716, %v3839
        %v3841 = vpop.f32.mrb[0].mxu0
        %v3842 = vpop.f32.mrb[0].mxu0
        %v3843 = vadd.f32 %v3716, %v3842
        %v3844 = vpop.f32.mrb[0].mxu0
        %3845 = vmatprep.mubr.bf16.mxu0 0
        %3846 = vmatmul.mubr.bf16.gmra.mrb[0].mxu0 %v3686
        %v3847 = vpop.f32.mrb[0].mxu0
        %v3848 = vadd.f32 %v3716, %v3847
        %v3849 = vpop.f32.mrb[0].mxu0
        %v3850 = vpop.f32.mrb[0].mxu0
        %v3851 = vadd.f32 %v3716, %v3850
        %v3852 = vpop.f32.mrb[0].mxu0
        %3853 = vmatprep.mubr.bf16.mxu0 0
        %3854 = vmatmul.mubr.bf16.gmra.mrb[0].mxu0 %v3687
        %v3855 = vpop.f32.mrb[0].mxu0
        %v3856 = vadd.f32 %v3716, %v3855
        %v3857 = vpop.f32.mrb[0].mxu0
        %v3858 = vpop.f32.mrb[0].mxu0
        %v3859 = vadd.f32 %v3716, %v3858
        %v3860 = vpop.f32.mrb[0].mxu0
        %3861 = vmatprep.mubr.bf16.mxu0 0
        %3862 = vmatmul.mubr.bf16.gmra.mrb[0].mxu0 %v3688
        %v3863 = vpop.f32.mrb[0].mxu0
        %v3864 = vadd.f32 %v3716, %v3863
        %v3865 = vpop.f32.mrb[0].mxu0
        %v3866 = vpop.f32.mrb[0].mxu0
        %v3867 = vadd.f32 %v3716, %v3866
        %v3868 = vpop.f32.mrb[0].mxu0
        %3869 = vmatprep.mubr.bf16.mxu0 0
        %3870 = vmatmul.mubr.bf16.gmra.mrb[0].mxu0 %v3689
        %v3871 = vpop.f32.mrb[0].mxu0
        %v3872 = vadd.f32 %v3716, %v3871
        %v3873 = vpop.f32.mrb[0].mxu0
        %v3874 = vpop.f32.mrb[0].mxu0
        %v3875 = vadd.f32 %v3716, %v3874
        %v3876 = vpop.f32.mrb[0].mxu0
        %3877 = vmatprep.mubr.bf16.mxu0 0
        %3878 = vmatmul.mubr.bf16.gmra.mrb[0].mxu0 %v3690
        %v3879 = vpop.f32.mrb[0].mxu0
        %v3880 = vadd.f32 %v3716, %v3879
        %v3881 = vpop.f32.mrb[0].mxu0
        %v3882 = vpop.f32.mrb[0].mxu0
        %v3883 = vadd.f32 %v3716, %v3882
        %v3884 = vpop.f32.mrb[0].mxu0
        %3885 = vmatprep.mubr.bf16.mxu0 0
        %3886 = vmatmul.mubr.bf16.gmra.mrb[0].mxu0 %v3691
        %v3887 = vpop.f32.mrb[0].mxu0
        %v3888 = vadd.f32 %v3716, %v3887
        %v3889 = vpop.f32.mrb[0].mxu0
        %v3890 = vpop.f32.mrb[0].mxu0
        %v3891 = vadd.f32 %v3716, %v3890
        %v3892 = vpop.f32.mrb[0].mxu0
        %3893 = vmatprep.mubr.bf16.mxu0 0
        %3894 = vmatmul.mubr.bf16.gmra.mrb[0].mxu0 %v3692
        %v3895 = vpop.f32.mrb[0].mxu0
        %v3896 = vadd.f32 %v3716, %v3895
        %v3897 = vpop.f32.mrb[0].mxu0
        %v3898 = vpop.f32.mrb[0].mxu0
        %v3899 = vadd.f32 %v3716, %v3898
        %v3900 = vpop.f32.mrb[0].mxu0
        %3901 = vmatprep.mubr.bf16.mxu0 0
        %3902 = vmatmul.mubr.bf16.gmra.mrb[0].mxu0 %v3693
        %v3903 = vpop.f32.mrb[0].mxu0
        %v3904 = vadd.f32 %v3716, %v3903
        %v3905 = vpop.f32.mrb[0].mxu0
        %v3906 = vpop.f32.mrb[0].mxu0
        %v3907 = vadd.f32 %v3716, %v3906
        %v3908 = vpop.f32.mrb[0].mxu0
        %3909 = vmatprep.mubr.bf16.mxu0 0
        %3910 = vmatmul.mubr.bf16.gmra.mrb[0].mxu0 %v3694
        %v3911 = vpop.f32.mrb[0].mxu0
        %v3912 = vadd.f32 %v3716, %v3911
        %v3913 = vpop.f32.mrb[0].mxu0
        %v3914 = vpop.f32.mrb[0].mxu0
        %v3915 = vadd.f32 %v3716, %v3914
        %v3916 = vpop.f32.mrb[0].mxu0
        %3917 = vmatprep.mubr.bf16.mxu0 0
        %3918 = vmatmul.mubr.bf16.gmra.mrb[0].mxu0 %v3695
        %v3919 = vpop.f32.mrb[0].mxu0
        %v3920 = vadd.f32 %v3716, %v3919
        %v3921 = vpop.f32.mrb[0].mxu0
        %v3922 = vpop.f32.mrb[0].mxu0
        %v3923 = vadd.f32 %v3716, %v3922
        %v3924 = vpop.f32.mrb[0].mxu0
        %3925 = vdwg.mxu0
        %v3926 = vmax.f32 %v3800, 0.0
        %v3927 = vmax.f32 %v3803, 0.0
        %v3928 = vmax.f32 %v3808, 0.0
        %v3929 = vmax.f32 %v3811, 0.0
        %v3930 = vmax.f32 %v3816, 0.0
        %v3931 = vmax.f32 %v3819, 0.0
        %v3932 = vmax.f32 %v3824, 0.0
        %v3933 = vmax.f32 %v3827, 0.0
        %v3934 = vmax.f32 %v3832, 0.0
        %v3935 = vmax.f32 %v3835, 0.0
        %v3936 = vmax.f32 %v3840, 0.0
        %v3937 = vmax.f32 %v3843, 0.0
        %v3938 = vmax.f32 %v3848, 0.0
        %v3939 = vmax.f32 %v3851, 0.0
        %v3940 = vmax.f32 %v3856, 0.0
        %v3941 = vmax.f32 %v3859, 0.0
        %v3942 = vmax.f32 %v3864, 0.0
        %v3943 = vmax.f32 %v3867, 0.0
        %v3944 = vmax.f32 %v3872, 0.0
        %v3945 = vmax.f32 %v3875, 0.0
        %v3946 = vmax.f32 %v3880, 0.0
        %v3947 = vmax.f32 %v3883, 0.0
        %v3948 = vmax.f32 %v3888, 0.0
        %v3949 = vmax.f32 %v3891, 0.0
        %v3950 = vmax.f32 %v3896, 0.0
        %v3951 = vmax.f32 %v3899, 0.0
        %v3952 = vmax.f32 %v3904, 0.0
        %v3953 = vmax.f32 %v3907, 0.0
        %v3954 = vmax.f32 %v3912, 0.0
        %v3955 = vmax.f32 %v3915, 0.0
        %v3956 = vmax.f32 %v3920, 0.0
        %v3957 = vmax.f32 %v3923, 0.0
        %3958 = vst [vmem:[%s958] sm:$0xff] %v3926
        %3959 = vst [vmem:[%s958 + $0x8] sm:$0xff] %v3927
        %3960 = vst [vmem:[%s958 + $0x10] sm:$0xff] %v3928
        %3961 = vst [vmem:[%s958 + $0x18] sm:$0xff] %v3929
        %3962 = vst [vmem:[%s958 + $0x20] sm:$0xff] %v3930
        %3963 = vst [vmem:[%s958 + $0x28] sm:$0xff] %v3931
        %3964 = vst [vmem:[%s958 + $0x30] sm:$0xff] %v3932
        %3965 = vst [vmem:[%s958 + $0x38] sm:$0xff] %v3933
        %3966 = vst [vmem:[%s958 + $0x40] sm:$0xff] %v3934
        %3967 = vst [vmem:[%s958 + $0x48] sm:$0xff] %v3935
        %3968 = vst [vmem:[%s958 + $0x50] sm:$0xff] %v3936
        %3969 = vst [vmem:[%s958 + $0x58] sm:$0xff] %v3937
        %3970 = vst [vmem:[%s958 + $0x60] sm:$0xff] %v3938
        %3971 = vst [vmem:[%s958 + $0x68] sm:$0xff] %v3939
        %3972 = vst [vmem:[%s958 + $0x70] sm:$0xff] %v3940
        %3973 = vst [vmem:[%s958 + $0x78] sm:$0xff] %v3941
        %3974 = vst [vmem:[%s958 + $0x80] sm:$0xff] %v3942
        %3975 = vst [vmem:[%s958 + $0x88] sm:$0xff] %v3943
        %3976 = vst [vmem:[%s958 + $0x90] sm:$0xff] %v3944
        %3977 = vst [vmem:[%s958 + $0x98] sm:$0xff] %v3945
        %3978 = vst [vmem:[%s958 + $0xa0] sm:$0xff] %v3946
        %3979 = vst [vmem:[%s958 + $0xa8] sm:$0xff] %v3947
        %3980 = vst [vmem:[%s958 + $0xb0] sm:$0xff] %v3948
        %3981 = vst [vmem:[%s958 + $0xb8] sm:$0xff] %v3949
        %3982 = vst [vmem:[%s958 + $0xc0] sm:$0xff] %v3950
        %3983 = vst [vmem:[%s958 + $0xc8] sm:$0xff] %v3951
        %3984 = vst [vmem:[%s958 + $0xd0] sm:$0xff] %v3952
        %3985 = vst [vmem:[%s958 + $0xd8] sm:$0xff] %v3953
        %3986 = vst [vmem:[%s958 + $0xe0] sm:$0xff] %v3954
        %3987 = vst [vmem:[%s958 + $0xe8] sm:$0xff] %v3955
        %3988 = vst [vmem:[%s958 + $0xf0] sm:$0xff] %v3956
        %3989 = vst [vmem:[%s958 + $0xf8] sm:$0xff] %v3957
        %s3990 = scalar_lea.vmem %s7, 64
        %v3991 = vld [vmem:[%s3990] sm:$0xf]
        %v3992 = vld [vmem:[%s3990 + $0x4] sm:$0xf]
        %v3993 = vld [vmem:[%s3990 + $0x8] sm:$0xf]
        %v3994 = vld [vmem:[%s3990 + $0xc] sm:$0xf]
        %v3995 = vld [vmem:[%s3990 + $0x10] sm:$0xf]
        %v3996 = vld [vmem:[%s3990 + $0x14] sm:$0xf]
        %v3997 = vld [vmem:[%s3990 + $0x18] sm:$0xf]
        %v3998 = vld [vmem:[%s3990 + $0x1c] sm:$0xf]
        %v3999 = vld [vmem:[%s3990 + $0x20] sm:$0xf]
        %v4000 = vld [vmem:[%s3990 + $0x24] sm:$0xf]
        %v4001 = vld [vmem:[%s3990 + $0x28] sm:$0xf]
        %v4002 = vld [vmem:[%s3990 + $0x2c] sm:$0xf]
        %v4003 = vld [vmem:[%s3990 + $0x30] sm:$0xf]
        %v4004 = vld [vmem:[%s3990 + $0x34] sm:$0xf]
        %v4005 = vld [vmem:[%s3990 + $0x38] sm:$0xf]
        %v4006 = vld [vmem:[%s3990 + $0x3c] sm:$0xf]
        %v4007 = vld [vmem:[%s8 + $0x1] sm:$0x1]
        %v4008 = vlaneseq
        %v4009 = vshrl.u32 %v4008, 7
        %v4010 = vsub.s32 0, %v4009
        %v4011 = vrot.slane %v4007, %v4010
        %v4028 = vunpack.c.l.b16 %v3991
        %v4029 = vunpack.c.l.b16 %v3992
        %v4030 = vunpack.c.l.b16 %v3993
        %v4031 = vunpack.c.l.b16 %v3994
        %v4032 = vunpack.c.l.b16 %v3995
        %v4033 = vunpack.c.l.b16 %v3996
        %v4034 = vunpack.c.l.b16 %v3997
        %v4035 = vunpack.c.l.b16 %v3998
        %v4036 = vunpack.c.l.b16 %v3999
        %v4037 = vunpack.c.l.b16 %v4000
        %v4038 = vunpack.c.l.b16 %v4001
        %v4039 = vunpack.c.l.b16 %v4002
        %v4040 = vunpack.c.l.b16 %v4003
        %v4041 = vunpack.c.l.b16 %v4004
        %v4042 = vunpack.c.l.b16 %v4005
        %v4043 = vunpack.c.l.b16 %v4006
        %v4044 = vpack.c.b16 %v4029, %v4028
        %v4045 = vpack.c.b16 %v4031, %v4030
        %v4046 = vpack.c.b16 %v4033, %v4032
        %v4047 = vpack.c.b16 %v4035, %v4034
        %v4048 = vpack.c.b16 %v4037, %v4036
        %v4049 = vpack.c.b16 %v4039, %v4038
        %v4050 = vpack.c.b16 %v4041, %v4040
        %v4051 = vpack.c.b16 %v4043, %v4042
        %4060 = vmatprep.subr.bf16.mxu0 0
        %4061 = vmatpush1.bf16.msra.mxu0 %v4044
        %4062 = vmatprep.subr.bf16.mxu0 0
        %4063 = vmatpush1.bf16.msra.mxu0 %v4045
        %4064 = vmatprep.subr.bf16.mxu0 0
        %4065 = vmatpush1.bf16.msra.mxu0 %v4046
        %4066 = vmatprep.subr.bf16.mxu0 0
        %4067 = vmatpush1.bf16.msra.mxu0 %v4047
        %4068 = vmatprep.subr.bf16.mxu0 0
        %4069 = vmatpush1.bf16.msra.mxu0 %v4048
        %4070 = vmatprep.subr.bf16.mxu0 0
        %4071 = vmatpush1.bf16.msra.mxu0 %v4049
        %4072 = vmatprep.subr.bf16.mxu0 0
        %4073 = vmatpush1.bf16.msra.mxu0 %v4050
        %4074 = vmatprep.subr.bf16.mxu0 0
        %4075 = vmatpush1.bf16.msra.mxu0 %v4051
        %4076 = vmatprep.subr.bf16.mxu0 0
        %4077 = vmatpush1.bf16.msra.mxu0 0
        %4078 = vmatprep.subr.bf16.mxu0 0
        %4079 = vmatpush1.bf16.msra.mxu0 0
        %4080 = vmatprep.subr.bf16.mxu0 0
        %4081 = vmatpush1.bf16.msra.mxu0 0
        %4082 = vmatprep.subr.bf16.mxu0 0
        %4083 = vmatpush1.bf16.msra.mxu0 0
        %4084 = vmatprep.subr.bf16.mxu0 0
        %4085 = vmatpush1.bf16.msra.mxu0 0
        %4086 = vmatprep.subr.bf16.mxu0 0
        %4087 = vmatpush1.bf16.msra.mxu0 0
        %4088 = vmatprep.subr.bf16.mxu0 0
        %4089 = vmatpush1.bf16.msra.mxu0 0
        %4090 = vmatprep.subr.bf16.mxu0 0
        %4091 = vmatpush1.bf16.msra.mxu0 0
        %4092 = vmatprep.mubr.bf16.mxu0 0
        %4093 = vmatmul.mubr.bf16.gmra.mrb[0].mxu0 %v3000
        %v4094 = vpop.f32.mrb[0].mxu0
        %v4095 = vadd.f32 %v4011, %v4094
        %v4096 = vpop.f32.mrb[0].mxu0
        %v4097 = vpop.f32.mrb[0].mxu0
        %v4098 = vadd.f32 %v4011, %v4097
        %v4099 = vpop.f32.mrb[0].mxu0
        %4100 = vmatprep.mubr.bf16.mxu0 0
        %4101 = vmatmul.mubr.bf16.gmra.mrb[0].mxu0 %v3001
        %v4102 = vpop.f32.mrb[0].mxu0
        %v4103 = vadd.f32 %v4011, %v4102
        %v4104 = vpop.f32.mrb[0].mxu0
        %v4105 = vpop.f32.mrb[0].mxu0
        %v4106 = vadd.f32 %v4011, %v4105
        %v4107 = vpop.f32.mrb[0].mxu0
        %4108 = vmatprep.mubr.bf16.mxu0 0
        %4109 = vmatmul.mubr.bf16.gmra.mrb[0].mxu0 %v3002
        %v4110 = vpop.f32.mrb[0].mxu0
        %v4111 = vadd.f32 %v4011, %v4110
        %v4112 = vpop.f32.mrb[0].mxu0
        %v4113 = vpop.f32.mrb[0].mxu0
        %v4114 = vadd.f32 %v4011, %v4113
        %v4115 = vpop.f32.mrb[0].mxu0
        %4116 = vmatprep.mubr.bf16.mxu0 0
        %4117 = vmatmul.mubr.bf16.gmra.mrb[0].mxu0 %v3003
        %v4118 = vpop.f32.mrb[0].mxu0
        %v4119 = vadd.f32 %v4011, %v4118
        %v4120 = vpop.f32.mrb[0].mxu0
        %v4121 = vpop.f32.mrb[0].mxu0
        %v4122 = vadd.f32 %v4011, %v4121
        %v4123 = vpop.f32.mrb[0].mxu0
        %4124 = vmatprep.mubr.bf16.mxu0 0
        %4125 = vmatmul.mubr.bf16.gmra.mrb[0].mxu0 %v3004
        %v4126 = vpop.f32.mrb[0].mxu0
        %v4127 = vadd.f32 %v4011, %v4126
        %v4128 = vpop.f32.mrb[0].mxu0
        %v4129 = vpop.f32.mrb[0].mxu0
        %v4130 = vadd.f32 %v4011, %v4129
        %v4131 = vpop.f32.mrb[0].mxu0
        %4132 = vmatprep.mubr.bf16.mxu0 0
        %4133 = vmatmul.mubr.bf16.gmra.mrb[0].mxu0 %v3005
        %v4134 = vpop.f32.mrb[0].mxu0
        %v4135 = vadd.f32 %v4011, %v4134
        %v4136 = vpop.f32.mrb[0].mxu0
        %v4137 = vpop.f32.mrb[0].mxu0
        %v4138 = vadd.f32 %v4011, %v4137
        %v4139 = vpop.f32.mrb[0].mxu0
        %4140 = vmatprep.mubr.bf16.mxu0 0
        %4141 = vmatmul.mubr.bf16.gmra.mrb[0].mxu0 %v3006
        %v4142 = vpop.f32.mrb[0].mxu0
        %v4143 = vadd.f32 %v4011, %v4142
        %v4144 = vpop.f32.mrb[0].mxu0
        %v4145 = vpop.f32.mrb[0].mxu0
        %v4146 = vadd.f32 %v4011, %v4145
        %v4147 = vpop.f32.mrb[0].mxu0
        %4148 = vmatprep.mubr.bf16.mxu0 0
        %4149 = vmatmul.mubr.bf16.gmra.mrb[0].mxu0 %v3007
        %v4150 = vpop.f32.mrb[0].mxu0
        %v4151 = vadd.f32 %v4011, %v4150
        %v4152 = vpop.f32.mrb[0].mxu0
        %v4153 = vpop.f32.mrb[0].mxu0
        %v4154 = vadd.f32 %v4011, %v4153
        %v4155 = vpop.f32.mrb[0].mxu0
        %4156 = vmatprep.mubr.bf16.mxu0 0
        %4157 = vmatmul.mubr.bf16.gmra.mrb[0].mxu0 %v3008
        %v4158 = vpop.f32.mrb[0].mxu0
        %v4159 = vadd.f32 %v4011, %v4158
        %v4160 = vpop.f32.mrb[0].mxu0
        %v4161 = vpop.f32.mrb[0].mxu0
        %v4162 = vadd.f32 %v4011, %v4161
        %v4163 = vpop.f32.mrb[0].mxu0
        %4164 = vmatprep.mubr.bf16.mxu0 0
        %4165 = vmatmul.mubr.bf16.gmra.mrb[0].mxu0 %v3009
        %v4166 = vpop.f32.mrb[0].mxu0
        %v4167 = vadd.f32 %v4011, %v4166
        %v4168 = vpop.f32.mrb[0].mxu0
        %v4169 = vpop.f32.mrb[0].mxu0
        %v4170 = vadd.f32 %v4011, %v4169
        %v4171 = vpop.f32.mrb[0].mxu0
        %4172 = vmatprep.mubr.bf16.mxu0 0
        %4173 = vmatmul.mubr.bf16.gmra.mrb[0].mxu0 %v3010
        %v4174 = vpop.f32.mrb[0].mxu0
        %v4175 = vadd.f32 %v4011, %v4174
        %v4176 = vpop.f32.mrb[0].mxu0
        %v4177 = vpop.f32.mrb[0].mxu0
        %v4178 = vadd.f32 %v4011, %v4177
        %v4179 = vpop.f32.mrb[0].mxu0
        %4180 = vmatprep.mubr.bf16.mxu0 0
        %4181 = vmatmul.mubr.bf16.gmra.mrb[0].mxu0 %v3011
        %v4182 = vpop.f32.mrb[0].mxu0
        %v4183 = vadd.f32 %v4011, %v4182
        %v4184 = vpop.f32.mrb[0].mxu0
        %v4185 = vpop.f32.mrb[0].mxu0
        %v4186 = vadd.f32 %v4011, %v4185
        %v4187 = vpop.f32.mrb[0].mxu0
        %4188 = vmatprep.mubr.bf16.mxu0 0
        %4189 = vmatmul.mubr.bf16.gmra.mrb[0].mxu0 %v3012
        %v4190 = vpop.f32.mrb[0].mxu0
        %v4191 = vadd.f32 %v4011, %v4190
        %v4192 = vpop.f32.mrb[0].mxu0
        %v4193 = vpop.f32.mrb[0].mxu0
        %v4194 = vadd.f32 %v4011, %v4193
        %v4195 = vpop.f32.mrb[0].mxu0
        %4196 = vmatprep.mubr.bf16.mxu0 0
        %4197 = vmatmul.mubr.bf16.gmra.mrb[0].mxu0 %v3013
        %v4198 = vpop.f32.mrb[0].mxu0
        %v4199 = vadd.f32 %v4011, %v4198
        %v4200 = vpop.f32.mrb[0].mxu0
        %v4201 = vpop.f32.mrb[0].mxu0
        %v4202 = vadd.f32 %v4011, %v4201
        %v4203 = vpop.f32.mrb[0].mxu0
        %4204 = vmatprep.mubr.bf16.mxu0 0
        %4205 = vmatmul.mubr.bf16.gmra.mrb[0].mxu0 %v3014
        %v4206 = vpop.f32.mrb[0].mxu0
        %v4207 = vadd.f32 %v4011, %v4206
        %v4208 = vpop.f32.mrb[0].mxu0
        %v4209 = vpop.f32.mrb[0].mxu0
        %v4210 = vadd.f32 %v4011, %v4209
        %v4211 = vpop.f32.mrb[0].mxu0
        %4212 = vmatprep.mubr.bf16.mxu0 0
        %4213 = vmatmul.mubr.bf16.gmra.mrb[0].mxu0 %v3015
        %v4214 = vpop.f32.mrb[0].mxu0
        %v4215 = vadd.f32 %v4011, %v4214
        %v4216 = vpop.f32.mrb[0].mxu0
        %v4217 = vpop.f32.mrb[0].mxu0
        %v4218 = vadd.f32 %v4011, %v4217
        %v4219 = vpop.f32.mrb[0].mxu0
        %4220 = vdwg.mxu0
        %v4221 = vmax.f32 %v4095, 0.0
        %v4222 = vmax.f32 %v4098, 0.0
        %v4223 = vmax.f32 %v4103, 0.0
        %v4224 = vmax.f32 %v4106, 0.0
        %v4225 = vmax.f32 %v4111, 0.0
        %v4226 = vmax.f32 %v4114, 0.0
        %v4227 = vmax.f32 %v4119, 0.0
        %v4228 = vmax.f32 %v4122, 0.0
        %v4229 = vmax.f32 %v4127, 0.0
        %v4230 = vmax.f32 %v4130, 0.0
        %v4231 = vmax.f32 %v4135, 0.0
        %v4232 = vmax.f32 %v4138, 0.0
        %v4233 = vmax.f32 %v4143, 0.0
        %v4234 = vmax.f32 %v4146, 0.0
        %v4235 = vmax.f32 %v4151, 0.0
        %v4236 = vmax.f32 %v4154, 0.0
        %v4237 = vmax.f32 %v4159, 0.0
        %v4238 = vmax.f32 %v4162, 0.0
        %v4239 = vmax.f32 %v4167, 0.0
        %v4240 = vmax.f32 %v4170, 0.0
        %v4241 = vmax.f32 %v4175, 0.0
        %v4242 = vmax.f32 %v4178, 0.0
        %v4243 = vmax.f32 %v4183, 0.0
        %v4244 = vmax.f32 %v4186, 0.0
        %v4245 = vmax.f32 %v4191, 0.0
        %v4246 = vmax.f32 %v4194, 0.0
        %v4247 = vmax.f32 %v4199, 0.0
        %v4248 = vmax.f32 %v4202, 0.0
        %v4249 = vmax.f32 %v4207, 0.0
        %v4250 = vmax.f32 %v4210, 0.0
        %v4251 = vmax.f32 %v4215, 0.0
        %v4252 = vmax.f32 %v4218, 0.0
        %v4253 = vpack.c.bf16 %v4222, %v4221
        %v4254 = vpack.c.bf16 %v4224, %v4223
        %v4255 = vpack.c.bf16 %v4226, %v4225
        %v4256 = vpack.c.bf16 %v4228, %v4227
        %v4257 = vpack.c.bf16 %v4230, %v4229
        %v4258 = vpack.c.bf16 %v4232, %v4231
        %v4259 = vpack.c.bf16 %v4234, %v4233
        %v4260 = vpack.c.bf16 %v4236, %v4235
        %v4261 = vpack.c.bf16 %v4238, %v4237
        %v4262 = vpack.c.bf16 %v4240, %v4239
        %v4263 = vpack.c.bf16 %v4242, %v4241
        %v4264 = vpack.c.bf16 %v4244, %v4243
        %v4265 = vpack.c.bf16 %v4246, %v4245
        %v4266 = vpack.c.bf16 %v4248, %v4247
        %v4267 = vpack.c.bf16 %v4250, %v4249
        %v4268 = vpack.c.bf16 %v4252, %v4251
        %s4269 = scalar_lea.vmem %s9, 64
        %v4270 = vld [vmem:[%s4269] sm:$0xf]
        %v4271 = vld [vmem:[%s4269 + $0x4] sm:$0xf]
        %v4272 = vld [vmem:[%s4269 + $0x8] sm:$0xf]
        %v4273 = vld [vmem:[%s4269 + $0xc] sm:$0xf]
        %v4274 = vld [vmem:[%s4269 + $0x10] sm:$0xf]
        %v4275 = vld [vmem:[%s4269 + $0x14] sm:$0xf]
        %v4276 = vld [vmem:[%s4269 + $0x18] sm:$0xf]
        %v4277 = vld [vmem:[%s4269 + $0x1c] sm:$0xf]
        %v4278 = vld [vmem:[%s4269 + $0x20] sm:$0xf]
        %v4279 = vld [vmem:[%s4269 + $0x24] sm:$0xf]
        %v4280 = vld [vmem:[%s4269 + $0x28] sm:$0xf]
        %v4281 = vld [vmem:[%s4269 + $0x2c] sm:$0xf]
        %v4282 = vld [vmem:[%s4269 + $0x30] sm:$0xf]
        %v4283 = vld [vmem:[%s4269 + $0x34] sm:$0xf]
        %v4284 = vld [vmem:[%s4269 + $0x38] sm:$0xf]
        %v4285 = vld [vmem:[%s4269 + $0x3c] sm:$0xf]
        %v4286 = vld [vmem:[%s10 + $0x1] sm:$0x1]
        %v4287 = vlaneseq
        %v4288 = vshrl.u32 %v4287, 7
        %v4289 = vsub.s32 0, %v4288
        %v4290 = vrot.slane %v4286, %v4289
        %v4307 = vunpack.c.l.b16 %v4270
        %v4308 = vunpack.c.l.b16 %v4271
        %v4309 = vunpack.c.l.b16 %v4272
        %v4310 = vunpack.c.l.b16 %v4273
        %v4311 = vunpack.c.l.b16 %v4274
        %v4312 = vunpack.c.l.b16 %v4275
        %v4313 = vunpack.c.l.b16 %v4276
        %v4314 = vunpack.c.l.b16 %v4277
        %v4315 = vunpack.c.l.b16 %v4278
        %v4316 = vunpack.c.l.b16 %v4279
        %v4317 = vunpack.c.l.b16 %v4280
        %v4318 = vunpack.c.l.b16 %v4281
        %v4319 = vunpack.c.l.b16 %v4282
        %v4320 = vunpack.c.l.b16 %v4283
        %v4321 = vunpack.c.l.b16 %v4284
        %v4322 = vunpack.c.l.b16 %v4285
        %v4323 = vpack.c.b16 %v4308, %v4307
        %v4324 = vpack.c.b16 %v4310, %v4309
        %v4325 = vpack.c.b16 %v4312, %v4311
        %v4326 = vpack.c.b16 %v4314, %v4313
        %v4327 = vpack.c.b16 %v4316, %v4315
        %v4328 = vpack.c.b16 %v4318, %v4317
        %v4329 = vpack.c.b16 %v4320, %v4319
        %v4330 = vpack.c.b16 %v4322, %v4321
        %4339 = vmatprep.subr.bf16.mxu0 0
        %4340 = vmatpush1.bf16.msra.mxu0 %v4323
        %4341 = vmatprep.subr.bf16.mxu0 0
        %4342 = vmatpush1.bf16.msra.mxu0 %v4324
        %4343 = vmatprep.subr.bf16.mxu0 0
        %4344 = vmatpush1.bf16.msra.mxu0 %v4325
        %4345 = vmatprep.subr.bf16.mxu0 0
        %4346 = vmatpush1.bf16.msra.mxu0 %v4326
        %4347 = vmatprep.subr.bf16.mxu0 0
        %4348 = vmatpush1.bf16.msra.mxu0 %v4327
        %4349 = vmatprep.subr.bf16.mxu0 0
        %4350 = vmatpush1.bf16.msra.mxu0 %v4328
        %4351 = vmatprep.subr.bf16.mxu0 0
        %4352 = vmatpush1.bf16.msra.mxu0 %v4329
        %4353 = vmatprep.subr.bf16.mxu0 0
        %4354 = vmatpush1.bf16.msra.mxu0 %v4330
        %4355 = vmatprep.subr.bf16.mxu0 0
        %4356 = vmatpush1.bf16.msra.mxu0 0
        %4357 = vmatprep.subr.bf16.mxu0 0
        %4358 = vmatpush1.bf16.msra.mxu0 0
        %4359 = vmatprep.subr.bf16.mxu0 0
        %4360 = vmatpush1.bf16.msra.mxu0 0
        %4361 = vmatprep.subr.bf16.mxu0 0
        %4362 = vmatpush1.bf16.msra.mxu0 0
        %4363 = vmatprep.subr.bf16.mxu0 0
        %4364 = vmatpush1.bf16.msra.mxu0 0
        %4365 = vmatprep.subr.bf16.mxu0 0
        %4366 = vmatpush1.bf16.msra.mxu0 0
        %4367 = vmatprep.subr.bf16.mxu0 0
        %4368 = vmatpush1.bf16.msra.mxu0 0
        %4369 = vmatprep.subr.bf16.mxu0 0
        %4370 = vmatpush1.bf16.msra.mxu0 0
        %4371 = vmatprep.mubr.bf16.mxu0 0
        %4372 = vmatmul.mubr.bf16.gmra.mrb[0].mxu0 %v4253
        %v4373 = vpop.f32.mrb[0].mxu0
        %v4374 = vadd.f32 %v4290, %v4373
        %v4375 = vpop.f32.mrb[0].mxu0
        %v4376 = vpop.f32.mrb[0].mxu0
        %v4377 = vadd.f32 %v4290, %v4376
        %v4378 = vpop.f32.mrb[0].mxu0
        %4379 = vmatprep.mubr.bf16.mxu0 0
        %4380 = vmatmul.mubr.bf16.gmra.mrb[0].mxu0 %v4254
        %v4381 = vpop.f32.mrb[0].mxu0
        %v4382 = vadd.f32 %v4290, %v4381
        %v4383 = vpop.f32.mrb[0].mxu0
        %v4384 = vpop.f32.mrb[0].mxu0
        %v4385 = vadd.f32 %v4290, %v4384
        %v4386 = vpop.f32.mrb[0].mxu0
        %4387 = vmatprep.mubr.bf16.mxu0 0
        %4388 = vmatmul.mubr.bf16.gmra.mrb[0].mxu0 %v4255
        %v4389 = vpop.f32.mrb[0].mxu0
        %v4390 = vadd.f32 %v4290, %v4389
        %v4391 = vpop.f32.mrb[0].mxu0
        %v4392 = vpop.f32.mrb[0].mxu0
        %v4393 = vadd.f32 %v4290, %v4392
        %v4394 = vpop.f32.mrb[0].mxu0
        %4395 = vmatprep.mubr.bf16.mxu0 0
        %4396 = vmatmul.mubr.bf16.gmra.mrb[0].mxu0 %v4256
        %v4397 = vpop.f32.mrb[0].mxu0
        %v4398 = vadd.f32 %v4290, %v4397
        %v4399 = vpop.f32.mrb[0].mxu0
        %v4400 = vpop.f32.mrb[0].mxu0
        %v4401 = vadd.f32 %v4290, %v4400
        %v4402 = vpop.f32.mrb[0].mxu0
        %4403 = vmatprep.mubr.bf16.mxu0 0
        %4404 = vmatmul.mubr.bf16.gmra.mrb[0].mxu0 %v4257
        %v4405 = vpop.f32.mrb[0].mxu0
        %v4406 = vadd.f32 %v4290, %v4405
        %v4407 = vpop.f32.mrb[0].mxu0
        %v4408 = vpop.f32.mrb[0].mxu0
        %v4409 = vadd.f32 %v4290, %v4408
        %v4410 = vpop.f32.mrb[0].mxu0
        %4411 = vmatprep.mubr.bf16.mxu0 0
        %4412 = vmatmul.mubr.bf16.gmra.mrb[0].mxu0 %v4258
        %v4413 = vpop.f32.mrb[0].mxu0
        %v4414 = vadd.f32 %v4290, %v4413
        %v4415 = vpop.f32.mrb[0].mxu0
        %v4416 = vpop.f32.mrb[0].mxu0
        %v4417 = vadd.f32 %v4290, %v4416
        %v4418 = vpop.f32.mrb[0].mxu0
        %4419 = vmatprep.mubr.bf16.mxu0 0
        %4420 = vmatmul.mubr.bf16.gmra.mrb[0].mxu0 %v4259
        %v4421 = vpop.f32.mrb[0].mxu0
        %v4422 = vadd.f32 %v4290, %v4421
        %v4423 = vpop.f32.mrb[0].mxu0
        %v4424 = vpop.f32.mrb[0].mxu0
        %v4425 = vadd.f32 %v4290, %v4424
        %v4426 = vpop.f32.mrb[0].mxu0
        %4427 = vmatprep.mubr.bf16.mxu0 0
        %4428 = vmatmul.mubr.bf16.gmra.mrb[0].mxu0 %v4260
        %v4429 = vpop.f32.mrb[0].mxu0
        %v4430 = vadd.f32 %v4290, %v4429
        %v4431 = vpop.f32.mrb[0].mxu0
        %v4432 = vpop.f32.mrb[0].mxu0
        %v4433 = vadd.f32 %v4290, %v4432
        %v4434 = vpop.f32.mrb[0].mxu0
        %4435 = vmatprep.mubr.bf16.mxu0 0
        %4436 = vmatmul.mubr.bf16.gmra.mrb[0].mxu0 %v4261
        %v4437 = vpop.f32.mrb[0].mxu0
        %v4438 = vadd.f32 %v4290, %v4437
        %v4439 = vpop.f32.mrb[0].mxu0
        %v4440 = vpop.f32.mrb[0].mxu0
        %v4441 = vadd.f32 %v4290, %v4440
        %v4442 = vpop.f32.mrb[0].mxu0
        %4443 = vmatprep.mubr.bf16.mxu0 0
        %4444 = vmatmul.mubr.bf16.gmra.mrb[0].mxu0 %v4262
        %v4445 = vpop.f32.mrb[0].mxu0
        %v4446 = vadd.f32 %v4290, %v4445
        %v4447 = vpop.f32.mrb[0].mxu0
        %v4448 = vpop.f32.mrb[0].mxu0
        %v4449 = vadd.f32 %v4290, %v4448
        %v4450 = vpop.f32.mrb[0].mxu0
        %4451 = vmatprep.mubr.bf16.mxu0 0
        %4452 = vmatmul.mubr.bf16.gmra.mrb[0].mxu0 %v4263
        %v4453 = vpop.f32.mrb[0].mxu0
        %v4454 = vadd.f32 %v4290, %v4453
        %v4455 = vpop.f32.mrb[0].mxu0
        %v4456 = vpop.f32.mrb[0].mxu0
        %v4457 = vadd.f32 %v4290, %v4456
        %v4458 = vpop.f32.mrb[0].mxu0
        %4459 = vmatprep.mubr.bf16.mxu0 0
        %4460 = vmatmul.mubr.bf16.gmra.mrb[0].mxu0 %v4264
        %v4461 = vpop.f32.mrb[0].mxu0
        %v4462 = vadd.f32 %v4290, %v4461
        %v4463 = vpop.f32.mrb[0].mxu0
        %v4464 = vpop.f32.mrb[0].mxu0
        %v4465 = vadd.f32 %v4290, %v4464
        %v4466 = vpop.f32.mrb[0].mxu0
        %4467 = vmatprep.mubr.bf16.mxu0 0
        %4468 = vmatmul.mubr.bf16.gmra.mrb[0].mxu0 %v4265
        %v4469 = vpop.f32.mrb[0].mxu0
        %v4470 = vadd.f32 %v4290, %v4469
        %v4471 = vpop.f32.mrb[0].mxu0
        %v4472 = vpop.f32.mrb[0].mxu0
        %v4473 = vadd.f32 %v4290, %v4472
        %v4474 = vpop.f32.mrb[0].mxu0
        %4475 = vmatprep.mubr.bf16.mxu0 0
        %4476 = vmatmul.mubr.bf16.gmra.mrb[0].mxu0 %v4266
        %v4477 = vpop.f32.mrb[0].mxu0
        %v4478 = vadd.f32 %v4290, %v4477
        %v4479 = vpop.f32.mrb[0].mxu0
        %v4480 = vpop.f32.mrb[0].mxu0
        %v4481 = vadd.f32 %v4290, %v4480
        %v4482 = vpop.f32.mrb[0].mxu0
        %4483 = vmatprep.mubr.bf16.mxu0 0
        %4484 = vmatmul.mubr.bf16.gmra.mrb[0].mxu0 %v4267
        %v4485 = vpop.f32.mrb[0].mxu0
        %v4486 = vadd.f32 %v4290, %v4485
        %v4487 = vpop.f32.mrb[0].mxu0
        %v4488 = vpop.f32.mrb[0].mxu0
        %v4489 = vadd.f32 %v4290, %v4488
        %v4490 = vpop.f32.mrb[0].mxu0
        %4491 = vmatprep.mubr.bf16.mxu0 0
        %4492 = vmatmul.mubr.bf16.gmra.mrb[0].mxu0 %v4268
        %v4493 = vpop.f32.mrb[0].mxu0
        %v4494 = vadd.f32 %v4290, %v4493
        %v4495 = vpop.f32.mrb[0].mxu0
        %v4496 = vpop.f32.mrb[0].mxu0
        %v4497 = vadd.f32 %v4290, %v4496
        %v4498 = vpop.f32.mrb[0].mxu0
        %4499 = vdwg.mxu0
        %v4500 = vmax.f32 %v4374, 0.0
        %v4501 = vmax.f32 %v4377, 0.0
        %v4502 = vmax.f32 %v4382, 0.0
        %v4503 = vmax.f32 %v4385, 0.0
        %v4504 = vmax.f32 %v4390, 0.0
        %v4505 = vmax.f32 %v4393, 0.0
        %v4506 = vmax.f32 %v4398, 0.0
        %v4507 = vmax.f32 %v4401, 0.0
        %v4508 = vmax.f32 %v4406, 0.0
        %v4509 = vmax.f32 %v4409, 0.0
        %v4510 = vmax.f32 %v4414, 0.0
        %v4511 = vmax.f32 %v4417, 0.0
        %v4512 = vmax.f32 %v4422, 0.0
        %v4513 = vmax.f32 %v4425, 0.0
        %v4514 = vmax.f32 %v4430, 0.0
        %v4515 = vmax.f32 %v4433, 0.0
        %v4516 = vmax.f32 %v4438, 0.0
        %v4517 = vmax.f32 %v4441, 0.0
        %v4518 = vmax.f32 %v4446, 0.0
        %v4519 = vmax.f32 %v4449, 0.0
        %v4520 = vmax.f32 %v4454, 0.0
        %v4521 = vmax.f32 %v4457, 0.0
        %v4522 = vmax.f32 %v4462, 0.0
        %v4523 = vmax.f32 %v4465, 0.0
        %v4524 = vmax.f32 %v4470, 0.0
        %v4525 = vmax.f32 %v4473, 0.0
        %v4526 = vmax.f32 %v4478, 0.0
        %v4527 = vmax.f32 %v4481, 0.0
        %v4528 = vmax.f32 %v4486, 0.0
        %v4529 = vmax.f32 %v4489, 0.0
        %v4530 = vmax.f32 %v4494, 0.0
        %v4531 = vmax.f32 %v4497, 0.0
        %s4532 = scalar_lea.vmem %s958, 256 [#allocation3]
        %4533 = vst [vmem:[%s4532] sm:$0xff] %v4500
        %4534 = vst [vmem:[%s4532 + $0x8] sm:$0xff] %v4501
        %4535 = vst [vmem:[%s4532 + $0x10] sm:$0xff] %v4502
        %4536 = vst [vmem:[%s4532 + $0x18] sm:$0xff] %v4503
        %4537 = vst [vmem:[%s4532 + $0x20] sm:$0xff] %v4504
        %4538 = vst [vmem:[%s4532 + $0x28] sm:$0xff] %v4505
        %4539 = vst [vmem:[%s4532 + $0x30] sm:$0xff] %v4506
        %4540 = vst [vmem:[%s4532 + $0x38] sm:$0xff] %v4507
        %4541 = vst [vmem:[%s4532 + $0x40] sm:$0xff] %v4508
        %4542 = vst [vmem:[%s4532 + $0x48] sm:$0xff] %v4509
        %4543 = vst [vmem:[%s4532 + $0x50] sm:$0xff] %v4510
        %4544 = vst [vmem:[%s4532 + $0x58] sm:$0xff] %v4511
        %4545 = vst [vmem:[%s4532 + $0x60] sm:$0xff] %v4512
        %4546 = vst [vmem:[%s4532 + $0x68] sm:$0xff] %v4513
        %4547 = vst [vmem:[%s4532 + $0x70] sm:$0xff] %v4514
        %4548 = vst [vmem:[%s4532 + $0x78] sm:$0xff] %v4515
        %4549 = vst [vmem:[%s4532 + $0x80] sm:$0xff] %v4516
        %4550 = vst [vmem:[%s4532 + $0x88] sm:$0xff] %v4517
        %4551 = vst [vmem:[%s4532 + $0x90] sm:$0xff] %v4518
        %4552 = vst [vmem:[%s4532 + $0x98] sm:$0xff] %v4519
        %4553 = vst [vmem:[%s4532 + $0xa0] sm:$0xff] %v4520
        %4554 = vst [vmem:[%s4532 + $0xa8] sm:$0xff] %v4521
        %4555 = vst [vmem:[%s4532 + $0xb0] sm:$0xff] %v4522
        %4556 = vst [vmem:[%s4532 + $0xb8] sm:$0xff] %v4523
        %4557 = vst [vmem:[%s4532 + $0xc0] sm:$0xff] %v4524
        %4558 = vst [vmem:[%s4532 + $0xc8] sm:$0xff] %v4525
        %4559 = vst [vmem:[%s4532 + $0xd0] sm:$0xff] %v4526
        %4560 = vst [vmem:[%s4532 + $0xd8] sm:$0xff] %v4527
        %4561 = vst [vmem:[%s4532 + $0xe0] sm:$0xff] %v4528
        %4562 = vst [vmem:[%s4532 + $0xe8] sm:$0xff] %v4529
        %4563 = vst [vmem:[%s4532 + $0xf0] sm:$0xff] %v4530
        %4564 = vst [vmem:[%s4532 + $0xf8] sm:$0xff] %v4531
        %s4565 = scalar_lea.vmem %s7, 128
        %v4566 = vld [vmem:[%s4565] sm:$0xf]
        %v4567 = vld [vmem:[%s4565 + $0x4] sm:$0xf]
        %v4568 = vld [vmem:[%s4565 + $0x8] sm:$0xf]
        %v4569 = vld [vmem:[%s4565 + $0xc] sm:$0xf]
        %v4570 = vld [vmem:[%s4565 + $0x10] sm:$0xf]
        %v4571 = vld [vmem:[%s4565 + $0x14] sm:$0xf]
        %v4572 = vld [vmem:[%s4565 + $0x18] sm:$0xf]
        %v4573 = vld [vmem:[%s4565 + $0x1c] sm:$0xf]
        %v4574 = vld [vmem:[%s4565 + $0x20] sm:$0xf]
        %v4575 = vld [vmem:[%s4565 + $0x24] sm:$0xf]
        %v4576 = vld [vmem:[%s4565 + $0x28] sm:$0xf]
        %v4577 = vld [vmem:[%s4565 + $0x2c] sm:$0xf]
        %v4578 = vld [vmem:[%s4565 + $0x30] sm:$0xf]
        %v4579 = vld [vmem:[%s4565 + $0x34] sm:$0xf]
        %v4580 = vld [vmem:[%s4565 + $0x38] sm:$0xf]
        %v4581 = vld [vmem:[%s4565 + $0x3c] sm:$0xf]
        %v4582 = vld [vmem:[%s8 + $0x2] sm:$0x1]
        %v4583 = vlaneseq
        %v4584 = vshrl.u32 %v4583, 7
        %v4585 = vsub.s32 0, %v4584
        %v4586 = vrot.slane %v4582, %v4585
        %v4603 = vunpack.c.l.b16 %v4566
        %v4604 = vunpack.c.l.b16 %v4567
        %v4605 = vunpack.c.l.b16 %v4568
        %v4606 = vunpack.c.l.b16 %v4569
        %v4607 = vunpack.c.l.b16 %v4570
        %v4608 = vunpack.c.l.b16 %v4571
        %v4609 = vunpack.c.l.b16 %v4572
        %v4610 = vunpack.c.l.b16 %v4573
        %v4611 = vunpack.c.l.b16 %v4574
        %v4612 = vunpack.c.l.b16 %v4575
        %v4613 = vunpack.c.l.b16 %v4576
        %v4614 = vunpack.c.l.b16 %v4577
        %v4615 = vunpack.c.l.b16 %v4578
        %v4616 = vunpack.c.l.b16 %v4579
        %v4617 = vunpack.c.l.b16 %v4580
        %v4618 = vunpack.c.l.b16 %v4581
        %v4619 = vpack.c.b16 %v4604, %v4603
        %v4620 = vpack.c.b16 %v4606, %v4605
        %v4621 = vpack.c.b16 %v4608, %v4607
        %v4622 = vpack.c.b16 %v4610, %v4609
        %v4623 = vpack.c.b16 %v4612, %v4611
        %v4624 = vpack.c.b16 %v4614, %v4613
        %v4625 = vpack.c.b16 %v4616, %v4615
        %v4626 = vpack.c.b16 %v4618, %v4617
        %4635 = vmatprep.subr.bf16.mxu0 0
        %4636 = vmatpush1.bf16.msra.mxu0 %v4619
        %4637 = vmatprep.subr.bf16.mxu0 0
        %4638 = vmatpush1.bf16.msra.mxu0 %v4620
        %4639 = vmatprep.subr.bf16.mxu0 0
        %4640 = vmatpush1.bf16.msra.mxu0 %v4621
        %4641 = vmatprep.subr.bf16.mxu0 0
        %4642 = vmatpush1.bf16.msra.mxu0 %v4622
        %4643 = vmatprep.subr.bf16.mxu0 0
        %4644 = vmatpush1.bf16.msra.mxu0 %v4623
        %4645 = vmatprep.subr.bf16.mxu0 0
        %4646 = vmatpush1.bf16.msra.mxu0 %v4624
        %4647 = vmatprep.subr.bf16.mxu0 0
        %4648 = vmatpush1.bf16.msra.mxu0 %v4625
        %4649 = vmatprep.subr.bf16.mxu0 0
        %4650 = vmatpush1.bf16.msra.mxu0 %v4626
        %4651 = vmatprep.subr.bf16.mxu0 0
        %4652 = vmatpush1.bf16.msra.mxu0 0
        %4653 = vmatprep.subr.bf16.mxu0 0
        %4654 = vmatpush1.bf16.msra.mxu0 0
        %4655 = vmatprep.subr.bf16.mxu0 0
        %4656 = vmatpush1.bf16.msra.mxu0 0
        %4657 = vmatprep.subr.bf16.mxu0 0
        %4658 = vmatpush1.bf16.msra.mxu0 0
        %4659 = vmatprep.subr.bf16.mxu0 0
        %4660 = vmatpush1.bf16.msra.mxu0 0
        %4661 = vmatprep.subr.bf16.mxu0 0
        %4662 = vmatpush1.bf16.msra.mxu0 0
        %4663 = vmatprep.subr.bf16.mxu0 0
        %4664 = vmatpush1.bf16.msra.mxu0 0
        %4665 = vmatprep.subr.bf16.mxu0 0
        %4666 = vmatpush1.bf16.msra.mxu0 0
        %4667 = vmatprep.mubr.bf16.mxu0 0
        %4668 = vmatmul.mubr.bf16.gmra.mrb[0].mxu0 %v3209
        %v4669 = vpop.f32.mrb[0].mxu0
        %v4670 = vadd.f32 %v4586, %v4669
        %v4671 = vpop.f32.mrb[0].mxu0
        %v4672 = vpop.f32.mrb[0].mxu0
        %v4673 = vadd.f32 %v4586, %v4672
        %v4674 = vpop.f32.mrb[0].mxu0
        %4675 = vmatprep.mubr.bf16.mxu0 0
        %4676 = vmatmul.mubr.bf16.gmra.mrb[0].mxu0 %v3210
        %v4677 = vpop.f32.mrb[0].mxu0
        %v4678 = vadd.f32 %v4586, %v4677
        %v4679 = vpop.f32.mrb[0].mxu0
        %v4680 = vpop.f32.mrb[0].mxu0
        %v4681 = vadd.f32 %v4586, %v4680
        %v4682 = vpop.f32.mrb[0].mxu0
        %4683 = vmatprep.mubr.bf16.mxu0 0
        %4684 = vmatmul.mubr.bf16.gmra.mrb[0].mxu0 %v3211
        %v4685 = vpop.f32.mrb[0].mxu0
        %v4686 = vadd.f32 %v4586, %v4685
        %v4687 = vpop.f32.mrb[0].mxu0
        %v4688 = vpop.f32.mrb[0].mxu0
        %v4689 = vadd.f32 %v4586, %v4688
        %v4690 = vpop.f32.mrb[0].mxu0
        %4691 = vmatprep.mubr.bf16.mxu0 0
        %4692 = vmatmul.mubr.bf16.gmra.mrb[0].mxu0 %v3212
        %v4693 = vpop.f32.mrb[0].mxu0
        %v4694 = vadd.f32 %v4586, %v4693
        %v4695 = vpop.f32.mrb[0].mxu0
        %v4696 = vpop.f32.mrb[0].mxu0
        %v4697 = vadd.f32 %v4586, %v4696
        %v4698 = vpop.f32.mrb[0].mxu0
        %4699 = vmatprep.mubr.bf16.mxu0 0
        %4700 = vmatmul.mubr.bf16.gmra.mrb[0].mxu0 %v3213
        %v4701 = vpop.f32.mrb[0].mxu0
        %v4702 = vadd.f32 %v4586, %v4701
        %v4703 = vpop.f32.mrb[0].mxu0
        %v4704 = vpop.f32.mrb[0].mxu0
        %v4705 = vadd.f32 %v4586, %v4704
        %v4706 = vpop.f32.mrb[0].mxu0
        %4707 = vmatprep.mubr.bf16.mxu0 0
        %4708 = vmatmul.mubr.bf16.gmra.mrb[0].mxu0 %v3214
        %v4709 = vpop.f32.mrb[0].mxu0
        %v4710 = vadd.f32 %v4586, %v4709
        %v4711 = vpop.f32.mrb[0].mxu0
        %v4712 = vpop.f32.mrb[0].mxu0
        %v4713 = vadd.f32 %v4586, %v4712
        %v4714 = vpop.f32.mrb[0].mxu0
        %4715 = vmatprep.mubr.bf16.mxu0 0
        %4716 = vmatmul.mubr.bf16.gmra.mrb[0].mxu0 %v3215
        %v4717 = vpop.f32.mrb[0].mxu0
        %v4718 = vadd.f32 %v4586, %v4717
        %v4719 = vpop.f32.mrb[0].mxu0
        %v4720 = vpop.f32.mrb[0].mxu0
        %v4721 = vadd.f32 %v4586, %v4720
        %v4722 = vpop.f32.mrb[0].mxu0
        %4723 = vmatprep.mubr.bf16.mxu0 0
        %4724 = vmatmul.mubr.bf16.gmra.mrb[0].mxu0 %v3216
        %v4725 = vpop.f32.mrb[0].mxu0
        %v4726 = vadd.f32 %v4586, %v4725
        %v4727 = vpop.f32.mrb[0].mxu0
        %v4728 = vpop.f32.mrb[0].mxu0
        %v4729 = vadd.f32 %v4586, %v4728
        %v4730 = vpop.f32.mrb[0].mxu0
        %4731 = vmatprep.mubr.bf16.mxu0 0
        %4732 = vmatmul.mubr.bf16.gmra.mrb[0].mxu0 %v3217
        %v4733 = vpop.f32.mrb[0].mxu0
        %v4734 = vadd.f32 %v4586, %v4733
        %v4735 = vpop.f32.mrb[0].mxu0
        %v4736 = vpop.f32.mrb[0].mxu0
        %v4737 = vadd.f32 %v4586, %v4736
        %v4738 = vpop.f32.mrb[0].mxu0
        %4739 = vmatprep.mubr.bf16.mxu0 0
        %4740 = vmatmul.mubr.bf16.gmra.mrb[0].mxu0 %v3218
        %v4741 = vpop.f32.mrb[0].mxu0
        %v4742 = vadd.f32 %v4586, %v4741
        %v4743 = vpop.f32.mrb[0].mxu0
        %v4744 = vpop.f32.mrb[0].mxu0
        %v4745 = vadd.f32 %v4586, %v4744
        %v4746 = vpop.f32.mrb[0].mxu0
        %4747 = vmatprep.mubr.bf16.mxu0 0
        %4748 = vmatmul.mubr.bf16.gmra.mrb[0].mxu0 %v3219
        %v4749 = vpop.f32.mrb[0].mxu0
        %v4750 = vadd.f32 %v4586, %v4749
        %v4751 = vpop.f32.mrb[0].mxu0
        %v4752 = vpop.f32.mrb[0].mxu0
        %v4753 = vadd.f32 %v4586, %v4752
        %v4754 = vpop.f32.mrb[0].mxu0
        %4755 = vmatprep.mubr.bf16.mxu0 0
        %4756 = vmatmul.mubr.bf16.gmra.mrb[0].mxu0 %v3220
        %v4757 = vpop.f32.mrb[0].mxu0
        %v4758 = vadd.f32 %v4586, %v4757
        %v4759 = vpop.f32.mrb[0].mxu0
        %v4760 = vpop.f32.mrb[0].mxu0
        %v4761 = vadd.f32 %v4586, %v4760
        %v4762 = vpop.f32.mrb[0].mxu0
        %4763 = vmatprep.mubr.bf16.mxu0 0
        %4764 = vmatmul.mubr.bf16.gmra.mrb[0].mxu0 %v3221
        %v4765 = vpop.f32.mrb[0].mxu0
        %v4766 = vadd.f32 %v4586, %v4765
        %v4767 = vpop.f32.mrb[0].mxu0
        %v4768 = vpop.f32.mrb[0].mxu0
        %v4769 = vadd.f32 %v4586, %v4768
        %v4770 = vpop.f32.mrb[0].mxu0
        %4771 = vmatprep.mubr.bf16.mxu0 0
        %4772 = vmatmul.mubr.bf16.gmra.mrb[0].mxu0 %v3222
        %v4773 = vpop.f32.mrb[0].mxu0
        %v4774 = vadd.f32 %v4586, %v4773
        %v4775 = vpop.f32.mrb[0].mxu0
        %v4776 = vpop.f32.mrb[0].mxu0
        %v4777 = vadd.f32 %v4586, %v4776
        %v4778 = vpop.f32.mrb[0].mxu0
        %4779 = vmatprep.mubr.bf16.mxu0 0
        %4780 = vmatmul.mubr.bf16.gmra.mrb[0].mxu0 %v3223
        %v4781 = vpop.f32.mrb[0].mxu0
        %v4782 = vadd.f32 %v4586, %v4781
        %v4783 = vpop.f32.mrb[0].mxu0
        %v4784 = vpop.f32.mrb[0].mxu0
        %v4785 = vadd.f32 %v4586, %v4784
        %v4786 = vpop.f32.mrb[0].mxu0
        %4787 = vmatprep.mubr.bf16.mxu0 0
        %4788 = vmatmul.mubr.bf16.gmra.mrb[0].mxu0 %v3224
        %v4789 = vpop.f32.mrb[0].mxu0
        %v4790 = vadd.f32 %v4586, %v4789
        %v4791 = vpop.f32.mrb[0].mxu0
        %v4792 = vpop.f32.mrb[0].mxu0
        %v4793 = vadd.f32 %v4586, %v4792
        %v4794 = vpop.f32.mrb[0].mxu0
        %4795 = vdwg.mxu0
        %v4796 = vmax.f32 %v4670, 0.0
        %v4797 = vmax.f32 %v4673, 0.0
        %v4798 = vmax.f32 %v4678, 0.0
        %v4799 = vmax.f32 %v4681, 0.0
        %v4800 = vmax.f32 %v4686, 0.0
        %v4801 = vmax.f32 %v4689, 0.0
        %v4802 = vmax.f32 %v4694, 0.0
        %v4803 = vmax.f32 %v4697, 0.0
        %v4804 = vmax.f32 %v4702, 0.0
        %v4805 = vmax.f32 %v4705, 0.0
        %v4806 = vmax.f32 %v4710, 0.0
        %v4807 = vmax.f32 %v4713, 0.0
        %v4808 = vmax.f32 %v4718, 0.0
        %v4809 = vmax.f32 %v4721, 0.0
        %v4810 = vmax.f32 %v4726, 0.0
        %v4811 = vmax.f32 %v4729, 0.0
        %v4812 = vmax.f32 %v4734, 0.0
        %v4813 = vmax.f32 %v4737, 0.0
        %v4814 = vmax.f32 %v4742, 0.0
        %v4815 = vmax.f32 %v4745, 0.0
        %v4816 = vmax.f32 %v4750, 0.0
        %v4817 = vmax.f32 %v4753, 0.0
        %v4818 = vmax.f32 %v4758, 0.0
        %v4819 = vmax.f32 %v4761, 0.0
        %v4820 = vmax.f32 %v4766, 0.0
        %v4821 = vmax.f32 %v4769, 0.0
        %v4822 = vmax.f32 %v4774, 0.0
        %v4823 = vmax.f32 %v4777, 0.0
        %v4824 = vmax.f32 %v4782, 0.0
        %v4825 = vmax.f32 %v4785, 0.0
        %v4826 = vmax.f32 %v4790, 0.0
        %v4827 = vmax.f32 %v4793, 0.0
        %v4828 = vpack.c.bf16 %v4797, %v4796
        %v4829 = vpack.c.bf16 %v4799, %v4798
        %v4830 = vpack.c.bf16 %v4801, %v4800
        %v4831 = vpack.c.bf16 %v4803, %v4802
        %v4832 = vpack.c.bf16 %v4805, %v4804
        %v4833 = vpack.c.bf16 %v4807, %v4806
        %v4834 = vpack.c.bf16 %v4809, %v4808
        %v4835 = vpack.c.bf16 %v4811, %v4810
        %v4836 = vpack.c.bf16 %v4813, %v4812
        %v4837 = vpack.c.bf16 %v4815, %v4814
        %v4838 = vpack.c.bf16 %v4817, %v4816
        %v4839 = vpack.c.bf16 %v4819, %v4818
        %v4840 = vpack.c.bf16 %v4821, %v4820
        %v4841 = vpack.c.bf16 %v4823, %v4822
        %v4842 = vpack.c.bf16 %v4825, %v4824
        %v4843 = vpack.c.bf16 %v4827, %v4826
        %s4844 = scalar_lea.vmem %s9, 128
        %v4845 = vld [vmem:[%s4844] sm:$0xf]
        %v4846 = vld [vmem:[%s4844 + $0x4] sm:$0xf]
        %v4847 = vld [vmem:[%s4844 + $0x8] sm:$0xf]
        %v4848 = vld [vmem:[%s4844 + $0xc] sm:$0xf]
        %v4849 = vld [vmem:[%s4844 + $0x10] sm:$0xf]
        %v4850 = vld [vmem:[%s4844 + $0x14] sm:$0xf]
        %v4851 = vld [vmem:[%s4844 + $0x18] sm:$0xf]
        %v4852 = vld [vmem:[%s4844 + $0x1c] sm:$0xf]
        %v4853 = vld [vmem:[%s4844 + $0x20] sm:$0xf]
        %v4854 = vld [vmem:[%s4844 + $0x24] sm:$0xf]
        %v4855 = vld [vmem:[%s4844 + $0x28] sm:$0xf]
        %v4856 = vld [vmem:[%s4844 + $0x2c] sm:$0xf]
        %v4857 = vld [vmem:[%s4844 + $0x30] sm:$0xf]
        %v4858 = vld [vmem:[%s4844 + $0x34] sm:$0xf]
        %v4859 = vld [vmem:[%s4844 + $0x38] sm:$0xf]
        %v4860 = vld [vmem:[%s4844 + $0x3c] sm:$0xf]
        %v4861 = vld [vmem:[%s10 + $0x2] sm:$0x1]
        %v4862 = vlaneseq
        %v4863 = vshrl.u32 %v4862, 7
        %v4864 = vsub.s32 0, %v4863
        %v4865 = vrot.slane %v4861, %v4864
        %v4882 = vunpack.c.l.b16 %v4845
        %v4883 = vunpack.c.l.b16 %v4846
        %v4884 = vunpack.c.l.b16 %v4847
        %v4885 = vunpack.c.l.b16 %v4848
        %v4886 = vunpack.c.l.b16 %v4849
        %v4887 = vunpack.c.l.b16 %v4850
        %v4888 = vunpack.c.l.b16 %v4851
        %v4889 = vunpack.c.l.b16 %v4852
        %v4890 = vunpack.c.l.b16 %v4853
        %v4891 = vunpack.c.l.b16 %v4854
        %v4892 = vunpack.c.l.b16 %v4855
        %v4893 = vunpack.c.l.b16 %v4856
        %v4894 = vunpack.c.l.b16 %v4857
        %v4895 = vunpack.c.l.b16 %v4858
        %v4896 = vunpack.c.l.b16 %v4859
        %v4897 = vunpack.c.l.b16 %v4860
        %v4898 = vpack.c.b16 %v4883, %v4882
        %v4899 = vpack.c.b16 %v4885, %v4884
        %v4900 = vpack.c.b16 %v4887, %v4886
        %v4901 = vpack.c.b16 %v4889, %v4888
        %v4902 = vpack.c.b16 %v4891, %v4890
        %v4903 = vpack.c.b16 %v4893, %v4892
        %v4904 = vpack.c.b16 %v4895, %v4894
        %v4905 = vpack.c.b16 %v4897, %v4896
        %4914 = vmatprep.subr.bf16.mxu0 0
        %4915 = vmatpush1.bf16.msra.mxu0 %v4898
        %4916 = vmatprep.subr.bf16.mxu0 0
        %4917 = vmatpush1.bf16.msra.mxu0 %v4899
        %4918 = vmatprep.subr.bf16.mxu0 0
        %4919 = vmatpush1.bf16.msra.mxu0 %v4900
        %4920 = vmatprep.subr.bf16.mxu0 0
        %4921 = vmatpush1.bf16.msra.mxu0 %v4901
        %4922 = vmatprep.subr.bf16.mxu0 0
        %4923 = vmatpush1.bf16.msra.mxu0 %v4902
        %4924 = vmatprep.subr.bf16.mxu0 0
        %4925 = vmatpush1.bf16.msra.mxu0 %v4903
        %4926 = vmatprep.subr.bf16.mxu0 0
        %4927 = vmatpush1.bf16.msra.mxu0 %v4904
        %4928 = vmatprep.subr.bf16.mxu0 0
        %4929 = vmatpush1.bf16.msra.mxu0 %v4905
        %4930 = vmatprep.subr.bf16.mxu0 0
        %4931 = vmatpush1.bf16.msra.mxu0 0
        %4932 = vmatprep.subr.bf16.mxu0 0
        %4933 = vmatpush1.bf16.msra.mxu0 0
        %4934 = vmatprep.subr.bf16.mxu0 0
        %4935 = vmatpush1.bf16.msra.mxu0 0
        %4936 = vmatprep.subr.bf16.mxu0 0
        %4937 = vmatpush1.bf16.msra.mxu0 0
        %4938 = vmatprep.subr.bf16.mxu0 0
        %4939 = vmatpush1.bf16.msra.mxu0 0
        %4940 = vmatprep.subr.bf16.mxu0 0
        %4941 = vmatpush1.bf16.msra.mxu0 0
        %4942 = vmatprep.subr.bf16.mxu0 0
        %4943 = vmatpush1.bf16.msra.mxu0 0
        %4944 = vmatprep.subr.bf16.mxu0 0
        %4945 = vmatpush1.bf16.msra.mxu0 0
        %4946 = vmatprep.mubr.bf16.mxu0 0
        %4947 = vmatmul.mubr.bf16.gmra.mrb[0].mxu0 %v4828
        %v4948 = vpop.f32.mrb[0].mxu0
        %v4949 = vadd.f32 %v4865, %v4948
        %v4950 = vpop.f32.mrb[0].mxu0
        %v4951 = vpop.f32.mrb[0].mxu0
        %v4952 = vadd.f32 %v4865, %v4951
        %v4953 = vpop.f32.mrb[0].mxu0
        %4954 = vmatprep.mubr.bf16.mxu0 0
        %4955 = vmatmul.mubr.bf16.gmra.mrb[0].mxu0 %v4829
        %v4956 = vpop.f32.mrb[0].mxu0
        %v4957 = vadd.f32 %v4865, %v4956
        %v4958 = vpop.f32.mrb[0].mxu0
        %v4959 = vpop.f32.mrb[0].mxu0
        %v4960 = vadd.f32 %v4865, %v4959
        %v4961 = vpop.f32.mrb[0].mxu0
        %4962 = vmatprep.mubr.bf16.mxu0 0
        %4963 = vmatmul.mubr.bf16.gmra.mrb[0].mxu0 %v4830
        %v4964 = vpop.f32.mrb[0].mxu0
        %v4965 = vadd.f32 %v4865, %v4964
        %v4966 = vpop.f32.mrb[0].mxu0
        %v4967 = vpop.f32.mrb[0].mxu0
        %v4968 = vadd.f32 %v4865, %v4967
        %v4969 = vpop.f32.mrb[0].mxu0
        %4970 = vmatprep.mubr.bf16.mxu0 0
        %4971 = vmatmul.mubr.bf16.gmra.mrb[0].mxu0 %v4831
        %v4972 = vpop.f32.mrb[0].mxu0
        %v4973 = vadd.f32 %v4865, %v4972
        %v4974 = vpop.f32.mrb[0].mxu0
        %v4975 = vpop.f32.mrb[0].mxu0
        %v4976 = vadd.f32 %v4865, %v4975
        %v4977 = vpop.f32.mrb[0].mxu0
        %4978 = vmatprep.mubr.bf16.mxu0 0
        %4979 = vmatmul.mubr.bf16.gmra.mrb[0].mxu0 %v4832
        %v4980 = vpop.f32.mrb[0].mxu0
        %v4981 = vadd.f32 %v4865, %v4980
        %v4982 = vpop.f32.mrb[0].mxu0
        %v4983 = vpop.f32.mrb[0].mxu0
        %v4984 = vadd.f32 %v4865, %v4983
        %v4985 = vpop.f32.mrb[0].mxu0
        %4986 = vmatprep.mubr.bf16.mxu0 0
        %4987 = vmatmul.mubr.bf16.gmra.mrb[0].mxu0 %v4833
        %v4988 = vpop.f32.mrb[0].mxu0
        %v4989 = vadd.f32 %v4865, %v4988
        %v4990 = vpop.f32.mrb[0].mxu0
        %v4991 = vpop.f32.mrb[0].mxu0
        %v4992 = vadd.f32 %v4865, %v4991
        %v4993 = vpop.f32.mrb[0].mxu0
        %4994 = vmatprep.mubr.bf16.mxu0 0
        %4995 = vmatmul.mubr.bf16.gmra.mrb[0].mxu0 %v4834
        %v4996 = vpop.f32.mrb[0].mxu0
        %v4997 = vadd.f32 %v4865, %v4996
        %v4998 = vpop.f32.mrb[0].mxu0
        %v4999 = vpop.f32.mrb[0].mxu0
        %v5000 = vadd.f32 %v4865, %v4999
        %v5001 = vpop.f32.mrb[0].mxu0
        %5002 = vmatprep.mubr.bf16.mxu0 0
        %5003 = vmatmul.mubr.bf16.gmra.mrb[0].mxu0 %v4835
        %v5004 = vpop.f32.mrb[0].mxu0
        %v5005 = vadd.f32 %v4865, %v5004
        %v5006 = vpop.f32.mrb[0].mxu0
        %v5007 = vpop.f32.mrb[0].mxu0
        %v5008 = vadd.f32 %v4865, %v5007
        %v5009 = vpop.f32.mrb[0].mxu0
        %5010 = vmatprep.mubr.bf16.mxu0 0
        %5011 = vmatmul.mubr.bf16.gmra.mrb[0].mxu0 %v4836
        %v5012 = vpop.f32.mrb[0].mxu0
        %v5013 = vadd.f32 %v4865, %v5012
        %v5014 = vpop.f32.mrb[0].mxu0
        %v5015 = vpop.f32.mrb[0].mxu0
        %v5016 = vadd.f32 %v4865, %v5015
        %v5017 = vpop.f32.mrb[0].mxu0
        %5018 = vmatprep.mubr.bf16.mxu0 0
        %5019 = vmatmul.mubr.bf16.gmra.mrb[0].mxu0 %v4837
        %v5020 = vpop.f32.mrb[0].mxu0
        %v5021 = vadd.f32 %v4865, %v5020
        %v5022 = vpop.f32.mrb[0].mxu0
        %v5023 = vpop.f32.mrb[0].mxu0
        %v5024 = vadd.f32 %v4865, %v5023
        %v5025 = vpop.f32.mrb[0].mxu0
        %5026 = vmatprep.mubr.bf16.mxu0 0
        %5027 = vmatmul.mubr.bf16.gmra.mrb[0].mxu0 %v4838
        %v5028 = vpop.f32.mrb[0].mxu0
        %v5029 = vadd.f32 %v4865, %v5028
        %v5030 = vpop.f32.mrb[0].mxu0
        %v5031 = vpop.f32.mrb[0].mxu0
        %v5032 = vadd.f32 %v4865, %v5031
        %v5033 = vpop.f32.mrb[0].mxu0
        %5034 = vmatprep.mubr.bf16.mxu0 0
        %5035 = vmatmul.mubr.bf16.gmra.mrb[0].mxu0 %v4839
        %v5036 = vpop.f32.mrb[0].mxu0
        %v5037 = vadd.f32 %v4865, %v5036
        %v5038 = vpop.f32.mrb[0].mxu0
        %v5039 = vpop.f32.mrb[0].mxu0
        %v5040 = vadd.f32 %v4865, %v5039
        %v5041 = vpop.f32.mrb[0].mxu0
        %5042 = vmatprep.mubr.bf16.mxu0 0
        %5043 = vmatmul.mubr.bf16.gmra.mrb[0].mxu0 %v4840
        %v5044 = vpop.f32.mrb[0].mxu0
        %v5045 = vadd.f32 %v4865, %v5044
        %v5046 = vpop.f32.mrb[0].mxu0
        %v5047 = vpop.f32.mrb[0].mxu0
        %v5048 = vadd.f32 %v4865, %v5047
        %v5049 = vpop.f32.mrb[0].mxu0
        %5050 = vmatprep.mubr.bf16.mxu0 0
        %5051 = vmatmul.mubr.bf16.gmra.mrb[0].mxu0 %v4841
        %v5052 = vpop.f32.mrb[0].mxu0
        %v5053 = vadd.f32 %v4865, %v5052
        %v5054 = vpop.f32.mrb[0].mxu0
        %v5055 = vpop.f32.mrb[0].mxu0
        %v5056 = vadd.f32 %v4865, %v5055
        %v5057 = vpop.f32.mrb[0].mxu0
        %5058 = vmatprep.mubr.bf16.mxu0 0
        %5059 = vmatmul.mubr.bf16.gmra.mrb[0].mxu0 %v4842
        %v5060 = vpop.f32.mrb[0].mxu0
        %v5061 = vadd.f32 %v4865, %v5060
        %v5062 = vpop.f32.mrb[0].mxu0
        %v5063 = vpop.f32.mrb[0].mxu0
        %v5064 = vadd.f32 %v4865, %v5063
        %v5065 = vpop.f32.mrb[0].mxu0
        %5066 = vmatprep.mubr.bf16.mxu0 0
        %5067 = vmatmul.mubr.bf16.gmra.mrb[0].mxu0 %v4843
        %v5068 = vpop.f32.mrb[0].mxu0
        %v5069 = vadd.f32 %v4865, %v5068
        %v5070 = vpop.f32.mrb[0].mxu0
        %v5071 = vpop.f32.mrb[0].mxu0
        %v5072 = vadd.f32 %v4865, %v5071
        %v5073 = vpop.f32.mrb[0].mxu0
        %5074 = vdwg.mxu0
        %v5075 = vmax.f32 %v4949, 0.0
        %v5076 = vmax.f32 %v4952, 0.0
        %v5077 = vmax.f32 %v4957, 0.0
        %v5078 = vmax.f32 %v4960, 0.0
        %v5079 = vmax.f32 %v4965, 0.0
        %v5080 = vmax.f32 %v4968, 0.0
        %v5081 = vmax.f32 %v4973, 0.0
        %v5082 = vmax.f32 %v4976, 0.0
        %v5083 = vmax.f32 %v4981, 0.0
        %v5084 = vmax.f32 %v4984, 0.0
        %v5085 = vmax.f32 %v4989, 0.0
        %v5086 = vmax.f32 %v4992, 0.0
        %v5087 = vmax.f32 %v4997, 0.0
        %v5088 = vmax.f32 %v5000, 0.0
        %v5089 = vmax.f32 %v5005, 0.0
        %v5090 = vmax.f32 %v5008, 0.0
        %v5091 = vmax.f32 %v5013, 0.0
        %v5092 = vmax.f32 %v5016, 0.0
        %v5093 = vmax.f32 %v5021, 0.0
        %v5094 = vmax.f32 %v5024, 0.0
        %v5095 = vmax.f32 %v5029, 0.0
        %v5096 = vmax.f32 %v5032, 0.0
        %v5097 = vmax.f32 %v5037, 0.0
        %v5098 = vmax.f32 %v5040, 0.0
        %v5099 = vmax.f32 %v5045, 0.0
        %v5100 = vmax.f32 %v5048, 0.0
        %v5101 = vmax.f32 %v5053, 0.0
        %v5102 = vmax.f32 %v5056, 0.0
        %v5103 = vmax.f32 %v5061, 0.0
        %v5104 = vmax.f32 %v5064, 0.0
        %v5105 = vmax.f32 %v5069, 0.0
        %v5106 = vmax.f32 %v5072, 0.0
        %s5107 = scalar_lea.vmem %s958, 512 [#allocation3]
        %5108 = vst [vmem:[%s5107] sm:$0xff] %v5075
        %5109 = vst [vmem:[%s5107 + $0x8] sm:$0xff] %v5076
        %5110 = vst [vmem:[%s5107 + $0x10] sm:$0xff] %v5077
        %5111 = vst [vmem:[%s5107 + $0x18] sm:$0xff] %v5078
        %5112 = vst [vmem:[%s5107 + $0x20] sm:$0xff] %v5079
        %5113 = vst [vmem:[%s5107 + $0x28] sm:$0xff] %v5080
        %5114 = vst [vmem:[%s5107 + $0x30] sm:$0xff] %v5081
        %5115 = vst [vmem:[%s5107 + $0x38] sm:$0xff] %v5082
        %5116 = vst [vmem:[%s5107 + $0x40] sm:$0xff] %v5083
        %5117 = vst [vmem:[%s5107 + $0x48] sm:$0xff] %v5084
        %5118 = vst [vmem:[%s5107 + $0x50] sm:$0xff] %v5085
        %5119 = vst [vmem:[%s5107 + $0x58] sm:$0xff] %v5086
        %5120 = vst [vmem:[%s5107 + $0x60] sm:$0xff] %v5087
        %5121 = vst [vmem:[%s5107 + $0x68] sm:$0xff] %v5088
        %5122 = vst [vmem:[%s5107 + $0x70] sm:$0xff] %v5089
        %5123 = vst [vmem:[%s5107 + $0x78] sm:$0xff] %v5090
        %5124 = vst [vmem:[%s5107 + $0x80] sm:$0xff] %v5091
        %5125 = vst [vmem:[%s5107 + $0x88] sm:$0xff] %v5092
        %5126 = vst [vmem:[%s5107 + $0x90] sm:$0xff] %v5093
        %5127 = vst [vmem:[%s5107 + $0x98] sm:$0xff] %v5094
        %5128 = vst [vmem:[%s5107 + $0xa0] sm:$0xff] %v5095
        %5129 = vst [vmem:[%s5107 + $0xa8] sm:$0xff] %v5096
        %5130 = vst [vmem:[%s5107 + $0xb0] sm:$0xff] %v5097
        %5131 = vst [vmem:[%s5107 + $0xb8] sm:$0xff] %v5098
        %5132 = vst [vmem:[%s5107 + $0xc0] sm:$0xff] %v5099
        %5133 = vst [vmem:[%s5107 + $0xc8] sm:$0xff] %v5100
        %5134 = vst [vmem:[%s5107 + $0xd0] sm:$0xff] %v5101
        %5135 = vst [vmem:[%s5107 + $0xd8] sm:$0xff] %v5102
        %5136 = vst [vmem:[%s5107 + $0xe0] sm:$0xff] %v5103
        %5137 = vst [vmem:[%s5107 + $0xe8] sm:$0xff] %v5104
        %5138 = vst [vmem:[%s5107 + $0xf0] sm:$0xff] %v5105
        %5139 = vst [vmem:[%s5107 + $0xf8] sm:$0xff] %v5106
        %v5140 = vpack.c.bf16 %v3387, %v3386
        %v5141 = vpack.c.bf16 %v3389, %v3388
        %v5142 = vpack.c.bf16 %v3391, %v3390
        %v5143 = vpack.c.bf16 %v3393, %v3392
        %v5144 = vpack.c.bf16 %v3395, %v3394
        %v5145 = vpack.c.bf16 %v3397, %v3396
        %v5146 = vpack.c.bf16 %v3399, %v3398
        %v5147 = vpack.c.bf16 %v3401, %v3400
        %v5148 = vpack.c.bf16 %v3403, %v3402
        %v5149 = vpack.c.bf16 %v3405, %v3404
        %v5150 = vpack.c.bf16 %v3407, %v3406
        %v5151 = vpack.c.bf16 %v3409, %v3408
        %v5152 = vpack.c.bf16 %v3411, %v3410
        %v5153 = vpack.c.bf16 %v3413, %v3412
        %v5154 = vpack.c.bf16 %v3415, %v3414
        %v5155 = vpack.c.bf16 %v3417, %v3416
        %s5156 = scalar_lea.vmem %s7, 192
        %v5157 = vld [vmem:[%s5156] sm:$0xf]
        %v5158 = vld [vmem:[%s5156 + $0x4] sm:$0xf]
        %v5159 = vld [vmem:[%s5156 + $0x8] sm:$0xf]
        %v5160 = vld [vmem:[%s5156 + $0xc] sm:$0xf]
        %v5161 = vld [vmem:[%s5156 + $0x10] sm:$0xf]
        %v5162 = vld [vmem:[%s5156 + $0x14] sm:$0xf]
        %v5163 = vld [vmem:[%s5156 + $0x18] sm:$0xf]
        %v5164 = vld [vmem:[%s5156 + $0x1c] sm:$0xf]
        %v5165 = vld [vmem:[%s5156 + $0x20] sm:$0xf]
        %v5166 = vld [vmem:[%s5156 + $0x24] sm:$0xf]
        %v5167 = vld [vmem:[%s5156 + $0x28] sm:$0xf]
        %v5168 = vld [vmem:[%s5156 + $0x2c] sm:$0xf]
        %v5169 = vld [vmem:[%s5156 + $0x30] sm:$0xf]
        %v5170 = vld [vmem:[%s5156 + $0x34] sm:$0xf]
        %v5171 = vld [vmem:[%s5156 + $0x38] sm:$0xf]
        %v5172 = vld [vmem:[%s5156 + $0x3c] sm:$0xf]
        %v5173 = vld [vmem:[%s8 + $0x3] sm:$0x1]
        %v5174 = vlaneseq
        %v5175 = vshrl.u32 %v5174, 7
        %v5176 = vsub.s32 0, %v5175
        %v5177 = vrot.slane %v5173, %v5176
        %v5194 = vunpack.c.l.b16 %v5157
        %v5195 = vunpack.c.l.b16 %v5158
        %v5196 = vunpack.c.l.b16 %v5159
        %v5197 = vunpack.c.l.b16 %v5160
        %v5198 = vunpack.c.l.b16 %v5161
        %v5199 = vunpack.c.l.b16 %v5162
        %v5200 = vunpack.c.l.b16 %v5163
        %v5201 = vunpack.c.l.b16 %v5164
        %v5202 = vunpack.c.l.b16 %v5165
        %v5203 = vunpack.c.l.b16 %v5166
        %v5204 = vunpack.c.l.b16 %v5167
        %v5205 = vunpack.c.l.b16 %v5168
        %v5206 = vunpack.c.l.b16 %v5169
        %v5207 = vunpack.c.l.b16 %v5170
        %v5208 = vunpack.c.l.b16 %v5171
        %v5209 = vunpack.c.l.b16 %v5172
        %v5210 = vpack.c.b16 %v5195, %v5194
        %v5211 = vpack.c.b16 %v5197, %v5196
        %v5212 = vpack.c.b16 %v5199, %v5198
        %v5213 = vpack.c.b16 %v5201, %v5200
        %v5214 = vpack.c.b16 %v5203, %v5202
        %v5215 = vpack.c.b16 %v5205, %v5204
        %v5216 = vpack.c.b16 %v5207, %v5206
        %v5217 = vpack.c.b16 %v5209, %v5208
        %5226 = vmatprep.subr.bf16.mxu0 0
        %5227 = vmatpush1.bf16.msra.mxu0 %v5210
        %5228 = vmatprep.subr.bf16.mxu0 0
        %5229 = vmatpush1.bf16.msra.mxu0 %v5211
        %5230 = vmatprep.subr.bf16.mxu0 0
        %5231 = vmatpush1.bf16.msra.mxu0 %v5212
        %5232 = vmatprep.subr.bf16.mxu0 0
        %5233 = vmatpush1.bf16.msra.mxu0 %v5213
        %5234 = vmatprep.subr.bf16.mxu0 0
        %5235 = vmatpush1.bf16.msra.mxu0 %v5214
        %5236 = vmatprep.subr.bf16.mxu0 0
        %5237 = vmatpush1.bf16.msra.mxu0 %v5215
        %5238 = vmatprep.subr.bf16.mxu0 0
        %5239 = vmatpush1.bf16.msra.mxu0 %v5216
        %5240 = vmatprep.subr.bf16.mxu0 0
        %5241 = vmatpush1.bf16.msra.mxu0 %v5217
        %5242 = vmatprep.subr.bf16.mxu0 0
        %5243 = vmatpush1.bf16.msra.mxu0 0
        %5244 = vmatprep.subr.bf16.mxu0 0
        %5245 = vmatpush1.bf16.msra.mxu0 0
        %5246 = vmatprep.subr.bf16.mxu0 0
        %5247 = vmatpush1.bf16.msra.mxu0 0
        %5248 = vmatprep.subr.bf16.mxu0 0
        %5249 = vmatpush1.bf16.msra.mxu0 0
        %5250 = vmatprep.subr.bf16.mxu0 0
        %5251 = vmatpush1.bf16.msra.mxu0 0
        %5252 = vmatprep.subr.bf16.mxu0 0
        %5253 = vmatpush1.bf16.msra.mxu0 0
        %5254 = vmatprep.subr.bf16.mxu0 0
        %5255 = vmatpush1.bf16.msra.mxu0 0
        %5256 = vmatprep.subr.bf16.mxu0 0
        %5257 = vmatpush1.bf16.msra.mxu0 0
        %5258 = vmatprep.mubr.bf16.mxu0 0
        %5259 = vmatmul.mubr.bf16.gmra.mrb[0].mxu0 %v5140
        %v5260 = vpop.f32.mrb[0].mxu0
        %v5261 = vadd.f32 %v5177, %v5260
        %v5262 = vpop.f32.mrb[0].mxu0
        %v5263 = vpop.f32.mrb[0].mxu0
        %v5264 = vadd.f32 %v5177, %v5263
        %v5265 = vpop.f32.mrb[0].mxu0
        %5266 = vmatprep.mubr.bf16.mxu0 0
        %5267 = vmatmul.mubr.bf16.gmra.mrb[0].mxu0 %v5141
        %v5268 = vpop.f32.mrb[0].mxu0
        %v5269 = vadd.f32 %v5177, %v5268
        %v5270 = vpop.f32.mrb[0].mxu0
        %v5271 = vpop.f32.mrb[0].mxu0
        %v5272 = vadd.f32 %v5177, %v5271
        %v5273 = vpop.f32.mrb[0].mxu0
        %5274 = vmatprep.mubr.bf16.mxu0 0
        %5275 = vmatmul.mubr.bf16.gmra.mrb[0].mxu0 %v5142
        %v5276 = vpop.f32.mrb[0].mxu0
        %v5277 = vadd.f32 %v5177, %v5276
        %v5278 = vpop.f32.mrb[0].mxu0
        %v5279 = vpop.f32.mrb[0].mxu0
        %v5280 = vadd.f32 %v5177, %v5279
        %v5281 = vpop.f32.mrb[0].mxu0
        %5282 = vmatprep.mubr.bf16.mxu0 0
        %5283 = vmatmul.mubr.bf16.gmra.mrb[0].mxu0 %v5143
        %v5284 = vpop.f32.mrb[0].mxu0
        %v5285 = vadd.f32 %v5177, %v5284
        %v5286 = vpop.f32.mrb[0].mxu0
        %v5287 = vpop.f32.mrb[0].mxu0
        %v5288 = vadd.f32 %v5177, %v5287
        %v5289 = vpop.f32.mrb[0].mxu0
        %5290 = vmatprep.mubr.bf16.mxu0 0
        %5291 = vmatmul.mubr.bf16.gmra.mrb[0].mxu0 %v5144
        %v5292 = vpop.f32.mrb[0].mxu0
        %v5293 = vadd.f32 %v5177, %v5292
        %v5294 = vpop.f32.mrb[0].mxu0
        %v5295 = vpop.f32.mrb[0].mxu0
        %v5296 = vadd.f32 %v5177, %v5295
        %v5297 = vpop.f32.mrb[0].mxu0
        %5298 = vmatprep.mubr.bf16.mxu0 0
        %5299 = vmatmul.mubr.bf16.gmra.mrb[0].mxu0 %v5145
        %v5300 = vpop.f32.mrb[0].mxu0
        %v5301 = vadd.f32 %v5177, %v5300
        %v5302 = vpop.f32.mrb[0].mxu0
        %v5303 = vpop.f32.mrb[0].mxu0
        %v5304 = vadd.f32 %v5177, %v5303
        %v5305 = vpop.f32.mrb[0].mxu0
        %5306 = vmatprep.mubr.bf16.mxu0 0
        %5307 = vmatmul.mubr.bf16.gmra.mrb[0].mxu0 %v5146
        %v5308 = vpop.f32.mrb[0].mxu0
        %v5309 = vadd.f32 %v5177, %v5308
        %v5310 = vpop.f32.mrb[0].mxu0
        %v5311 = vpop.f32.mrb[0].mxu0
        %v5312 = vadd.f32 %v5177, %v5311
        %v5313 = vpop.f32.mrb[0].mxu0
        %5314 = vmatprep.mubr.bf16.mxu0 0
        %5315 = vmatmul.mubr.bf16.gmra.mrb[0].mxu0 %v5147
        %v5316 = vpop.f32.mrb[0].mxu0
        %v5317 = vadd.f32 %v5177, %v5316
        %v5318 = vpop.f32.mrb[0].mxu0
        %v5319 = vpop.f32.mrb[0].mxu0
        %v5320 = vadd.f32 %v5177, %v5319
        %v5321 = vpop.f32.mrb[0].mxu0
        %5322 = vmatprep.mubr.bf16.mxu0 0
        %5323 = vmatmul.mubr.bf16.gmra.mrb[0].mxu0 %v5148
        %v5324 = vpop.f32.mrb[0].mxu0
        %v5325 = vadd.f32 %v5177, %v5324
        %v5326 = vpop.f32.mrb[0].mxu0
        %v5327 = vpop.f32.mrb[0].mxu0
        %v5328 = vadd.f32 %v5177, %v5327
        %v5329 = vpop.f32.mrb[0].mxu0
        %5330 = vmatprep.mubr.bf16.mxu0 0
        %5331 = vmatmul.mubr.bf16.gmra.mrb[0].mxu0 %v5149
        %v5332 = vpop.f32.mrb[0].mxu0
        %v5333 = vadd.f32 %v5177, %v5332
        %v5334 = vpop.f32.mrb[0].mxu0
        %v5335 = vpop.f32.mrb[0].mxu0
        %v5336 = vadd.f32 %v5177, %v5335
        %v5337 = vpop.f32.mrb[0].mxu0
        %5338 = vmatprep.mubr.bf16.mxu0 0
        %5339 = vmatmul.mubr.bf16.gmra.mrb[0].mxu0 %v5150
        %v5340 = vpop.f32.mrb[0].mxu0
        %v5341 = vadd.f32 %v5177, %v5340
        %v5342 = vpop.f32.mrb[0].mxu0
        %v5343 = vpop.f32.mrb[0].mxu0
        %v5344 = vadd.f32 %v5177, %v5343
        %v5345 = vpop.f32.mrb[0].mxu0
        %5346 = vmatprep.mubr.bf16.mxu0 0
        %5347 = vmatmul.mubr.bf16.gmra.mrb[0].mxu0 %v5151
        %v5348 = vpop.f32.mrb[0].mxu0
        %v5349 = vadd.f32 %v5177, %v5348
        %v5350 = vpop.f32.mrb[0].mxu0
        %v5351 = vpop.f32.mrb[0].mxu0
        %v5352 = vadd.f32 %v5177, %v5351
        %v5353 = vpop.f32.mrb[0].mxu0
        %5354 = vmatprep.mubr.bf16.mxu0 0
        %5355 = vmatmul.mubr.bf16.gmra.mrb[0].mxu0 %v5152
        %v5356 = vpop.f32.mrb[0].mxu0
        %v5357 = vadd.f32 %v5177, %v5356
        %v5358 = vpop.f32.mrb[0].mxu0
        %v5359 = vpop.f32.mrb[0].mxu0
        %v5360 = vadd.f32 %v5177, %v5359
        %v5361 = vpop.f32.mrb[0].mxu0
        %5362 = vmatprep.mubr.bf16.mxu0 0
        %5363 = vmatmul.mubr.bf16.gmra.mrb[0].mxu0 %v5153
        %v5364 = vpop.f32.mrb[0].mxu0
        %v5365 = vadd.f32 %v5177, %v5364
        %v5366 = vpop.f32.mrb[0].mxu0
        %v5367 = vpop.f32.mrb[0].mxu0
        %v5368 = vadd.f32 %v5177, %v5367
        %v5369 = vpop.f32.mrb[0].mxu0
        %5370 = vmatprep.mubr.bf16.mxu0 0
        %5371 = vmatmul.mubr.bf16.gmra.mrb[0].mxu0 %v5154
        %v5372 = vpop.f32.mrb[0].mxu0
        %v5373 = vadd.f32 %v5177, %v5372
        %v5374 = vpop.f32.mrb[0].mxu0
        %v5375 = vpop.f32.mrb[0].mxu0
        %v5376 = vadd.f32 %v5177, %v5375
        %v5377 = vpop.f32.mrb[0].mxu0
        %5378 = vmatprep.mubr.bf16.mxu0 0
        %5379 = vmatmul.mubr.bf16.gmra.mrb[0].mxu0 %v5155
        %v5380 = vpop.f32.mrb[0].mxu0
        %v5381 = vadd.f32 %v5177, %v5380
        %v5382 = vpop.f32.mrb[0].mxu0
        %v5383 = vpop.f32.mrb[0].mxu0
        %v5384 = vadd.f32 %v5177, %v5383
        %v5385 = vpop.f32.mrb[0].mxu0
        %5386 = vdwg.mxu0
        %v5387 = vmax.f32 %v5261, 0.0
        %v5388 = vmax.f32 %v5264, 0.0
        %v5389 = vmax.f32 %v5269, 0.0
        %v5390 = vmax.f32 %v5272, 0.0
        %v5391 = vmax.f32 %v5277, 0.0
        %v5392 = vmax.f32 %v5280, 0.0
        %v5393 = vmax.f32 %v5285, 0.0
        %v5394 = vmax.f32 %v5288, 0.0
        %v5395 = vmax.f32 %v5293, 0.0
        %v5396 = vmax.f32 %v5296, 0.0
        %v5397 = vmax.f32 %v5301, 0.0
        %v5398 = vmax.f32 %v5304, 0.0
        %v5399 = vmax.f32 %v5309, 0.0
        %v5400 = vmax.f32 %v5312, 0.0
        %v5401 = vmax.f32 %v5317, 0.0
        %v5402 = vmax.f32 %v5320, 0.0
        %v5403 = vmax.f32 %v5325, 0.0
        %v5404 = vmax.f32 %v5328, 0.0
        %v5405 = vmax.f32 %v5333, 0.0
        %v5406 = vmax.f32 %v5336, 0.0
        %v5407 = vmax.f32 %v5341, 0.0
        %v5408 = vmax.f32 %v5344, 0.0
        %v5409 = vmax.f32 %v5349, 0.0
        %v5410 = vmax.f32 %v5352, 0.0
        %v5411 = vmax.f32 %v5357, 0.0
        %v5412 = vmax.f32 %v5360, 0.0
        %v5413 = vmax.f32 %v5365, 0.0
        %v5414 = vmax.f32 %v5368, 0.0
        %v5415 = vmax.f32 %v5373, 0.0
        %v5416 = vmax.f32 %v5376, 0.0
        %v5417 = vmax.f32 %v5381, 0.0
        %v5418 = vmax.f32 %v5384, 0.0
        %v5419 = vpack.c.bf16 %v5388, %v5387
        %v5420 = vpack.c.bf16 %v5390, %v5389
        %v5421 = vpack.c.bf16 %v5392, %v5391
        %v5422 = vpack.c.bf16 %v5394, %v5393
        %v5423 = vpack.c.bf16 %v5396, %v5395
        %v5424 = vpack.c.bf16 %v5398, %v5397
        %v5425 = vpack.c.bf16 %v5400, %v5399
        %v5426 = vpack.c.bf16 %v5402, %v5401
        %v5427 = vpack.c.bf16 %v5404, %v5403
        %v5428 = vpack.c.bf16 %v5406, %v5405
        %v5429 = vpack.c.bf16 %v5408, %v5407
        %v5430 = vpack.c.bf16 %v5410, %v5409
        %v5431 = vpack.c.bf16 %v5412, %v5411
        %v5432 = vpack.c.bf16 %v5414, %v5413
        %v5433 = vpack.c.bf16 %v5416, %v5415
        %v5434 = vpack.c.bf16 %v5418, %v5417
        %s5435 = scalar_lea.vmem %s9, 192
        %v5436 = vld [vmem:[%s5435] sm:$0xf]
        %v5437 = vld [vmem:[%s5435 + $0x4] sm:$0xf]
        %v5438 = vld [vmem:[%s5435 + $0x8] sm:$0xf]
        %v5439 = vld [vmem:[%s5435 + $0xc] sm:$0xf]
        %v5440 = vld [vmem:[%s5435 + $0x10] sm:$0xf]
        %v5441 = vld [vmem:[%s5435 + $0x14] sm:$0xf]
        %v5442 = vld [vmem:[%s5435 + $0x18] sm:$0xf]
        %v5443 = vld [vmem:[%s5435 + $0x1c] sm:$0xf]
        %v5444 = vld [vmem:[%s5435 + $0x20] sm:$0xf]
        %v5445 = vld [vmem:[%s5435 + $0x24] sm:$0xf]
        %v5446 = vld [vmem:[%s5435 + $0x28] sm:$0xf]
        %v5447 = vld [vmem:[%s5435 + $0x2c] sm:$0xf]
        %v5448 = vld [vmem:[%s5435 + $0x30] sm:$0xf]
        %v5449 = vld [vmem:[%s5435 + $0x34] sm:$0xf]
        %v5450 = vld [vmem:[%s5435 + $0x38] sm:$0xf]
        %v5451 = vld [vmem:[%s5435 + $0x3c] sm:$0xf]
        %v5452 = vld [vmem:[%s10 + $0x3] sm:$0x1]
        %v5453 = vlaneseq
        %v5454 = vshrl.u32 %v5453, 7
        %v5455 = vsub.s32 0, %v5454
        %v5456 = vrot.slane %v5452, %v5455
        %v5473 = vunpack.c.l.b16 %v5436
        %v5474 = vunpack.c.l.b16 %v5437
        %v5475 = vunpack.c.l.b16 %v5438
        %v5476 = vunpack.c.l.b16 %v5439
        %v5477 = vunpack.c.l.b16 %v5440
        %v5478 = vunpack.c.l.b16 %v5441
        %v5479 = vunpack.c.l.b16 %v5442
        %v5480 = vunpack.c.l.b16 %v5443
        %v5481 = vunpack.c.l.b16 %v5444
        %v5482 = vunpack.c.l.b16 %v5445
        %v5483 = vunpack.c.l.b16 %v5446
        %v5484 = vunpack.c.l.b16 %v5447
        %v5485 = vunpack.c.l.b16 %v5448
        %v5486 = vunpack.c.l.b16 %v5449
        %v5487 = vunpack.c.l.b16 %v5450
        %v5488 = vunpack.c.l.b16 %v5451
        %v5489 = vpack.c.b16 %v5474, %v5473
        %v5490 = vpack.c.b16 %v5476, %v5475
        %v5491 = vpack.c.b16 %v5478, %v5477
        %v5492 = vpack.c.b16 %v5480, %v5479
        %v5493 = vpack.c.b16 %v5482, %v5481
        %v5494 = vpack.c.b16 %v5484, %v5483
        %v5495 = vpack.c.b16 %v5486, %v5485
        %v5496 = vpack.c.b16 %v5488, %v5487
        %5505 = vmatprep.subr.bf16.mxu0 0
        %5506 = vmatpush1.bf16.msra.mxu0 %v5489
        %5507 = vmatprep.subr.bf16.mxu0 0
        %5508 = vmatpush1.bf16.msra.mxu0 %v5490
        %5509 = vmatprep.subr.bf16.mxu0 0
        %5510 = vmatpush1.bf16.msra.mxu0 %v5491
        %5511 = vmatprep.subr.bf16.mxu0 0
        %5512 = vmatpush1.bf16.msra.mxu0 %v5492
        %5513 = vmatprep.subr.bf16.mxu0 0
        %5514 = vmatpush1.bf16.msra.mxu0 %v5493
        %5515 = vmatprep.subr.bf16.mxu0 0
        %5516 = vmatpush1.bf16.msra.mxu0 %v5494
        %5517 = vmatprep.subr.bf16.mxu0 0
        %5518 = vmatpush1.bf16.msra.mxu0 %v5495
        %5519 = vmatprep.subr.bf16.mxu0 0
        %5520 = vmatpush1.bf16.msra.mxu0 %v5496
        %5521 = vmatprep.subr.bf16.mxu0 0
        %5522 = vmatpush1.bf16.msra.mxu0 0
        %5523 = vmatprep.subr.bf16.mxu0 0
        %5524 = vmatpush1.bf16.msra.mxu0 0
        %5525 = vmatprep.subr.bf16.mxu0 0
        %5526 = vmatpush1.bf16.msra.mxu0 0
        %5527 = vmatprep.subr.bf16.mxu0 0
        %5528 = vmatpush1.bf16.msra.mxu0 0
        %5529 = vmatprep.subr.bf16.mxu0 0
        %5530 = vmatpush1.bf16.msra.mxu0 0
        %5531 = vmatprep.subr.bf16.mxu0 0
        %5532 = vmatpush1.bf16.msra.mxu0 0
        %5533 = vmatprep.subr.bf16.mxu0 0
        %5534 = vmatpush1.bf16.msra.mxu0 0
        %5535 = vmatprep.subr.bf16.mxu0 0
        %5536 = vmatpush1.bf16.msra.mxu0 0
        %5537 = vmatprep.mubr.bf16.mxu0 0
        %5538 = vmatmul.mubr.bf16.gmra.mrb[0].mxu0 %v5419
        %v5539 = vpop.f32.mrb[0].mxu0
        %v5540 = vadd.f32 %v5456, %v5539
        %v5541 = vpop.f32.mrb[0].mxu0
        %v5542 = vpop.f32.mrb[0].mxu0
        %v5543 = vadd.f32 %v5456, %v5542
        %v5544 = vpop.f32.mrb[0].mxu0
        %5545 = vmatprep.mubr.bf16.mxu0 0
        %5546 = vmatmul.mubr.bf16.gmra.mrb[0].mxu0 %v5420
        %v5547 = vpop.f32.mrb[0].mxu0
        %v5548 = vadd.f32 %v5456, %v5547
        %v5549 = vpop.f32.mrb[0].mxu0
        %v5550 = vpop.f32.mrb[0].mxu0
        %v5551 = vadd.f32 %v5456, %v5550
        %v5552 = vpop.f32.mrb[0].mxu0
        %5553 = vmatprep.mubr.bf16.mxu0 0
        %5554 = vmatmul.mubr.bf16.gmra.mrb[0].mxu0 %v5421
        %v5555 = vpop.f32.mrb[0].mxu0
        %v5556 = vadd.f32 %v5456, %v5555
        %v5557 = vpop.f32.mrb[0].mxu0
        %v5558 = vpop.f32.mrb[0].mxu0
        %v5559 = vadd.f32 %v5456, %v5558
        %v5560 = vpop.f32.mrb[0].mxu0
        %5561 = vmatprep.mubr.bf16.mxu0 0
        %5562 = vmatmul.mubr.bf16.gmra.mrb[0].mxu0 %v5422
        %v5563 = vpop.f32.mrb[0].mxu0
        %v5564 = vadd.f32 %v5456, %v5563
        %v5565 = vpop.f32.mrb[0].mxu0
        %v5566 = vpop.f32.mrb[0].mxu0
        %v5567 = vadd.f32 %v5456, %v5566
        %v5568 = vpop.f32.mrb[0].mxu0
        %5569 = vmatprep.mubr.bf16.mxu0 0
        %5570 = vmatmul.mubr.bf16.gmra.mrb[0].mxu0 %v5423
        %v5571 = vpop.f32.mrb[0].mxu0
        %v5572 = vadd.f32 %v5456, %v5571
        %v5573 = vpop.f32.mrb[0].mxu0
        %v5574 = vpop.f32.mrb[0].mxu0
        %v5575 = vadd.f32 %v5456, %v5574
        %v5576 = vpop.f32.mrb[0].mxu0
        %5577 = vmatprep.mubr.bf16.mxu0 0
        %5578 = vmatmul.mubr.bf16.gmra.mrb[0].mxu0 %v5424
        %v5579 = vpop.f32.mrb[0].mxu0
        %v5580 = vadd.f32 %v5456, %v5579
        %v5581 = vpop.f32.mrb[0].mxu0
        %v5582 = vpop.f32.mrb[0].mxu0
        %v5583 = vadd.f32 %v5456, %v5582
        %v5584 = vpop.f32.mrb[0].mxu0
        %5585 = vmatprep.mubr.bf16.mxu0 0
        %5586 = vmatmul.mubr.bf16.gmra.mrb[0].mxu0 %v5425
        %v5587 = vpop.f32.mrb[0].mxu0
        %v5588 = vadd.f32 %v5456, %v5587
        %v5589 = vpop.f32.mrb[0].mxu0
        %v5590 = vpop.f32.mrb[0].mxu0
        %v5591 = vadd.f32 %v5456, %v5590
        %v5592 = vpop.f32.mrb[0].mxu0
        %5593 = vmatprep.mubr.bf16.mxu0 0
        %5594 = vmatmul.mubr.bf16.gmra.mrb[0].mxu0 %v5426
        %v5595 = vpop.f32.mrb[0].mxu0
        %v5596 = vadd.f32 %v5456, %v5595
        %v5597 = vpop.f32.mrb[0].mxu0
        %v5598 = vpop.f32.mrb[0].mxu0
        %v5599 = vadd.f32 %v5456, %v5598
        %v5600 = vpop.f32.mrb[0].mxu0
        %5601 = vmatprep.mubr.bf16.mxu0 0
        %5602 = vmatmul.mubr.bf16.gmra.mrb[0].mxu0 %v5427
        %v5603 = vpop.f32.mrb[0].mxu0
        %v5604 = vadd.f32 %v5456, %v5603
        %v5605 = vpop.f32.mrb[0].mxu0
        %v5606 = vpop.f32.mrb[0].mxu0
        %v5607 = vadd.f32 %v5456, %v5606
        %v5608 = vpop.f32.mrb[0].mxu0
        %5609 = vmatprep.mubr.bf16.mxu0 0
        %5610 = vmatmul.mubr.bf16.gmra.mrb[0].mxu0 %v5428
        %v5611 = vpop.f32.mrb[0].mxu0
        %v5612 = vadd.f32 %v5456, %v5611
        %v5613 = vpop.f32.mrb[0].mxu0
        %v5614 = vpop.f32.mrb[0].mxu0
        %v5615 = vadd.f32 %v5456, %v5614
        %v5616 = vpop.f32.mrb[0].mxu0
        %5617 = vmatprep.mubr.bf16.mxu0 0
        %5618 = vmatmul.mubr.bf16.gmra.mrb[0].mxu0 %v5429
        %v5619 = vpop.f32.mrb[0].mxu0
        %v5620 = vadd.f32 %v5456, %v5619
        %v5621 = vpop.f32.mrb[0].mxu0
        %v5622 = vpop.f32.mrb[0].mxu0
        %v5623 = vadd.f32 %v5456, %v5622
        %v5624 = vpop.f32.mrb[0].mxu0
        %5625 = vmatprep.mubr.bf16.mxu0 0
        %5626 = vmatmul.mubr.bf16.gmra.mrb[0].mxu0 %v5430
        %v5627 = vpop.f32.mrb[0].mxu0
        %v5628 = vadd.f32 %v5456, %v5627
        %v5629 = vpop.f32.mrb[0].mxu0
        %v5630 = vpop.f32.mrb[0].mxu0
        %v5631 = vadd.f32 %v5456, %v5630
        %v5632 = vpop.f32.mrb[0].mxu0
        %5633 = vmatprep.mubr.bf16.mxu0 0
        %5634 = vmatmul.mubr.bf16.gmra.mrb[0].mxu0 %v5431
        %v5635 = vpop.f32.mrb[0].mxu0
        %v5636 = vadd.f32 %v5456, %v5635
        %v5637 = vpop.f32.mrb[0].mxu0
        %v5638 = vpop.f32.mrb[0].mxu0
        %v5639 = vadd.f32 %v5456, %v5638
        %v5640 = vpop.f32.mrb[0].mxu0
        %5641 = vmatprep.mubr.bf16.mxu0 0
        %5642 = vmatmul.mubr.bf16.gmra.mrb[0].mxu0 %v5432
        %v5643 = vpop.f32.mrb[0].mxu0
        %v5644 = vadd.f32 %v5456, %v5643
        %v5645 = vpop.f32.mrb[0].mxu0
        %v5646 = vpop.f32.mrb[0].mxu0
        %v5647 = vadd.f32 %v5456, %v5646
        %v5648 = vpop.f32.mrb[0].mxu0
        %5649 = vmatprep.mubr.bf16.mxu0 0
        %5650 = vmatmul.mubr.bf16.gmra.mrb[0].mxu0 %v5433
        %v5651 = vpop.f32.mrb[0].mxu0
        %v5652 = vadd.f32 %v5456, %v5651
        %v5653 = vpop.f32.mrb[0].mxu0
        %v5654 = vpop.f32.mrb[0].mxu0
        %v5655 = vadd.f32 %v5456, %v5654
        %v5656 = vpop.f32.mrb[0].mxu0
        %5657 = vmatprep.mubr.bf16.mxu0 0
        %5658 = vmatmul.mubr.bf16.gmra.mrb[0].mxu0 %v5434
        %v5659 = vpop.f32.mrb[0].mxu0
        %v5660 = vadd.f32 %v5456, %v5659
        %v5661 = vpop.f32.mrb[0].mxu0
        %v5662 = vpop.f32.mrb[0].mxu0
        %v5663 = vadd.f32 %v5456, %v5662
        %v5664 = vpop.f32.mrb[0].mxu0
        %5665 = vdwg.mxu0
        %v5666 = vmax.f32 %v5540, 0.0
        %v5667 = vmax.f32 %v5543, 0.0
        %v5668 = vmax.f32 %v5548, 0.0
        %v5669 = vmax.f32 %v5551, 0.0
        %v5670 = vmax.f32 %v5556, 0.0
        %v5671 = vmax.f32 %v5559, 0.0
        %v5672 = vmax.f32 %v5564, 0.0
        %v5673 = vmax.f32 %v5567, 0.0
        %v5674 = vmax.f32 %v5572, 0.0
        %v5675 = vmax.f32 %v5575, 0.0
        %v5676 = vmax.f32 %v5580, 0.0
        %v5677 = vmax.f32 %v5583, 0.0
        %v5678 = vmax.f32 %v5588, 0.0
        %v5679 = vmax.f32 %v5591, 0.0
        %v5680 = vmax.f32 %v5596, 0.0
        %v5681 = vmax.f32 %v5599, 0.0
        %v5682 = vmax.f32 %v5604, 0.0
        %v5683 = vmax.f32 %v5607, 0.0
        %v5684 = vmax.f32 %v5612, 0.0
        %v5685 = vmax.f32 %v5615, 0.0
        %v5686 = vmax.f32 %v5620, 0.0
        %v5687 = vmax.f32 %v5623, 0.0
        %v5688 = vmax.f32 %v5628, 0.0
        %v5689 = vmax.f32 %v5631, 0.0
        %v5690 = vmax.f32 %v5636, 0.0
        %v5691 = vmax.f32 %v5639, 0.0
        %v5692 = vmax.f32 %v5644, 0.0
        %v5693 = vmax.f32 %v5647, 0.0
        %v5694 = vmax.f32 %v5652, 0.0
        %v5695 = vmax.f32 %v5655, 0.0
        %v5696 = vmax.f32 %v5660, 0.0
        %v5697 = vmax.f32 %v5663, 0.0
        %s5698 = scalar_lea.vmem %s958, 768 [#allocation3]
        %5699 = vst [vmem:[%s5698] sm:$0xff] %v5666
        %5700 = vst [vmem:[%s5698 + $0x8] sm:$0xff] %v5667
        %5701 = vst [vmem:[%s5698 + $0x10] sm:$0xff] %v5668
        %5702 = vst [vmem:[%s5698 + $0x18] sm:$0xff] %v5669
        %5703 = vst [vmem:[%s5698 + $0x20] sm:$0xff] %v5670
        %5704 = vst [vmem:[%s5698 + $0x28] sm:$0xff] %v5671
        %5705 = vst [vmem:[%s5698 + $0x30] sm:$0xff] %v5672
        %5706 = vst [vmem:[%s5698 + $0x38] sm:$0xff] %v5673
        %5707 = vst [vmem:[%s5698 + $0x40] sm:$0xff] %v5674
        %5708 = vst [vmem:[%s5698 + $0x48] sm:$0xff] %v5675
        %5709 = vst [vmem:[%s5698 + $0x50] sm:$0xff] %v5676
        %5710 = vst [vmem:[%s5698 + $0x58] sm:$0xff] %v5677
        %5711 = vst [vmem:[%s5698 + $0x60] sm:$0xff] %v5678
        %5712 = vst [vmem:[%s5698 + $0x68] sm:$0xff] %v5679
        %5713 = vst [vmem:[%s5698 + $0x70] sm:$0xff] %v5680
        %5714 = vst [vmem:[%s5698 + $0x78] sm:$0xff] %v5681
        %5715 = vst [vmem:[%s5698 + $0x80] sm:$0xff] %v5682
        %5716 = vst [vmem:[%s5698 + $0x88] sm:$0xff] %v5683
        %5717 = vst [vmem:[%s5698 + $0x90] sm:$0xff] %v5684
        %5718 = vst [vmem:[%s5698 + $0x98] sm:$0xff] %v5685
        %5719 = vst [vmem:[%s5698 + $0xa0] sm:$0xff] %v5686
        %5720 = vst [vmem:[%s5698 + $0xa8] sm:$0xff] %v5687
        %5721 = vst [vmem:[%s5698 + $0xb0] sm:$0xff] %v5688
        %5722 = vst [vmem:[%s5698 + $0xb8] sm:$0xff] %v5689
        %5723 = vst [vmem:[%s5698 + $0xc0] sm:$0xff] %v5690
        %5724 = vst [vmem:[%s5698 + $0xc8] sm:$0xff] %v5691
        %5725 = vst [vmem:[%s5698 + $0xd0] sm:$0xff] %v5692
        %5726 = vst [vmem:[%s5698 + $0xd8] sm:$0xff] %v5693
        %5727 = vst [vmem:[%s5698 + $0xe0] sm:$0xff] %v5694
        %5728 = vst [vmem:[%s5698 + $0xe8] sm:$0xff] %v5695
        %5729 = vst [vmem:[%s5698 + $0xf0] sm:$0xff] %v5696
        %5730 = vst [vmem:[%s5698 + $0xf8] sm:$0xff] %v5697
        %s5731 = sand.u32 %s274, 1
        %s5732 = scalar_lea.sflag [#allocation4], %s5731
        %s5733 = sand.u32 %s274, 1
        %s5734 = smul.addr %s5733, 1024
        %s5735 = scalar_lea.vmem [#allocation3], %s5734
        %s5736 = sand.u32 %s300, 1
        %s5737 = scalar_lea.sflag [#allocation6], %s5736
        %s5738 = sand.u32 %s300, 1
        %s5739 = smul.addr %s5738, 256
        %s5740 = scalar_lea.vmem [#allocation5], %s5739
        // Predicated region
        $region103: #{cell_forward_pallas_batched.1} parent=97 // pred_check
          %p5741 = pneg %p284
        $region104: #{cell_forward_pallas_batched.1} parent=97 // pred_check_branch
          %5743 = sbr.rel (%p5741) target = $region106
        $region105: #{cell_forward_pallas_batched.1} parent=97 // pred_region
          #allocation8 [shape = 'u32[6]{0}', space=smem, size = 0x18, scoped, tag = 'DMA stride descriptor']
          %s5744 = smul.u32 32, %s30
          %s5746 = ssub.s32 16384, 16384
          %5747 = vsyncadd %s5732, %s5746
          %s5748 = smul.addr %s5744, 128
          %s5749 = scalar_lea.hbm %s11, %s5748
          %s5751 = sshll.u32 1, 14
          %s5752 = sxor.u32 4294967295, %s5751
          %s5755 = sshll.u32 7, 18
          %s5756 = sxor.u32 4294967295, %s5755
          %s5757 = sand.u32 0, %s5756
          %s5759 = sor.u32 %s5757, 0
          %s5761 = sshll.u32 3, 24
          %s5762 = sxor.u32 4294967295, %s5761
          %s5763 = sand.u32 %s5759, %s5762
          %s5765 = sor.u32 %s5763, 0
          %s5766 = sshll.u32 %s5735, 4
          %s5767 = int_to_ptr.vmem [resolvable:$true] %s5766
          %5773 = sst [smem:[#allocation8]] 4096
          %s5774 = scalar_lea.smem [#allocation8], 1
          %5775 = sst [smem:[%s5774]] 8192
          %s5776 = scalar_lea.smem [#allocation8], 2
          %5777 = sst [smem:[%s5776]] 32
          %s5778 = scalar_lea.smem [#allocation8], 3
          %5779 = sst [smem:[%s5778]] 128
          %s5780 = scalar_lea.smem [#allocation8], 4
          %5781 = sst [smem:[%s5780]] 128
          %s5782 = scalar_lea.smem [#allocation8], 5
          %5783 = sst [smem:[%s5782]] 8
          %5785 = dma.general %s5767, 16384, %s5749, %s5732, [#allocation7], [#allocation8], %s5765, 0
        $region106: #{cell_forward_pallas_batched.1} parent=97 // pred_fallthru
          _
        // Predicated region
        $region107: #{cell_forward_pallas_batched.1} parent=97 // pred_check
          %p5786 = pneg %p310
        $region108: #{cell_forward_pallas_batched.1} parent=97 // pred_check_branch
          %5788 = sbr.rel (%p5786) target = $region110
        $region109: #{cell_forward_pallas_batched.1} parent=97 // pred_region
          %s5789 = smul.u32 32, %s30
          %s5791 = ssub.s32 4096, 4096
          %5792 = vsyncadd %s5737, %s5791
          %s5793 = smul.addr %s5789, 128
          %s5794 = scalar_lea.hbm %s12, %s5793
          %s5795 = sshll.u32 %s5740, 4
          %s5796 = int_to_ptr.vmem [resolvable:$true] %s5795
          %5801 = dma.vmem_to_hbm [thread:$0]  %s5796, 4096, %s5794, %s5737, 128, 128, 8
        $region110: #{cell_forward_pallas_batched.1} parent=97 // pred_fallthru
          _
      $region98: #{cell_forward_pallas_batched.1} parent=5 // pred_fallthru
        _
      %p5802 = scmp.le.s32.totalorder 2, %s25
      // Predicated region
      $region111: #{cell_forward_pallas_batched.1} parent=5 // pred_check
        %p5803 = pneg %p5802
      $region112: #{cell_forward_pallas_batched.1} parent=5 // pred_check_branch
        %5805 = sbr.rel (%p5803) target = $region114
      $region113: #{cell_forward_pallas_batched.1} parent=5 // pred_region
        %s5806 = ssub.s32 %s25, 2
        // Predicated region
        $region115: #{cell_forward_pallas_batched.1} parent=113 // pred_check
          %p5807 = pneg %p290
        $region116: #{cell_forward_pallas_batched.1} parent=113 // pred_check_branch
          %5809 = sbr.rel (%p5807) target = $region118
        $region117: #{cell_forward_pallas_batched.1} parent=113 // pred_region
          %s5810 = sand.u32 %s275, 1
          %s5811 = scalar_lea.sflag [#allocation4], %s5810
          %s5812 = sand.u32 %s275, 1
          %s5813 = smul.addr %s5812, 1024
          %s5814 = scalar_lea.vmem [#allocation3], %s5813
          %5815 = dma.done %s5811, 16384
        $region118: #{cell_forward_pallas_batched.1} parent=113 // pred_fallthru
          _
        // Predicated region
        $region119: #{cell_forward_pallas_batched.1} parent=113 // pred_check
          %p5816 = pneg %p316
        $region120: #{cell_forward_pallas_batched.1} parent=113 // pred_check_branch
          %5818 = sbr.rel (%p5816) target = $region122
        $region121: #{cell_forward_pallas_batched.1} parent=113 // pred_region
          %s5819 = sand.u32 %s301, 1
          %s5820 = scalar_lea.sflag [#allocation6], %s5819
          %s5821 = sand.u32 %s301, 1
          %s5822 = smul.addr %s5821, 256
          %s5823 = scalar_lea.vmem [#allocation5], %s5822
          %5824 = dma.done %s5820, 4096
        $region122: #{cell_forward_pallas_batched.1} parent=113 // pred_fallthru
          _
      $region114: #{cell_forward_pallas_batched.1} parent=5 // pred_fallthru
        _
    $region6: #{cell_forward_pallas_batched.1} parent=1 // loop_footer
      %s29 = sadd.s32 1, %s25
    $region7: #{cell_forward_pallas_batched.1} parent=1 // loop_footer_branch
      %24 = sbr.rel target = $region3
    $region8: #{cell_forward_pallas_batched.1} parent=1 // loop_exit
      _
    %5825 = vsyncpa [#allocation4], 1
    %s5826 = scalar_lea.sflag [#allocation4], 1
    %5827 = vsyncpa %s5826, 1
    %5828 = vsyncpa [#allocation6], 1
    %s5829 = scalar_lea.sflag [#allocation6], 1
    %5830 = vsyncpa %s5829, 1

</llo_original>
